<compile_context>
chip_gen: v5e
topology: v5e:2x2
jax: 0.10.0
libtpu: 0.0.40
codegen_flags: <defaults>
</compile_context>

<pallas_src>
import functools

import jax
import jax.numpy as jnp
import numpy as np
from jax.experimental import pallas as pl
from jax.experimental.pallas import tpu as pltpu


# Padded-activation scratch layout per image: (H+2, PAD_OFF + W + PAD_TAIL, C).
# Real pixels sit at columns [PAD_OFF, PAD_OFF+W); the halo columns are
# PAD_OFF-1 (left) and PAD_OFF+W (right).  PAD_OFF / PAD_TAIL are 16 so that
# interior stores and halo-strip zeroing stay (16,128)-tile aligned even for
# bf16 scratch (bf16 packs 16 rows per sublane tile).
PAD_OFF = 16
PAD_TAIL = 16


# ----------------------------------------------------------------------------
# In-kernel helpers
# ----------------------------------------------------------------------------
def _zero_halo(ref, *, H, W):
    """Zero only the halo strips of a padded scratch ref (B, H+2, Wpad, C).

    The interior is fully overwritten every step, and columns outside
    [PAD_OFF-1, PAD_OFF+W] are never read, so zeroing the two side strips and
    the top/bottom rows is sufficient.  Done every grid step so megacore
    sharding (per-core scratch) stays correct.
    """
    B, Hp, Wpad, C = ref.shape
    dt = ref.dtype
    tail = Wpad - (PAD_OFF + W)
    # left strip (contains the left halo column PAD_OFF-1)
    ref[:, :, 0:PAD_OFF, :] = jnp.zeros((B, Hp, PAD_OFF, C), dt)
    # right strip (contains the right halo column PAD_OFF+W)
    ref[:, :, PAD_OFF + W:PAD_OFF + W + tail, :] = jnp.zeros((B, Hp, tail, C), dt)
    # top / bottom halo rows over the interior columns
    ref[:, 0:1, PAD_OFF:PAD_OFF + W, :] = jnp.zeros((B, 1, W, C), dt)
    ref[:, H + 1:H + 2, PAD_OFF:PAD_OFF + W, :] = jnp.zeros((B, 1, W, C), dt)


def _conv1_im2col_tiles(x1_ref, pad_out_ref, w_ref, b_ref, *, b, H, W, rt):
    """Layer 1: Conv2d(3->64) as M-tiled im2col matmuls (K=27) + ReLU."""
    cout = pad_out_ref.shape[-1]
    for t in range(H // rt):
        h0 = t * rt
        x = x1_ref[b, h0 * W:(h0 + rt) * W, :]                    # (rt*W, 27) bf16
        a = jnp.dot(x, w_ref[...], preferred_element_type=jnp.float32)
        a = jnp.maximum(a + b_ref[...], 0.0)                      # (rt*W, 64) f32
        pad_out_ref[b:b + 1, 1 + h0:1 + h0 + rt, PAD_OFF:PAD_OFF + W, :] = (
            a.reshape(1, rt, W, cout).astype(pad_out_ref.dtype))


def _conv3x3_mxu_tiles(pad_in_ref, pad_out_ref, w_ref, b_ref, *,
                       b, H, W, rt, fold_dy):
    """3x3 same-conv (+ReLU) from one padded scratch into the next.

    pad_in_ref:  (B, H+2, Wpad, Cin)  bf16
    pad_out_ref: (B, H+2, Wpad, Cout)
    w_ref: fold_dy=False -> (9, Cin, Cout);  fold_dy=True -> (3, 3*Cin, Cout)
    b_ref: (1, Cout) f32

    M is tiled in strips of rt image rows (rt*W ~ 128) so the f32 accumulator
    stays register-resident across the tap dots.
    """
    cin = pad_in_ref.shape[-1]
    cout = pad_out_ref.shape[-1]
    for t in range(H // rt):
        h0 = t * rt
        acc = jnp.broadcast_to(b_ref[...], (rt * W, cout)).astype(jnp.float32)
        for dx in range(3):
            lo = PAD_OFF - 1 + dx
            # one sublane-shifted slab per dx; dy slices ride the outer axis.
            xs = pad_in_ref[b, h0:h0 + rt + 2, lo:lo + W, :]      # (rt+2, W, Cin)
            if fold_dy:
                # channel-concat the 3 dy-shifted patches -> one K=3*Cin dot.
                lhs = jnp.concatenate(
                    [xs[dy:dy + rt].reshape(rt * W, cin) for dy in range(3)],
                    axis=-1)                                      # (rt*W, 3*Cin)
                acc = acc + jnp.dot(lhs, w_ref[dx],
                                    preferred_element_type=jnp.float32)
            else:
                for dy in range(3):
                    patch = xs[dy:dy + rt].reshape(rt * W, cin)
                    acc = acc + jnp.dot(patch, w_ref[3 * dy + dx],
                                        preferred_element_type=jnp.float32)
        a = jnp.maximum(acc, 0.0).reshape(1, rt, W, cout)         # ReLU in f32
        pad_out_ref[b:b + 1, 1 + h0:1 + h0 + rt, PAD_OFF:PAD_OFF + W, :] = (
            a.astype(pad_out_ref.dtype))


def _conv3x3_sigmoid_cout1(pad_in_ref, out_ref, w_ref, b_ref, *, b, H, W):
    """Final 3x3 conv, Cout=1: f32 VPU FMA + per-tap lane reduce + sigmoid.

    pad_in_ref: (B, H+2, Wpad, Cin) f32      w_ref: (9, 1, Cin) f32
    b_ref: (1, 1) f32                        writes out_ref[b] lane-dense (H*W).
    """
    acc = jnp.zeros((H, W), jnp.float32)
    for dx in range(3):
        lo = PAD_OFF - 1 + dx
        xs = pad_in_ref[b, :, lo:lo + W, :]                       # (H+2, W, Cin)
        for dy in range(3):
            acc = acc + jnp.sum(xs[dy:dy + H] * w_ref[3 * dy + dx], axis=-1)
    out = jax.nn.sigmoid(acc + b_ref[...])                        # (H, W) f32
    out_ref[b:b + 1, :, :] = out.reshape(1, 1, H * W).astype(out_ref.dtype)


# ----------------------------------------------------------------------------
# Fused kernel: B batch elements per grid step
# ----------------------------------------------------------------------------
def _sam_kernel(x1_ref, w1_ref, b1_ref, w2_ref, b2_ref, w3_ref, b3_ref,
                w4_ref, b4_ref, out_ref, pad1_ref, pad2_ref, pad3_ref,
                *, B, H, W, rt):
    # Zero only the halo strips (per step: megacore-safe).
    _zero_halo(pad1_ref, H=H, W=W)
    _zero_halo(pad2_ref, H=H, W=W)
    _zero_halo(pad3_ref, H=H, W=W)

    for b in range(B):
        # layer 1: Conv2d(3->64) + ReLU  (im2col matmul, K=27)
        _conv1_im2col_tiles(x1_ref, pad1_ref, w1_ref, b1_ref,
                            b=b, H=H, W=W, rt=rt)
        # layer 2: Conv2d(64->128) + ReLU   (9 dots of K=64 per M-tile)
        _conv3x3_mxu_tiles(pad1_ref, pad2_ref, w2_ref, b2_ref,
                           b=b, H=H, W=W, rt=rt, fold_dy=False)
        # layer 3: ConvTranspose2d(128->64) == flipped-kernel conv + ReLU
        #          (dy-folded: 3 dots of K=384 per M-tile, lane-aligned concat)
        _conv3x3_mxu_tiles(pad2_ref, pad3_ref, w3_ref, b3_ref,
                           b=b, H=H, W=W, rt=rt, fold_dy=True)
        # layer 4: ConvTranspose2d(64->1) + Sigmoid  (VPU + lane reductions)
        _conv3x3_sigmoid_cout1(pad3_ref, out_ref, w4_ref, b4_ref, b=b, H=H, W=W)


# ----------------------------------------------------------------------------
# Tiling / budgeting helpers (trace-time, static shapes)
# ----------------------------------------------------------------------------
def _rows_per_tile(H, W):
    rt = min(H, max(1, 128 // W))
    while H % rt:
        rt -= 1
    return max(rt, 1)


def _scratch_bytes_per_image(H, W):
    Hp, Wpad = H + 2, PAD_OFF + W + PAD_TAIL
    # lane dim pads to 128: pad1 bf16 + pad2 bf16 + pad3 f32
    return Hp * Wpad * 128 * (2 + 2 + 4)


def _pick_batch_block(N, H, W, scratch_budget_bytes=16 << 20):
    per_img = max(_scratch_bytes_per_image(H, W), 1)
    cap = max(1, min(8, scratch_budget_bytes // per_img, max(1, N // 2)))
    b = int(cap)
    while N % b:
        b -= 1
    return max(b, 1)


def _vmem_limit_bytes(B, H, W):
    scratch = B * _scratch_bytes_per_image(H, W)
    # double-buffered x1col (bf16, 27 lanes padded to 128) + output block
    blocks = 2 * B * H * W * (128 * 2 + 4)
    weights = 2 << 20
    est = scratch + blocks + weights + (8 << 20)
    return int(min(max(est, 16 << 20), 48 << 20))   # safe on v5e/v6e/v7x


def _sam_pallas(x1col, w1, b1, w2, b2, w3, b3, w4, b4, *, H, W, batch_block):
    N = x1col.shape[0]
    B = batch_block
    assert N % B == 0
    Hp = H + 2
    Wpad = PAD_OFF + W + PAD_TAIL
    rt = _rows_per_tile(H, W)
    c1 = w2.shape[1]   # 64
    c2 = w2.shape[2]   # 128
    c3 = w3.shape[2]   # 64

    kernel = functools.partial(_sam_kernel, B=B, H=H, W=W, rt=rt)
    out = pl.pallas_call(
        kernel,
        out_shape=jax.ShapeDtypeStruct((N, 1, H * W), jnp.float32),
        grid=(N // B,),
        in_specs=[
            pl.BlockSpec((B, H * W, x1col.shape[-1]), lambda n: (n, 0, 0)),
            pl.BlockSpec(w1.shape, lambda n: (0, 0)),
            pl.BlockSpec(b1.shape, lambda n: (0, 0)),
            pl.BlockSpec(w2.shape, lambda n: (0, 0, 0)),
            pl.BlockSpec(b2.shape, lambda n: (0, 0)),
            pl.BlockSpec(w3.shape, lambda n: (0, 0, 0)),
            pl.BlockSpec(b3.shape, lambda n: (0, 0)),
            pl.BlockSpec(w4.shape, lambda n: (0, 0, 0)),
            pl.BlockSpec(b4.shape, lambda n: (0, 0)),
        ],
        out_specs=pl.BlockSpec((B, 1, H * W), lambda n: (n, 0, 0)),
        scratch_shapes=[
            pltpu.VMEM((B, Hp, Wpad, c1), jnp.bfloat16),   # pad1 (bf16)
            pltpu.VMEM((B, Hp, Wpad, c2), jnp.bfloat16),   # pad2 (bf16)
            pltpu.VMEM((B, Hp, Wpad, c3), jnp.float32),    # pad3 (f32, VPU layer)
        ],
        compiler_params=pltpu.CompilerParams(
            dimension_semantics=("parallel",),
            vmem_limit_bytes=_vmem_limit_bytes(B, H, W)),
    )(x1col, w1, b1, w2, b2, w3, b3, w4, b4)
    return out


# ----------------------------------------------------------------------------
# Weight preparation (tap-major layouts)
# ----------------------------------------------------------------------------
def conv_weight_to_taps(w):
    """Conv2d weight (Cout, Cin, 3, 3) -> (9, Cin, Cout) same-conv taps."""
    cout, cin = w.shape[0], w.shape[1]
    return jnp.transpose(w, (2, 3, 1, 0)).reshape(9, cin, cout)


def deconv_weight_to_taps(w):
    """ConvTranspose2d weight (Cin, Cout, 3, 3) -> (9, Cin, Cout) conv taps.

    Only valid for stride=1, padding=1, kernel_size=3 (flip + channel swap).
    """
    cin, cout = w.shape[0], w.shape[1]
    wf = w[:, :, ::-1, ::-1]
    return jnp.transpose(wf, (2, 3, 0, 1)).reshape(9, cin, cout)


def _fold_dy(taps):
    """(9, Cin, Cout) tap-major -> (3, 3*Cin, Cout): dx outer, dy stacked on K."""
    _, cin, cout = taps.shape
    t = taps.reshape(3, 3, cin, cout)          # (dy, dx, Cin, Cout)
    t = jnp.transpose(t, (1, 0, 2, 3))         # (dx, dy, Cin, Cout)
    return t.reshape(3, 3 * cin, cout)


def _im2col_3x3(x_nhwc):
    """(N,H,W,C) -> (N, H*W, 9*C) patch matrix for a 3x3 same conv."""
    N, H, W, C = x_nhwc.shape
    xp = jnp.pad(x_nhwc, ((0, 0), (1, 1), (1, 1), (0, 0)))
    cols = [xp[:, dy:dy + H, dx:dx + W, :] for dy in range(3) for dx in range(3)]
    return jnp.concatenate(cols, axis=-1).reshape(N, H * W, 9 * C)


# ----------------------------------------------------------------------------
# Parameter init (PyTorch-default-style uniform; deterministic)
# ----------------------------------------------------------------------------
def _uniform(key, shape, bound):
    return jax.random.uniform(key, shape, jnp.float32, -bound, bound)


def init_params(key):
    ks = jax.random.split(key, 8)
    p = {}
    p["w1"] = _uniform(ks[0], (64, 3, 3, 3), 1.0 / np.sqrt(3 * 9))
    p["b1"] = _uniform(ks[1], (64,), 1.0 / np.sqrt(3 * 9))
    p["w2"] = _uniform(ks[2], (128, 64, 3, 3), 1.0 / np.sqrt(64 * 9))
    p["b2"] = _uniform(ks[3], (128,), 1.0 / np.sqrt(64 * 9))
    p["wt1"] = _uniform(ks[4], (128, 64, 3, 3), 1.0 / np.sqrt(64 * 9))
    p["bt1"] = _uniform(ks[5], (64,), 1.0 / np.sqrt(64 * 9))
    p["wt2"] = _uniform(ks[6], (64, 1, 3, 3), 1.0 / np.sqrt(1 * 9))
    p["bt2"] = _uniform(ks[7], (1,), 1.0 / np.sqrt(1 * 9))
    return p


# ----------------------------------------------------------------------------
# Public forward (NCHW in / NCHW out, matching the PyTorch module)
# ----------------------------------------------------------------------------
def sam_forward(params, x_nchw):
    N, C, H, W = x_nchw.shape
    assert C == 3, "SAMModel expects 3 input channels"
    assert H % 8 == 0 and W % 8 == 0, "spatial dims must be multiples of 8"
    # W % 16 == 0 is ideal (bf16 sublane packing); smaller W is correct but slower.

    x = jnp.transpose(x_nchw, (0, 2, 3, 1)).astype(jnp.float32)   # NCHW -> NHWC

    # Layer-1 im2col on the tiny 3-channel input (layout prep only).
    x1col = _im2col_3x3(x).astype(jnp.bfloat16)                   # (N, H*W, 27)

    # Tap-major weights: bf16 for MXU layers, f32 for the Cout=1 VPU layer.
    w1 = conv_weight_to_taps(params["w1"]).reshape(27, -1).astype(jnp.bfloat16)
    b1 = params["b1"].reshape(1, -1).astype(jnp.float32)
    w2 = conv_weight_to_taps(params["w2"]).astype(jnp.bfloat16)             # (9,64,128)
    b2 = params["b2"].reshape(1, -1).astype(jnp.float32)
    w3 = _fold_dy(deconv_weight_to_taps(params["wt1"])).astype(jnp.bfloat16)  # (3,384,64)
    b3 = params["bt1"].reshape(1, -1).astype(jnp.float32)
    w4 = jnp.transpose(deconv_weight_to_taps(params["wt2"]),
                       (0, 2, 1)).astype(jnp.float32)                       # (9,1,64)
    b4 = params["bt2"].reshape(1, 1).astype(jnp.float32)

    bb = _pick_batch_block(N, H, W)
    out = _sam_pallas(x1col, w1, b1, w2, b2, w3, b3, w4, b4,
                      H=H, W=W, batch_block=bb)                   # (N, 1, H*W)
    return out.reshape(N, 1, H, W)


# ----------------------------------------------------------------------------
# Pure-JAX f32 reference for correctness check
# ----------------------------------------------------------------------------
def _ref_conv3x3(x_nhwc, w_taps, bias, activation):
    N, H, W, Cin = x_nhwc.shape
    Cout = w_taps.shape[-1]
    xp = jnp.pad(x_nhwc, ((0, 0), (1, 1), (1, 1), (0, 0)))
    acc = jnp.zeros((N, H, W, Cout), jnp.float32) + bias
    for dy in range(3):
        for dx in range(3):
            acc = acc + jnp.einsum(
                "nhwc,cd->nhwd", xp[:, dy:dy + H, dx:dx + W, :], w_taps[dy * 3 + dx])
    return jnp.maximum(acc, 0.0) if activation == "relu" else jax.nn.sigmoid(acc)


def sam_forward_ref(params, x_nchw):
    x = jnp.transpose(x_nchw, (0, 2, 3, 1)).astype(jnp.float32)
    x = _ref_conv3x3(x, conv_weight_to_taps(params["w1"]), params["b1"], "relu")
    x = _ref_conv3x3(x, conv_weight_to_taps(params["w2"]), params["b2"], "relu")
    x = _ref_conv3x3(x, deconv_weight_to_taps(params["wt1"]), params["bt1"], "relu")
    x = _ref_conv3x3(x, deconv_weight_to_taps(params["wt2"]), params["bt2"], "sigmoid")
    return jnp.transpose(x, (0, 3, 1, 2))


if __name__ == "__main__":
    key = jax.random.PRNGKey(0)
    pkey, xkey = jax.random.split(key)

    params = init_params(pkey)
    # batch=2, 3 channels (module requires 3), 16x16 spatial.
    x = jax.random.normal(xkey, (2, 3, 16, 16), dtype=jnp.float32)

    out = jax.jit(sam_forward)(params, x)
    out = jax.block_until_ready(out)

    assert out.shape == (2, 1, 16, 16), out.shape
    ref = sam_forward_ref(params, x)
    # bf16 MXU operands / bf16 intermediate activations with f32 accumulation
    # -> loose-ish tolerance vs f32 reference.
    np.testing.assert_allclose(np.asarray(out), np.asarray(ref), rtol=2e-2, atol=2e-2)

    print("KERNEL_OK")
</pallas_src>

<mosaic_0001>
module attributes {stable_mosaic.version = 11 : i64} {
  func.func @_sam_kernel(%arg0: i32, %arg1: memref<1x256x27xbf16, #tpu.memory_space<vmem>>, %arg2: memref<27x64xbf16, #tpu.memory_space<vmem>>, %arg3: memref<1x64xf32, #tpu.memory_space<vmem>>, %arg4: memref<9x64x128xbf16, #tpu.memory_space<vmem>>, %arg5: memref<1x128xf32, #tpu.memory_space<vmem>>, %arg6: memref<3x384x64xbf16, #tpu.memory_space<vmem>>, %arg7: memref<1x64xf32, #tpu.memory_space<vmem>>, %arg8: memref<9x1x64xf32, #tpu.memory_space<vmem>>, %arg9: memref<1x1xf32, #tpu.memory_space<vmem>>, %arg10: memref<1x1x256xf32, #tpu.memory_space<vmem>>, %arg11: memref<1x18x48x64xbf16, #tpu.memory_space<vmem>>, %arg12: memref<1x18x48x128xbf16, #tpu.memory_space<vmem>>, %arg13: memref<1x18x48x64xf32, #tpu.memory_space<vmem>>) attributes {dimension_semantics = [#tpu.dimension_semantics<parallel>], iteration_bounds = array<i64: 2>, scalar_prefetch = 0 : i64, scratch_operands = 3 : i64, tpu.core_type = #tpu.core_type<tc>, window_params = [{transform_indices = @transform_0, window_bounds = array<i64: 1, 256, 27>}, {pipeline_mode = #tpu.pipeline_mode<synchronous>, transform_indices = @transform_1, window_bounds = array<i64: 27, 64>}, {pipeline_mode = #tpu.pipeline_mode<synchronous>, transform_indices = @transform_2, window_bounds = array<i64: 1, 64>}, {pipeline_mode = #tpu.pipeline_mode<synchronous>, transform_indices = @transform_3, window_bounds = array<i64: 9, 64, 128>}, {pipeline_mode = #tpu.pipeline_mode<synchronous>, transform_indices = @transform_4, window_bounds = array<i64: 1, 128>}, {pipeline_mode = #tpu.pipeline_mode<synchronous>, transform_indices = @transform_5, window_bounds = array<i64: 3, 384, 64>}, {pipeline_mode = #tpu.pipeline_mode<synchronous>, transform_indices = @transform_6, window_bounds = array<i64: 1, 64>}, {pipeline_mode = #tpu.pipeline_mode<synchronous>, transform_indices = @transform_7, window_bounds = array<i64: 9, 1, 64>}, {pipeline_mode = #tpu.pipeline_mode<synchronous>, transform_indices = @transform_8, window_bounds = array<i64: 1, 1>}, {transform_indices = @transform_9, window_bounds = array<i64: 1, 1, 256>}]} {
    %cst = arith.constant 0.000000e+00 : bf16
    %0 = vector.broadcast %cst : bf16 to vector<1x18x16x64xbf16>
    %c0 = arith.constant 0 : index
    %c0_0 = arith.constant 0 : index
    %c0_1 = arith.constant 0 : index
    %c0_2 = arith.constant 0 : index
    %1 = vector.load %arg11[%c0, %c0_0, %c0_1, %c0_2] : memref<1x18x48x64xbf16, #tpu.memory_space<vmem>>, vector<1x18x16x64xbf16>
    tpu.vector_store %arg11[%c0, %c0_0, %c0_1, %c0_2], %0 {strides = array<i32>} : memref<1x18x48x64xbf16, #tpu.memory_space<vmem>>, vector<1x18x16x64xbf16>,
    %cst_3 = arith.constant 0.000000e+00 : bf16
    %2 = vector.broadcast %cst_3 : bf16 to vector<1x18x16x64xbf16>
    %c0_4 = arith.constant 0 : index
    %c0_5 = arith.constant 0 : index
    %c32 = arith.constant 32 : index
    %c0_6 = arith.constant 0 : index
    %3 = vector.load %arg11[%c0_4, %c0_5, %c32, %c0_6] : memref<1x18x48x64xbf16, #tpu.memory_space<vmem>>, vector<1x18x16x64xbf16>
    tpu.vector_store %arg11[%c0_4, %c0_5, %c32, %c0_6], %2 {strides = array<i32>} : memref<1x18x48x64xbf16, #tpu.memory_space<vmem>>, vector<1x18x16x64xbf16>,
    %cst_7 = arith.constant 0.000000e+00 : bf16
    %4 = vector.broadcast %cst_7 : bf16 to vector<1x1x16x64xbf16>
    %c0_8 = arith.constant 0 : index
    %c0_9 = arith.constant 0 : index
    %c16 = arith.constant 16 : index
    %c0_10 = arith.constant 0 : index
    %5 = vector.load %arg11[%c0_8, %c0_9, %c16, %c0_10] : memref<1x18x48x64xbf16, #tpu.memory_space<vmem>>, vector<1x1x16x64xbf16>
    tpu.vector_store %arg11[%c0_8, %c0_9, %c16, %c0_10], %4 {strides = array<i32>} : memref<1x18x48x64xbf16, #tpu.memory_space<vmem>>, vector<1x1x16x64xbf16>,
    %cst_11 = arith.constant 0.000000e+00 : bf16
    %6 = vector.broadcast %cst_11 : bf16 to vector<1x1x16x64xbf16>
    %c0_12 = arith.constant 0 : index
    %c17 = arith.constant 17 : index
    %c16_13 = arith.constant 16 : index
    %c0_14 = arith.constant 0 : index
    %7 = vector.load %arg11[%c0_12, %c17, %c16_13, %c0_14] : memref<1x18x48x64xbf16, #tpu.memory_space<vmem>>, vector<1x1x16x64xbf16>
    tpu.vector_store %arg11[%c0_12, %c17, %c16_13, %c0_14], %6 {strides = array<i32>} : memref<1x18x48x64xbf16, #tpu.memory_space<vmem>>, vector<1x1x16x64xbf16>,
    %cst_15 = arith.constant 0.000000e+00 : bf16
    %8 = vector.broadcast %cst_15 : bf16 to vector<1x18x16x128xbf16>
    %c0_16 = arith.constant 0 : index
    %c0_17 = arith.constant 0 : index
    %c0_18 = arith.constant 0 : index
    %c0_19 = arith.constant 0 : index
    %9 = vector.load %arg12[%c0_16, %c0_17, %c0_18, %c0_19] : memref<1x18x48x128xbf16, #tpu.memory_space<vmem>>, vector<1x18x16x128xbf16>
    tpu.vector_store %arg12[%c0_16, %c0_17, %c0_18, %c0_19], %8 {strides = array<i32>} : memref<1x18x48x128xbf16, #tpu.memory_space<vmem>>, vector<1x18x16x128xbf16>,
    %cst_20 = arith.constant 0.000000e+00 : bf16
    %10 = vector.broadcast %cst_20 : bf16 to vector<1x18x16x128xbf16>
    %c0_21 = arith.constant 0 : index
    %c0_22 = arith.constant 0 : index
    %c32_23 = arith.constant 32 : index
    %c0_24 = arith.constant 0 : index
    %11 = vector.load %arg12[%c0_21, %c0_22, %c32_23, %c0_24] : memref<1x18x48x128xbf16, #tpu.memory_space<vmem>>, vector<1x18x16x128xbf16>
    tpu.vector_store %arg12[%c0_21, %c0_22, %c32_23, %c0_24], %10 {strides = array<i32>} : memref<1x18x48x128xbf16, #tpu.memory_space<vmem>>, vector<1x18x16x128xbf16>,
    %cst_25 = arith.constant 0.000000e+00 : bf16
    %12 = vector.broadcast %cst_25 : bf16 to vector<1x1x16x128xbf16>
    %c0_26 = arith.constant 0 : index
    %c0_27 = arith.constant 0 : index
    %c16_28 = arith.constant 16 : index
    %c0_29 = arith.constant 0 : index
    %13 = vector.load %arg12[%c0_26, %c0_27, %c16_28, %c0_29] : memref<1x18x48x128xbf16, #tpu.memory_space<vmem>>, vector<1x1x16x128xbf16>
    tpu.vector_store %arg12[%c0_26, %c0_27, %c16_28, %c0_29], %12 {strides = array<i32>} : memref<1x18x48x128xbf16, #tpu.memory_space<vmem>>, vector<1x1x16x128xbf16>,
    %cst_30 = arith.constant 0.000000e+00 : bf16
    %14 = vector.broadcast %cst_30 : bf16 to vector<1x1x16x128xbf16>
    %c0_31 = arith.constant 0 : index
    %c17_32 = arith.constant 17 : index
    %c16_33 = arith.constant 16 : index
    %c0_34 = arith.constant 0 : index
    %15 = vector.load %arg12[%c0_31, %c17_32, %c16_33, %c0_34] : memref<1x18x48x128xbf16, #tpu.memory_space<vmem>>, vector<1x1x16x128xbf16>
    tpu.vector_store %arg12[%c0_31, %c17_32, %c16_33, %c0_34], %14 {strides = array<i32>} : memref<1x18x48x128xbf16, #tpu.memory_space<vmem>>, vector<1x1x16x128xbf16>,
    %cst_35 = arith.constant 0.000000e+00 : f32
    %16 = vector.broadcast %cst_35 : f32 to vector<1x18x16x64xf32>
    %c0_36 = arith.constant 0 : index
    %c0_37 = arith.constant 0 : index
    %c0_38 = arith.constant 0 : index
    %c0_39 = arith.constant 0 : index
    %17 = vector.load %arg13[%c0_36, %c0_37, %c0_38, %c0_39] : memref<1x18x48x64xf32, #tpu.memory_space<vmem>>, vector<1x18x16x64xf32>
    tpu.vector_store %arg13[%c0_36, %c0_37, %c0_38, %c0_39], %16 {strides = array<i32>} : memref<1x18x48x64xf32, #tpu.memory_space<vmem>>, vector<1x18x16x64xf32>,
    %cst_40 = arith.constant 0.000000e+00 : f32
    %18 = vector.broadcast %cst_40 : f32 to vector<1x18x16x64xf32>
    %c0_41 = arith.constant 0 : index
    %c0_42 = arith.constant 0 : index
    %c32_43 = arith.constant 32 : index
    %c0_44 = arith.constant 0 : index
    %19 = vector.load %arg13[%c0_41, %c0_42, %c32_43, %c0_44] : memref<1x18x48x64xf32, #tpu.memory_space<vmem>>, vector<1x18x16x64xf32>
    tpu.vector_store %arg13[%c0_41, %c0_42, %c32_43, %c0_44], %18 {strides = array<i32>} : memref<1x18x48x64xf32, #tpu.memory_space<vmem>>, vector<1x18x16x64xf32>,
    %cst_45 = arith.constant 0.000000e+00 : f32
    %20 = vector.broadcast %cst_45 : f32 to vector<1x1x16x64xf32>
    %c0_46 = arith.constant 0 : index
    %c0_47 = arith.constant 0 : index
    %c16_48 = arith.constant 16 : index
    %c0_49 = arith.constant 0 : index
    %21 = vector.load %arg13[%c0_46, %c0_47, %c16_48, %c0_49] : memref<1x18x48x64xf32, #tpu.memory_space<vmem>>, vector<1x1x16x64xf32>
    tpu.vector_store %arg13[%c0_46, %c0_47, %c16_48, %c0_49], %20 {strides = array<i32>} : memref<1x18x48x64xf32, #tpu.memory_space<vmem>>, vector<1x1x16x64xf32>,
    %cst_50 = arith.constant 0.000000e+00 : f32
    %22 = vector.broadcast %cst_50 : f32 to vector<1x1x16x64xf32>
    %c0_51 = arith.constant 0 : index
    %c17_52 = arith.constant 17 : index
    %c16_53 = arith.constant 16 : index
    %c0_54 = arith.constant 0 : index
    %23 = vector.load %arg13[%c0_51, %c17_52, %c16_53, %c0_54] : memref<1x18x48x64xf32, #tpu.memory_space<vmem>>, vector<1x1x16x64xf32>
    tpu.vector_store %arg13[%c0_51, %c17_52, %c16_53, %c0_54], %22 {strides = array<i32>} : memref<1x18x48x64xf32, #tpu.memory_space<vmem>>, vector<1x1x16x64xf32>,
    %c0_55 = arith.constant 0 : index
    %c0_56 = arith.constant 0 : index
    %c0_57 = arith.constant 0 : index
    %24 = vector.load %arg1[%c0_55, %c0_56, %c0_57] : memref<1x256x27xbf16, #tpu.memory_space<vmem>>, vector<1x128x27xbf16>
    %25 = vector.shape_cast %24 : vector<1x128x27xbf16> to vector<128x27xbf16>
    %c0_58 = arith.constant 0 : index
    %c0_59 = arith.constant 0 : index
    %26 = vector.load %arg2[%c0_58, %c0_59] : memref<27x64xbf16, #tpu.memory_space<vmem>>, vector<27x64xbf16>
    %cst_60 = arith.constant dense<0.000000e+00> : vector<128x64xf32>
    %27 = tpu.matmul %25, %26, %cst_60 {dimension_numbers = #tpu.dot_dimension_numbers<[1], [0], [0], [1], [0, 0, 1, 1], [], []>} : vector<128x27xbf16>, vector<27x64xbf16>, vector<128x64xf32> -> vector<128x64xf32>
    %c0_61 = arith.constant 0 : index
    %c0_62 = arith.constant 0 : index
    %28 = vector.load %arg3[%c0_61, %c0_62] : memref<1x64xf32, #tpu.memory_space<vmem>>, vector<1x64xf32>
    %29 = vector.broadcast %28 : vector<1x64xf32> to vector<128x64xf32>
    %30 = arith.addf %27, %29 : vector<128x64xf32>
    %cst_63 = arith.constant 0.000000e+00 : f32
    %31 = vector.broadcast %cst_63 : f32 to vector<128x64xf32>
    %32 = arith.maximumf %30, %31 : vector<128x64xf32>
    %33 = vector.shape_cast %32 : vector<128x64xf32> to vector<1x8x16x64xf32>
    %34 = arith.truncf %33 : vector<1x8x16x64xf32> to vector<1x8x16x64xbf16>
    %c0_64 = arith.constant 0 : index
    %c1 = arith.constant 1 : index
    %c16_65 = arith.constant 16 : index
    %c0_66 = arith.constant 0 : index
    %35 = vector.load %arg11[%c0_64, %c1, %c16_65, %c0_66] : memref<1x18x48x64xbf16, #tpu.memory_space<vmem>>, vector<1x8x16x64xbf16>
    tpu.vector_store %arg11[%c0_64, %c1, %c16_65, %c0_66], %34 {strides = array<i32>} : memref<1x18x48x64xbf16, #tpu.memory_space<vmem>>, vector<1x8x16x64xbf16>,
    %c0_67 = arith.constant 0 : index
    %c128 = arith.constant 128 : index
    %c0_68 = arith.constant 0 : index
    %36 = vector.load %arg1[%c0_67, %c128, %c0_68] : memref<1x256x27xbf16, #tpu.memory_space<vmem>>, vector<1x128x27xbf16>
    %37 = vector.shape_cast %36 : vector<1x128x27xbf16> to vector<128x27xbf16>
    %c0_69 = arith.constant 0 : index
    %c0_70 = arith.constant 0 : index
    %38 = vector.load %arg2[%c0_69, %c0_70] : memref<27x64xbf16, #tpu.memory_space<vmem>>, vector<27x64xbf16>
    %cst_71 = arith.constant dense<0.000000e+00> : vector<128x64xf32>
    %39 = tpu.matmul %37, %38, %cst_71 {dimension_numbers = #tpu.dot_dimension_numbers<[1], [0], [0], [1], [0, 0, 1, 1], [], []>} : vector<128x27xbf16>, vector<27x64xbf16>, vector<128x64xf32> -> vector<128x64xf32>
    %c0_72 = arith.constant 0 : index
    %c0_73 = arith.constant 0 : index
    %40 = vector.load %arg3[%c0_72, %c0_73] : memref<1x64xf32, #tpu.memory_space<vmem>>, vector<1x64xf32>
    %41 = vector.broadcast %40 : vector<1x64xf32> to vector<128x64xf32>
    %42 = arith.addf %39, %41 : vector<128x64xf32>
    %cst_74 = arith.constant 0.000000e+00 : f32
    %43 = vector.broadcast %cst_74 : f32 to vector<128x64xf32>
    %44 = arith.maximumf %42, %43 : vector<128x64xf32>
    %45 = vector.shape_cast %44 : vector<128x64xf32> to vector<1x8x16x64xf32>
    %46 = arith.truncf %45 : vector<1x8x16x64xf32> to vector<1x8x16x64xbf16>
    %c0_75 = arith.constant 0 : index
    %c9 = arith.constant 9 : index
    %c16_76 = arith.constant 16 : index
    %c0_77 = arith.constant 0 : index
    %47 = vector.load %arg11[%c0_75, %c9, %c16_76, %c0_77] : memref<1x18x48x64xbf16, #tpu.memory_space<vmem>>, vector<1x8x16x64xbf16>
    tpu.vector_store %arg11[%c0_75, %c9, %c16_76, %c0_77], %46 {strides = array<i32>} : memref<1x18x48x64xbf16, #tpu.memory_space<vmem>>, vector<1x8x16x64xbf16>,
    %c0_78 = arith.constant 0 : index
    %c0_79 = arith.constant 0 : index
    %48 = vector.load %arg5[%c0_78, %c0_79] : memref<1x128xf32, #tpu.memory_space<vmem>>, vector<1x128xf32>
    %49 = vector.shape_cast %48 : vector<1x128xf32> to vector<1x128xf32>
    %50 = vector.broadcast %49 : vector<1x128xf32> to vector<128x128xf32>
    %c0_80 = arith.constant 0 : index
    %c0_81 = arith.constant 0 : index
    %c15 = arith.constant 15 : index
    %c0_82 = arith.constant 0 : index
    %51 = vector.load %arg11[%c0_80, %c0_81, %c15, %c0_82] : memref<1x18x48x64xbf16, #tpu.memory_space<vmem>>, vector<1x10x16x64xbf16>
    %52 = vector.shape_cast %51 : vector<1x10x16x64xbf16> to vector<10x16x64xbf16>
    %53 = vector.extract_strided_slice %52 {offsets = [0, 0, 0], sizes = [8, 16, 64], strides = [1, 1, 1]} : vector<10x16x64xbf16> to vector<8x16x64xbf16>
    %54 = vector.shape_cast %53 : vector<8x16x64xbf16> to vector<128x64xbf16>
    %c0_83 = arith.constant 0 : index
    %c0_84 = arith.constant 0 : index
    %c0_85 = arith.constant 0 : index
    %55 = vector.load %arg4[%c0_83, %c0_84, %c0_85] : memref<9x64x128xbf16, #tpu.memory_space<vmem>>, vector<1x64x128xbf16>
    %56 = vector.shape_cast %55 : vector<1x64x128xbf16> to vector<64x128xbf16>
    %cst_86 = arith.constant dense<0.000000e+00> : vector<128x128xf32>
    %57 = tpu.matmul %54, %56, %cst_86 {dimension_numbers = #tpu.dot_dimension_numbers<[1], [0], [0], [1], [0, 0, 1, 1], [], []>} : vector<128x64xbf16>, vector<64x128xbf16>, vector<128x128xf32> -> vector<128x128xf32>
    %58 = arith.addf %50, %57 : vector<128x128xf32>
    %59 = vector.extract_strided_slice %52 {offsets = [1, 0, 0], sizes = [8, 16, 64], strides = [1, 1, 1]} : vector<10x16x64xbf16> to vector<8x16x64xbf16>
    %60 = vector.shape_cast %59 : vector<8x16x64xbf16> to vector<128x64xbf16>
    %c3 = arith.constant 3 : index
    %c0_87 = arith.constant 0 : index
    %c0_88 = arith.constant 0 : index
    %61 = vector.load %arg4[%c3, %c0_87, %c0_88] : memref<9x64x128xbf16, #tpu.memory_space<vmem>>, vector<1x64x128xbf16>
    %62 = vector.shape_cast %61 : vector<1x64x128xbf16> to vector<64x128xbf16>
    %cst_89 = arith.constant dense<0.000000e+00> : vector<128x128xf32>
    %63 = tpu.matmul %60, %62, %cst_89 {dimension_numbers = #tpu.dot_dimension_numbers<[1], [0], [0], [1], [0, 0, 1, 1], [], []>} : vector<128x64xbf16>, vector<64x128xbf16>, vector<128x128xf32> -> vector<128x128xf32>
    %64 = arith.addf %58, %63 : vector<128x128xf32>
    %65 = vector.extract_strided_slice %52 {offsets = [2, 0, 0], sizes = [8, 16, 64], strides = [1, 1, 1]} : vector<10x16x64xbf16> to vector<8x16x64xbf16>
    %66 = vector.shape_cast %65 : vector<8x16x64xbf16> to vector<128x64xbf16>
    %c6 = arith.constant 6 : index
    %c0_90 = arith.constant 0 : index
    %c0_91 = arith.constant 0 : index
    %67 = vector.load %arg4[%c6, %c0_90, %c0_91] : memref<9x64x128xbf16, #tpu.memory_space<vmem>>, vector<1x64x128xbf16>
    %68 = vector.shape_cast %67 : vector<1x64x128xbf16> to vector<64x128xbf16>
    %cst_92 = arith.constant dense<0.000000e+00> : vector<128x128xf32>
    %69 = tpu.matmul %66, %68, %cst_92 {dimension_numbers = #tpu.dot_dimension_numbers<[1], [0], [0], [1], [0, 0, 1, 1], [], []>} : vector<128x64xbf16>, vector<64x128xbf16>, vector<128x128xf32> -> vector<128x128xf32>
    %70 = arith.addf %64, %69 : vector<128x128xf32>
    %c0_93 = arith.constant 0 : index
    %c0_94 = arith.constant 0 : index
    %c16_95 = arith.constant 16 : index
    %c0_96 = arith.constant 0 : index
    %71 = vector.load %arg11[%c0_93, %c0_94, %c16_95, %c0_96] : memref<1x18x48x64xbf16, #tpu.memory_space<vmem>>, vector<1x10x16x64xbf16>
    %72 = vector.shape_cast %71 : vector<1x10x16x64xbf16> to vector<10x16x64xbf16>
    %73 = vector.extract_strided_slice %72 {offsets = [0, 0, 0], sizes = [8, 16, 64], strides = [1, 1, 1]} : vector<10x16x64xbf16> to vector<8x16x64xbf16>
    %74 = vector.shape_cast %73 : vector<8x16x64xbf16> to vector<128x64xbf16>
    %c1_97 = arith.constant 1 : index
    %c0_98 = arith.constant 0 : index
    %c0_99 = arith.constant 0 : index
    %75 = vector.load %arg4[%c1_97, %c0_98, %c0_99] : memref<9x64x128xbf16, #tpu.memory_space<vmem>>, vector<1x64x128xbf16>
    %76 = vector.shape_cast %75 : vector<1x64x128xbf16> to vector<64x128xbf16>
    %cst_100 = arith.constant dense<0.000000e+00> : vector<128x128xf32>
    %77 = tpu.matmul %74, %76, %cst_100 {dimension_numbers = #tpu.dot_dimension_numbers<[1], [0], [0], [1], [0, 0, 1, 1], [], []>} : vector<128x64xbf16>, vector<64x128xbf16>, vector<128x128xf32> -> vector<128x128xf32>
    %78 = arith.addf %70, %77 : vector<128x128xf32>
    %79 = vector.extract_strided_slice %72 {offsets = [1, 0, 0], sizes = [8, 16, 64], strides = [1, 1, 1]} : vector<10x16x64xbf16> to vector<8x16x64xbf16>
    %80 = vector.shape_cast %79 : vector<8x16x64xbf16> to vector<128x64xbf16>
    %c4 = arith.constant 4 : index
    %c0_101 = arith.constant 0 : index
    %c0_102 = arith.constant 0 : index
    %81 = vector.load %arg4[%c4, %c0_101, %c0_102] : memref<9x64x128xbf16, #tpu.memory_space<vmem>>, vector<1x64x128xbf16>
    %82 = vector.shape_cast %81 : vector<1x64x128xbf16> to vector<64x128xbf16>
    %cst_103 = arith.constant dense<0.000000e+00> : vector<128x128xf32>
    %83 = tpu.matmul %80, %82, %cst_103 {dimension_numbers = #tpu.dot_dimension_numbers<[1], [0], [0], [1], [0, 0, 1, 1], [], []>} : vector<128x64xbf16>, vector<64x128xbf16>, vector<128x128xf32> -> vector<128x128xf32>
    %84 = arith.addf %78, %83 : vector<128x128xf32>
    %85 = vector.extract_strided_slice %72 {offsets = [2, 0, 0], sizes = [8, 16, 64], strides = [1, 1, 1]} : vector<10x16x64xbf16> to vector<8x16x64xbf16>
    %86 = vector.shape_cast %85 : vector<8x16x64xbf16> to vector<128x64xbf16>
    %c7 = arith.constant 7 : index
    %c0_104 = arith.constant 0 : index
    %c0_105 = arith.constant 0 : index
    %87 = vector.load %arg4[%c7, %c0_104, %c0_105] : memref<9x64x128xbf16, #tpu.memory_space<vmem>>, vector<1x64x128xbf16>
    %88 = vector.shape_cast %87 : vector<1x64x128xbf16> to vector<64x128xbf16>
    %cst_106 = arith.constant dense<0.000000e+00> : vector<128x128xf32>
    %89 = tpu.matmul %86, %88, %cst_106 {dimension_numbers = #tpu.dot_dimension_numbers<[1], [0], [0], [1], [0, 0, 1, 1], [], []>} : vector<128x64xbf16>, vector<64x128xbf16>, vector<128x128xf32> -> vector<128x128xf32>
    %90 = arith.addf %84, %89 : vector<128x128xf32>
    %c0_107 = arith.constant 0 : index
    %c0_108 = arith.constant 0 : index
    %c17_109 = arith.constant 17 : index
    %c0_110 = arith.constant 0 : index
    %91 = vector.load %arg11[%c0_107, %c0_108, %c17_109, %c0_110] : memref<1x18x48x64xbf16, #tpu.memory_space<vmem>>, vector<1x10x16x64xbf16>
    %92 = vector.shape_cast %91 : vector<1x10x16x64xbf16> to vector<10x16x64xbf16>
    %93 = vector.extract_strided_slice %92 {offsets = [0, 0, 0], sizes = [8, 16, 64], strides = [1, 1, 1]} : vector<10x16x64xbf16> to vector<8x16x64xbf16>
    %94 = vector.shape_cast %93 : vector<8x16x64xbf16> to vector<128x64xbf16>
    %c2 = arith.constant 2 : index
    %c0_111 = arith.constant 0 : index
    %c0_112 = arith.constant 0 : index
    %95 = vector.load %arg4[%c2, %c0_111, %c0_112] : memref<9x64x128xbf16, #tpu.memory_space<vmem>>, vector<1x64x128xbf16>
    %96 = vector.shape_cast %95 : vector<1x64x128xbf16> to vector<64x128xbf16>
    %cst_113 = arith.constant dense<0.000000e+00> : vector<128x128xf32>
    %97 = tpu.matmul %94, %96, %cst_113 {dimension_numbers = #tpu.dot_dimension_numbers<[1], [0], [0], [1], [0, 0, 1, 1], [], []>} : vector<128x64xbf16>, vector<64x128xbf16>, vector<128x128xf32> -> vector<128x128xf32>
    %98 = arith.addf %90, %97 : vector<128x128xf32>
    %99 = vector.extract_strided_slice %92 {offsets = [1, 0, 0], sizes = [8, 16, 64], strides = [1, 1, 1]} : vector<10x16x64xbf16> to vector<8x16x64xbf16>
    %100 = vector.shape_cast %99 : vector<8x16x64xbf16> to vector<128x64xbf16>
    %c5 = arith.constant 5 : index
    %c0_114 = arith.constant 0 : index
    %c0_115 = arith.constant 0 : index
    %101 = vector.load %arg4[%c5, %c0_114, %c0_115] : memref<9x64x128xbf16, #tpu.memory_space<vmem>>, vector<1x64x128xbf16>
    %102 = vector.shape_cast %101 : vector<1x64x128xbf16> to vector<64x128xbf16>
    %cst_116 = arith.constant dense<0.000000e+00> : vector<128x128xf32>
    %103 = tpu.matmul %100, %102, %cst_116 {dimension_numbers = #tpu.dot_dimension_numbers<[1], [0], [0], [1], [0, 0, 1, 1], [], []>} : vector<128x64xbf16>, vector<64x128xbf16>, vector<128x128xf32> -> vector<128x128xf32>
    %104 = arith.addf %98, %103 : vector<128x128xf32>
    %105 = vector.extract_strided_slice %92 {offsets = [2, 0, 0], sizes = [8, 16, 64], strides = [1, 1, 1]} : vector<10x16x64xbf16> to vector<8x16x64xbf16>
    %106 = vector.shape_cast %105 : vector<8x16x64xbf16> to vector<128x64xbf16>
    %c8 = arith.constant 8 : index
    %c0_117 = arith.constant 0 : index
    %c0_118 = arith.constant 0 : index
    %107 = vector.load %arg4[%c8, %c0_117, %c0_118] : memref<9x64x128xbf16, #tpu.memory_space<vmem>>, vector<1x64x128xbf16>
    %108 = vector.shape_cast %107 : vector<1x64x128xbf16> to vector<64x128xbf16>
    %cst_119 = arith.constant dense<0.000000e+00> : vector<128x128xf32>
    %109 = tpu.matmul %106, %108, %cst_119 {dimension_numbers = #tpu.dot_dimension_numbers<[1], [0], [0], [1], [0, 0, 1, 1], [], []>} : vector<128x64xbf16>, vector<64x128xbf16>, vector<128x128xf32> -> vector<128x128xf32>
    %110 = arith.addf %104, %109 : vector<128x128xf32>
    %cst_120 = arith.constant 0.000000e+00 : f32
    %111 = vector.broadcast %cst_120 : f32 to vector<128x128xf32>
    %112 = arith.maximumf %110, %111 : vector<128x128xf32>
    %113 = vector.shape_cast %112 : vector<128x128xf32> to vector<1x8x16x128xf32>
    %114 = arith.truncf %113 : vector<1x8x16x128xf32> to vector<1x8x16x128xbf16>
    %c0_121 = arith.constant 0 : index
    %c1_122 = arith.constant 1 : index
    %c16_123 = arith.constant 16 : index
    %c0_124 = arith.constant 0 : index
    %115 = vector.load %arg12[%c0_121, %c1_122, %c16_123, %c0_124] : memref<1x18x48x128xbf16, #tpu.memory_space<vmem>>, vector<1x8x16x128xbf16>
    tpu.vector_store %arg12[%c0_121, %c1_122, %c16_123, %c0_124], %114 {strides = array<i32>} : memref<1x18x48x128xbf16, #tpu.memory_space<vmem>>, vector<1x8x16x128xbf16>,
    %c0_125 = arith.constant 0 : index
    %c0_126 = arith.constant 0 : index
    %116 = vector.load %arg5[%c0_125, %c0_126] : memref<1x128xf32, #tpu.memory_space<vmem>>, vector<1x128xf32>
    %117 = vector.shape_cast %116 : vector<1x128xf32> to vector<1x128xf32>
    %118 = vector.broadcast %117 : vector<1x128xf32> to vector<128x128xf32>
    %c0_127 = arith.constant 0 : index
    %c8_128 = arith.constant 8 : index
    %c15_129 = arith.constant 15 : index
    %c0_130 = arith.constant 0 : index
    %119 = vector.load %arg11[%c0_127, %c8_128, %c15_129, %c0_130] : memref<1x18x48x64xbf16, #tpu.memory_space<vmem>>, vector<1x10x16x64xbf16>
    %120 = vector.shape_cast %119 : vector<1x10x16x64xbf16> to vector<10x16x64xbf16>
    %121 = vector.extract_strided_slice %120 {offsets = [0, 0, 0], sizes = [8, 16, 64], strides = [1, 1, 1]} : vector<10x16x64xbf16> to vector<8x16x64xbf16>
    %122 = vector.shape_cast %121 : vector<8x16x64xbf16> to vector<128x64xbf16>
    %c0_131 = arith.constant 0 : index
    %c0_132 = arith.constant 0 : index
    %c0_133 = arith.constant 0 : index
    %123 = vector.load %arg4[%c0_131, %c0_132, %c0_133] : memref<9x64x128xbf16, #tpu.memory_space<vmem>>, vector<1x64x128xbf16>
    %124 = vector.shape_cast %123 : vector<1x64x128xbf16> to vector<64x128xbf16>
    %cst_134 = arith.constant dense<0.000000e+00> : vector<128x128xf32>
    %125 = tpu.matmul %122, %124, %cst_134 {dimension_numbers = #tpu.dot_dimension_numbers<[1], [0], [0], [1], [0, 0, 1, 1], [], []>} : vector<128x64xbf16>, vector<64x128xbf16>, vector<128x128xf32> -> vector<128x128xf32>
    %126 = arith.addf %118, %125 : vector<128x128xf32>
    %127 = vector.extract_strided_slice %120 {offsets = [1, 0, 0], sizes = [8, 16, 64], strides = [1, 1, 1]} : vector<10x16x64xbf16> to vector<8x16x64xbf16>
    %128 = vector.shape_cast %127 : vector<8x16x64xbf16> to vector<128x64xbf16>
    %c3_135 = arith.constant 3 : index
    %c0_136 = arith.constant 0 : index
    %c0_137 = arith.constant 0 : index
    %129 = vector.load %arg4[%c3_135, %c0_136, %c0_137] : memref<9x64x128xbf16, #tpu.memory_space<vmem>>, vector<1x64x128xbf16>
    %130 = vector.shape_cast %129 : vector<1x64x128xbf16> to vector<64x128xbf16>
    %cst_138 = arith.constant dense<0.000000e+00> : vector<128x128xf32>
    %131 = tpu.matmul %128, %130, %cst_138 {dimension_numbers = #tpu.dot_dimension_numbers<[1], [0], [0], [1], [0, 0, 1, 1], [], []>} : vector<128x64xbf16>, vector<64x128xbf16>, vector<128x128xf32> -> vector<128x128xf32>
    %132 = arith.addf %126, %131 : vector<128x128xf32>
    %133 = vector.extract_strided_slice %120 {offsets = [2, 0, 0], sizes = [8, 16, 64], strides = [1, 1, 1]} : vector<10x16x64xbf16> to vector<8x16x64xbf16>
    %134 = vector.shape_cast %133 : vector<8x16x64xbf16> to vector<128x64xbf16>
    %c6_139 = arith.constant 6 : index
    %c0_140 = arith.constant 0 : index
    %c0_141 = arith.constant 0 : index
    %135 = vector.load %arg4[%c6_139, %c0_140, %c0_141] : memref<9x64x128xbf16, #tpu.memory_space<vmem>>, vector<1x64x128xbf16>
    %136 = vector.shape_cast %135 : vector<1x64x128xbf16> to vector<64x128xbf16>
    %cst_142 = arith.constant dense<0.000000e+00> : vector<128x128xf32>
    %137 = tpu.matmul %134, %136, %cst_142 {dimension_numbers = #tpu.dot_dimension_numbers<[1], [0], [0], [1], [0, 0, 1, 1], [], []>} : vector<128x64xbf16>, vector<64x128xbf16>, vector<128x128xf32> -> vector<128x128xf32>
    %138 = arith.addf %132, %137 : vector<128x128xf32>
    %c0_143 = arith.constant 0 : index
    %c8_144 = arith.constant 8 : index
    %c16_145 = arith.constant 16 : index
    %c0_146 = arith.constant 0 : index
    %139 = vector.load %arg11[%c0_143, %c8_144, %c16_145, %c0_146] : memref<1x18x48x64xbf16, #tpu.memory_space<vmem>>, vector<1x10x16x64xbf16>
    %140 = vector.shape_cast %139 : vector<1x10x16x64xbf16> to vector<10x16x64xbf16>
    %141 = vector.extract_strided_slice %140 {offsets = [0, 0, 0], sizes = [8, 16, 64], strides = [1, 1, 1]} : vector<10x16x64xbf16> to vector<8x16x64xbf16>
    %142 = vector.shape_cast %141 : vector<8x16x64xbf16> to vector<128x64xbf16>
    %c1_147 = arith.constant 1 : index
    %c0_148 = arith.constant 0 : index
    %c0_149 = arith.constant 0 : index
    %143 = vector.load %arg4[%c1_147, %c0_148, %c0_149] : memref<9x64x128xbf16, #tpu.memory_space<vmem>>, vector<1x64x128xbf16>
    %144 = vector.shape_cast %143 : vector<1x64x128xbf16> to vector<64x128xbf16>
    %cst_150 = arith.constant dense<0.000000e+00> : vector<128x128xf32>
    %145 = tpu.matmul %142, %144, %cst_150 {dimension_numbers = #tpu.dot_dimension_numbers<[1], [0], [0], [1], [0, 0, 1, 1], [], []>} : vector<128x64xbf16>, vector<64x128xbf16>, vector<128x128xf32> -> vector<128x128xf32>
    %146 = arith.addf %138, %145 : vector<128x128xf32>
    %147 = vector.extract_strided_slice %140 {offsets = [1, 0, 0], sizes = [8, 16, 64], strides = [1, 1, 1]} : vector<10x16x64xbf16> to vector<8x16x64xbf16>
    %148 = vector.shape_cast %147 : vector<8x16x64xbf16> to vector<128x64xbf16>
    %c4_151 = arith.constant 4 : index
    %c0_152 = arith.constant 0 : index
    %c0_153 = arith.constant 0 : index
    %149 = vector.load %arg4[%c4_151, %c0_152, %c0_153] : memref<9x64x128xbf16, #tpu.memory_space<vmem>>, vector<1x64x128xbf16>
    %150 = vector.shape_cast %149 : vector<1x64x128xbf16> to vector<64x128xbf16>
    %cst_154 = arith.constant dense<0.000000e+00> : vector<128x128xf32>
    %151 = tpu.matmul %148, %150, %cst_154 {dimension_numbers = #tpu.dot_dimension_numbers<[1], [0], [0], [1], [0, 0, 1, 1], [], []>} : vector<128x64xbf16>, vector<64x128xbf16>, vector<128x128xf32> -> vector<128x128xf32>
    %152 = arith.addf %146, %151 : vector<128x128xf32>
    %153 = vector.extract_strided_slice %140 {offsets = [2, 0, 0], sizes = [8, 16, 64], strides = [1, 1, 1]} : vector<10x16x64xbf16> to vector<8x16x64xbf16>
    %154 = vector.shape_cast %153 : vector<8x16x64xbf16> to vector<128x64xbf16>
    %c7_155 = arith.constant 7 : index
    %c0_156 = arith.constant 0 : index
    %c0_157 = arith.constant 0 : index
    %155 = vector.load %arg4[%c7_155, %c0_156, %c0_157] : memref<9x64x128xbf16, #tpu.memory_space<vmem>>, vector<1x64x128xbf16>
    %156 = vector.shape_cast %155 : vector<1x64x128xbf16> to vector<64x128xbf16>
    %cst_158 = arith.constant dense<0.000000e+00> : vector<128x128xf32>
    %157 = tpu.matmul %154, %156, %cst_158 {dimension_numbers = #tpu.dot_dimension_numbers<[1], [0], [0], [1], [0, 0, 1, 1], [], []>} : vector<128x64xbf16>, vector<64x128xbf16>, vector<128x128xf32> -> vector<128x128xf32>
    %158 = arith.addf %152, %157 : vector<128x128xf32>
    %c0_159 = arith.constant 0 : index
    %c8_160 = arith.constant 8 : index
    %c17_161 = arith.constant 17 : index
    %c0_162 = arith.constant 0 : index
    %159 = vector.load %arg11[%c0_159, %c8_160, %c17_161, %c0_162] : memref<1x18x48x64xbf16, #tpu.memory_space<vmem>>, vector<1x10x16x64xbf16>
    %160 = vector.shape_cast %159 : vector<1x10x16x64xbf16> to vector<10x16x64xbf16>
    %161 = vector.extract_strided_slice %160 {offsets = [0, 0, 0], sizes = [8, 16, 64], strides = [1, 1, 1]} : vector<10x16x64xbf16> to vector<8x16x64xbf16>
    %162 = vector.shape_cast %161 : vector<8x16x64xbf16> to vector<128x64xbf16>
    %c2_163 = arith.constant 2 : index
    %c0_164 = arith.constant 0 : index
    %c0_165 = arith.constant 0 : index
    %163 = vector.load %arg4[%c2_163, %c0_164, %c0_165] : memref<9x64x128xbf16, #tpu.memory_space<vmem>>, vector<1x64x128xbf16>
    %164 = vector.shape_cast %163 : vector<1x64x128xbf16> to vector<64x128xbf16>
    %cst_166 = arith.constant dense<0.000000e+00> : vector<128x128xf32>
    %165 = tpu.matmul %162, %164, %cst_166 {dimension_numbers = #tpu.dot_dimension_numbers<[1], [0], [0], [1], [0, 0, 1, 1], [], []>} : vector<128x64xbf16>, vector<64x128xbf16>, vector<128x128xf32> -> vector<128x128xf32>
    %166 = arith.addf %158, %165 : vector<128x128xf32>
    %167 = vector.extract_strided_slice %160 {offsets = [1, 0, 0], sizes = [8, 16, 64], strides = [1, 1, 1]} : vector<10x16x64xbf16> to vector<8x16x64xbf16>
    %168 = vector.shape_cast %167 : vector<8x16x64xbf16> to vector<128x64xbf16>
    %c5_167 = arith.constant 5 : index
    %c0_168 = arith.constant 0 : index
    %c0_169 = arith.constant 0 : index
    %169 = vector.load %arg4[%c5_167, %c0_168, %c0_169] : memref<9x64x128xbf16, #tpu.memory_space<vmem>>, vector<1x64x128xbf16>
    %170 = vector.shape_cast %169 : vector<1x64x128xbf16> to vector<64x128xbf16>
    %cst_170 = arith.constant dense<0.000000e+00> : vector<128x128xf32>
    %171 = tpu.matmul %168, %170, %cst_170 {dimension_numbers = #tpu.dot_dimension_numbers<[1], [0], [0], [1], [0, 0, 1, 1], [], []>} : vector<128x64xbf16>, vector<64x128xbf16>, vector<128x128xf32> -> vector<128x128xf32>
    %172 = arith.addf %166, %171 : vector<128x128xf32>
    %173 = vector.extract_strided_slice %160 {offsets = [2, 0, 0], sizes = [8, 16, 64], strides = [1, 1, 1]} : vector<10x16x64xbf16> to vector<8x16x64xbf16>
    %174 = vector.shape_cast %173 : vector<8x16x64xbf16> to vector<128x64xbf16>
    %c8_171 = arith.constant 8 : index
    %c0_172 = arith.constant 0 : index
    %c0_173 = arith.constant 0 : index
    %175 = vector.load %arg4[%c8_171, %c0_172, %c0_173] : memref<9x64x128xbf16, #tpu.memory_space<vmem>>, vector<1x64x128xbf16>
    %176 = vector.shape_cast %175 : vector<1x64x128xbf16> to vector<64x128xbf16>
    %cst_174 = arith.constant dense<0.000000e+00> : vector<128x128xf32>
    %177 = tpu.matmul %174, %176, %cst_174 {dimension_numbers = #tpu.dot_dimension_numbers<[1], [0], [0], [1], [0, 0, 1, 1], [], []>} : vector<128x64xbf16>, vector<64x128xbf16>, vector<128x128xf32> -> vector<128x128xf32>
    %178 = arith.addf %172, %177 : vector<128x128xf32>
    %cst_175 = arith.constant 0.000000e+00 : f32
    %179 = vector.broadcast %cst_175 : f32 to vector<128x128xf32>
    %180 = arith.maximumf %178, %179 : vector<128x128xf32>
    %181 = vector.shape_cast %180 : vector<128x128xf32> to vector<1x8x16x128xf32>
    %182 = arith.truncf %181 : vector<1x8x16x128xf32> to vector<1x8x16x128xbf16>
    %c0_176 = arith.constant 0 : index
    %c9_177 = arith.constant 9 : index
    %c16_178 = arith.constant 16 : index
    %c0_179 = arith.constant 0 : index
    %183 = vector.load %arg12[%c0_176, %c9_177, %c16_178, %c0_179] : memref<1x18x48x128xbf16, #tpu.memory_space<vmem>>, vector<1x8x16x128xbf16>
    tpu.vector_store %arg12[%c0_176, %c9_177, %c16_178, %c0_179], %182 {strides = array<i32>} : memref<1x18x48x128xbf16, #tpu.memory_space<vmem>>, vector<1x8x16x128xbf16>,
    %c0_180 = arith.constant 0 : index
    %c0_181 = arith.constant 0 : index
    %184 = vector.load %arg7[%c0_180, %c0_181] : memref<1x64xf32, #tpu.memory_space<vmem>>, vector<1x64xf32>
    %185 = vector.shape_cast %184 : vector<1x64xf32> to vector<1x64xf32>
    %186 = vector.broadcast %185 : vector<1x64xf32> to vector<128x64xf32>
    %c0_182 = arith.constant 0 : index
    %c0_183 = arith.constant 0 : index
    %c15_184 = arith.constant 15 : index
    %c0_185 = arith.constant 0 : index
    %187 = vector.load %arg12[%c0_182, %c0_183, %c15_184, %c0_185] : memref<1x18x48x128xbf16, #tpu.memory_space<vmem>>, vector<1x10x16x128xbf16>
    %188 = vector.shape_cast %187 : vector<1x10x16x128xbf16> to vector<10x16x128xbf16>
    %189 = vector.extract_strided_slice %188 {offsets = [0, 0, 0], sizes = [8, 16, 128], strides = [1, 1, 1]} : vector<10x16x128xbf16> to vector<8x16x128xbf16>
    %190 = vector.shape_cast %189 : vector<8x16x128xbf16> to vector<128x128xbf16>
    %191 = vector.extract_strided_slice %188 {offsets = [1, 0, 0], sizes = [8, 16, 128], strides = [1, 1, 1]} : vector<10x16x128xbf16> to vector<8x16x128xbf16>
    %192 = vector.shape_cast %191 : vector<8x16x128xbf16> to vector<128x128xbf16>
    %193 = vector.extract_strided_slice %188 {offsets = [2, 0, 0], sizes = [8, 16, 128], strides = [1, 1, 1]} : vector<10x16x128xbf16> to vector<8x16x128xbf16>
    %194 = vector.shape_cast %193 : vector<8x16x128xbf16> to vector<128x128xbf16>
    %195 = tpu.concatenate %190, %192, %194 in 1 : vector<128x128xbf16>, vector<128x128xbf16>, vector<128x128xbf16> -> vector<128x384xbf16>
    %c0_186 = arith.constant 0 : index
    %c0_187 = arith.constant 0 : index
    %c0_188 = arith.constant 0 : index
    %196 = vector.load %arg6[%c0_186, %c0_187, %c0_188] : memref<3x384x64xbf16, #tpu.memory_space<vmem>>, vector<1x384x64xbf16>
    %197 = vector.shape_cast %196 : vector<1x384x64xbf16> to vector<384x64xbf16>
    %cst_189 = arith.constant dense<0.000000e+00> : vector<128x64xf32>
    %198 = tpu.matmul %195, %197, %cst_189 {dimension_numbers = #tpu.dot_dimension_numbers<[1], [0], [0], [1], [0, 0, 1, 1], [], []>} : vector<128x384xbf16>, vector<384x64xbf16>, vector<128x64xf32> -> vector<128x64xf32>
    %199 = arith.addf %186, %198 : vector<128x64xf32>
    %c0_190 = arith.constant 0 : index
    %c0_191 = arith.constant 0 : index
    %c16_192 = arith.constant 16 : index
    %c0_193 = arith.constant 0 : index
    %200 = vector.load %arg12[%c0_190, %c0_191, %c16_192, %c0_193] : memref<1x18x48x128xbf16, #tpu.memory_space<vmem>>, vector<1x10x16x128xbf16>
    %201 = vector.shape_cast %200 : vector<1x10x16x128xbf16> to vector<10x16x128xbf16>
    %202 = vector.extract_strided_slice %201 {offsets = [0, 0, 0], sizes = [8, 16, 128], strides = [1, 1, 1]} : vector<10x16x128xbf16> to vector<8x16x128xbf16>
    %203 = vector.shape_cast %202 : vector<8x16x128xbf16> to vector<128x128xbf16>
    %204 = vector.extract_strided_slice %201 {offsets = [1, 0, 0], sizes = [8, 16, 128], strides = [1, 1, 1]} : vector<10x16x128xbf16> to vector<8x16x128xbf16>
    %205 = vector.shape_cast %204 : vector<8x16x128xbf16> to vector<128x128xbf16>
    %206 = vector.extract_strided_slice %201 {offsets = [2, 0, 0], sizes = [8, 16, 128], strides = [1, 1, 1]} : vector<10x16x128xbf16> to vector<8x16x128xbf16>
    %207 = vector.shape_cast %206 : vector<8x16x128xbf16> to vector<128x128xbf16>
    %208 = tpu.concatenate %203, %205, %207 in 1 : vector<128x128xbf16>, vector<128x128xbf16>, vector<128x128xbf16> -> vector<128x384xbf16>
    %c1_194 = arith.constant 1 : index
    %c0_195 = arith.constant 0 : index
    %c0_196 = arith.constant 0 : index
    %209 = vector.load %arg6[%c1_194, %c0_195, %c0_196] : memref<3x384x64xbf16, #tpu.memory_space<vmem>>, vector<1x384x64xbf16>
    %210 = vector.shape_cast %209 : vector<1x384x64xbf16> to vector<384x64xbf16>
    %cst_197 = arith.constant dense<0.000000e+00> : vector<128x64xf32>
    %211 = tpu.matmul %208, %210, %cst_197 {dimension_numbers = #tpu.dot_dimension_numbers<[1], [0], [0], [1], [0, 0, 1, 1], [], []>} : vector<128x384xbf16>, vector<384x64xbf16>, vector<128x64xf32> -> vector<128x64xf32>
    %212 = arith.addf %199, %211 : vector<128x64xf32>
    %c0_198 = arith.constant 0 : index
    %c0_199 = arith.constant 0 : index
    %c17_200 = arith.constant 17 : index
    %c0_201 = arith.constant 0 : index
    %213 = vector.load %arg12[%c0_198, %c0_199, %c17_200, %c0_201] : memref<1x18x48x128xbf16, #tpu.memory_space<vmem>>, vector<1x10x16x128xbf16>
    %214 = vector.shape_cast %213 : vector<1x10x16x128xbf16> to vector<10x16x128xbf16>
    %215 = vector.extract_strided_slice %214 {offsets = [0, 0, 0], sizes = [8, 16, 128], strides = [1, 1, 1]} : vector<10x16x128xbf16> to vector<8x16x128xbf16>
    %216 = vector.shape_cast %215 : vector<8x16x128xbf16> to vector<128x128xbf16>
    %217 = vector.extract_strided_slice %214 {offsets = [1, 0, 0], sizes = [8, 16, 128], strides = [1, 1, 1]} : vector<10x16x128xbf16> to vector<8x16x128xbf16>
    %218 = vector.shape_cast %217 : vector<8x16x128xbf16> to vector<128x128xbf16>
    %219 = vector.extract_strided_slice %214 {offsets = [2, 0, 0], sizes = [8, 16, 128], strides = [1, 1, 1]} : vector<10x16x128xbf16> to vector<8x16x128xbf16>
    %220 = vector.shape_cast %219 : vector<8x16x128xbf16> to vector<128x128xbf16>
    %221 = tpu.concatenate %216, %218, %220 in 1 : vector<128x128xbf16>, vector<128x128xbf16>, vector<128x128xbf16> -> vector<128x384xbf16>
    %c2_202 = arith.constant 2 : index
    %c0_203 = arith.constant 0 : index
    %c0_204 = arith.constant 0 : index
    %222 = vector.load %arg6[%c2_202, %c0_203, %c0_204] : memref<3x384x64xbf16, #tpu.memory_space<vmem>>, vector<1x384x64xbf16>
    %223 = vector.shape_cast %222 : vector<1x384x64xbf16> to vector<384x64xbf16>
    %cst_205 = arith.constant dense<0.000000e+00> : vector<128x64xf32>
    %224 = tpu.matmul %221, %223, %cst_205 {dimension_numbers = #tpu.dot_dimension_numbers<[1], [0], [0], [1], [0, 0, 1, 1], [], []>} : vector<128x384xbf16>, vector<384x64xbf16>, vector<128x64xf32> -> vector<128x64xf32>
    %225 = arith.addf %212, %224 : vector<128x64xf32>
    %cst_206 = arith.constant 0.000000e+00 : f32
    %226 = vector.broadcast %cst_206 : f32 to vector<128x64xf32>
    %227 = arith.maximumf %225, %226 : vector<128x64xf32>
    %228 = vector.shape_cast %227 : vector<128x64xf32> to vector<1x8x16x64xf32>
    %c0_207 = arith.constant 0 : index
    %c1_208 = arith.constant 1 : index
    %c16_209 = arith.constant 16 : index
    %c0_210 = arith.constant 0 : index
    %229 = vector.load %arg13[%c0_207, %c1_208, %c16_209, %c0_210] : memref<1x18x48x64xf32, #tpu.memory_space<vmem>>, vector<1x8x16x64xf32>
    tpu.vector_store %arg13[%c0_207, %c1_208, %c16_209, %c0_210], %228 {strides = array<i32>} : memref<1x18x48x64xf32, #tpu.memory_space<vmem>>, vector<1x8x16x64xf32>,
    %c0_211 = arith.constant 0 : index
    %c0_212 = arith.constant 0 : index
    %230 = vector.load %arg7[%c0_211, %c0_212] : memref<1x64xf32, #tpu.memory_space<vmem>>, vector<1x64xf32>
    %231 = vector.shape_cast %230 : vector<1x64xf32> to vector<1x64xf32>
    %232 = vector.broadcast %231 : vector<1x64xf32> to vector<128x64xf32>
    %c0_213 = arith.constant 0 : index
    %c8_214 = arith.constant 8 : index
    %c15_215 = arith.constant 15 : index
    %c0_216 = arith.constant 0 : index
    %233 = vector.load %arg12[%c0_213, %c8_214, %c15_215, %c0_216] : memref<1x18x48x128xbf16, #tpu.memory_space<vmem>>, vector<1x10x16x128xbf16>
    %234 = vector.shape_cast %233 : vector<1x10x16x128xbf16> to vector<10x16x128xbf16>
    %235 = vector.extract_strided_slice %234 {offsets = [0, 0, 0], sizes = [8, 16, 128], strides = [1, 1, 1]} : vector<10x16x128xbf16> to vector<8x16x128xbf16>
    %236 = vector.shape_cast %235 : vector<8x16x128xbf16> to vector<128x128xbf16>
    %237 = vector.extract_strided_slice %234 {offsets = [1, 0, 0], sizes = [8, 16, 128], strides = [1, 1, 1]} : vector<10x16x128xbf16> to vector<8x16x128xbf16>
    %238 = vector.shape_cast %237 : vector<8x16x128xbf16> to vector<128x128xbf16>
    %239 = vector.extract_strided_slice %234 {offsets = [2, 0, 0], sizes = [8, 16, 128], strides = [1, 1, 1]} : vector<10x16x128xbf16> to vector<8x16x128xbf16>
    %240 = vector.shape_cast %239 : vector<8x16x128xbf16> to vector<128x128xbf16>
    %241 = tpu.concatenate %236, %238, %240 in 1 : vector<128x128xbf16>, vector<128x128xbf16>, vector<128x128xbf16> -> vector<128x384xbf16>
    %c0_217 = arith.constant 0 : index
    %c0_218 = arith.constant 0 : index
    %c0_219 = arith.constant 0 : index
    %242 = vector.load %arg6[%c0_217, %c0_218, %c0_219] : memref<3x384x64xbf16, #tpu.memory_space<vmem>>, vector<1x384x64xbf16>
    %243 = vector.shape_cast %242 : vector<1x384x64xbf16> to vector<384x64xbf16>
    %cst_220 = arith.constant dense<0.000000e+00> : vector<128x64xf32>
    %244 = tpu.matmul %241, %243, %cst_220 {dimension_numbers = #tpu.dot_dimension_numbers<[1], [0], [0], [1], [0, 0, 1, 1], [], []>} : vector<128x384xbf16>, vector<384x64xbf16>, vector<128x64xf32> -> vector<128x64xf32>
    %245 = arith.addf %232, %244 : vector<128x64xf32>
    %c0_221 = arith.constant 0 : index
    %c8_222 = arith.constant 8 : index
    %c16_223 = arith.constant 16 : index
    %c0_224 = arith.constant 0 : index
    %246 = vector.load %arg12[%c0_221, %c8_222, %c16_223, %c0_224] : memref<1x18x48x128xbf16, #tpu.memory_space<vmem>>, vector<1x10x16x128xbf16>
    %247 = vector.shape_cast %246 : vector<1x10x16x128xbf16> to vector<10x16x128xbf16>
    %248 = vector.extract_strided_slice %247 {offsets = [0, 0, 0], sizes = [8, 16, 128], strides = [1, 1, 1]} : vector<10x16x128xbf16> to vector<8x16x128xbf16>
    %249 = vector.shape_cast %248 : vector<8x16x128xbf16> to vector<128x128xbf16>
    %250 = vector.extract_strided_slice %247 {offsets = [1, 0, 0], sizes = [8, 16, 128], strides = [1, 1, 1]} : vector<10x16x128xbf16> to vector<8x16x128xbf16>
    %251 = vector.shape_cast %250 : vector<8x16x128xbf16> to vector<128x128xbf16>
    %252 = vector.extract_strided_slice %247 {offsets = [2, 0, 0], sizes = [8, 16, 128], strides = [1, 1, 1]} : vector<10x16x128xbf16> to vector<8x16x128xbf16>
    %253 = vector.shape_cast %252 : vector<8x16x128xbf16> to vector<128x128xbf16>
    %254 = tpu.concatenate %249, %251, %253 in 1 : vector<128x128xbf16>, vector<128x128xbf16>, vector<128x128xbf16> -> vector<128x384xbf16>
    %c1_225 = arith.constant 1 : index
    %c0_226 = arith.constant 0 : index
    %c0_227 = arith.constant 0 : index
    %255 = vector.load %arg6[%c1_225, %c0_226, %c0_227] : memref<3x384x64xbf16, #tpu.memory_space<vmem>>, vector<1x384x64xbf16>
    %256 = vector.shape_cast %255 : vector<1x384x64xbf16> to vector<384x64xbf16>
    %cst_228 = arith.constant dense<0.000000e+00> : vector<128x64xf32>
    %257 = tpu.matmul %254, %256, %cst_228 {dimension_numbers = #tpu.dot_dimension_numbers<[1], [0], [0], [1], [0, 0, 1, 1], [], []>} : vector<128x384xbf16>, vector<384x64xbf16>, vector<128x64xf32> -> vector<128x64xf32>
    %258 = arith.addf %245, %257 : vector<128x64xf32>
    %c0_229 = arith.constant 0 : index
    %c8_230 = arith.constant 8 : index
    %c17_231 = arith.constant 17 : index
    %c0_232 = arith.constant 0 : index
    %259 = vector.load %arg12[%c0_229, %c8_230, %c17_231, %c0_232] : memref<1x18x48x128xbf16, #tpu.memory_space<vmem>>, vector<1x10x16x128xbf16>
    %260 = vector.shape_cast %259 : vector<1x10x16x128xbf16> to vector<10x16x128xbf16>
    %261 = vector.extract_strided_slice %260 {offsets = [0, 0, 0], sizes = [8, 16, 128], strides = [1, 1, 1]} : vector<10x16x128xbf16> to vector<8x16x128xbf16>
    %262 = vector.shape_cast %261 : vector<8x16x128xbf16> to vector<128x128xbf16>
    %263 = vector.extract_strided_slice %260 {offsets = [1, 0, 0], sizes = [8, 16, 128], strides = [1, 1, 1]} : vector<10x16x128xbf16> to vector<8x16x128xbf16>
    %264 = vector.shape_cast %263 : vector<8x16x128xbf16> to vector<128x128xbf16>
    %265 = vector.extract_strided_slice %260 {offsets = [2, 0, 0], sizes = [8, 16, 128], strides = [1, 1, 1]} : vector<10x16x128xbf16> to vector<8x16x128xbf16>
    %266 = vector.shape_cast %265 : vector<8x16x128xbf16> to vector<128x128xbf16>
    %267 = tpu.concatenate %262, %264, %266 in 1 : vector<128x128xbf16>, vector<128x128xbf16>, vector<128x128xbf16> -> vector<128x384xbf16>
    %c2_233 = arith.constant 2 : index
    %c0_234 = arith.constant 0 : index
    %c0_235 = arith.constant 0 : index
    %268 = vector.load %arg6[%c2_233, %c0_234, %c0_235] : memref<3x384x64xbf16, #tpu.memory_space<vmem>>, vector<1x384x64xbf16>
    %269 = vector.shape_cast %268 : vector<1x384x64xbf16> to vector<384x64xbf16>
    %cst_236 = arith.constant dense<0.000000e+00> : vector<128x64xf32>
    %270 = tpu.matmul %267, %269, %cst_236 {dimension_numbers = #tpu.dot_dimension_numbers<[1], [0], [0], [1], [0, 0, 1, 1], [], []>} : vector<128x384xbf16>, vector<384x64xbf16>, vector<128x64xf32> -> vector<128x64xf32>
    %271 = arith.addf %258, %270 : vector<128x64xf32>
    %cst_237 = arith.constant 0.000000e+00 : f32
    %272 = vector.broadcast %cst_237 : f32 to vector<128x64xf32>
    %273 = arith.maximumf %271, %272 : vector<128x64xf32>
    %274 = vector.shape_cast %273 : vector<128x64xf32> to vector<1x8x16x64xf32>
    %c0_238 = arith.constant 0 : index
    %c9_239 = arith.constant 9 : index
    %c16_240 = arith.constant 16 : index
    %c0_241 = arith.constant 0 : index
    %275 = vector.load %arg13[%c0_238, %c9_239, %c16_240, %c0_241] : memref<1x18x48x64xf32, #tpu.memory_space<vmem>>, vector<1x8x16x64xf32>
    tpu.vector_store %arg13[%c0_238, %c9_239, %c16_240, %c0_241], %274 {strides = array<i32>} : memref<1x18x48x64xf32, #tpu.memory_space<vmem>>, vector<1x8x16x64xf32>,
    %cst_242 = arith.constant 0.000000e+00 : f32
    %276 = vector.broadcast %cst_242 : f32 to vector<16x16xf32>
    %c0_243 = arith.constant 0 : index
    %c0_244 = arith.constant 0 : index
    %c15_245 = arith.constant 15 : index
    %c0_246 = arith.constant 0 : index
    %277 = vector.load %arg13[%c0_243, %c0_244, %c15_245, %c0_246] : memref<1x18x48x64xf32, #tpu.memory_space<vmem>>, vector<1x18x16x64xf32>
    %278 = vector.shape_cast %277 : vector<1x18x16x64xf32> to vector<18x16x64xf32>
    %279 = vector.extract_strided_slice %278 {offsets = [0, 0, 0], sizes = [16, 16, 64], strides = [1, 1, 1]} : vector<18x16x64xf32> to vector<16x16x64xf32>
    %c0_247 = arith.constant 0 : index
    %c0_248 = arith.constant 0 : index
    %c0_249 = arith.constant 0 : index
    %280 = vector.load %arg8[%c0_247, %c0_248, %c0_249] : memref<9x1x64xf32, #tpu.memory_space<vmem>>, vector<1x1x64xf32>
    %281 = vector.shape_cast %280 : vector<1x1x64xf32> to vector<1x64xf32>
    %282 = vector.shape_cast %281 : vector<1x64xf32> to vector<1x1x64xf32>
    %283 = vector.broadcast %282 : vector<1x1x64xf32> to vector<16x16x64xf32>
    %284 = arith.mulf %279, %283 : vector<16x16x64xf32>
    %cst_250 = arith.constant dense<0.000000e+00> : vector<16x16xf32>
    %285 = vector.multi_reduction <add>, %284, %cst_250 [2] : vector<16x16x64xf32> to vector<16x16xf32>
    %286 = arith.addf %276, %285 : vector<16x16xf32>
    %287 = vector.extract_strided_slice %278 {offsets = [1, 0, 0], sizes = [16, 16, 64], strides = [1, 1, 1]} : vector<18x16x64xf32> to vector<16x16x64xf32>
    %c3_251 = arith.constant 3 : index
    %c0_252 = arith.constant 0 : index
    %c0_253 = arith.constant 0 : index
    %288 = vector.load %arg8[%c3_251, %c0_252, %c0_253] : memref<9x1x64xf32, #tpu.memory_space<vmem>>, vector<1x1x64xf32>
    %289 = vector.shape_cast %288 : vector<1x1x64xf32> to vector<1x64xf32>
    %290 = vector.shape_cast %289 : vector<1x64xf32> to vector<1x1x64xf32>
    %291 = vector.broadcast %290 : vector<1x1x64xf32> to vector<16x16x64xf32>
    %292 = arith.mulf %287, %291 : vector<16x16x64xf32>
    %cst_254 = arith.constant dense<0.000000e+00> : vector<16x16xf32>
    %293 = vector.multi_reduction <add>, %292, %cst_254 [2] : vector<16x16x64xf32> to vector<16x16xf32>
    %294 = arith.addf %286, %293 : vector<16x16xf32>
    %295 = vector.extract_strided_slice %278 {offsets = [2, 0, 0], sizes = [16, 16, 64], strides = [1, 1, 1]} : vector<18x16x64xf32> to vector<16x16x64xf32>
    %c6_255 = arith.constant 6 : index
    %c0_256 = arith.constant 0 : index
    %c0_257 = arith.constant 0 : index
    %296 = vector.load %arg8[%c6_255, %c0_256, %c0_257] : memref<9x1x64xf32, #tpu.memory_space<vmem>>, vector<1x1x64xf32>
    %297 = vector.shape_cast %296 : vector<1x1x64xf32> to vector<1x64xf32>
    %298 = vector.shape_cast %297 : vector<1x64xf32> to vector<1x1x64xf32>
    %299 = vector.broadcast %298 : vector<1x1x64xf32> to vector<16x16x64xf32>
    %300 = arith.mulf %295, %299 : vector<16x16x64xf32>
    %cst_258 = arith.constant dense<0.000000e+00> : vector<16x16xf32>
    %301 = vector.multi_reduction <add>, %300, %cst_258 [2] : vector<16x16x64xf32> to vector<16x16xf32>
    %302 = arith.addf %294, %301 : vector<16x16xf32>
    %c0_259 = arith.constant 0 : index
    %c0_260 = arith.constant 0 : index
    %c16_261 = arith.constant 16 : index
    %c0_262 = arith.constant 0 : index
    %303 = vector.load %arg13[%c0_259, %c0_260, %c16_261, %c0_262] : memref<1x18x48x64xf32, #tpu.memory_space<vmem>>, vector<1x18x16x64xf32>
    %304 = vector.shape_cast %303 : vector<1x18x16x64xf32> to vector<18x16x64xf32>
    %305 = vector.extract_strided_slice %304 {offsets = [0, 0, 0], sizes = [16, 16, 64], strides = [1, 1, 1]} : vector<18x16x64xf32> to vector<16x16x64xf32>
    %c1_263 = arith.constant 1 : index
    %c0_264 = arith.constant 0 : index
    %c0_265 = arith.constant 0 : index
    %306 = vector.load %arg8[%c1_263, %c0_264, %c0_265] : memref<9x1x64xf32, #tpu.memory_space<vmem>>, vector<1x1x64xf32>
    %307 = vector.shape_cast %306 : vector<1x1x64xf32> to vector<1x64xf32>
    %308 = vector.shape_cast %307 : vector<1x64xf32> to vector<1x1x64xf32>
    %309 = vector.broadcast %308 : vector<1x1x64xf32> to vector<16x16x64xf32>
    %310 = arith.mulf %305, %309 : vector<16x16x64xf32>
    %cst_266 = arith.constant dense<0.000000e+00> : vector<16x16xf32>
    %311 = vector.multi_reduction <add>, %310, %cst_266 [2] : vector<16x16x64xf32> to vector<16x16xf32>
    %312 = arith.addf %302, %311 : vector<16x16xf32>
    %313 = vector.extract_strided_slice %304 {offsets = [1, 0, 0], sizes = [16, 16, 64], strides = [1, 1, 1]} : vector<18x16x64xf32> to vector<16x16x64xf32>
    %c4_267 = arith.constant 4 : index
    %c0_268 = arith.constant 0 : index
    %c0_269 = arith.constant 0 : index
    %314 = vector.load %arg8[%c4_267, %c0_268, %c0_269] : memref<9x1x64xf32, #tpu.memory_space<vmem>>, vector<1x1x64xf32>
    %315 = vector.shape_cast %314 : vector<1x1x64xf32> to vector<1x64xf32>
    %316 = vector.shape_cast %315 : vector<1x64xf32> to vector<1x1x64xf32>
    %317 = vector.broadcast %316 : vector<1x1x64xf32> to vector<16x16x64xf32>
    %318 = arith.mulf %313, %317 : vector<16x16x64xf32>
    %cst_270 = arith.constant dense<0.000000e+00> : vector<16x16xf32>
    %319 = vector.multi_reduction <add>, %318, %cst_270 [2] : vector<16x16x64xf32> to vector<16x16xf32>
    %320 = arith.addf %312, %319 : vector<16x16xf32>
    %321 = vector.extract_strided_slice %304 {offsets = [2, 0, 0], sizes = [16, 16, 64], strides = [1, 1, 1]} : vector<18x16x64xf32> to vector<16x16x64xf32>
    %c7_271 = arith.constant 7 : index
    %c0_272 = arith.constant 0 : index
    %c0_273 = arith.constant 0 : index
    %322 = vector.load %arg8[%c7_271, %c0_272, %c0_273] : memref<9x1x64xf32, #tpu.memory_space<vmem>>, vector<1x1x64xf32>
    %323 = vector.shape_cast %322 : vector<1x1x64xf32> to vector<1x64xf32>
    %324 = vector.shape_cast %323 : vector<1x64xf32> to vector<1x1x64xf32>
    %325 = vector.broadcast %324 : vector<1x1x64xf32> to vector<16x16x64xf32>
    %326 = arith.mulf %321, %325 : vector<16x16x64xf32>
    %cst_274 = arith.constant dense<0.000000e+00> : vector<16x16xf32>
    %327 = vector.multi_reduction <add>, %326, %cst_274 [2] : vector<16x16x64xf32> to vector<16x16xf32>
    %328 = arith.addf %320, %327 : vector<16x16xf32>
    %c0_275 = arith.constant 0 : index
    %c0_276 = arith.constant 0 : index
    %c17_277 = arith.constant 17 : index
    %c0_278 = arith.constant 0 : index
    %329 = vector.load %arg13[%c0_275, %c0_276, %c17_277, %c0_278] : memref<1x18x48x64xf32, #tpu.memory_space<vmem>>, vector<1x18x16x64xf32>
    %330 = vector.shape_cast %329 : vector<1x18x16x64xf32> to vector<18x16x64xf32>
    %331 = vector.extract_strided_slice %330 {offsets = [0, 0, 0], sizes = [16, 16, 64], strides = [1, 1, 1]} : vector<18x16x64xf32> to vector<16x16x64xf32>
    %c2_279 = arith.constant 2 : index
    %c0_280 = arith.constant 0 : index
    %c0_281 = arith.constant 0 : index
    %332 = vector.load %arg8[%c2_279, %c0_280, %c0_281] : memref<9x1x64xf32, #tpu.memory_space<vmem>>, vector<1x1x64xf32>
    %333 = vector.shape_cast %332 : vector<1x1x64xf32> to vector<1x64xf32>
    %334 = vector.shape_cast %333 : vector<1x64xf32> to vector<1x1x64xf32>
    %335 = vector.broadcast %334 : vector<1x1x64xf32> to vector<16x16x64xf32>
    %336 = arith.mulf %331, %335 : vector<16x16x64xf32>
    %cst_282 = arith.constant dense<0.000000e+00> : vector<16x16xf32>
    %337 = vector.multi_reduction <add>, %336, %cst_282 [2] : vector<16x16x64xf32> to vector<16x16xf32>
    %338 = arith.addf %328, %337 : vector<16x16xf32>
    %339 = vector.extract_strided_slice %330 {offsets = [1, 0, 0], sizes = [16, 16, 64], strides = [1, 1, 1]} : vector<18x16x64xf32> to vector<16x16x64xf32>
    %c5_283 = arith.constant 5 : index
    %c0_284 = arith.constant 0 : index
    %c0_285 = arith.constant 0 : index
    %340 = vector.load %arg8[%c5_283, %c0_284, %c0_285] : memref<9x1x64xf32, #tpu.memory_space<vmem>>, vector<1x1x64xf32>
    %341 = vector.shape_cast %340 : vector<1x1x64xf32> to vector<1x64xf32>
    %342 = vector.shape_cast %341 : vector<1x64xf32> to vector<1x1x64xf32>
    %343 = vector.broadcast %342 : vector<1x1x64xf32> to vector<16x16x64xf32>
    %344 = arith.mulf %339, %343 : vector<16x16x64xf32>
    %cst_286 = arith.constant dense<0.000000e+00> : vector<16x16xf32>
    %345 = vector.multi_reduction <add>, %344, %cst_286 [2] : vector<16x16x64xf32> to vector<16x16xf32>
    %346 = arith.addf %338, %345 : vector<16x16xf32>
    %347 = vector.extract_strided_slice %330 {offsets = [2, 0, 0], sizes = [16, 16, 64], strides = [1, 1, 1]} : vector<18x16x64xf32> to vector<16x16x64xf32>
    %c8_287 = arith.constant 8 : index
    %c0_288 = arith.constant 0 : index
    %c0_289 = arith.constant 0 : index
    %348 = vector.load %arg8[%c8_287, %c0_288, %c0_289] : memref<9x1x64xf32, #tpu.memory_space<vmem>>, vector<1x1x64xf32>
    %349 = vector.shape_cast %348 : vector<1x1x64xf32> to vector<1x64xf32>
    %350 = vector.shape_cast %349 : vector<1x64xf32> to vector<1x1x64xf32>
    %351 = vector.broadcast %350 : vector<1x1x64xf32> to vector<16x16x64xf32>
    %352 = arith.mulf %347, %351 : vector<16x16x64xf32>
    %cst_290 = arith.constant dense<0.000000e+00> : vector<16x16xf32>
    %353 = vector.multi_reduction <add>, %352, %cst_290 [2] : vector<16x16x64xf32> to vector<16x16xf32>
    %354 = arith.addf %346, %353 : vector<16x16xf32>
    %c0_291 = arith.constant 0 : index
    %c0_292 = arith.constant 0 : index
    %355 = vector.load %arg9[%c0_291, %c0_292] : memref<1x1xf32, #tpu.memory_space<vmem>>, vector<1x1xf32>
    %356 = vector.broadcast %355 : vector<1x1xf32> to vector<16x16xf32>
    %357 = arith.addf %354, %356 : vector<16x16xf32>
    %358 = arith.negf %357 : vector<16x16xf32>
    %359 = math.exp %358 : vector<16x16xf32>
    %cst_293 = arith.constant 1.000000e+00 : f32
    %360 = vector.broadcast %cst_293 : f32 to vector<16x16xf32>
    %361 = arith.addf %360, %359 : vector<16x16xf32>
    %362 = arith.divf %360, %361 : vector<16x16xf32>
    %363 = vector.shape_cast %362 : vector<16x16xf32> to vector<1x1x256xf32>
    %c0_294 = arith.constant 0 : index
    %c0_295 = arith.constant 0 : index
    %c0_296 = arith.constant 0 : index
    %364 = vector.load %arg10[%c0_294, %c0_295, %c0_296] : memref<1x1x256xf32, #tpu.memory_space<vmem>>, vector<1x1x256xf32>
    tpu.vector_store %arg10[%c0_294, %c0_295, %c0_296], %363 {strides = array<i32>} : memref<1x1x256xf32, #tpu.memory_space<vmem>>, vector<1x1x256xf32>,
    return
  }
  func.func @transform_0(%arg0: i32) -> (i32, i32, i32) {
    %c0_i32 = arith.constant 0 : i32
    %c0_i32_0 = arith.constant 0 : i32
    %c0_i32_1 = arith.constant 0 : i32
    return %arg0, %c0_i32, %c0_i32_0 : i32, i32, i32
  }
  func.func @transform_1(%arg0: i32) -> (i32, i32) {
    %c0_i32 = arith.constant 0 : i32
    %c0_i32_0 = arith.constant 0 : i32
    %c0_i32_1 = arith.constant 0 : i32
    return %c0_i32, %c0_i32_0 : i32, i32
  }
  func.func @transform_2(%arg0: i32) -> (i32, i32) {
    %c0_i32 = arith.constant 0 : i32
    %c0_i32_0 = arith.constant 0 : i32
    %c0_i32_1 = arith.constant 0 : i32
    return %c0_i32, %c0_i32_0 : i32, i32
  }
  func.func @transform_3(%arg0: i32) -> (i32, i32, i32) {
    %c0_i32 = arith.constant 0 : i32
    %c0_i32_0 = arith.constant 0 : i32
    %c0_i32_1 = arith.constant 0 : i32
    %c0_i32_2 = arith.constant 0 : i32
    return %c0_i32, %c0_i32_0, %c0_i32_1 : i32, i32, i32
  }
  func.func @transform_4(%arg0: i32) -> (i32, i32) {
    %c0_i32 = arith.constant 0 : i32
    %c0_i32_0 = arith.constant 0 : i32
    %c0_i32_1 = arith.constant 0 : i32
    return %c0_i32, %c0_i32_0 : i32, i32
  }
  func.func @transform_5(%arg0: i32) -> (i32, i32, i32) {
    %c0_i32 = arith.constant 0 : i32
    %c0_i32_0 = arith.constant 0 : i32
    %c0_i32_1 = arith.constant 0 : i32
    %c0_i32_2 = arith.constant 0 : i32
    return %c0_i32, %c0_i32_0, %c0_i32_1 : i32, i32, i32
  }
  func.func @transform_6(%arg0: i32) -> (i32, i32) {
    %c0_i32 = arith.constant 0 : i32
    %c0_i32_0 = arith.constant 0 : i32
    %c0_i32_1 = arith.constant 0 : i32
    return %c0_i32, %c0_i32_0 : i32, i32
  }
  func.func @transform_7(%arg0: i32) -> (i32, i32, i32) {
    %c0_i32 = arith.constant 0 : i32
    %c0_i32_0 = arith.constant 0 : i32
    %c0_i32_1 = arith.constant 0 : i32
    %c0_i32_2 = arith.constant 0 : i32
    return %c0_i32, %c0_i32_0, %c0_i32_1 : i32, i32, i32
  }
  func.func @transform_8(%arg0: i32) -> (i32, i32) {
    %c0_i32 = arith.constant 0 : i32
    %c0_i32_0 = arith.constant 0 : i32
    %c0_i32_1 = arith.constant 0 : i32
    return %c0_i32, %c0_i32_0 : i32, i32
  }
  func.func @transform_9(%arg0: i32) -> (i32, i32, i32) {
    %c0_i32 = arith.constant 0 : i32
    %c0_i32_0 = arith.constant 0 : i32
    %c0_i32_1 = arith.constant 0 : i32
    return %arg0, %c0_i32, %c0_i32_0 : i32, i32, i32
  }
}

</mosaic_0001>

<llo_original>
// kernel: sam_forward.1
$region0: #{sam_forward.1}
  #allocation0 [shape = 'u32[]', space=smem, size = 0x4, offset = 0x4, fixed_abs, tag = 'smem constant byte address 0x4 - core index']
  #allocation1 [shape = 'u32[72,128]{1,0:T(1,128)}', space=vmem, size = 0x9000, scoped, tag = 'internal scratch']
  #allocation2 [shape = 'bf16[1,18,48,64]{3,2,1,0:T(8,128)(2,1)}', space=vmem, size = 0x36000, scoped, tag = 'scratch operand']
  #allocation3 [shape = 'bf16[1,18,48,128]{3,2,1,0:T(8,128)(2,1)}', space=vmem, size = 0x36000, scoped, tag = 'scratch operand']
  #allocation4 [shape = 'f32[1,18,48,64]{3,2,1,0:T(8,128)}', space=vmem, size = 0x6c000, scoped, tag = 'scratch operand']
  #allocation5 [shape = 'f32[1,1]{1,0:T(1,128)S(1)}', space=vmem, size = 0x200, scoped, tag = 'scoped memory for sam_forward.1']
  %s0 = inlined_call_operand.vmem [shape: bf16[2,256,27], index: 0, kind: input, shape index: {}]
  %s1 = inlined_call_operand.vmem [shape: bf16[27,64], index: 1, kind: input, shape index: {}]
  %s2 = inlined_call_operand.vmem [shape: f32[1,64], index: 2, kind: input, shape index: {}]
  %s3 = inlined_call_operand.vmem [shape: bf16[9,64,128], index: 3, kind: input, shape index: {}]
  %s4 = inlined_call_operand.vmem [shape: f32[1,128], index: 4, kind: input, shape index: {}]
  %s5 = inlined_call_operand.vmem [shape: bf16[3,384,64], index: 5, kind: input, shape index: {}]
  %s6 = inlined_call_operand.vmem [shape: f32[1,64], index: 6, kind: input, shape index: {}]
  %s7 = inlined_call_operand.vmem [shape: f32[9,1,64], index: 7, kind: input, shape index: {}]
  %s8 = inlined_call_operand.<no memory space> [shape: f32[1,1], index: 8, kind: input, shape index: {}]
  %s9 = inlined_call_operand.vmem [shape: f32[2,1,256], index: 9, kind: output, shape index: {}]
  %s10 = sld [smem:[#allocation0]]
  $region69: #{sam_forward.1} parent=0
    _
  %s12 = ssub.s32 1, %s10
  %s13 = scalar_select 0, %s12, %s10
  %v14 = vstv %s8
  %15 = vst [vmem:[#allocation5] sm:$0x1] %v14
  loop: start=0, step=1, limit=4
  $region2: #{sam_forward.1} parent=0 // loop_pre_header
    _
  $region3: #{sam_forward.1} parent=0 // loop_header
    %s17 = sphi 0, %s21
    %p18 = scmp.ge.s32.totalorder %s17, 4
    %s27 = sphi 0, %s29
    %s30 = sphi 0, %s27
    %s31 = sphi 0, %s30
    %s47 = sphi 0, %s31
    %s51 = sphi 0, %s51
    %s53 = sphi 0, %s51
    %s54 = sphi 0, %s53
    %s68 = sphi 0, %s54
    %s72 = sphi 0, %s72
    %s74 = sphi 0, %s72
    %s75 = sphi 0, %s74
    %s89 = sphi 0, %s75
    %s93 = sphi 0, %s93
    %s95 = sphi 0, %s93
    %s96 = sphi 0, %s95
    %s110 = sphi 0, %s96
    %s114 = sphi 0, %s114
    %s116 = sphi 0, %s114
    %s117 = sphi 0, %s116
    %s131 = sphi 0, %s117
    %s135 = sphi 0, %s135
    %s137 = sphi 0, %s135
    %s138 = sphi 0, %s137
    %s152 = sphi 0, %s138
    %s156 = sphi 0, %s156
    %s158 = sphi 0, %s156
    %s159 = sphi 0, %s158
    %s173 = sphi 0, %s159
    %s177 = sphi 0, %s177
    %s179 = sphi 0, %s177
    %s180 = sphi 0, %s179
    %s194 = sphi 0, %s180
    %s198 = sphi 0, %s198
    %s200 = sphi 0, %s198
    %s201 = sphi 0, %s200
    %s215 = sphi 0, %s201
    %s221 = sphi 0, %s223
    %s224 = sphi 0, %s221
    %s225 = sphi 0, %s224
    %s241 = sphi 0, %s225
  $region4: #{sam_forward.1} parent=0 // loop_header_branch
    %20 = sbr.rel (%p18) target = $region8
  $region5: #{sam_forward.1} parent=0 // loop_body
    %s22 = ssub.s32 %s17, 1
    %s23 = ssub.s32 %s17, 2
    %s24 = sadd.s32 %s17, 1
    %s25 = ssub.s32 %s17, %s24
    %p26 = scmp.eq.s32.totalorder %s25, 0
    %s28 = sadd.s32 %s27, 1
    %s29 = scalar_select %p26, %s27, %s28
    %p32 = pneg %p26
    %p33 = scmp.eq.s32.totalorder %s17, 1
    %p34 = por %p32, %p33
    %p35 = scmp.ne.s32.totalorder %s27, %s30
    %p36 = scmp.eq.s32.totalorder %s17, 0
    %p37 = por %p35, %p36
    %p38 = scmp.ne.s32.totalorder %s27, %s30
    %p39 = scmp.eq.s32.totalorder %s22, 1
    %p40 = por %p38, %p39
    %p41 = scmp.ne.s32.totalorder %s30, %s31
    %p42 = scmp.eq.s32.totalorder %s22, 0
    %p43 = por %p41, %p42
    %p44 = scmp.ne.s32.totalorder %s30, %s31
    %p45 = scmp.eq.s32.totalorder %s23, 1
    %p46 = por %p44, %p45
    %p48 = scmp.ne.s32.totalorder %s31, %s47
    %p49 = scmp.eq.s32.totalorder %s23, 0
    %p50 = por %p48, %p49
    %s52 = sadd.s32 %s51, 1
    %p55 = scmp.eq.s32.totalorder %s17, 1
    %p56 = scmp.ne.s32.totalorder %s51, %s53
    %p57 = scmp.eq.s32.totalorder %s17, 0
    %p58 = por %p56, %p57
    %p59 = scmp.ne.s32.totalorder %s51, %s53
    %p60 = scmp.eq.s32.totalorder %s22, 1
    %p61 = por %p59, %p60
    %p62 = scmp.ne.s32.totalorder %s53, %s54
    %p63 = scmp.eq.s32.totalorder %s22, 0
    %p64 = por %p62, %p63
    %p65 = scmp.ne.s32.totalorder %s53, %s54
    %p66 = scmp.eq.s32.totalorder %s23, 1
    %p67 = por %p65, %p66
    %p69 = scmp.ne.s32.totalorder %s54, %s68
    %p70 = scmp.eq.s32.totalorder %s23, 0
    %p71 = por %p69, %p70
    %s73 = sadd.s32 %s72, 1
    %p76 = scmp.eq.s32.totalorder %s17, 1
    %p77 = scmp.ne.s32.totalorder %s72, %s74
    %p78 = scmp.eq.s32.totalorder %s17, 0
    %p79 = por %p77, %p78
    %p80 = scmp.ne.s32.totalorder %s72, %s74
    %p81 = scmp.eq.s32.totalorder %s22, 1
    %p82 = por %p80, %p81
    %p83 = scmp.ne.s32.totalorder %s74, %s75
    %p84 = scmp.eq.s32.totalorder %s22, 0
    %p85 = por %p83, %p84
    %p86 = scmp.ne.s32.totalorder %s74, %s75
    %p87 = scmp.eq.s32.totalorder %s23, 1
    %p88 = por %p86, %p87
    %p90 = scmp.ne.s32.totalorder %s75, %s89
    %p91 = scmp.eq.s32.totalorder %s23, 0
    %p92 = por %p90, %p91
    %s94 = sadd.s32 %s93, 1
    %p97 = scmp.eq.s32.totalorder %s17, 1
    %p98 = scmp.ne.s32.totalorder %s93, %s95
    %p99 = scmp.eq.s32.totalorder %s17, 0
    %p100 = por %p98, %p99
    %p101 = scmp.ne.s32.totalorder %s93, %s95
    %p102 = scmp.eq.s32.totalorder %s22, 1
    %p103 = por %p101, %p102
    %p104 = scmp.ne.s32.totalorder %s95, %s96
    %p105 = scmp.eq.s32.totalorder %s22, 0
    %p106 = por %p104, %p105
    %p107 = scmp.ne.s32.totalorder %s95, %s96
    %p108 = scmp.eq.s32.totalorder %s23, 1
    %p109 = por %p107, %p108
    %p111 = scmp.ne.s32.totalorder %s96, %s110
    %p112 = scmp.eq.s32.totalorder %s23, 0
    %p113 = por %p111, %p112
    %s115 = sadd.s32 %s114, 1
    %p118 = scmp.eq.s32.totalorder %s17, 1
    %p119 = scmp.ne.s32.totalorder %s114, %s116
    %p120 = scmp.eq.s32.totalorder %s17, 0
    %p121 = por %p119, %p120
    %p122 = scmp.ne.s32.totalorder %s114, %s116
    %p123 = scmp.eq.s32.totalorder %s22, 1
    %p124 = por %p122, %p123
    %p125 = scmp.ne.s32.totalorder %s116, %s117
    %p126 = scmp.eq.s32.totalorder %s22, 0
    %p127 = por %p125, %p126
    %p128 = scmp.ne.s32.totalorder %s116, %s117
    %p129 = scmp.eq.s32.totalorder %s23, 1
    %p130 = por %p128, %p129
    %p132 = scmp.ne.s32.totalorder %s117, %s131
    %p133 = scmp.eq.s32.totalorder %s23, 0
    %p134 = por %p132, %p133
    %s136 = sadd.s32 %s135, 1
    %p139 = scmp.eq.s32.totalorder %s17, 1
    %p140 = scmp.ne.s32.totalorder %s135, %s137
    %p141 = scmp.eq.s32.totalorder %s17, 0
    %p142 = por %p140, %p141
    %p143 = scmp.ne.s32.totalorder %s135, %s137
    %p144 = scmp.eq.s32.totalorder %s22, 1
    %p145 = por %p143, %p144
    %p146 = scmp.ne.s32.totalorder %s137, %s138
    %p147 = scmp.eq.s32.totalorder %s22, 0
    %p148 = por %p146, %p147
    %p149 = scmp.ne.s32.totalorder %s137, %s138
    %p150 = scmp.eq.s32.totalorder %s23, 1
    %p151 = por %p149, %p150
    %p153 = scmp.ne.s32.totalorder %s138, %s152
    %p154 = scmp.eq.s32.totalorder %s23, 0
    %p155 = por %p153, %p154
    %s157 = sadd.s32 %s156, 1
    %p160 = scmp.eq.s32.totalorder %s17, 1
    %p161 = scmp.ne.s32.totalorder %s156, %s158
    %p162 = scmp.eq.s32.totalorder %s17, 0
    %p163 = por %p161, %p162
    %p164 = scmp.ne.s32.totalorder %s156, %s158
    %p165 = scmp.eq.s32.totalorder %s22, 1
    %p166 = por %p164, %p165
    %p167 = scmp.ne.s32.totalorder %s158, %s159
    %p168 = scmp.eq.s32.totalorder %s22, 0
    %p169 = por %p167, %p168
    %p170 = scmp.ne.s32.totalorder %s158, %s159
    %p171 = scmp.eq.s32.totalorder %s23, 1
    %p172 = por %p170, %p171
    %p174 = scmp.ne.s32.totalorder %s159, %s173
    %p175 = scmp.eq.s32.totalorder %s23, 0
    %p176 = por %p174, %p175
    %s178 = sadd.s32 %s177, 1
    %p181 = scmp.eq.s32.totalorder %s17, 1
    %p182 = scmp.ne.s32.totalorder %s177, %s179
    %p183 = scmp.eq.s32.totalorder %s17, 0
    %p184 = por %p182, %p183
    %p185 = scmp.ne.s32.totalorder %s177, %s179
    %p186 = scmp.eq.s32.totalorder %s22, 1
    %p187 = por %p185, %p186
    %p188 = scmp.ne.s32.totalorder %s179, %s180
    %p189 = scmp.eq.s32.totalorder %s22, 0
    %p190 = por %p188, %p189
    %p191 = scmp.ne.s32.totalorder %s179, %s180
    %p192 = scmp.eq.s32.totalorder %s23, 1
    %p193 = por %p191, %p192
    %p195 = scmp.ne.s32.totalorder %s180, %s194
    %p196 = scmp.eq.s32.totalorder %s23, 0
    %p197 = por %p195, %p196
    %s199 = sadd.s32 %s198, 1
    %p202 = scmp.eq.s32.totalorder %s17, 1
    %p203 = scmp.ne.s32.totalorder %s198, %s200
    %p204 = scmp.eq.s32.totalorder %s17, 0
    %p205 = por %p203, %p204
    %p206 = scmp.ne.s32.totalorder %s198, %s200
    %p207 = scmp.eq.s32.totalorder %s22, 1
    %p208 = por %p206, %p207
    %p209 = scmp.ne.s32.totalorder %s200, %s201
    %p210 = scmp.eq.s32.totalorder %s22, 0
    %p211 = por %p209, %p210
    %p212 = scmp.ne.s32.totalorder %s200, %s201
    %p213 = scmp.eq.s32.totalorder %s23, 1
    %p214 = por %p212, %p213
    %p216 = scmp.ne.s32.totalorder %s201, %s215
    %p217 = scmp.eq.s32.totalorder %s23, 0
    %p218 = por %p216, %p217
    %s219 = ssub.s32 %s17, %s24
    %p220 = scmp.eq.s32.totalorder %s219, 0
    %s222 = sadd.s32 %s221, 1
    %s223 = scalar_select %p220, %s221, %s222
    %p226 = pneg %p220
    %p227 = scmp.eq.s32.totalorder %s17, 1
    %p228 = por %p226, %p227
    %p229 = scmp.ne.s32.totalorder %s221, %s224
    %p230 = scmp.eq.s32.totalorder %s17, 0
    %p231 = por %p229, %p230
    %p232 = scmp.ne.s32.totalorder %s221, %s224
    %p233 = scmp.eq.s32.totalorder %s22, 1
    %p234 = por %p232, %p233
    %p235 = scmp.ne.s32.totalorder %s224, %s225
    %p236 = scmp.eq.s32.totalorder %s22, 0
    %p237 = por %p235, %p236
    %p238 = scmp.ne.s32.totalorder %s224, %s225
    %p239 = scmp.eq.s32.totalorder %s23, 1
    %p240 = por %p238, %p239
    %p242 = scmp.ne.s32.totalorder %s225, %s241
    %p243 = scmp.eq.s32.totalorder %s23, 0
    %p244 = por %p242, %p243
    %p245 = scmp.le.s32.totalorder 1, %s17
    %p246 = scmp.lt.s32.totalorder %s17, 3
    %p247 = pnand %p245, %p246
    %p248 = pneg %p247
    // Predicated region
    $region9: #{sam_forward.1} parent=5 // pred_check
      _
    $region10: #{sam_forward.1} parent=5 // pred_check_branch
      %250 = sbr.rel (%p247) target = $region12
    $region11: #{sam_forward.1} parent=5 // pred_region
      %s251 = ssub.s32 %s17, 1
      // Predicated region
      $region13: #{sam_forward.1} parent=11 // pred_check
        %p252 = pneg %p64
      $region14: #{sam_forward.1} parent=11 // pred_check_branch
        %254 = sbr.rel (%p252) target = $region16
      $region15: #{sam_forward.1} parent=11 // pred_region
        _
      $region16: #{sam_forward.1} parent=11 // pred_fallthru
        _
      // Predicated region
      $region17: #{sam_forward.1} parent=11 // pred_check
        %p255 = pneg %p85
      $region18: #{sam_forward.1} parent=11 // pred_check_branch
        %257 = sbr.rel (%p255) target = $region20
      $region19: #{sam_forward.1} parent=11 // pred_region
        _
      $region20: #{sam_forward.1} parent=11 // pred_fallthru
        _
      // Predicated region
      $region21: #{sam_forward.1} parent=11 // pred_check
        %p258 = pneg %p106
      $region22: #{sam_forward.1} parent=11 // pred_check_branch
        %260 = sbr.rel (%p258) target = $region24
      $region23: #{sam_forward.1} parent=11 // pred_region
        _
      $region24: #{sam_forward.1} parent=11 // pred_fallthru
        _
      // Predicated region
      $region25: #{sam_forward.1} parent=11 // pred_check
        %p261 = pneg %p127
      $region26: #{sam_forward.1} parent=11 // pred_check_branch
        %263 = sbr.rel (%p261) target = $region28
      $region27: #{sam_forward.1} parent=11 // pred_region
        _
      $region28: #{sam_forward.1} parent=11 // pred_fallthru
        _
      // Predicated region
      $region29: #{sam_forward.1} parent=11 // pred_check
        %p264 = pneg %p148
      $region30: #{sam_forward.1} parent=11 // pred_check_branch
        %266 = sbr.rel (%p264) target = $region32
      $region31: #{sam_forward.1} parent=11 // pred_region
        _
      $region32: #{sam_forward.1} parent=11 // pred_fallthru
        _
      // Predicated region
      $region33: #{sam_forward.1} parent=11 // pred_check
        %p267 = pneg %p169
      $region34: #{sam_forward.1} parent=11 // pred_check_branch
        %269 = sbr.rel (%p267) target = $region36
      $region35: #{sam_forward.1} parent=11 // pred_region
        _
      $region36: #{sam_forward.1} parent=11 // pred_fallthru
        _
      // Predicated region
      $region37: #{sam_forward.1} parent=11 // pred_check
        %p270 = pneg %p190
      $region38: #{sam_forward.1} parent=11 // pred_check_branch
        %272 = sbr.rel (%p270) target = $region40
      $region39: #{sam_forward.1} parent=11 // pred_region
        _
      $region40: #{sam_forward.1} parent=11 // pred_fallthru
        _
      // Predicated region
      $region41: #{sam_forward.1} parent=11 // pred_check
        %p273 = pneg %p211
      $region42: #{sam_forward.1} parent=11 // pred_check_branch
        %275 = sbr.rel (%p273) target = $region44
      $region43: #{sam_forward.1} parent=11 // pred_region
        _
      $region44: #{sam_forward.1} parent=11 // pred_fallthru
        _
    $region12: #{sam_forward.1} parent=5 // pred_fallthru
      _
    %p276 = scmp.lt.s32.totalorder %s17, 2
    // Predicated region
    $region45: #{sam_forward.1} parent=5 // pred_check
      %p277 = pneg %p276
    $region46: #{sam_forward.1} parent=5 // pred_check_branch
      %279 = sbr.rel (%p277) target = $region48
    $region47: #{sam_forward.1} parent=5 // pred_region
      // Predicated region
      $region49: #{sam_forward.1} parent=47 // pred_check
        %p280 = pneg %p37
      $region50: #{sam_forward.1} parent=47 // pred_check_branch
        %282 = sbr.rel (%p280) target = $region52
      $region51: #{sam_forward.1} parent=47 // pred_region
        %p283 = scmp.lt.s32.totalorder %s17, 1
        %s284 = scalar_select %p283, %s17, 1
        %s285 = smul.addr %s284, 32
        %s286 = smul.addr %s285, 4
        %s287 = scalar_lea.vmem %s0, %s286
      $region52: #{sam_forward.1} parent=47 // pred_fallthru
        _
    $region48: #{sam_forward.1} parent=5 // pred_fallthru
      _
    %p288 = scmp.le.s32.totalorder 1, %s17
    %p289 = scmp.lt.s32.totalorder %s17, 3
    %p290 = pnand %p288, %p289
    %p291 = pneg %p290
    // Predicated region
    $region53: #{sam_forward.1} parent=5 // pred_check
      _
    $region54: #{sam_forward.1} parent=5 // pred_check_branch
      %293 = sbr.rel (%p290) target = $region56
    $region55: #{sam_forward.1} parent=5 // pred_region
      %s294 = ssub.s32 %s17, 1
      %p295 = scmp.lt.s32.totalorder %s22, 1
      %s296 = scalar_select %p295, %s22, 1
      %s297 = smul.addr %s296, 32
      %s298 = smul.addr %s297, 4
      %s299 = scalar_lea.vmem %s0, %s298
      %p300 = pneg %p43
      %p301 = pneg %p40
      %p302 = pneg %p64
      %p303 = pneg %p61
      %p304 = pneg %p85
      %p305 = pneg %p82
      %p306 = pneg %p106
      %p307 = pneg %p103
      %p308 = pneg %p127
      %p309 = pneg %p124
      %p310 = pneg %p148
      %p311 = pneg %p145
      %p312 = pneg %p169
      %p313 = pneg %p166
      %p314 = pneg %p190
      %p315 = pneg %p187
      %p316 = pneg %p211
      %p317 = pneg %p208
      %p318 = pneg %p237
      %p319 = pneg %p234
      %p320 = scmp.lt.s32.totalorder %s22, 1
      %s321 = scalar_select %p320, %s22, 1
      %s322 = smul.addr %s321, 2
      %s323 = scalar_lea.vmem %s9, %s322
      %p324 = scmp.lt.s32.totalorder %s22, 1
      %s325 = scalar_select %p324, %s22, 1
      %s326 = smul.addr %s325, 32
      %s327 = smul.addr %s326, 4
      %s328 = scalar_lea.vmem %s0, %s327
      %p329 = scmp.lt.s32.totalorder %s22, 1
      %s330 = scalar_select %p329, %s22, 1
      %s331 = smul.addr %s330, 2
      %s332 = scalar_lea.vmem %s9, %s331
      %vm334 = vcmask 519168
      %335 = vst.msk [vmem:[#allocation2] sm:$0xf] %vm334, 0
      %336 = vst.msk [vmem:[#allocation2 + $0x4] sm:$0xf] %vm334, 0
      %337 = vst.msk [vmem:[#allocation2 + $0x18] sm:$0xf] %vm334, 0
      %338 = vst.msk [vmem:[#allocation2 + $0x1c] sm:$0xf] %vm334, 0
      %339 = vst.msk [vmem:[#allocation2 + $0x30] sm:$0xf] %vm334, 0
      %340 = vst.msk [vmem:[#allocation2 + $0x34] sm:$0xf] %vm334, 0
      %341 = vst.msk [vmem:[#allocation2 + $0x48] sm:$0xf] %vm334, 0
      %342 = vst.msk [vmem:[#allocation2 + $0x4c] sm:$0xf] %vm334, 0
      %343 = vst.msk [vmem:[#allocation2 + $0x60] sm:$0xf] %vm334, 0
      %344 = vst.msk [vmem:[#allocation2 + $0x64] sm:$0xf] %vm334, 0
      %345 = vst.msk [vmem:[#allocation2 + $0x78] sm:$0xf] %vm334, 0
      %346 = vst.msk [vmem:[#allocation2 + $0x7c] sm:$0xf] %vm334, 0
      %347 = vst.msk [vmem:[#allocation2 + $0x90] sm:$0xf] %vm334, 0
      %348 = vst.msk [vmem:[#allocation2 + $0x94] sm:$0xf] %vm334, 0
      %349 = vst.msk [vmem:[#allocation2 + $0xa8] sm:$0xf] %vm334, 0
      %350 = vst.msk [vmem:[#allocation2 + $0xac] sm:$0xf] %vm334, 0
      %351 = vst.msk [vmem:[#allocation2 + $0xc0] sm:$0xf] %vm334, 0
      %352 = vst.msk [vmem:[#allocation2 + $0xc4] sm:$0xf] %vm334, 0
      %353 = vst.msk [vmem:[#allocation2 + $0xd8] sm:$0xf] %vm334, 0
      %354 = vst.msk [vmem:[#allocation2 + $0xdc] sm:$0xf] %vm334, 0
      %355 = vst.msk [vmem:[#allocation2 + $0xf0] sm:$0xf] %vm334, 0
      %356 = vst.msk [vmem:[#allocation2 + $0xf4] sm:$0xf] %vm334, 0
      %357 = vst.msk [vmem:[#allocation2 + $0x108] sm:$0xf] %vm334, 0
      %358 = vst.msk [vmem:[#allocation2 + $0x10c] sm:$0xf] %vm334, 0
      %359 = vst.msk [vmem:[#allocation2 + $0x120] sm:$0xf] %vm334, 0
      %360 = vst.msk [vmem:[#allocation2 + $0x124] sm:$0xf] %vm334, 0
      %361 = vst.msk [vmem:[#allocation2 + $0x138] sm:$0xf] %vm334, 0
      %362 = vst.msk [vmem:[#allocation2 + $0x13c] sm:$0xf] %vm334, 0
      %363 = vst.msk [vmem:[#allocation2 + $0x150] sm:$0xf] %vm334, 0
      %364 = vst.msk [vmem:[#allocation2 + $0x154] sm:$0xf] %vm334, 0
      %365 = vst.msk [vmem:[#allocation2 + $0x168] sm:$0xf] %vm334, 0
      %366 = vst.msk [vmem:[#allocation2 + $0x16c] sm:$0xf] %vm334, 0
      %367 = vst.msk [vmem:[#allocation2 + $0x180] sm:$0xf] %vm334, 0
      %368 = vst.msk [vmem:[#allocation2 + $0x184] sm:$0xf] %vm334, 0
      %369 = vst.msk [vmem:[#allocation2 + $0x198] sm:$0xf] %vm334, 0
      %370 = vst.msk [vmem:[#allocation2 + $0x19c] sm:$0xf] %vm334, 0
      %371 = vst.msk [vmem:[#allocation2 + $0x10] sm:$0xf] %vm334, 0
      %372 = vst.msk [vmem:[#allocation2 + $0x14] sm:$0xf] %vm334, 0
      %373 = vst.msk [vmem:[#allocation2 + $0x28] sm:$0xf] %vm334, 0
      %374 = vst.msk [vmem:[#allocation2 + $0x2c] sm:$0xf] %vm334, 0
      %375 = vst.msk [vmem:[#allocation2 + $0x40] sm:$0xf] %vm334, 0
      %376 = vst.msk [vmem:[#allocation2 + $0x44] sm:$0xf] %vm334, 0
      %377 = vst.msk [vmem:[#allocation2 + $0x58] sm:$0xf] %vm334, 0
      %378 = vst.msk [vmem:[#allocation2 + $0x5c] sm:$0xf] %vm334, 0
      %379 = vst.msk [vmem:[#allocation2 + $0x70] sm:$0xf] %vm334, 0
      %380 = vst.msk [vmem:[#allocation2 + $0x74] sm:$0xf] %vm334, 0
      %381 = vst.msk [vmem:[#allocation2 + $0x88] sm:$0xf] %vm334, 0
      %382 = vst.msk [vmem:[#allocation2 + $0x8c] sm:$0xf] %vm334, 0
      %383 = vst.msk [vmem:[#allocation2 + $0xa0] sm:$0xf] %vm334, 0
      %384 = vst.msk [vmem:[#allocation2 + $0xa4] sm:$0xf] %vm334, 0
      %385 = vst.msk [vmem:[#allocation2 + $0xb8] sm:$0xf] %vm334, 0
      %386 = vst.msk [vmem:[#allocation2 + $0xbc] sm:$0xf] %vm334, 0
      %387 = vst.msk [vmem:[#allocation2 + $0xd0] sm:$0xf] %vm334, 0
      %388 = vst.msk [vmem:[#allocation2 + $0xd4] sm:$0xf] %vm334, 0
      %389 = vst.msk [vmem:[#allocation2 + $0xe8] sm:$0xf] %vm334, 0
      %390 = vst.msk [vmem:[#allocation2 + $0xec] sm:$0xf] %vm334, 0
      %391 = vst.msk [vmem:[#allocation2 + $0x100] sm:$0xf] %vm334, 0
      %392 = vst.msk [vmem:[#allocation2 + $0x104] sm:$0xf] %vm334, 0
      %393 = vst.msk [vmem:[#allocation2 + $0x118] sm:$0xf] %vm334, 0
      %394 = vst.msk [vmem:[#allocation2 + $0x11c] sm:$0xf] %vm334, 0
      %395 = vst.msk [vmem:[#allocation2 + $0x130] sm:$0xf] %vm334, 0
      %396 = vst.msk [vmem:[#allocation2 + $0x134] sm:$0xf] %vm334, 0
      %397 = vst.msk [vmem:[#allocation2 + $0x148] sm:$0xf] %vm334, 0
      %398 = vst.msk [vmem:[#allocation2 + $0x14c] sm:$0xf] %vm334, 0
      %399 = vst.msk [vmem:[#allocation2 + $0x160] sm:$0xf] %vm334, 0
      %400 = vst.msk [vmem:[#allocation2 + $0x164] sm:$0xf] %vm334, 0
      %401 = vst.msk [vmem:[#allocation2 + $0x178] sm:$0xf] %vm334, 0
      %402 = vst.msk [vmem:[#allocation2 + $0x17c] sm:$0xf] %vm334, 0
      %403 = vst.msk [vmem:[#allocation2 + $0x190] sm:$0xf] %vm334, 0
      %404 = vst.msk [vmem:[#allocation2 + $0x194] sm:$0xf] %vm334, 0
      %405 = vst.msk [vmem:[#allocation2 + $0x1a8] sm:$0xf] %vm334, 0
      %406 = vst.msk [vmem:[#allocation2 + $0x1ac] sm:$0xf] %vm334, 0
      %407 = vst.msk [vmem:[#allocation2 + $0x8] sm:$0xf] %vm334, 0
      %408 = vst.msk [vmem:[#allocation2 + $0xc] sm:$0xf] %vm334, 0
      %s409 = scalar_lea.vmem [#allocation2], 408
      %410 = vst.msk [vmem:[%s409 + $0x8] sm:$0xf] %vm334, 0
      %411 = vst.msk [vmem:[%s409 + $0xc] sm:$0xf] %vm334, 0
      %412 = vst [vmem:[#allocation3] sm:$0xf] 0
      %413 = vst [vmem:[#allocation3 + $0x4] sm:$0xf] 0
      %414 = vst [vmem:[#allocation3 + $0x18] sm:$0xf] 0
      %415 = vst [vmem:[#allocation3 + $0x1c] sm:$0xf] 0
      %416 = vst [vmem:[#allocation3 + $0x30] sm:$0xf] 0
      %417 = vst [vmem:[#allocation3 + $0x34] sm:$0xf] 0
      %418 = vst [vmem:[#allocation3 + $0x48] sm:$0xf] 0
      %419 = vst [vmem:[#allocation3 + $0x4c] sm:$0xf] 0
      %420 = vst [vmem:[#allocation3 + $0x60] sm:$0xf] 0
      %421 = vst [vmem:[#allocation3 + $0x64] sm:$0xf] 0
      %422 = vst [vmem:[#allocation3 + $0x78] sm:$0xf] 0
      %423 = vst [vmem:[#allocation3 + $0x7c] sm:$0xf] 0
      %424 = vst [vmem:[#allocation3 + $0x90] sm:$0xf] 0
      %425 = vst [vmem:[#allocation3 + $0x94] sm:$0xf] 0
      %426 = vst [vmem:[#allocation3 + $0xa8] sm:$0xf] 0
      %427 = vst [vmem:[#allocation3 + $0xac] sm:$0xf] 0
      %428 = vst [vmem:[#allocation3 + $0xc0] sm:$0xf] 0
      %429 = vst [vmem:[#allocation3 + $0xc4] sm:$0xf] 0
      %430 = vst [vmem:[#allocation3 + $0xd8] sm:$0xf] 0
      %431 = vst [vmem:[#allocation3 + $0xdc] sm:$0xf] 0
      %432 = vst [vmem:[#allocation3 + $0xf0] sm:$0xf] 0
      %433 = vst [vmem:[#allocation3 + $0xf4] sm:$0xf] 0
      %434 = vst [vmem:[#allocation3 + $0x108] sm:$0xf] 0
      %435 = vst [vmem:[#allocation3 + $0x10c] sm:$0xf] 0
      %436 = vst [vmem:[#allocation3 + $0x120] sm:$0xf] 0
      %437 = vst [vmem:[#allocation3 + $0x124] sm:$0xf] 0
      %438 = vst [vmem:[#allocation3 + $0x138] sm:$0xf] 0
      %439 = vst [vmem:[#allocation3 + $0x13c] sm:$0xf] 0
      %440 = vst [vmem:[#allocation3 + $0x150] sm:$0xf] 0
      %441 = vst [vmem:[#allocation3 + $0x154] sm:$0xf] 0
      %442 = vst [vmem:[#allocation3 + $0x168] sm:$0xf] 0
      %443 = vst [vmem:[#allocation3 + $0x16c] sm:$0xf] 0
      %444 = vst [vmem:[#allocation3 + $0x180] sm:$0xf] 0
      %445 = vst [vmem:[#allocation3 + $0x184] sm:$0xf] 0
      %446 = vst [vmem:[#allocation3 + $0x198] sm:$0xf] 0
      %447 = vst [vmem:[#allocation3 + $0x19c] sm:$0xf] 0
      %448 = vst [vmem:[#allocation3 + $0x10] sm:$0xf] 0
      %449 = vst [vmem:[#allocation3 + $0x14] sm:$0xf] 0
      %450 = vst [vmem:[#allocation3 + $0x28] sm:$0xf] 0
      %451 = vst [vmem:[#allocation3 + $0x2c] sm:$0xf] 0
      %452 = vst [vmem:[#allocation3 + $0x40] sm:$0xf] 0
      %453 = vst [vmem:[#allocation3 + $0x44] sm:$0xf] 0
      %454 = vst [vmem:[#allocation3 + $0x58] sm:$0xf] 0
      %455 = vst [vmem:[#allocation3 + $0x5c] sm:$0xf] 0
      %456 = vst [vmem:[#allocation3 + $0x70] sm:$0xf] 0
      %457 = vst [vmem:[#allocation3 + $0x74] sm:$0xf] 0
      %458 = vst [vmem:[#allocation3 + $0x88] sm:$0xf] 0
      %459 = vst [vmem:[#allocation3 + $0x8c] sm:$0xf] 0
      %460 = vst [vmem:[#allocation3 + $0xa0] sm:$0xf] 0
      %461 = vst [vmem:[#allocation3 + $0xa4] sm:$0xf] 0
      %462 = vst [vmem:[#allocation3 + $0xb8] sm:$0xf] 0
      %463 = vst [vmem:[#allocation3 + $0xbc] sm:$0xf] 0
      %464 = vst [vmem:[#allocation3 + $0xd0] sm:$0xf] 0
      %465 = vst [vmem:[#allocation3 + $0xd4] sm:$0xf] 0
      %466 = vst [vmem:[#allocation3 + $0xe8] sm:$0xf] 0
      %467 = vst [vmem:[#allocation3 + $0xec] sm:$0xf] 0
      %468 = vst [vmem:[#allocation3 + $0x100] sm:$0xf] 0
      %469 = vst [vmem:[#allocation3 + $0x104] sm:$0xf] 0
      %470 = vst [vmem:[#allocation3 + $0x118] sm:$0xf] 0
      %471 = vst [vmem:[#allocation3 + $0x11c] sm:$0xf] 0
      %472 = vst [vmem:[#allocation3 + $0x130] sm:$0xf] 0
      %473 = vst [vmem:[#allocation3 + $0x134] sm:$0xf] 0
      %474 = vst [vmem:[#allocation3 + $0x148] sm:$0xf] 0
      %475 = vst [vmem:[#allocation3 + $0x14c] sm:$0xf] 0
      %476 = vst [vmem:[#allocation3 + $0x160] sm:$0xf] 0
      %477 = vst [vmem:[#allocation3 + $0x164] sm:$0xf] 0
      %478 = vst [vmem:[#allocation3 + $0x178] sm:$0xf] 0
      %479 = vst [vmem:[#allocation3 + $0x17c] sm:$0xf] 0
      %480 = vst [vmem:[#allocation3 + $0x190] sm:$0xf] 0
      %481 = vst [vmem:[#allocation3 + $0x194] sm:$0xf] 0
      %482 = vst [vmem:[#allocation3 + $0x1a8] sm:$0xf] 0
      %483 = vst [vmem:[#allocation3 + $0x1ac] sm:$0xf] 0
      %484 = vst [vmem:[#allocation3 + $0x8] sm:$0xf] 0
      %485 = vst [vmem:[#allocation3 + $0xc] sm:$0xf] 0
      %s486 = scalar_lea.vmem [#allocation3], 408
      %487 = vst [vmem:[%s486 + $0x8] sm:$0xf] 0
      %488 = vst [vmem:[%s486 + $0xc] sm:$0xf] 0
      %vm489 = vcmask 523264
      %490 = vst.msk [vmem:[#allocation4] sm:$0xff] %vm489, 0.0
      %491 = vst.msk [vmem:[#allocation4 + $0x8] sm:$0xff] %vm489, 0.0
      %492 = vst.msk [vmem:[#allocation4 + $0x30] sm:$0xff] %vm489, 0.0
      %493 = vst.msk [vmem:[#allocation4 + $0x38] sm:$0xff] %vm489, 0.0
      %494 = vst.msk [vmem:[#allocation4 + $0x60] sm:$0xff] %vm489, 0.0
      %495 = vst.msk [vmem:[#allocation4 + $0x68] sm:$0xff] %vm489, 0.0
      %496 = vst.msk [vmem:[#allocation4 + $0x90] sm:$0xff] %vm489, 0.0
      %497 = vst.msk [vmem:[#allocation4 + $0x98] sm:$0xff] %vm489, 0.0
      %498 = vst.msk [vmem:[#allocation4 + $0xc0] sm:$0xff] %vm489, 0.0
      %499 = vst.msk [vmem:[#allocation4 + $0xc8] sm:$0xff] %vm489, 0.0
      %500 = vst.msk [vmem:[#allocation4 + $0xf0] sm:$0xff] %vm489, 0.0
      %501 = vst.msk [vmem:[#allocation4 + $0xf8] sm:$0xff] %vm489, 0.0
      %502 = vst.msk [vmem:[#allocation4 + $0x120] sm:$0xff] %vm489, 0.0
      %503 = vst.msk [vmem:[#allocation4 + $0x128] sm:$0xff] %vm489, 0.0
      %504 = vst.msk [vmem:[#allocation4 + $0x150] sm:$0xff] %vm489, 0.0
      %505 = vst.msk [vmem:[#allocation4 + $0x158] sm:$0xff] %vm489, 0.0
      %506 = vst.msk [vmem:[#allocation4 + $0x180] sm:$0xff] %vm489, 0.0
      %507 = vst.msk [vmem:[#allocation4 + $0x188] sm:$0xff] %vm489, 0.0
      %508 = vst.msk [vmem:[#allocation4 + $0x1b0] sm:$0xff] %vm489, 0.0
      %509 = vst.msk [vmem:[#allocation4 + $0x1b8] sm:$0xff] %vm489, 0.0
      %510 = vst.msk [vmem:[#allocation4 + $0x1e0] sm:$0xff] %vm489, 0.0
      %511 = vst.msk [vmem:[#allocation4 + $0x1e8] sm:$0xff] %vm489, 0.0
      %512 = vst.msk [vmem:[#allocation4 + $0x210] sm:$0xff] %vm489, 0.0
      %513 = vst.msk [vmem:[#allocation4 + $0x218] sm:$0xff] %vm489, 0.0
      %514 = vst.msk [vmem:[#allocation4 + $0x240] sm:$0xff] %vm489, 0.0
      %515 = vst.msk [vmem:[#allocation4 + $0x248] sm:$0xff] %vm489, 0.0
      %516 = vst.msk [vmem:[#allocation4 + $0x270] sm:$0xff] %vm489, 0.0
      %517 = vst.msk [vmem:[#allocation4 + $0x278] sm:$0xff] %vm489, 0.0
      %518 = vst.msk [vmem:[#allocation4 + $0x2a0] sm:$0xff] %vm489, 0.0
      %519 = vst.msk [vmem:[#allocation4 + $0x2a8] sm:$0xff] %vm489, 0.0
      %520 = vst.msk [vmem:[#allocation4 + $0x2d0] sm:$0xff] %vm489, 0.0
      %521 = vst.msk [vmem:[#allocation4 + $0x2d8] sm:$0xff] %vm489, 0.0
      %522 = vst.msk [vmem:[#allocation4 + $0x300] sm:$0xff] %vm489, 0.0
      %523 = vst.msk [vmem:[#allocation4 + $0x308] sm:$0xff] %vm489, 0.0
      %524 = vst.msk [vmem:[#allocation4 + $0x330] sm:$0xff] %vm489, 0.0
      %525 = vst.msk [vmem:[#allocation4 + $0x338] sm:$0xff] %vm489, 0.0
      %526 = vst.msk [vmem:[#allocation4 + $0x20] sm:$0xff] %vm489, 0.0
      %527 = vst.msk [vmem:[#allocation4 + $0x28] sm:$0xff] %vm489, 0.0
      %528 = vst.msk [vmem:[#allocation4 + $0x50] sm:$0xff] %vm489, 0.0
      %529 = vst.msk [vmem:[#allocation4 + $0x58] sm:$0xff] %vm489, 0.0
      %530 = vst.msk [vmem:[#allocation4 + $0x80] sm:$0xff] %vm489, 0.0
      %531 = vst.msk [vmem:[#allocation4 + $0x88] sm:$0xff] %vm489, 0.0
      %532 = vst.msk [vmem:[#allocation4 + $0xb0] sm:$0xff] %vm489, 0.0
      %533 = vst.msk [vmem:[#allocation4 + $0xb8] sm:$0xff] %vm489, 0.0
      %534 = vst.msk [vmem:[#allocation4 + $0xe0] sm:$0xff] %vm489, 0.0
      %535 = vst.msk [vmem:[#allocation4 + $0xe8] sm:$0xff] %vm489, 0.0
      %536 = vst.msk [vmem:[#allocation4 + $0x110] sm:$0xff] %vm489, 0.0
      %537 = vst.msk [vmem:[#allocation4 + $0x118] sm:$0xff] %vm489, 0.0
      %538 = vst.msk [vmem:[#allocation4 + $0x140] sm:$0xff] %vm489, 0.0
      %539 = vst.msk [vmem:[#allocation4 + $0x148] sm:$0xff] %vm489, 0.0
      %540 = vst.msk [vmem:[#allocation4 + $0x170] sm:$0xff] %vm489, 0.0
      %541 = vst.msk [vmem:[#allocation4 + $0x178] sm:$0xff] %vm489, 0.0
      %542 = vst.msk [vmem:[#allocation4 + $0x1a0] sm:$0xff] %vm489, 0.0
      %543 = vst.msk [vmem:[#allocation4 + $0x1a8] sm:$0xff] %vm489, 0.0
      %544 = vst.msk [vmem:[#allocation4 + $0x1d0] sm:$0xff] %vm489, 0.0
      %545 = vst.msk [vmem:[#allocation4 + $0x1d8] sm:$0xff] %vm489, 0.0
      %546 = vst.msk [vmem:[#allocation4 + $0x200] sm:$0xff] %vm489, 0.0
      %547 = vst.msk [vmem:[#allocation4 + $0x208] sm:$0xff] %vm489, 0.0
      %548 = vst.msk [vmem:[#allocation4 + $0x230] sm:$0xff] %vm489, 0.0
      %549 = vst.msk [vmem:[#allocation4 + $0x238] sm:$0xff] %vm489, 0.0
      %550 = vst.msk [vmem:[#allocation4 + $0x260] sm:$0xff] %vm489, 0.0
      %551 = vst.msk [vmem:[#allocation4 + $0x268] sm:$0xff] %vm489, 0.0
      %552 = vst.msk [vmem:[#allocation4 + $0x290] sm:$0xff] %vm489, 0.0
      %553 = vst.msk [vmem:[#allocation4 + $0x298] sm:$0xff] %vm489, 0.0
      %554 = vst.msk [vmem:[#allocation4 + $0x2c0] sm:$0xff] %vm489, 0.0
      %555 = vst.msk [vmem:[#allocation4 + $0x2c8] sm:$0xff] %vm489, 0.0
      %556 = vst.msk [vmem:[#allocation4 + $0x2f0] sm:$0xff] %vm489, 0.0
      %557 = vst.msk [vmem:[#allocation4 + $0x2f8] sm:$0xff] %vm489, 0.0
      %558 = vst.msk [vmem:[#allocation4 + $0x320] sm:$0xff] %vm489, 0.0
      %559 = vst.msk [vmem:[#allocation4 + $0x328] sm:$0xff] %vm489, 0.0
      %560 = vst.msk [vmem:[#allocation4 + $0x350] sm:$0xff] %vm489, 0.0
      %561 = vst.msk [vmem:[#allocation4 + $0x358] sm:$0xff] %vm489, 0.0
      %562 = vst.msk [vmem:[#allocation4 + $0x10] sm:$0xff] %vm489, 0.0
      %563 = vst.msk [vmem:[#allocation4 + $0x18] sm:$0xff] %vm489, 0.0
      %s564 = scalar_lea.vmem [#allocation4], 816
      %565 = vst.msk [vmem:[%s564 + $0x10] sm:$0xff] %vm489, 0.0
      %566 = vst.msk [vmem:[%s564 + $0x18] sm:$0xff] %vm489, 0.0
      %v567 = vld [vmem:[%s328] sm:$0xf]
      %v568 = vld [vmem:[%s328 + $0x4] sm:$0xf]
      %v569 = vld [vmem:[%s328 + $0x8] sm:$0xf]
      %v570 = vld [vmem:[%s328 + $0xc] sm:$0xf]
      %v571 = vld [vmem:[%s328 + $0x10] sm:$0xf]
      %v572 = vld [vmem:[%s328 + $0x14] sm:$0xf]
      %v573 = vld [vmem:[%s328 + $0x18] sm:$0xf]
      %v574 = vld [vmem:[%s328 + $0x1c] sm:$0xf]
      %v575 = vld [vmem:[%s328 + $0x20] sm:$0xf]
      %v576 = vld [vmem:[%s328 + $0x24] sm:$0xf]
      %v577 = vld [vmem:[%s328 + $0x28] sm:$0xf]
      %v578 = vld [vmem:[%s328 + $0x2c] sm:$0xf]
      %v579 = vld [vmem:[%s328 + $0x30] sm:$0xf]
      %v580 = vld [vmem:[%s328 + $0x34] sm:$0xf]
      %v581 = vld [vmem:[%s328 + $0x38] sm:$0xf]
      %v582 = vld [vmem:[%s328 + $0x3c] sm:$0xf]
      %v583 = vld [vmem:[%s1] sm:$0xf]
      %v584 = vld [vmem:[%s1 + $0x4] sm:$0xf]
      %v585 = vld [vmem:[%s1 + $0x8] sm:$0xf]
      %v586 = vld [vmem:[%s1 + $0xc] sm:$0x3]
      %v587 = vld [vmem:[%s2] sm:$0x1]
      %v589 = vperm.slane %v587, 0
      %v607 = vunpack.c.l.b16 %v567
      %v608 = vunpack.c.l.b16 %v568
      %v609 = vunpack.c.l.b16 %v569
      %v610 = vunpack.c.l.b16 %v570
      %v611 = vunpack.c.l.b16 %v571
      %v612 = vunpack.c.l.b16 %v572
      %v613 = vunpack.c.l.b16 %v573
      %v614 = vunpack.c.l.b16 %v574
      %v615 = vunpack.c.l.b16 %v575
      %v616 = vunpack.c.l.b16 %v576
      %v617 = vunpack.c.l.b16 %v577
      %v618 = vunpack.c.l.b16 %v578
      %v619 = vunpack.c.l.b16 %v579
      %v620 = vunpack.c.l.b16 %v580
      %v621 = vunpack.c.l.b16 %v581
      %v622 = vunpack.c.l.b16 %v582
      %v623 = vpack.c.b16 %v608, %v607
      %v624 = vpack.c.b16 %v610, %v609
      %v625 = vpack.c.b16 %v612, %v611
      %v626 = vpack.c.b16 %v614, %v613
      %v627 = vpack.c.b16 %v616, %v615
      %v628 = vpack.c.b16 %v618, %v617
      %v629 = vpack.c.b16 %v620, %v619
      %v630 = vpack.c.b16 %v622, %v621
      %v635 = vunpack.c.l.b16 %v583
      %v636 = vunpack.c.l.b16 %v584
      %v637 = vunpack.c.l.b16 %v585
      %v638 = vunpack.c.l.b16 %v586
      %v639 = vpack.c.b16 %v636, %v635
      %v640 = vpack.c.b16 %v638, %v637
      %vm642 = vcmask 220160
      %v644 = vsel %vm642, %v623, 0
      %v647 = vsel %vm642, %v624, 0
      %v650 = vsel %vm642, %v625, 0
      %v653 = vsel %vm642, %v626, 0
      %v656 = vsel %vm642, %v627, 0
      %v659 = vsel %vm642, %v628, 0
      %v662 = vsel %vm642, %v629, 0
      %v665 = vsel %vm642, %v630, 0
      %vm667 = vcmask 1044480
      %vm668 = vcmask 1045504
      %v669 = vsel %vm667, 4294967295, 65535
      %v670 = vsel %vm668, %v669, 0
      %v672 = vand.u32 %v640, %v670
      %674 = vmatpush.bf16.msra.mxu0 0
      %675 = vmatpush.bf16.msra.mxu0 0
      %676 = vmatpush.bf16.msra.mxu0 0
      %677 = vmatpush.bf16.msra.mxu0 0
      %678 = vmatpush.bf16.msra.mxu0 0
      %679 = vmatpush.bf16.msra.mxu0 0
      %680 = vmatpush.bf16.msra.mxu0 %v672
      %681 = vmatpush.bf16.msra.mxu0 %v639
      %682 = vmatmul.bf16.gmra.mxu0 %v644
      %v683 = vpop.f32.mrf.mxu0
      %v684 = vadd.f32 %v589, %v683
      %v685 = vpop.f32.mrf.mxu0
      %v686 = vadd.f32 %v589, %v685
      %687 = vmatmul.bf16.gmra.mxu0 %v647
      %v688 = vpop.f32.mrf.mxu0
      %v689 = vadd.f32 %v589, %v688
      %v690 = vpop.f32.mrf.mxu0
      %v691 = vadd.f32 %v589, %v690
      %692 = vmatmul.bf16.gmra.mxu0 %v650
      %v693 = vpop.f32.mrf.mxu0
      %v694 = vadd.f32 %v589, %v693
      %v695 = vpop.f32.mrf.mxu0
      %v696 = vadd.f32 %v589, %v695
      %697 = vmatmul.bf16.gmra.mxu0 %v653
      %v698 = vpop.f32.mrf.mxu0
      %v699 = vadd.f32 %v589, %v698
      %v700 = vpop.f32.mrf.mxu0
      %v701 = vadd.f32 %v589, %v700
      %702 = vmatmul.bf16.gmra.mxu0 %v656
      %v703 = vpop.f32.mrf.mxu0
      %v704 = vadd.f32 %v589, %v703
      %v705 = vpop.f32.mrf.mxu0
      %v706 = vadd.f32 %v589, %v705
      %707 = vmatmul.bf16.gmra.mxu0 %v659
      %v708 = vpop.f32.mrf.mxu0
      %v709 = vadd.f32 %v589, %v708
      %v710 = vpop.f32.mrf.mxu0
      %v711 = vadd.f32 %v589, %v710
      %712 = vmatmul.bf16.gmra.mxu0 %v662
      %v713 = vpop.f32.mrf.mxu0
      %v714 = vadd.f32 %v589, %v713
      %v715 = vpop.f32.mrf.mxu0
      %v716 = vadd.f32 %v589, %v715
      %717 = vmatmul.bf16.gmra.mxu0 %v665
      %v718 = vpop.f32.mrf.mxu0
      %v719 = vadd.f32 %v589, %v718
      %v720 = vpop.f32.mrf.mxu0
      %v721 = vadd.f32 %v589, %v720
      %722 = vdwg.mxu0
      %v723 = vmax.f32 %v684, 0.0
      %v724 = vmax.f32 %v686, 0.0
      %v725 = vmax.f32 %v689, 0.0
      %v726 = vmax.f32 %v691, 0.0
      %v727 = vmax.f32 %v694, 0.0
      %v728 = vmax.f32 %v696, 0.0
      %v729 = vmax.f32 %v699, 0.0
      %v730 = vmax.f32 %v701, 0.0
      %v731 = vmax.f32 %v704, 0.0
      %v732 = vmax.f32 %v706, 0.0
      %v733 = vmax.f32 %v709, 0.0
      %v734 = vmax.f32 %v711, 0.0
      %v735 = vmax.f32 %v714, 0.0
      %v736 = vmax.f32 %v716, 0.0
      %v737 = vmax.f32 %v719, 0.0
      %v738 = vmax.f32 %v721, 0.0
      %v739 = vpack.c.bf16 %v723, %v723
      %v740 = vpack.c.bf16 %v724, %v724
      %v741 = vpack.c.bf16 %v725, %v725
      %v742 = vpack.c.bf16 %v726, %v726
      %v743 = vpack.c.bf16 %v727, %v727
      %v744 = vpack.c.bf16 %v728, %v728
      %v745 = vpack.c.bf16 %v729, %v729
      %v746 = vpack.c.bf16 %v730, %v730
      %v747 = vpack.c.bf16 %v731, %v731
      %v748 = vpack.c.bf16 %v732, %v732
      %v749 = vpack.c.bf16 %v733, %v733
      %v750 = vpack.c.bf16 %v734, %v734
      %v751 = vpack.c.bf16 %v735, %v735
      %v752 = vpack.c.bf16 %v736, %v736
      %v753 = vpack.c.bf16 %v737, %v737
      %v754 = vpack.c.bf16 %v738, %v738
      %s755 = scalar_lea.vmem [#allocation2], 24
      %756 = vst.msk [vmem:[%s755 + $0x8] sm:$0xf] %vm334, %v739
      %757 = vst.msk [vmem:[%s755 + $0xc] sm:$0xf] %vm334, %v740
      %758 = vst.msk [vmem:[%s755 + $0x20] sm:$0xf] %vm334, %v741
      %759 = vst.msk [vmem:[%s755 + $0x24] sm:$0xf] %vm334, %v742
      %760 = vst.msk [vmem:[%s755 + $0x38] sm:$0xf] %vm334, %v743
      %761 = vst.msk [vmem:[%s755 + $0x3c] sm:$0xf] %vm334, %v744
      %762 = vst.msk [vmem:[%s755 + $0x50] sm:$0xf] %vm334, %v745
      %763 = vst.msk [vmem:[%s755 + $0x54] sm:$0xf] %vm334, %v746
      %764 = vst.msk [vmem:[%s755 + $0x68] sm:$0xf] %vm334, %v747
      %765 = vst.msk [vmem:[%s755 + $0x6c] sm:$0xf] %vm334, %v748
      %766 = vst.msk [vmem:[%s755 + $0x80] sm:$0xf] %vm334, %v749
      %767 = vst.msk [vmem:[%s755 + $0x84] sm:$0xf] %vm334, %v750
      %768 = vst.msk [vmem:[%s755 + $0x98] sm:$0xf] %vm334, %v751
      %769 = vst.msk [vmem:[%s755 + $0x9c] sm:$0xf] %vm334, %v752
      %770 = vst.msk [vmem:[%s755 + $0xb0] sm:$0xf] %vm334, %v753
      %771 = vst.msk [vmem:[%s755 + $0xb4] sm:$0xf] %vm334, %v754
      %v772 = vld [vmem:[%s328 + $0x40] sm:$0xf]
      %v773 = vld [vmem:[%s328 + $0x44] sm:$0xf]
      %v774 = vld [vmem:[%s328 + $0x48] sm:$0xf]
      %v775 = vld [vmem:[%s328 + $0x4c] sm:$0xf]
      %v776 = vld [vmem:[%s328 + $0x50] sm:$0xf]
      %v777 = vld [vmem:[%s328 + $0x54] sm:$0xf]
      %v778 = vld [vmem:[%s328 + $0x58] sm:$0xf]
      %v779 = vld [vmem:[%s328 + $0x5c] sm:$0xf]
      %v780 = vld [vmem:[%s328 + $0x60] sm:$0xf]
      %v781 = vld [vmem:[%s328 + $0x64] sm:$0xf]
      %v782 = vld [vmem:[%s328 + $0x68] sm:$0xf]
      %v783 = vld [vmem:[%s328 + $0x6c] sm:$0xf]
      %v784 = vld [vmem:[%s328 + $0x70] sm:$0xf]
      %v785 = vld [vmem:[%s328 + $0x74] sm:$0xf]
      %v786 = vld [vmem:[%s328 + $0x78] sm:$0xf]
      %v787 = vld [vmem:[%s328 + $0x7c] sm:$0xf]
      %v788 = vld [vmem:[%s1] sm:$0xf]
      %v789 = vld [vmem:[%s1 + $0x4] sm:$0xf]
      %v790 = vld [vmem:[%s1 + $0x8] sm:$0xf]
      %v791 = vld [vmem:[%s1 + $0xc] sm:$0x3]
      %v792 = vld [vmem:[%s2] sm:$0x1]
      %v794 = vperm.slane %v792, 0
      %v812 = vunpack.c.l.b16 %v772
      %v813 = vunpack.c.l.b16 %v773
      %v814 = vunpack.c.l.b16 %v774
      %v815 = vunpack.c.l.b16 %v775
      %v816 = vunpack.c.l.b16 %v776
      %v817 = vunpack.c.l.b16 %v777
      %v818 = vunpack.c.l.b16 %v778
      %v819 = vunpack.c.l.b16 %v779
      %v820 = vunpack.c.l.b16 %v780
      %v821 = vunpack.c.l.b16 %v781
      %v822 = vunpack.c.l.b16 %v782
      %v823 = vunpack.c.l.b16 %v783
      %v824 = vunpack.c.l.b16 %v784
      %v825 = vunpack.c.l.b16 %v785
      %v826 = vunpack.c.l.b16 %v786
      %v827 = vunpack.c.l.b16 %v787
      %v828 = vpack.c.b16 %v813, %v812
      %v829 = vpack.c.b16 %v815, %v814
      %v830 = vpack.c.b16 %v817, %v816
      %v831 = vpack.c.b16 %v819, %v818
      %v832 = vpack.c.b16 %v821, %v820
      %v833 = vpack.c.b16 %v823, %v822
      %v834 = vpack.c.b16 %v825, %v824
      %v835 = vpack.c.b16 %v827, %v826
      %v840 = vunpack.c.l.b16 %v788
      %v841 = vunpack.c.l.b16 %v789
      %v842 = vunpack.c.l.b16 %v790
      %v843 = vunpack.c.l.b16 %v791
      %v844 = vpack.c.b16 %v841, %v840
      %v845 = vpack.c.b16 %v843, %v842
      %v848 = vsel %vm642, %v828, 0
      %v851 = vsel %vm642, %v829, 0
      %v854 = vsel %vm642, %v830, 0
      %v857 = vsel %vm642, %v831, 0
      %v860 = vsel %vm642, %v832, 0
      %v863 = vsel %vm642, %v833, 0
      %v866 = vsel %vm642, %v834, 0
      %v869 = vsel %vm642, %v835, 0
      %v872 = vand.u32 %v845, %v670
      %874 = vmatpush.bf16.msra.mxu0 0
      %875 = vmatpush.bf16.msra.mxu0 0
      %876 = vmatpush.bf16.msra.mxu0 0
      %877 = vmatpush.bf16.msra.mxu0 0
      %878 = vmatpush.bf16.msra.mxu0 0
      %879 = vmatpush.bf16.msra.mxu0 0
      %880 = vmatpush.bf16.msra.mxu0 %v872
      %881 = vmatpush.bf16.msra.mxu0 %v844
      %882 = vmatmul.bf16.gmra.mxu0 %v848
      %v883 = vpop.f32.mrf.mxu0
      %v884 = vadd.f32 %v794, %v883
      %v885 = vpop.f32.mrf.mxu0
      %v886 = vadd.f32 %v794, %v885
      %887 = vmatmul.bf16.gmra.mxu0 %v851
      %v888 = vpop.f32.mrf.mxu0
      %v889 = vadd.f32 %v794, %v888
      %v890 = vpop.f32.mrf.mxu0
      %v891 = vadd.f32 %v794, %v890
      %892 = vmatmul.bf16.gmra.mxu0 %v854
      %v893 = vpop.f32.mrf.mxu0
      %v894 = vadd.f32 %v794, %v893
      %v895 = vpop.f32.mrf.mxu0
      %v896 = vadd.f32 %v794, %v895
      %897 = vmatmul.bf16.gmra.mxu0 %v857
      %v898 = vpop.f32.mrf.mxu0
      %v899 = vadd.f32 %v794, %v898
      %v900 = vpop.f32.mrf.mxu0
      %v901 = vadd.f32 %v794, %v900
      %902 = vmatmul.bf16.gmra.mxu0 %v860
      %v903 = vpop.f32.mrf.mxu0
      %v904 = vadd.f32 %v794, %v903
      %v905 = vpop.f32.mrf.mxu0
      %v906 = vadd.f32 %v794, %v905
      %907 = vmatmul.bf16.gmra.mxu0 %v863
      %v908 = vpop.f32.mrf.mxu0
      %v909 = vadd.f32 %v794, %v908
      %v910 = vpop.f32.mrf.mxu0
      %v911 = vadd.f32 %v794, %v910
      %912 = vmatmul.bf16.gmra.mxu0 %v866
      %v913 = vpop.f32.mrf.mxu0
      %v914 = vadd.f32 %v794, %v913
      %v915 = vpop.f32.mrf.mxu0
      %v916 = vadd.f32 %v794, %v915
      %917 = vmatmul.bf16.gmra.mxu0 %v869
      %v918 = vpop.f32.mrf.mxu0
      %v919 = vadd.f32 %v794, %v918
      %v920 = vpop.f32.mrf.mxu0
      %v921 = vadd.f32 %v794, %v920
      %922 = vdwg.mxu0
      %v923 = vmax.f32 %v884, 0.0
      %v924 = vmax.f32 %v886, 0.0
      %v925 = vmax.f32 %v889, 0.0
      %v926 = vmax.f32 %v891, 0.0
      %v927 = vmax.f32 %v894, 0.0
      %v928 = vmax.f32 %v896, 0.0
      %v929 = vmax.f32 %v899, 0.0
      %v930 = vmax.f32 %v901, 0.0
      %v931 = vmax.f32 %v904, 0.0
      %v932 = vmax.f32 %v906, 0.0
      %v933 = vmax.f32 %v909, 0.0
      %v934 = vmax.f32 %v911, 0.0
      %v935 = vmax.f32 %v914, 0.0
      %v936 = vmax.f32 %v916, 0.0
      %v937 = vmax.f32 %v919, 0.0
      %v938 = vmax.f32 %v921, 0.0
      %v939 = vpack.c.bf16 %v923, %v923
      %v940 = vpack.c.bf16 %v924, %v924
      %v941 = vpack.c.bf16 %v925, %v925
      %v942 = vpack.c.bf16 %v926, %v926
      %v943 = vpack.c.bf16 %v927, %v927
      %v944 = vpack.c.bf16 %v928, %v928
      %v945 = vpack.c.bf16 %v929, %v929
      %v946 = vpack.c.bf16 %v930, %v930
      %v947 = vpack.c.bf16 %v931, %v931
      %v948 = vpack.c.bf16 %v932, %v932
      %v949 = vpack.c.bf16 %v933, %v933
      %v950 = vpack.c.bf16 %v934, %v934
      %v951 = vpack.c.bf16 %v935, %v935
      %v952 = vpack.c.bf16 %v936, %v936
      %v953 = vpack.c.bf16 %v937, %v937
      %v954 = vpack.c.bf16 %v938, %v938
      %s955 = scalar_lea.vmem [#allocation2], 216
      %956 = vst.msk [vmem:[%s955 + $0x8] sm:$0xf] %vm334, %v939
      %957 = vst.msk [vmem:[%s955 + $0xc] sm:$0xf] %vm334, %v940
      %958 = vst.msk [vmem:[%s955 + $0x20] sm:$0xf] %vm334, %v941
      %959 = vst.msk [vmem:[%s955 + $0x24] sm:$0xf] %vm334, %v942
      %960 = vst.msk [vmem:[%s955 + $0x38] sm:$0xf] %vm334, %v943
      %961 = vst.msk [vmem:[%s955 + $0x3c] sm:$0xf] %vm334, %v944
      %962 = vst.msk [vmem:[%s955 + $0x50] sm:$0xf] %vm334, %v945
      %963 = vst.msk [vmem:[%s955 + $0x54] sm:$0xf] %vm334, %v946
      %964 = vst.msk [vmem:[%s955 + $0x68] sm:$0xf] %vm334, %v947
      %965 = vst.msk [vmem:[%s955 + $0x6c] sm:$0xf] %vm334, %v948
      %966 = vst.msk [vmem:[%s955 + $0x80] sm:$0xf] %vm334, %v949
      %967 = vst.msk [vmem:[%s955 + $0x84] sm:$0xf] %vm334, %v950
      %968 = vst.msk [vmem:[%s955 + $0x98] sm:$0xf] %vm334, %v951
      %969 = vst.msk [vmem:[%s955 + $0x9c] sm:$0xf] %vm334, %v952
      %970 = vst.msk [vmem:[%s955 + $0xb0] sm:$0xf] %vm334, %v953
      %971 = vst.msk [vmem:[%s955 + $0xb4] sm:$0xf] %vm334, %v954
      %v972 = vld [vmem:[%s4] sm:$0x1]
      %v974 = vperm.slane %v972, 0
      %v976 = vld [vmem:[#allocation2 + $0x4] sm:$0x8]
      %v977 = vld [vmem:[#allocation2 + $0x8] sm:$0xf]
      %v978 = vld [vmem:[#allocation2 + $0xc] sm:$0xf]
      %v979 = vld [vmem:[#allocation2 + $0x1c] sm:$0x8]
      %v980 = vld [vmem:[#allocation2 + $0x20] sm:$0xf]
      %v981 = vld [vmem:[#allocation2 + $0x24] sm:$0xf]
      %v982 = vld [vmem:[#allocation2 + $0x34] sm:$0x8]
      %v983 = vld [vmem:[#allocation2 + $0x38] sm:$0xf]
      %v984 = vld [vmem:[#allocation2 + $0x3c] sm:$0xf]
      %v985 = vld [vmem:[#allocation2 + $0x4c] sm:$0x8]
      %v986 = vld [vmem:[#allocation2 + $0x50] sm:$0xf]
      %v987 = vld [vmem:[#allocation2 + $0x54] sm:$0xf]
      %v988 = vld [vmem:[#allocation2 + $0x64] sm:$0x8]
      %v989 = vld [vmem:[#allocation2 + $0x68] sm:$0xf]
      %v990 = vld [vmem:[#allocation2 + $0x6c] sm:$0xf]
      %v991 = vld [vmem:[#allocation2 + $0x7c] sm:$0x8]
      %v992 = vld [vmem:[#allocation2 + $0x80] sm:$0xf]
      %v993 = vld [vmem:[#allocation2 + $0x84] sm:$0xf]
      %v994 = vld [vmem:[#allocation2 + $0x94] sm:$0x8]
      %v995 = vld [vmem:[#allocation2 + $0x98] sm:$0xf]
      %v996 = vld [vmem:[#allocation2 + $0x9c] sm:$0xf]
      %v997 = vld [vmem:[#allocation2 + $0xac] sm:$0x8]
      %v998 = vld [vmem:[#allocation2 + $0xb0] sm:$0xf]
      %v999 = vld [vmem:[#allocation2 + $0xb4] sm:$0xf]
      %v1000 = vld [vmem:[#allocation2 + $0xc4] sm:$0x8]
      %v1001 = vld [vmem:[#allocation2 + $0xc8] sm:$0xf]
      %v1002 = vld [vmem:[#allocation2 + $0xcc] sm:$0xf]
      %v1003 = vld [vmem:[#allocation2 + $0xdc] sm:$0x8]
      %v1004 = vld [vmem:[#allocation2 + $0xe0] sm:$0xf]
      %v1005 = vld [vmem:[#allocation2 + $0xe4] sm:$0xf]
      %vm1006 = vsmask.f32 256
      %vm1007 = vsmask.f32 4368
      %vm1008 = vmor %vm1006, %vm1007
      %v1010 = vshrl.u32 %v976, 16
      %v1012 = vrot.slane %v1010, 7
      %v1013 = vrot.slane %v1012, 4
      %v1015 = vshrl.u32 %v977, 16
      %v1017 = vrot.slane %v1015, 7
      %v1018 = vshll.u32 %v977, 16
      %v1020 = vor.u32 %v1017, %v1018
      %v1021 = vsel %vm1008, %v1013, %v1020
      %v1022 = vrot.slane %v1017, 4
      %v1024 = vshrl.u32 %v978, 16
      %v1026 = vrot.slane %v1024, 7
      %v1027 = vshll.u32 %v978, 16
      %v1029 = vor.u32 %v1026, %v1027
      %v1030 = vsel %vm1008, %v1022, %v1029
      %v1032 = vshrl.u32 %v979, 16
      %v1034 = vrot.slane %v1032, 7
      %v1035 = vrot.slane %v1034, 4
      %v1037 = vshrl.u32 %v980, 16
      %v1039 = vrot.slane %v1037, 7
      %v1040 = vshll.u32 %v980, 16
      %v1042 = vor.u32 %v1039, %v1040
      %v1043 = vsel %vm1008, %v1035, %v1042
      %v1044 = vrot.slane %v1039, 4
      %v1046 = vshrl.u32 %v981, 16
      %v1048 = vrot.slane %v1046, 7
      %v1049 = vshll.u32 %v981, 16
      %v1051 = vor.u32 %v1048, %v1049
      %v1052 = vsel %vm1008, %v1044, %v1051
      %v1054 = vshrl.u32 %v982, 16
      %v1056 = vrot.slane %v1054, 7
      %v1057 = vrot.slane %v1056, 4
      %v1059 = vshrl.u32 %v983, 16
      %v1061 = vrot.slane %v1059, 7
      %v1062 = vshll.u32 %v983, 16
      %v1064 = vor.u32 %v1061, %v1062
      %v1065 = vsel %vm1008, %v1057, %v1064
      %v1066 = vrot.slane %v1061, 4
      %v1068 = vshrl.u32 %v984, 16
      %v1070 = vrot.slane %v1068, 7
      %v1071 = vshll.u32 %v984, 16
      %v1073 = vor.u32 %v1070, %v1071
      %v1074 = vsel %vm1008, %v1066, %v1073
      %v1076 = vshrl.u32 %v985, 16
      %v1078 = vrot.slane %v1076, 7
      %v1079 = vrot.slane %v1078, 4
      %v1081 = vshrl.u32 %v986, 16
      %v1083 = vrot.slane %v1081, 7
      %v1084 = vshll.u32 %v986, 16
      %v1086 = vor.u32 %v1083, %v1084
      %v1087 = vsel %vm1008, %v1079, %v1086
      %v1088 = vrot.slane %v1083, 4
      %v1090 = vshrl.u32 %v987, 16
      %v1092 = vrot.slane %v1090, 7
      %v1093 = vshll.u32 %v987, 16
      %v1095 = vor.u32 %v1092, %v1093
      %v1096 = vsel %vm1008, %v1088, %v1095
      %v1098 = vshrl.u32 %v988, 16
      %v1100 = vrot.slane %v1098, 7
      %v1101 = vrot.slane %v1100, 4
      %v1103 = vshrl.u32 %v989, 16
      %v1105 = vrot.slane %v1103, 7
      %v1106 = vshll.u32 %v989, 16
      %v1108 = vor.u32 %v1105, %v1106
      %v1109 = vsel %vm1008, %v1101, %v1108
      %v1110 = vrot.slane %v1105, 4
      %v1112 = vshrl.u32 %v990, 16
      %v1114 = vrot.slane %v1112, 7
      %v1115 = vshll.u32 %v990, 16
      %v1117 = vor.u32 %v1114, %v1115
      %v1118 = vsel %vm1008, %v1110, %v1117
      %v1120 = vshrl.u32 %v991, 16
      %v1122 = vrot.slane %v1120, 7
      %v1123 = vrot.slane %v1122, 4
      %v1125 = vshrl.u32 %v992, 16
      %v1127 = vrot.slane %v1125, 7
      %v1128 = vshll.u32 %v992, 16
      %v1130 = vor.u32 %v1127, %v1128
      %v1131 = vsel %vm1008, %v1123, %v1130
      %v1132 = vrot.slane %v1127, 4
      %v1134 = vshrl.u32 %v993, 16
      %v1136 = vrot.slane %v1134, 7
      %v1137 = vshll.u32 %v993, 16
      %v1139 = vor.u32 %v1136, %v1137
      %v1140 = vsel %vm1008, %v1132, %v1139
      %v1142 = vshrl.u32 %v994, 16
      %v1144 = vrot.slane %v1142, 7
      %v1145 = vrot.slane %v1144, 4
      %v1147 = vshrl.u32 %v995, 16
      %v1149 = vrot.slane %v1147, 7
      %v1150 = vshll.u32 %v995, 16
      %v1152 = vor.u32 %v1149, %v1150
      %v1153 = vsel %vm1008, %v1145, %v1152
      %v1154 = vrot.slane %v1149, 4
      %v1156 = vshrl.u32 %v996, 16
      %v1158 = vrot.slane %v1156, 7
      %v1159 = vshll.u32 %v996, 16
      %v1161 = vor.u32 %v1158, %v1159
      %v1162 = vsel %vm1008, %v1154, %v1161
      %v1164 = vshrl.u32 %v997, 16
      %v1166 = vrot.slane %v1164, 7
      %v1167 = vrot.slane %v1166, 4
      %v1169 = vshrl.u32 %v998, 16
      %v1171 = vrot.slane %v1169, 7
      %v1172 = vshll.u32 %v998, 16
      %v1174 = vor.u32 %v1171, %v1172
      %v1175 = vsel %vm1008, %v1167, %v1174
      %v1176 = vrot.slane %v1171, 4
      %v1178 = vshrl.u32 %v999, 16
      %v1180 = vrot.slane %v1178, 7
      %v1181 = vshll.u32 %v999, 16
      %v1183 = vor.u32 %v1180, %v1181
      %v1184 = vsel %vm1008, %v1176, %v1183
      %v1185 = vld [vmem:[%s3] sm:$0xf]
      %v1186 = vld [vmem:[%s3 + $0x4] sm:$0xf]
      %v1187 = vld [vmem:[%s3 + $0x8] sm:$0xf]
      %v1188 = vld [vmem:[%s3 + $0xc] sm:$0xf]
      %v1189 = vld [vmem:[%s3 + $0x10] sm:$0xf]
      %v1190 = vld [vmem:[%s3 + $0x14] sm:$0xf]
      %v1191 = vld [vmem:[%s3 + $0x18] sm:$0xf]
      %v1192 = vld [vmem:[%s3 + $0x1c] sm:$0xf]
      %v1193 = vunpack.c.l.b16 %v1021
      %v1194 = vunpack.c.l.b16 %v1030
      %v1195 = vunpack.c.l.b16 %v1043
      %v1196 = vunpack.c.l.b16 %v1052
      %v1197 = vunpack.c.l.b16 %v1065
      %v1198 = vunpack.c.l.b16 %v1074
      %v1199 = vunpack.c.l.b16 %v1087
      %v1200 = vunpack.c.l.b16 %v1096
      %v1201 = vunpack.c.l.b16 %v1109
      %v1202 = vunpack.c.l.b16 %v1118
      %v1203 = vunpack.c.l.b16 %v1131
      %v1204 = vunpack.c.l.b16 %v1140
      %v1205 = vunpack.c.l.b16 %v1153
      %v1206 = vunpack.c.l.b16 %v1162
      %v1207 = vunpack.c.l.b16 %v1175
      %v1208 = vunpack.c.l.b16 %v1184
      %v1209 = vpack.c.b16 %v1194, %v1193
      %v1210 = vpack.c.b16 %v1196, %v1195
      %v1211 = vpack.c.b16 %v1198, %v1197
      %v1212 = vpack.c.b16 %v1200, %v1199
      %v1213 = vpack.c.b16 %v1202, %v1201
      %v1214 = vpack.c.b16 %v1204, %v1203
      %v1215 = vpack.c.b16 %v1206, %v1205
      %v1216 = vpack.c.b16 %v1208, %v1207
      %v1225 = vunpack.c.l.b16 %v1185
      %v1226 = vunpack.c.l.b16 %v1186
      %v1227 = vunpack.c.l.b16 %v1187
      %v1228 = vunpack.c.l.b16 %v1188
      %v1229 = vunpack.c.l.b16 %v1189
      %v1230 = vunpack.c.l.b16 %v1190
      %v1231 = vunpack.c.l.b16 %v1191
      %v1232 = vunpack.c.l.b16 %v1192
      %v1233 = vpack.c.b16 %v1226, %v1225
      %v1234 = vpack.c.b16 %v1228, %v1227
      %v1235 = vpack.c.b16 %v1230, %v1229
      %v1236 = vpack.c.b16 %v1232, %v1231
      %v1242 = vsel %vm489, %v1209, 0
      %v1245 = vsel %vm489, %v1210, 0
      %v1248 = vsel %vm489, %v1211, 0
      %v1251 = vsel %vm489, %v1212, 0
      %v1254 = vsel %vm489, %v1213, 0
      %v1257 = vsel %vm489, %v1214, 0
      %v1260 = vsel %vm489, %v1215, 0
      %v1263 = vsel %vm489, %v1216, 0
      %1265 = vmatpush.bf16.msra.mxu0 0
      %1266 = vmatpush.bf16.msra.mxu0 0
      %1267 = vmatpush.bf16.msra.mxu0 0
      %1268 = vmatpush.bf16.msra.mxu0 0
      %1269 = vmatpush.bf16.msra.mxu0 %v1236
      %1270 = vmatpush.bf16.msra.mxu0 %v1235
      %1271 = vmatpush.bf16.msra.mxu0 %v1234
      %1272 = vmatpush.bf16.msra.mxu0 %v1233
      %1273 = vmatmul.bf16.gmra.mxu0 %v1242
      %v1274 = vpop.f32.mrf.mxu0
      %v1275 = vadd.f32 0.0, %v1274
      %v1276 = vpop.f32.mrf.mxu0
      %v1277 = vadd.f32 0.0, %v1276
      %1278 = vmatmul.bf16.gmra.mxu0 %v1245
      %v1279 = vpop.f32.mrf.mxu0
      %v1280 = vadd.f32 0.0, %v1279
      %v1281 = vpop.f32.mrf.mxu0
      %v1282 = vadd.f32 0.0, %v1281
      %1283 = vmatmul.bf16.gmra.mxu0 %v1248
      %v1284 = vpop.f32.mrf.mxu0
      %v1285 = vadd.f32 0.0, %v1284
      %v1286 = vpop.f32.mrf.mxu0
      %v1287 = vadd.f32 0.0, %v1286
      %1288 = vmatmul.bf16.gmra.mxu0 %v1251
      %v1289 = vpop.f32.mrf.mxu0
      %v1290 = vadd.f32 0.0, %v1289
      %v1291 = vpop.f32.mrf.mxu0
      %v1292 = vadd.f32 0.0, %v1291
      %1293 = vmatmul.bf16.gmra.mxu0 %v1254
      %v1294 = vpop.f32.mrf.mxu0
      %v1295 = vadd.f32 0.0, %v1294
      %v1296 = vpop.f32.mrf.mxu0
      %v1297 = vadd.f32 0.0, %v1296
      %1298 = vmatmul.bf16.gmra.mxu0 %v1257
      %v1299 = vpop.f32.mrf.mxu0
      %v1300 = vadd.f32 0.0, %v1299
      %v1301 = vpop.f32.mrf.mxu0
      %v1302 = vadd.f32 0.0, %v1301
      %1303 = vmatmul.bf16.gmra.mxu0 %v1260
      %v1304 = vpop.f32.mrf.mxu0
      %v1305 = vadd.f32 0.0, %v1304
      %v1306 = vpop.f32.mrf.mxu0
      %v1307 = vadd.f32 0.0, %v1306
      %1308 = vmatmul.bf16.gmra.mxu0 %v1263
      %v1309 = vpop.f32.mrf.mxu0
      %v1310 = vadd.f32 0.0, %v1309
      %v1311 = vpop.f32.mrf.mxu0
      %v1312 = vadd.f32 0.0, %v1311
      %1313 = vdwg.mxu0
      %v1314 = vadd.f32 %v974, %v1275
      %v1315 = vadd.f32 %v974, %v1277
      %v1316 = vadd.f32 %v974, %v1280
      %v1317 = vadd.f32 %v974, %v1282
      %v1318 = vadd.f32 %v974, %v1285
      %v1319 = vadd.f32 %v974, %v1287
      %v1320 = vadd.f32 %v974, %v1290
      %v1321 = vadd.f32 %v974, %v1292
      %v1322 = vadd.f32 %v974, %v1295
      %v1323 = vadd.f32 %v974, %v1297
      %v1324 = vadd.f32 %v974, %v1300
      %v1325 = vadd.f32 %v974, %v1302
      %v1326 = vadd.f32 %v974, %v1305
      %v1327 = vadd.f32 %v974, %v1307
      %v1328 = vadd.f32 %v974, %v1310
      %v1329 = vadd.f32 %v974, %v1312
      %v1331 = vshrl.u32 %v1000, 16
      %v1333 = vrot.slane %v1331, 7
      %v1334 = vrot.slane %v1333, 4
      %v1336 = vshrl.u32 %v1001, 16
      %v1338 = vrot.slane %v1336, 7
      %v1339 = vshll.u32 %v1001, 16
      %v1341 = vor.u32 %v1338, %v1339
      %v1342 = vsel %vm1008, %v1334, %v1341
      %v1343 = vrot.slane %v1338, 4
      %v1345 = vshrl.u32 %v1002, 16
      %v1347 = vrot.slane %v1345, 7
      %v1348 = vshll.u32 %v1002, 16
      %v1350 = vor.u32 %v1347, %v1348
      %v1351 = vsel %vm1008, %v1343, %v1350
      %s1352 = scalar_lea.vmem %s3, 96
      %v1353 = vld [vmem:[%s1352] sm:$0xf]
      %v1354 = vld [vmem:[%s1352 + $0x4] sm:$0xf]
      %v1355 = vld [vmem:[%s1352 + $0x8] sm:$0xf]
      %v1356 = vld [vmem:[%s1352 + $0xc] sm:$0xf]
      %v1357 = vld [vmem:[%s1352 + $0x10] sm:$0xf]
      %v1358 = vld [vmem:[%s1352 + $0x14] sm:$0xf]
      %v1359 = vld [vmem:[%s1352 + $0x18] sm:$0xf]
      %v1360 = vld [vmem:[%s1352 + $0x1c] sm:$0xf]
      %v1361 = vunpack.c.l.b16 %v1342
      %v1362 = vunpack.c.l.b16 %v1351
      %v1363 = vpack.c.b16 %v1362, %v1361
      %v1372 = vunpack.c.l.b16 %v1353
      %v1373 = vunpack.c.l.b16 %v1354
      %v1374 = vunpack.c.l.b16 %v1355
      %v1375 = vunpack.c.l.b16 %v1356
      %v1376 = vunpack.c.l.b16 %v1357
      %v1377 = vunpack.c.l.b16 %v1358
      %v1378 = vunpack.c.l.b16 %v1359
      %v1379 = vunpack.c.l.b16 %v1360
      %v1380 = vpack.c.b16 %v1373, %v1372
      %v1381 = vpack.c.b16 %v1375, %v1374
      %v1382 = vpack.c.b16 %v1377, %v1376
      %v1383 = vpack.c.b16 %v1379, %v1378
      %v1389 = vsel %vm489, %v1363, 0
      %1391 = vmatpush.bf16.msra.mxu0 0
      %1392 = vmatpush.bf16.msra.mxu0 0
      %1393 = vmatpush.bf16.msra.mxu0 0
      %1394 = vmatpush.bf16.msra.mxu0 0
      %1395 = vmatpush.bf16.msra.mxu0 %v1383
      %1396 = vmatpush.bf16.msra.mxu0 %v1382
      %1397 = vmatpush.bf16.msra.mxu0 %v1381
      %1398 = vmatpush.bf16.msra.mxu0 %v1380
      %1399 = vmatmul.bf16.gmra.mxu0 %v1245
      %v1400 = vpop.f32.mrf.mxu0
      %v1401 = vadd.f32 0.0, %v1400
      %v1402 = vpop.f32.mrf.mxu0
      %v1403 = vadd.f32 0.0, %v1402
      %1404 = vmatmul.bf16.gmra.mxu0 %v1248
      %v1405 = vpop.f32.mrf.mxu0
      %v1406 = vadd.f32 0.0, %v1405
      %v1407 = vpop.f32.mrf.mxu0
      %v1408 = vadd.f32 0.0, %v1407
      %1409 = vmatmul.bf16.gmra.mxu0 %v1251
      %v1410 = vpop.f32.mrf.mxu0
      %v1411 = vadd.f32 0.0, %v1410
      %v1412 = vpop.f32.mrf.mxu0
      %v1413 = vadd.f32 0.0, %v1412
      %1414 = vmatmul.bf16.gmra.mxu0 %v1254
      %v1415 = vpop.f32.mrf.mxu0
      %v1416 = vadd.f32 0.0, %v1415
      %v1417 = vpop.f32.mrf.mxu0
      %v1418 = vadd.f32 0.0, %v1417
      %1419 = vmatmul.bf16.gmra.mxu0 %v1257
      %v1420 = vpop.f32.mrf.mxu0
      %v1421 = vadd.f32 0.0, %v1420
      %v1422 = vpop.f32.mrf.mxu0
      %v1423 = vadd.f32 0.0, %v1422
      %1424 = vmatmul.bf16.gmra.mxu0 %v1260
      %v1425 = vpop.f32.mrf.mxu0
      %v1426 = vadd.f32 0.0, %v1425
      %v1427 = vpop.f32.mrf.mxu0
      %v1428 = vadd.f32 0.0, %v1427
      %1429 = vmatmul.bf16.gmra.mxu0 %v1263
      %v1430 = vpop.f32.mrf.mxu0
      %v1431 = vadd.f32 0.0, %v1430
      %v1432 = vpop.f32.mrf.mxu0
      %v1433 = vadd.f32 0.0, %v1432
      %1434 = vmatmul.bf16.gmra.mxu0 %v1389
      %v1435 = vpop.f32.mrf.mxu0
      %v1436 = vadd.f32 0.0, %v1435
      %v1437 = vpop.f32.mrf.mxu0
      %v1438 = vadd.f32 0.0, %v1437
      %1439 = vdwg.mxu0
      %v1440 = vadd.f32 %v1314, %v1401
      %v1441 = vadd.f32 %v1315, %v1403
      %v1442 = vadd.f32 %v1316, %v1406
      %v1443 = vadd.f32 %v1317, %v1408
      %v1444 = vadd.f32 %v1318, %v1411
      %v1445 = vadd.f32 %v1319, %v1413
      %v1446 = vadd.f32 %v1320, %v1416
      %v1447 = vadd.f32 %v1321, %v1418
      %v1448 = vadd.f32 %v1322, %v1421
      %v1449 = vadd.f32 %v1323, %v1423
      %v1450 = vadd.f32 %v1324, %v1426
      %v1451 = vadd.f32 %v1325, %v1428
      %v1452 = vadd.f32 %v1326, %v1431
      %v1453 = vadd.f32 %v1327, %v1433
      %v1454 = vadd.f32 %v1328, %v1436
      %v1455 = vadd.f32 %v1329, %v1438
      %v1457 = vshrl.u32 %v1003, 16
      %v1459 = vrot.slane %v1457, 7
      %v1460 = vrot.slane %v1459, 4
      %v1462 = vshrl.u32 %v1004, 16
      %v1464 = vrot.slane %v1462, 7
      %v1465 = vshll.u32 %v1004, 16
      %v1467 = vor.u32 %v1464, %v1465
      %v1468 = vsel %vm1008, %v1460, %v1467
      %v1469 = vrot.slane %v1464, 4
      %v1471 = vshrl.u32 %v1005, 16
      %v1473 = vrot.slane %v1471, 7
      %v1474 = vshll.u32 %v1005, 16
      %v1476 = vor.u32 %v1473, %v1474
      %v1477 = vsel %vm1008, %v1469, %v1476
      %s1478 = scalar_lea.vmem %s3, 192
      %v1479 = vld [vmem:[%s1478] sm:$0xf]
      %v1480 = vld [vmem:[%s1478 + $0x4] sm:$0xf]
      %v1481 = vld [vmem:[%s1478 + $0x8] sm:$0xf]
      %v1482 = vld [vmem:[%s1478 + $0xc] sm:$0xf]
      %v1483 = vld [vmem:[%s1478 + $0x10] sm:$0xf]
      %v1484 = vld [vmem:[%s1478 + $0x14] sm:$0xf]
      %v1485 = vld [vmem:[%s1478 + $0x18] sm:$0xf]
      %v1486 = vld [vmem:[%s1478 + $0x1c] sm:$0xf]
      %v1487 = vunpack.c.l.b16 %v1468
      %v1488 = vunpack.c.l.b16 %v1477
      %v1489 = vpack.c.b16 %v1488, %v1487
      %v1498 = vunpack.c.l.b16 %v1479
      %v1499 = vunpack.c.l.b16 %v1480
      %v1500 = vunpack.c.l.b16 %v1481
      %v1501 = vunpack.c.l.b16 %v1482
      %v1502 = vunpack.c.l.b16 %v1483
      %v1503 = vunpack.c.l.b16 %v1484
      %v1504 = vunpack.c.l.b16 %v1485
      %v1505 = vunpack.c.l.b16 %v1486
      %v1506 = vpack.c.b16 %v1499, %v1498
      %v1507 = vpack.c.b16 %v1501, %v1500
      %v1508 = vpack.c.b16 %v1503, %v1502
      %v1509 = vpack.c.b16 %v1505, %v1504
      %v1515 = vsel %vm489, %v1489, 0
      %1517 = vmatpush.bf16.msra.mxu0 0
      %1518 = vmatpush.bf16.msra.mxu0 0
      %1519 = vmatpush.bf16.msra.mxu0 0
      %1520 = vmatpush.bf16.msra.mxu0 0
      %1521 = vmatpush.bf16.msra.mxu0 %v1509
      %1522 = vmatpush.bf16.msra.mxu0 %v1508
      %1523 = vmatpush.bf16.msra.mxu0 %v1507
      %1524 = vmatpush.bf16.msra.mxu0 %v1506
      %1525 = vmatmul.bf16.gmra.mxu0 %v1248
      %v1526 = vpop.f32.mrf.mxu0
      %v1527 = vadd.f32 0.0, %v1526
      %v1528 = vpop.f32.mrf.mxu0
      %v1529 = vadd.f32 0.0, %v1528
      %1530 = vmatmul.bf16.gmra.mxu0 %v1251
      %v1531 = vpop.f32.mrf.mxu0
      %v1532 = vadd.f32 0.0, %v1531
      %v1533 = vpop.f32.mrf.mxu0
      %v1534 = vadd.f32 0.0, %v1533
      %1535 = vmatmul.bf16.gmra.mxu0 %v1254
      %v1536 = vpop.f32.mrf.mxu0
      %v1537 = vadd.f32 0.0, %v1536
      %v1538 = vpop.f32.mrf.mxu0
      %v1539 = vadd.f32 0.0, %v1538
      %1540 = vmatmul.bf16.gmra.mxu0 %v1257
      %v1541 = vpop.f32.mrf.mxu0
      %v1542 = vadd.f32 0.0, %v1541
      %v1543 = vpop.f32.mrf.mxu0
      %v1544 = vadd.f32 0.0, %v1543
      %1545 = vmatmul.bf16.gmra.mxu0 %v1260
      %v1546 = vpop.f32.mrf.mxu0
      %v1547 = vadd.f32 0.0, %v1546
      %v1548 = vpop.f32.mrf.mxu0
      %v1549 = vadd.f32 0.0, %v1548
      %1550 = vmatmul.bf16.gmra.mxu0 %v1263
      %v1551 = vpop.f32.mrf.mxu0
      %v1552 = vadd.f32 0.0, %v1551
      %v1553 = vpop.f32.mrf.mxu0
      %v1554 = vadd.f32 0.0, %v1553
      %1555 = vmatmul.bf16.gmra.mxu0 %v1389
      %v1556 = vpop.f32.mrf.mxu0
      %v1557 = vadd.f32 0.0, %v1556
      %v1558 = vpop.f32.mrf.mxu0
      %v1559 = vadd.f32 0.0, %v1558
      %1560 = vmatmul.bf16.gmra.mxu0 %v1515
      %v1561 = vpop.f32.mrf.mxu0
      %v1562 = vadd.f32 0.0, %v1561
      %v1563 = vpop.f32.mrf.mxu0
      %v1564 = vadd.f32 0.0, %v1563
      %1565 = vdwg.mxu0
      %v1566 = vadd.f32 %v1440, %v1527
      %v1567 = vadd.f32 %v1441, %v1529
      %v1568 = vadd.f32 %v1442, %v1532
      %v1569 = vadd.f32 %v1443, %v1534
      %v1570 = vadd.f32 %v1444, %v1537
      %v1571 = vadd.f32 %v1445, %v1539
      %v1572 = vadd.f32 %v1446, %v1542
      %v1573 = vadd.f32 %v1447, %v1544
      %v1574 = vadd.f32 %v1448, %v1547
      %v1575 = vadd.f32 %v1449, %v1549
      %v1576 = vadd.f32 %v1450, %v1552
      %v1577 = vadd.f32 %v1451, %v1554
      %v1578 = vadd.f32 %v1452, %v1557
      %v1579 = vadd.f32 %v1453, %v1559
      %v1580 = vadd.f32 %v1454, %v1562
      %v1581 = vadd.f32 %v1455, %v1564
      %s1582 = scalar_lea.vmem %s3, 32
      %v1583 = vld [vmem:[%s1582] sm:$0xf]
      %v1584 = vld [vmem:[%s1582 + $0x4] sm:$0xf]
      %v1585 = vld [vmem:[%s1582 + $0x8] sm:$0xf]
      %v1586 = vld [vmem:[%s1582 + $0xc] sm:$0xf]
      %v1587 = vld [vmem:[%s1582 + $0x10] sm:$0xf]
      %v1588 = vld [vmem:[%s1582 + $0x14] sm:$0xf]
      %v1589 = vld [vmem:[%s1582 + $0x18] sm:$0xf]
      %v1590 = vld [vmem:[%s1582 + $0x1c] sm:$0xf]
      %v1607 = vunpack.c.l.b16 %v977
      %v1608 = vunpack.c.l.b16 %v978
      %v1609 = vunpack.c.l.b16 %v980
      %v1610 = vunpack.c.l.b16 %v981
      %v1611 = vunpack.c.l.b16 %v983
      %v1612 = vunpack.c.l.b16 %v984
      %v1613 = vunpack.c.l.b16 %v986
      %v1614 = vunpack.c.l.b16 %v987
      %v1615 = vunpack.c.l.b16 %v989
      %v1616 = vunpack.c.l.b16 %v990
      %v1617 = vunpack.c.l.b16 %v992
      %v1618 = vunpack.c.l.b16 %v993
      %v1619 = vunpack.c.l.b16 %v995
      %v1620 = vunpack.c.l.b16 %v996
      %v1621 = vunpack.c.l.b16 %v998
      %v1622 = vunpack.c.l.b16 %v999
      %v1623 = vpack.c.b16 %v1608, %v1607
      %v1624 = vpack.c.b16 %v1610, %v1609
      %v1625 = vpack.c.b16 %v1612, %v1611
      %v1626 = vpack.c.b16 %v1614, %v1613
      %v1627 = vpack.c.b16 %v1616, %v1615
      %v1628 = vpack.c.b16 %v1618, %v1617
      %v1629 = vpack.c.b16 %v1620, %v1619
      %v1630 = vpack.c.b16 %v1622, %v1621
      %v1639 = vunpack.c.l.b16 %v1583
      %v1640 = vunpack.c.l.b16 %v1584
      %v1641 = vunpack.c.l.b16 %v1585
      %v1642 = vunpack.c.l.b16 %v1586
      %v1643 = vunpack.c.l.b16 %v1587
      %v1644 = vunpack.c.l.b16 %v1588
      %v1645 = vunpack.c.l.b16 %v1589
      %v1646 = vunpack.c.l.b16 %v1590
      %v1647 = vpack.c.b16 %v1640, %v1639
      %v1648 = vpack.c.b16 %v1642, %v1641
      %v1649 = vpack.c.b16 %v1644, %v1643
      %v1650 = vpack.c.b16 %v1646, %v1645
      %v1656 = vsel %vm489, %v1623, 0
      %v1659 = vsel %vm489, %v1624, 0
      %v1662 = vsel %vm489, %v1625, 0
      %v1665 = vsel %vm489, %v1626, 0
      %v1668 = vsel %vm489, %v1627, 0
      %v1671 = vsel %vm489, %v1628, 0
      %v1674 = vsel %vm489, %v1629, 0
      %v1677 = vsel %vm489, %v1630, 0
      %1679 = vmatpush.bf16.msra.mxu0 0
      %1680 = vmatpush.bf16.msra.mxu0 0
      %1681 = vmatpush.bf16.msra.mxu0 0
      %1682 = vmatpush.bf16.msra.mxu0 0
      %1683 = vmatpush.bf16.msra.mxu0 %v1650
      %1684 = vmatpush.bf16.msra.mxu0 %v1649
      %1685 = vmatpush.bf16.msra.mxu0 %v1648
      %1686 = vmatpush.bf16.msra.mxu0 %v1647
      %1687 = vmatmul.bf16.gmra.mxu0 %v1656
      %v1688 = vpop.f32.mrf.mxu0
      %v1689 = vadd.f32 0.0, %v1688
      %v1690 = vpop.f32.mrf.mxu0
      %v1691 = vadd.f32 0.0, %v1690
      %1692 = vmatmul.bf16.gmra.mxu0 %v1659
      %v1693 = vpop.f32.mrf.mxu0
      %v1694 = vadd.f32 0.0, %v1693
      %v1695 = vpop.f32.mrf.mxu0
      %v1696 = vadd.f32 0.0, %v1695
      %1697 = vmatmul.bf16.gmra.mxu0 %v1662
      %v1698 = vpop.f32.mrf.mxu0
      %v1699 = vadd.f32 0.0, %v1698
      %v1700 = vpop.f32.mrf.mxu0
      %v1701 = vadd.f32 0.0, %v1700
      %1702 = vmatmul.bf16.gmra.mxu0 %v1665
      %v1703 = vpop.f32.mrf.mxu0
      %v1704 = vadd.f32 0.0, %v1703
      %v1705 = vpop.f32.mrf.mxu0
      %v1706 = vadd.f32 0.0, %v1705
      %1707 = vmatmul.bf16.gmra.mxu0 %v1668
      %v1708 = vpop.f32.mrf.mxu0
      %v1709 = vadd.f32 0.0, %v1708
      %v1710 = vpop.f32.mrf.mxu0
      %v1711 = vadd.f32 0.0, %v1710
      %1712 = vmatmul.bf16.gmra.mxu0 %v1671
      %v1713 = vpop.f32.mrf.mxu0
      %v1714 = vadd.f32 0.0, %v1713
      %v1715 = vpop.f32.mrf.mxu0
      %v1716 = vadd.f32 0.0, %v1715
      %1717 = vmatmul.bf16.gmra.mxu0 %v1674
      %v1718 = vpop.f32.mrf.mxu0
      %v1719 = vadd.f32 0.0, %v1718
      %v1720 = vpop.f32.mrf.mxu0
      %v1721 = vadd.f32 0.0, %v1720
      %1722 = vmatmul.bf16.gmra.mxu0 %v1677
      %v1723 = vpop.f32.mrf.mxu0
      %v1724 = vadd.f32 0.0, %v1723
      %v1725 = vpop.f32.mrf.mxu0
      %v1726 = vadd.f32 0.0, %v1725
      %1727 = vdwg.mxu0
      %v1728 = vadd.f32 %v1566, %v1689
      %v1729 = vadd.f32 %v1567, %v1691
      %v1730 = vadd.f32 %v1568, %v1694
      %v1731 = vadd.f32 %v1569, %v1696
      %v1732 = vadd.f32 %v1570, %v1699
      %v1733 = vadd.f32 %v1571, %v1701
      %v1734 = vadd.f32 %v1572, %v1704
      %v1735 = vadd.f32 %v1573, %v1706
      %v1736 = vadd.f32 %v1574, %v1709
      %v1737 = vadd.f32 %v1575, %v1711
      %v1738 = vadd.f32 %v1576, %v1714
      %v1739 = vadd.f32 %v1577, %v1716
      %v1740 = vadd.f32 %v1578, %v1719
      %v1741 = vadd.f32 %v1579, %v1721
      %v1742 = vadd.f32 %v1580, %v1724
      %v1743 = vadd.f32 %v1581, %v1726
      %s1744 = scalar_lea.vmem %s3, 128
      %v1745 = vld [vmem:[%s1744] sm:$0xf]
      %v1746 = vld [vmem:[%s1744 + $0x4] sm:$0xf]
      %v1747 = vld [vmem:[%s1744 + $0x8] sm:$0xf]
      %v1748 = vld [vmem:[%s1744 + $0xc] sm:$0xf]
      %v1749 = vld [vmem:[%s1744 + $0x10] sm:$0xf]
      %v1750 = vld [vmem:[%s1744 + $0x14] sm:$0xf]
      %v1751 = vld [vmem:[%s1744 + $0x18] sm:$0xf]
      %v1752 = vld [vmem:[%s1744 + $0x1c] sm:$0xf]
      %v1755 = vunpack.c.l.b16 %v1001
      %v1756 = vunpack.c.l.b16 %v1002
      %v1757 = vpack.c.b16 %v1756, %v1755
      %v1766 = vunpack.c.l.b16 %v1745
      %v1767 = vunpack.c.l.b16 %v1746
      %v1768 = vunpack.c.l.b16 %v1747
      %v1769 = vunpack.c.l.b16 %v1748
      %v1770 = vunpack.c.l.b16 %v1749
      %v1771 = vunpack.c.l.b16 %v1750
      %v1772 = vunpack.c.l.b16 %v1751
      %v1773 = vunpack.c.l.b16 %v1752
      %v1774 = vpack.c.b16 %v1767, %v1766
      %v1775 = vpack.c.b16 %v1769, %v1768
      %v1776 = vpack.c.b16 %v1771, %v1770
      %v1777 = vpack.c.b16 %v1773, %v1772
      %v1783 = vsel %vm489, %v1757, 0
      %1785 = vmatpush.bf16.msra.mxu0 0
      %1786 = vmatpush.bf16.msra.mxu0 0
      %1787 = vmatpush.bf16.msra.mxu0 0
      %1788 = vmatpush.bf16.msra.mxu0 0
      %1789 = vmatpush.bf16.msra.mxu0 %v1777
      %1790 = vmatpush.bf16.msra.mxu0 %v1776
      %1791 = vmatpush.bf16.msra.mxu0 %v1775
      %1792 = vmatpush.bf16.msra.mxu0 %v1774
      %1793 = vmatmul.bf16.gmra.mxu0 %v1659
      %v1794 = vpop.f32.mrf.mxu0
      %v1795 = vadd.f32 0.0, %v1794
      %v1796 = vpop.f32.mrf.mxu0
      %v1797 = vadd.f32 0.0, %v1796
      %1798 = vmatmul.bf16.gmra.mxu0 %v1662
      %v1799 = vpop.f32.mrf.mxu0
      %v1800 = vadd.f32 0.0, %v1799
      %v1801 = vpop.f32.mrf.mxu0
      %v1802 = vadd.f32 0.0, %v1801
      %1803 = vmatmul.bf16.gmra.mxu0 %v1665
      %v1804 = vpop.f32.mrf.mxu0
      %v1805 = vadd.f32 0.0, %v1804
      %v1806 = vpop.f32.mrf.mxu0
      %v1807 = vadd.f32 0.0, %v1806
      %1808 = vmatmul.bf16.gmra.mxu0 %v1668
      %v1809 = vpop.f32.mrf.mxu0
      %v1810 = vadd.f32 0.0, %v1809
      %v1811 = vpop.f32.mrf.mxu0
      %v1812 = vadd.f32 0.0, %v1811
      %1813 = vmatmul.bf16.gmra.mxu0 %v1671
      %v1814 = vpop.f32.mrf.mxu0
      %v1815 = vadd.f32 0.0, %v1814
      %v1816 = vpop.f32.mrf.mxu0
      %v1817 = vadd.f32 0.0, %v1816
      %1818 = vmatmul.bf16.gmra.mxu0 %v1674
      %v1819 = vpop.f32.mrf.mxu0
      %v1820 = vadd.f32 0.0, %v1819
      %v1821 = vpop.f32.mrf.mxu0
      %v1822 = vadd.f32 0.0, %v1821
      %1823 = vmatmul.bf16.gmra.mxu0 %v1677
      %v1824 = vpop.f32.mrf.mxu0
      %v1825 = vadd.f32 0.0, %v1824
      %v1826 = vpop.f32.mrf.mxu0
      %v1827 = vadd.f32 0.0, %v1826
      %1828 = vmatmul.bf16.gmra.mxu0 %v1783
      %v1829 = vpop.f32.mrf.mxu0
      %v1830 = vadd.f32 0.0, %v1829
      %v1831 = vpop.f32.mrf.mxu0
      %v1832 = vadd.f32 0.0, %v1831
      %1833 = vdwg.mxu0
      %v1834 = vadd.f32 %v1728, %v1795
      %v1835 = vadd.f32 %v1729, %v1797
      %v1836 = vadd.f32 %v1730, %v1800
      %v1837 = vadd.f32 %v1731, %v1802
      %v1838 = vadd.f32 %v1732, %v1805
      %v1839 = vadd.f32 %v1733, %v1807
      %v1840 = vadd.f32 %v1734, %v1810
      %v1841 = vadd.f32 %v1735, %v1812
      %v1842 = vadd.f32 %v1736, %v1815
      %v1843 = vadd.f32 %v1737, %v1817
      %v1844 = vadd.f32 %v1738, %v1820
      %v1845 = vadd.f32 %v1739, %v1822
      %v1846 = vadd.f32 %v1740, %v1825
      %v1847 = vadd.f32 %v1741, %v1827
      %v1848 = vadd.f32 %v1742, %v1830
      %v1849 = vadd.f32 %v1743, %v1832
      %s1850 = scalar_lea.vmem %s3, 224
      %v1851 = vld [vmem:[%s1850] sm:$0xf]
      %v1852 = vld [vmem:[%s1850 + $0x4] sm:$0xf]
      %v1853 = vld [vmem:[%s1850 + $0x8] sm:$0xf]
      %v1854 = vld [vmem:[%s1850 + $0xc] sm:$0xf]
      %v1855 = vld [vmem:[%s1850 + $0x10] sm:$0xf]
      %v1856 = vld [vmem:[%s1850 + $0x14] sm:$0xf]
      %v1857 = vld [vmem:[%s1850 + $0x18] sm:$0xf]
      %v1858 = vld [vmem:[%s1850 + $0x1c] sm:$0xf]
      %v1861 = vunpack.c.l.b16 %v1004
      %v1862 = vunpack.c.l.b16 %v1005
      %v1863 = vpack.c.b16 %v1862, %v1861
      %v1872 = vunpack.c.l.b16 %v1851
      %v1873 = vunpack.c.l.b16 %v1852
      %v1874 = vunpack.c.l.b16 %v1853
      %v1875 = vunpack.c.l.b16 %v1854
      %v1876 = vunpack.c.l.b16 %v1855
      %v1877 = vunpack.c.l.b16 %v1856
      %v1878 = vunpack.c.l.b16 %v1857
      %v1879 = vunpack.c.l.b16 %v1858
      %v1880 = vpack.c.b16 %v1873, %v1872
      %v1881 = vpack.c.b16 %v1875, %v1874
      %v1882 = vpack.c.b16 %v1877, %v1876
      %v1883 = vpack.c.b16 %v1879, %v1878
      %v1889 = vsel %vm489, %v1863, 0
      %1891 = vmatpush.bf16.msra.mxu0 0
      %1892 = vmatpush.bf16.msra.mxu0 0
      %1893 = vmatpush.bf16.msra.mxu0 0
      %1894 = vmatpush.bf16.msra.mxu0 0
      %1895 = vmatpush.bf16.msra.mxu0 %v1883
      %1896 = vmatpush.bf16.msra.mxu0 %v1882
      %1897 = vmatpush.bf16.msra.mxu0 %v1881
      %1898 = vmatpush.bf16.msra.mxu0 %v1880
      %1899 = vmatmul.bf16.gmra.mxu0 %v1662
      %v1900 = vpop.f32.mrf.mxu0
      %v1901 = vadd.f32 0.0, %v1900
      %v1902 = vpop.f32.mrf.mxu0
      %v1903 = vadd.f32 0.0, %v1902
      %1904 = vmatmul.bf16.gmra.mxu0 %v1665
      %v1905 = vpop.f32.mrf.mxu0
      %v1906 = vadd.f32 0.0, %v1905
      %v1907 = vpop.f32.mrf.mxu0
      %v1908 = vadd.f32 0.0, %v1907
      %1909 = vmatmul.bf16.gmra.mxu0 %v1668
      %v1910 = vpop.f32.mrf.mxu0
      %v1911 = vadd.f32 0.0, %v1910
      %v1912 = vpop.f32.mrf.mxu0
      %v1913 = vadd.f32 0.0, %v1912
      %1914 = vmatmul.bf16.gmra.mxu0 %v1671
      %v1915 = vpop.f32.mrf.mxu0
      %v1916 = vadd.f32 0.0, %v1915
      %v1917 = vpop.f32.mrf.mxu0
      %v1918 = vadd.f32 0.0, %v1917
      %1919 = vmatmul.bf16.gmra.mxu0 %v1674
      %v1920 = vpop.f32.mrf.mxu0
      %v1921 = vadd.f32 0.0, %v1920
      %v1922 = vpop.f32.mrf.mxu0
      %v1923 = vadd.f32 0.0, %v1922
      %1924 = vmatmul.bf16.gmra.mxu0 %v1677
      %v1925 = vpop.f32.mrf.mxu0
      %v1926 = vadd.f32 0.0, %v1925
      %v1927 = vpop.f32.mrf.mxu0
      %v1928 = vadd.f32 0.0, %v1927
      %1929 = vmatmul.bf16.gmra.mxu0 %v1783
      %v1930 = vpop.f32.mrf.mxu0
      %v1931 = vadd.f32 0.0, %v1930
      %v1932 = vpop.f32.mrf.mxu0
      %v1933 = vadd.f32 0.0, %v1932
      %1934 = vmatmul.bf16.gmra.mxu0 %v1889
      %v1935 = vpop.f32.mrf.mxu0
      %v1936 = vadd.f32 0.0, %v1935
      %v1937 = vpop.f32.mrf.mxu0
      %v1938 = vadd.f32 0.0, %v1937
      %1939 = vdwg.mxu0
      %v1940 = vadd.f32 %v1834, %v1901
      %v1941 = vadd.f32 %v1835, %v1903
      %v1942 = vadd.f32 %v1836, %v1906
      %v1943 = vadd.f32 %v1837, %v1908
      %v1944 = vadd.f32 %v1838, %v1911
      %v1945 = vadd.f32 %v1839, %v1913
      %v1946 = vadd.f32 %v1840, %v1916
      %v1947 = vadd.f32 %v1841, %v1918
      %v1948 = vadd.f32 %v1842, %v1921
      %v1949 = vadd.f32 %v1843, %v1923
      %v1950 = vadd.f32 %v1844, %v1926
      %v1951 = vadd.f32 %v1845, %v1928
      %v1952 = vadd.f32 %v1846, %v1931
      %v1953 = vadd.f32 %v1847, %v1933
      %v1954 = vadd.f32 %v1848, %v1936
      %v1955 = vadd.f32 %v1849, %v1938
      %v1956 = vld [vmem:[#allocation2 + $0x8] sm:$0xf]
      %v1957 = vld [vmem:[#allocation2 + $0xc] sm:$0xf]
      %v1958 = vld [vmem:[#allocation2 + $0x10] sm:$0x1]
      %v1959 = vld [vmem:[#allocation2 + $0x20] sm:$0xf]
      %v1960 = vld [vmem:[#allocation2 + $0x24] sm:$0xf]
      %v1961 = vld [vmem:[#allocation2 + $0x28] sm:$0x1]
      %v1962 = vld [vmem:[#allocation2 + $0x38] sm:$0xf]
      %v1963 = vld [vmem:[#allocation2 + $0x3c] sm:$0xf]
      %v1964 = vld [vmem:[#allocation2 + $0x40] sm:$0x1]
      %v1965 = vld [vmem:[#allocation2 + $0x50] sm:$0xf]
      %v1966 = vld [vmem:[#allocation2 + $0x54] sm:$0xf]
      %v1967 = vld [vmem:[#allocation2 + $0x58] sm:$0x1]
      %v1968 = vld [vmem:[#allocation2 + $0x68] sm:$0xf]
      %v1969 = vld [vmem:[#allocation2 + $0x6c] sm:$0xf]
      %v1970 = vld [vmem:[#allocation2 + $0x70] sm:$0x1]
      %v1971 = vld [vmem:[#allocation2 + $0x80] sm:$0xf]
      %v1972 = vld [vmem:[#allocation2 + $0x84] sm:$0xf]
      %v1973 = vld [vmem:[#allocation2 + $0x88] sm:$0x1]
      %v1974 = vld [vmem:[#allocation2 + $0x98] sm:$0xf]
      %v1975 = vld [vmem:[#allocation2 + $0x9c] sm:$0xf]
      %v1976 = vld [vmem:[#allocation2 + $0xa0] sm:$0x1]
      %v1977 = vld [vmem:[#allocation2 + $0xb0] sm:$0xf]
      %v1978 = vld [vmem:[#allocation2 + $0xb4] sm:$0xf]
      %v1979 = vld [vmem:[#allocation2 + $0xb8] sm:$0x1]
      %v1980 = vld [vmem:[#allocation2 + $0xc8] sm:$0xf]
      %v1981 = vld [vmem:[#allocation2 + $0xcc] sm:$0xf]
      %v1982 = vld [vmem:[#allocation2 + $0xd0] sm:$0x1]
      %v1983 = vld [vmem:[#allocation2 + $0xe0] sm:$0xf]
      %v1984 = vld [vmem:[#allocation2 + $0xe4] sm:$0xf]
      %v1985 = vld [vmem:[#allocation2 + $0xe8] sm:$0x1]
      %vm1986 = vsmask.f32 3328
      %vm1987 = vsmask.f32 7440
      %vm1988 = vmor %vm1986, %vm1987
      %v1990 = vshrl.u32 %v1956, 16
      %v1992 = vrot.slane %v1990, 4
      %v1993 = vshll.u32 %v1956, 16
      %v1995 = vrot.slane %v1993, 5
      %v1996 = vor.u32 %v1992, %v1995
      %v1997 = vrot.slane %v1996, 4
      %v1999 = vshll.u32 %v1957, 16
      %v2001 = vrot.slane %v1999, 5
      %v2002 = vsel %vm1988, %v1997, %v2001
      %v2003 = vshrl.u32 %v1957, 16
      %v2005 = vrot.slane %v2003, 4
      %v2006 = vor.u32 %v2005, %v2001
      %v2007 = vrot.slane %v2006, 4
      %v2009 = vshll.u32 %v1958, 16
      %v2011 = vrot.slane %v2009, 5
      %v2012 = vsel %vm1988, %v2007, %v2011
      %v2014 = vshrl.u32 %v1959, 16
      %v2016 = vrot.slane %v2014, 4
      %v2017 = vshll.u32 %v1959, 16
      %v2019 = vrot.slane %v2017, 5
      %v2020 = vor.u32 %v2016, %v2019
      %v2021 = vrot.slane %v2020, 4
      %v2023 = vshll.u32 %v1960, 16
      %v2025 = vrot.slane %v2023, 5
      %v2026 = vsel %vm1988, %v2021, %v2025
      %v2027 = vshrl.u32 %v1960, 16
      %v2029 = vrot.slane %v2027, 4
      %v2030 = vor.u32 %v2029, %v2025
      %v2031 = vrot.slane %v2030, 4
      %v2033 = vshll.u32 %v1961, 16
      %v2035 = vrot.slane %v2033, 5
      %v2036 = vsel %vm1988, %v2031, %v2035
      %v2038 = vshrl.u32 %v1962, 16
      %v2040 = vrot.slane %v2038, 4
      %v2041 = vshll.u32 %v1962, 16
      %v2043 = vrot.slane %v2041, 5
      %v2044 = vor.u32 %v2040, %v2043
      %v2045 = vrot.slane %v2044, 4
      %v2047 = vshll.u32 %v1963, 16
      %v2049 = vrot.slane %v2047, 5
      %v2050 = vsel %vm1988, %v2045, %v2049
      %v2051 = vshrl.u32 %v1963, 16
      %v2053 = vrot.slane %v2051, 4
      %v2054 = vor.u32 %v2053, %v2049
      %v2055 = vrot.slane %v2054, 4
      %v2057 = vshll.u32 %v1964, 16
      %v2059 = vrot.slane %v2057, 5
      %v2060 = vsel %vm1988, %v2055, %v2059
      %v2062 = vshrl.u32 %v1965, 16
      %v2064 = vrot.slane %v2062, 4
      %v2065 = vshll.u32 %v1965, 16
      %v2067 = vrot.slane %v2065, 5
      %v2068 = vor.u32 %v2064, %v2067
      %v2069 = vrot.slane %v2068, 4
      %v2071 = vshll.u32 %v1966, 16
      %v2073 = vrot.slane %v2071, 5
      %v2074 = vsel %vm1988, %v2069, %v2073
      %v2075 = vshrl.u32 %v1966, 16
      %v2077 = vrot.slane %v2075, 4
      %v2078 = vor.u32 %v2077, %v2073
      %v2079 = vrot.slane %v2078, 4
      %v2081 = vshll.u32 %v1967, 16
      %v2083 = vrot.slane %v2081, 5
      %v2084 = vsel %vm1988, %v2079, %v2083
      %v2086 = vshrl.u32 %v1968, 16
      %v2088 = vrot.slane %v2086, 4
      %v2089 = vshll.u32 %v1968, 16
      %v2091 = vrot.slane %v2089, 5
      %v2092 = vor.u32 %v2088, %v2091
      %v2093 = vrot.slane %v2092, 4
      %v2095 = vshll.u32 %v1969, 16
      %v2097 = vrot.slane %v2095, 5
      %v2098 = vsel %vm1988, %v2093, %v2097
      %v2099 = vshrl.u32 %v1969, 16
      %v2101 = vrot.slane %v2099, 4
      %v2102 = vor.u32 %v2101, %v2097
      %v2103 = vrot.slane %v2102, 4
      %v2105 = vshll.u32 %v1970, 16
      %v2107 = vrot.slane %v2105, 5
      %v2108 = vsel %vm1988, %v2103, %v2107
      %v2110 = vshrl.u32 %v1971, 16
      %v2112 = vrot.slane %v2110, 4
      %v2113 = vshll.u32 %v1971, 16
      %v2115 = vrot.slane %v2113, 5
      %v2116 = vor.u32 %v2112, %v2115
      %v2117 = vrot.slane %v2116, 4
      %v2119 = vshll.u32 %v1972, 16
      %v2121 = vrot.slane %v2119, 5
      %v2122 = vsel %vm1988, %v2117, %v2121
      %v2123 = vshrl.u32 %v1972, 16
      %v2125 = vrot.slane %v2123, 4
      %v2126 = vor.u32 %v2125, %v2121
      %v2127 = vrot.slane %v2126, 4
      %v2129 = vshll.u32 %v1973, 16
      %v2131 = vrot.slane %v2129, 5
      %v2132 = vsel %vm1988, %v2127, %v2131
      %v2134 = vshrl.u32 %v1974, 16
      %v2136 = vrot.slane %v2134, 4
      %v2137 = vshll.u32 %v1974, 16
      %v2139 = vrot.slane %v2137, 5
      %v2140 = vor.u32 %v2136, %v2139
      %v2141 = vrot.slane %v2140, 4
      %v2143 = vshll.u32 %v1975, 16
      %v2145 = vrot.slane %v2143, 5
      %v2146 = vsel %vm1988, %v2141, %v2145
      %v2147 = vshrl.u32 %v1975, 16
      %v2149 = vrot.slane %v2147, 4
      %v2150 = vor.u32 %v2149, %v2145
      %v2151 = vrot.slane %v2150, 4
      %v2153 = vshll.u32 %v1976, 16
      %v2155 = vrot.slane %v2153, 5
      %v2156 = vsel %vm1988, %v2151, %v2155
      %v2158 = vshrl.u32 %v1977, 16
      %v2160 = vrot.slane %v2158, 4
      %v2161 = vshll.u32 %v1977, 16
      %v2163 = vrot.slane %v2161, 5
      %v2164 = vor.u32 %v2160, %v2163
      %v2165 = vrot.slane %v2164, 4
      %v2167 = vshll.u32 %v1978, 16
      %v2169 = vrot.slane %v2167, 5
      %v2170 = vsel %vm1988, %v2165, %v2169
      %v2171 = vshrl.u32 %v1978, 16
      %v2173 = vrot.slane %v2171, 4
      %v2174 = vor.u32 %v2173, %v2169
      %v2175 = vrot.slane %v2174, 4
      %v2177 = vshll.u32 %v1979, 16
      %v2179 = vrot.slane %v2177, 5
      %v2180 = vsel %vm1988, %v2175, %v2179
      %s2181 = scalar_lea.vmem %s3, 64
      %v2182 = vld [vmem:[%s2181] sm:$0xf]
      %v2183 = vld [vmem:[%s2181 + $0x4] sm:$0xf]
      %v2184 = vld [vmem:[%s2181 + $0x8] sm:$0xf]
      %v2185 = vld [vmem:[%s2181 + $0xc] sm:$0xf]
      %v2186 = vld [vmem:[%s2181 + $0x10] sm:$0xf]
      %v2187 = vld [vmem:[%s2181 + $0x14] sm:$0xf]
      %v2188 = vld [vmem:[%s2181 + $0x18] sm:$0xf]
      %v2189 = vld [vmem:[%s2181 + $0x1c] sm:$0xf]
      %v2190 = vunpack.c.l.b16 %v2002
      %v2191 = vunpack.c.l.b16 %v2012
      %v2192 = vunpack.c.l.b16 %v2026
      %v2193 = vunpack.c.l.b16 %v2036
      %v2194 = vunpack.c.l.b16 %v2050
      %v2195 = vunpack.c.l.b16 %v2060
      %v2196 = vunpack.c.l.b16 %v2074
      %v2197 = vunpack.c.l.b16 %v2084
      %v2198 = vunpack.c.l.b16 %v2098
      %v2199 = vunpack.c.l.b16 %v2108
      %v2200 = vunpack.c.l.b16 %v2122
      %v2201 = vunpack.c.l.b16 %v2132
      %v2202 = vunpack.c.l.b16 %v2146
      %v2203 = vunpack.c.l.b16 %v2156
      %v2204 = vunpack.c.l.b16 %v2170
      %v2205 = vunpack.c.l.b16 %v2180
      %v2206 = vpack.c.b16 %v2191, %v2190
      %v2207 = vpack.c.b16 %v2193, %v2192
      %v2208 = vpack.c.b16 %v2195, %v2194
      %v2209 = vpack.c.b16 %v2197, %v2196
      %v2210 = vpack.c.b16 %v2199, %v2198
      %v2211 = vpack.c.b16 %v2201, %v2200
      %v2212 = vpack.c.b16 %v2203, %v2202
      %v2213 = vpack.c.b16 %v2205, %v2204
      %v2222 = vunpack.c.l.b16 %v2182
      %v2223 = vunpack.c.l.b16 %v2183
      %v2224 = vunpack.c.l.b16 %v2184
      %v2225 = vunpack.c.l.b16 %v2185
      %v2226 = vunpack.c.l.b16 %v2186
      %v2227 = vunpack.c.l.b16 %v2187
      %v2228 = vunpack.c.l.b16 %v2188
      %v2229 = vunpack.c.l.b16 %v2189
      %v2230 = vpack.c.b16 %v2223, %v2222
      %v2231 = vpack.c.b16 %v2225, %v2224
      %v2232 = vpack.c.b16 %v2227, %v2226
      %v2233 = vpack.c.b16 %v2229, %v2228
      %v2239 = vsel %vm489, %v2206, 0
      %v2242 = vsel %vm489, %v2207, 0
      %v2245 = vsel %vm489, %v2208, 0
      %v2248 = vsel %vm489, %v2209, 0
      %v2251 = vsel %vm489, %v2210, 0
      %v2254 = vsel %vm489, %v2211, 0
      %v2257 = vsel %vm489, %v2212, 0
      %v2260 = vsel %vm489, %v2213, 0
      %2262 = vmatpush.bf16.msra.mxu0 0
      %2263 = vmatpush.bf16.msra.mxu0 0
      %2264 = vmatpush.bf16.msra.mxu0 0
      %2265 = vmatpush.bf16.msra.mxu0 0
      %2266 = vmatpush.bf16.msra.mxu0 %v2233
      %2267 = vmatpush.bf16.msra.mxu0 %v2232
      %2268 = vmatpush.bf16.msra.mxu0 %v2231
      %2269 = vmatpush.bf16.msra.mxu0 %v2230
      %2270 = vmatmul.bf16.gmra.mxu0 %v2239
      %v2271 = vpop.f32.mrf.mxu0
      %v2272 = vadd.f32 0.0, %v2271
      %v2273 = vpop.f32.mrf.mxu0
      %v2274 = vadd.f32 0.0, %v2273
      %2275 = vmatmul.bf16.gmra.mxu0 %v2242
      %v2276 = vpop.f32.mrf.mxu0
      %v2277 = vadd.f32 0.0, %v2276
      %v2278 = vpop.f32.mrf.mxu0
      %v2279 = vadd.f32 0.0, %v2278
      %2280 = vmatmul.bf16.gmra.mxu0 %v2245
      %v2281 = vpop.f32.mrf.mxu0
      %v2282 = vadd.f32 0.0, %v2281
      %v2283 = vpop.f32.mrf.mxu0
      %v2284 = vadd.f32 0.0, %v2283
      %2285 = vmatmul.bf16.gmra.mxu0 %v2248
      %v2286 = vpop.f32.mrf.mxu0
      %v2287 = vadd.f32 0.0, %v2286
      %v2288 = vpop.f32.mrf.mxu0
      %v2289 = vadd.f32 0.0, %v2288
      %2290 = vmatmul.bf16.gmra.mxu0 %v2251
      %v2291 = vpop.f32.mrf.mxu0
      %v2292 = vadd.f32 0.0, %v2291
      %v2293 = vpop.f32.mrf.mxu0
      %v2294 = vadd.f32 0.0, %v2293
      %2295 = vmatmul.bf16.gmra.mxu0 %v2254
      %v2296 = vpop.f32.mrf.mxu0
      %v2297 = vadd.f32 0.0, %v2296
      %v2298 = vpop.f32.mrf.mxu0
      %v2299 = vadd.f32 0.0, %v2298
      %2300 = vmatmul.bf16.gmra.mxu0 %v2257
      %v2301 = vpop.f32.mrf.mxu0
      %v2302 = vadd.f32 0.0, %v2301
      %v2303 = vpop.f32.mrf.mxu0
      %v2304 = vadd.f32 0.0, %v2303
      %2305 = vmatmul.bf16.gmra.mxu0 %v2260
      %v2306 = vpop.f32.mrf.mxu0
      %v2307 = vadd.f32 0.0, %v2306
      %v2308 = vpop.f32.mrf.mxu0
      %v2309 = vadd.f32 0.0, %v2308
      %2310 = vdwg.mxu0
      %v2311 = vadd.f32 %v1940, %v2272
      %v2312 = vadd.f32 %v1941, %v2274
      %v2313 = vadd.f32 %v1942, %v2277
      %v2314 = vadd.f32 %v1943, %v2279
      %v2315 = vadd.f32 %v1944, %v2282
      %v2316 = vadd.f32 %v1945, %v2284
      %v2317 = vadd.f32 %v1946, %v2287
      %v2318 = vadd.f32 %v1947, %v2289
      %v2319 = vadd.f32 %v1948, %v2292
      %v2320 = vadd.f32 %v1949, %v2294
      %v2321 = vadd.f32 %v1950, %v2297
      %v2322 = vadd.f32 %v1951, %v2299
      %v2323 = vadd.f32 %v1952, %v2302
      %v2324 = vadd.f32 %v1953, %v2304
      %v2325 = vadd.f32 %v1954, %v2307
      %v2326 = vadd.f32 %v1955, %v2309
      %v2328 = vshrl.u32 %v1980, 16
      %v2330 = vrot.slane %v2328, 4
      %v2331 = vshll.u32 %v1980, 16
      %v2333 = vrot.slane %v2331, 5
      %v2334 = vor.u32 %v2330, %v2333
      %v2335 = vrot.slane %v2334, 4
      %v2337 = vshll.u32 %v1981, 16
      %v2339 = vrot.slane %v2337, 5
      %v2340 = vsel %vm1988, %v2335, %v2339
      %v2341 = vshrl.u32 %v1981, 16
      %v2343 = vrot.slane %v2341, 4
      %v2344 = vor.u32 %v2343, %v2339
      %v2345 = vrot.slane %v2344, 4
      %v2347 = vshll.u32 %v1982, 16
      %v2349 = vrot.slane %v2347, 5
      %v2350 = vsel %vm1988, %v2345, %v2349
      %s2351 = scalar_lea.vmem %s3, 160
      %v2352 = vld [vmem:[%s2351] sm:$0xf]
      %v2353 = vld [vmem:[%s2351 + $0x4] sm:$0xf]
      %v2354 = vld [vmem:[%s2351 + $0x8] sm:$0xf]
      %v2355 = vld [vmem:[%s2351 + $0xc] sm:$0xf]
      %v2356 = vld [vmem:[%s2351 + $0x10] sm:$0xf]
      %v2357 = vld [vmem:[%s2351 + $0x14] sm:$0xf]
      %v2358 = vld [vmem:[%s2351 + $0x18] sm:$0xf]
      %v2359 = vld [vmem:[%s2351 + $0x1c] sm:$0xf]
      %v2360 = vunpack.c.l.b16 %v2340
      %v2361 = vunpack.c.l.b16 %v2350
      %v2362 = vpack.c.b16 %v2361, %v2360
      %v2371 = vunpack.c.l.b16 %v2352
      %v2372 = vunpack.c.l.b16 %v2353
      %v2373 = vunpack.c.l.b16 %v2354
      %v2374 = vunpack.c.l.b16 %v2355
      %v2375 = vunpack.c.l.b16 %v2356
      %v2376 = vunpack.c.l.b16 %v2357
      %v2377 = vunpack.c.l.b16 %v2358
      %v2378 = vunpack.c.l.b16 %v2359
      %v2379 = vpack.c.b16 %v2372, %v2371
      %v2380 = vpack.c.b16 %v2374, %v2373
      %v2381 = vpack.c.b16 %v2376, %v2375
      %v2382 = vpack.c.b16 %v2378, %v2377
      %v2388 = vsel %vm489, %v2362, 0
      %2390 = vmatpush.bf16.msra.mxu0 0
      %2391 = vmatpush.bf16.msra.mxu0 0
      %2392 = vmatpush.bf16.msra.mxu0 0
      %2393 = vmatpush.bf16.msra.mxu0 0
      %2394 = vmatpush.bf16.msra.mxu0 %v2382
      %2395 = vmatpush.bf16.msra.mxu0 %v2381
      %2396 = vmatpush.bf16.msra.mxu0 %v2380
      %2397 = vmatpush.bf16.msra.mxu0 %v2379
      %2398 = vmatmul.bf16.gmra.mxu0 %v2242
      %v2399 = vpop.f32.mrf.mxu0
      %v2400 = vadd.f32 0.0, %v2399
      %v2401 = vpop.f32.mrf.mxu0
      %v2402 = vadd.f32 0.0, %v2401
      %2403 = vmatmul.bf16.gmra.mxu0 %v2245
      %v2404 = vpop.f32.mrf.mxu0
      %v2405 = vadd.f32 0.0, %v2404
      %v2406 = vpop.f32.mrf.mxu0
      %v2407 = vadd.f32 0.0, %v2406
      %2408 = vmatmul.bf16.gmra.mxu0 %v2248
      %v2409 = vpop.f32.mrf.mxu0
      %v2410 = vadd.f32 0.0, %v2409
      %v2411 = vpop.f32.mrf.mxu0
      %v2412 = vadd.f32 0.0, %v2411
      %2413 = vmatmul.bf16.gmra.mxu0 %v2251
      %v2414 = vpop.f32.mrf.mxu0
      %v2415 = vadd.f32 0.0, %v2414
      %v2416 = vpop.f32.mrf.mxu0
      %v2417 = vadd.f32 0.0, %v2416
      %2418 = vmatmul.bf16.gmra.mxu0 %v2254
      %v2419 = vpop.f32.mrf.mxu0
      %v2420 = vadd.f32 0.0, %v2419
      %v2421 = vpop.f32.mrf.mxu0
      %v2422 = vadd.f32 0.0, %v2421
      %2423 = vmatmul.bf16.gmra.mxu0 %v2257
      %v2424 = vpop.f32.mrf.mxu0
      %v2425 = vadd.f32 0.0, %v2424
      %v2426 = vpop.f32.mrf.mxu0
      %v2427 = vadd.f32 0.0, %v2426
      %2428 = vmatmul.bf16.gmra.mxu0 %v2260
      %v2429 = vpop.f32.mrf.mxu0
      %v2430 = vadd.f32 0.0, %v2429
      %v2431 = vpop.f32.mrf.mxu0
      %v2432 = vadd.f32 0.0, %v2431
      %2433 = vmatmul.bf16.gmra.mxu0 %v2388
      %v2434 = vpop.f32.mrf.mxu0
      %v2435 = vadd.f32 0.0, %v2434
      %v2436 = vpop.f32.mrf.mxu0
      %v2437 = vadd.f32 0.0, %v2436
      %2438 = vdwg.mxu0
      %v2439 = vadd.f32 %v2311, %v2400
      %v2440 = vadd.f32 %v2312, %v2402
      %v2441 = vadd.f32 %v2313, %v2405
      %v2442 = vadd.f32 %v2314, %v2407
      %v2443 = vadd.f32 %v2315, %v2410
      %v2444 = vadd.f32 %v2316, %v2412
      %v2445 = vadd.f32 %v2317, %v2415
      %v2446 = vadd.f32 %v2318, %v2417
      %v2447 = vadd.f32 %v2319, %v2420
      %v2448 = vadd.f32 %v2320, %v2422
      %v2449 = vadd.f32 %v2321, %v2425
      %v2450 = vadd.f32 %v2322, %v2427
      %v2451 = vadd.f32 %v2323, %v2430
      %v2452 = vadd.f32 %v2324, %v2432
      %v2453 = vadd.f32 %v2325, %v2435
      %v2454 = vadd.f32 %v2326, %v2437
      %v2456 = vshrl.u32 %v1983, 16
      %v2458 = vrot.slane %v2456, 4
      %v2459 = vshll.u32 %v1983, 16
      %v2461 = vrot.slane %v2459, 5
      %v2462 = vor.u32 %v2458, %v2461
      %v2463 = vrot.slane %v2462, 4
      %v2465 = vshll.u32 %v1984, 16
      %v2467 = vrot.slane %v2465, 5
      %v2468 = vsel %vm1988, %v2463, %v2467
      %v2469 = vshrl.u32 %v1984, 16
      %v2471 = vrot.slane %v2469, 4
      %v2472 = vor.u32 %v2471, %v2467
      %v2473 = vrot.slane %v2472, 4
      %v2475 = vshll.u32 %v1985, 16
      %v2477 = vrot.slane %v2475, 5
      %v2478 = vsel %vm1988, %v2473, %v2477
      %s2479 = scalar_lea.vmem %s3, 256
      %v2480 = vld [vmem:[%s2479] sm:$0xf]
      %v2481 = vld [vmem:[%s2479 + $0x4] sm:$0xf]
      %v2482 = vld [vmem:[%s2479 + $0x8] sm:$0xf]
      %v2483 = vld [vmem:[%s2479 + $0xc] sm:$0xf]
      %v2484 = vld [vmem:[%s2479 + $0x10] sm:$0xf]
      %v2485 = vld [vmem:[%s2479 + $0x14] sm:$0xf]
      %v2486 = vld [vmem:[%s2479 + $0x18] sm:$0xf]
      %v2487 = vld [vmem:[%s2479 + $0x1c] sm:$0xf]
      %v2488 = vunpack.c.l.b16 %v2468
      %v2489 = vunpack.c.l.b16 %v2478
      %v2490 = vpack.c.b16 %v2489, %v2488
      %v2499 = vunpack.c.l.b16 %v2480
      %v2500 = vunpack.c.l.b16 %v2481
      %v2501 = vunpack.c.l.b16 %v2482
      %v2502 = vunpack.c.l.b16 %v2483
      %v2503 = vunpack.c.l.b16 %v2484
      %v2504 = vunpack.c.l.b16 %v2485
      %v2505 = vunpack.c.l.b16 %v2486
      %v2506 = vunpack.c.l.b16 %v2487
      %v2507 = vpack.c.b16 %v2500, %v2499
      %v2508 = vpack.c.b16 %v2502, %v2501
      %v2509 = vpack.c.b16 %v2504, %v2503
      %v2510 = vpack.c.b16 %v2506, %v2505
      %v2516 = vsel %vm489, %v2490, 0
      %2518 = vmatpush.bf16.msra.mxu0 0
      %2519 = vmatpush.bf16.msra.mxu0 0
      %2520 = vmatpush.bf16.msra.mxu0 0
      %2521 = vmatpush.bf16.msra.mxu0 0
      %2522 = vmatpush.bf16.msra.mxu0 %v2510
      %2523 = vmatpush.bf16.msra.mxu0 %v2509
      %2524 = vmatpush.bf16.msra.mxu0 %v2508
      %2525 = vmatpush.bf16.msra.mxu0 %v2507
      %2526 = vmatmul.bf16.gmra.mxu0 %v2245
      %v2527 = vpop.f32.mrf.mxu0
      %v2528 = vadd.f32 0.0, %v2527
      %v2529 = vpop.f32.mrf.mxu0
      %v2530 = vadd.f32 0.0, %v2529
      %2531 = vmatmul.bf16.gmra.mxu0 %v2248
      %v2532 = vpop.f32.mrf.mxu0
      %v2533 = vadd.f32 0.0, %v2532
      %v2534 = vpop.f32.mrf.mxu0
      %v2535 = vadd.f32 0.0, %v2534
      %2536 = vmatmul.bf16.gmra.mxu0 %v2251
      %v2537 = vpop.f32.mrf.mxu0
      %v2538 = vadd.f32 0.0, %v2537
      %v2539 = vpop.f32.mrf.mxu0
      %v2540 = vadd.f32 0.0, %v2539
      %2541 = vmatmul.bf16.gmra.mxu0 %v2254
      %v2542 = vpop.f32.mrf.mxu0
      %v2543 = vadd.f32 0.0, %v2542
      %v2544 = vpop.f32.mrf.mxu0
      %v2545 = vadd.f32 0.0, %v2544
      %2546 = vmatmul.bf16.gmra.mxu0 %v2257
      %v2547 = vpop.f32.mrf.mxu0
      %v2548 = vadd.f32 0.0, %v2547
      %v2549 = vpop.f32.mrf.mxu0
      %v2550 = vadd.f32 0.0, %v2549
      %2551 = vmatmul.bf16.gmra.mxu0 %v2260
      %v2552 = vpop.f32.mrf.mxu0
      %v2553 = vadd.f32 0.0, %v2552
      %v2554 = vpop.f32.mrf.mxu0
      %v2555 = vadd.f32 0.0, %v2554
      %2556 = vmatmul.bf16.gmra.mxu0 %v2388
      %v2557 = vpop.f32.mrf.mxu0
      %v2558 = vadd.f32 0.0, %v2557
      %v2559 = vpop.f32.mrf.mxu0
      %v2560 = vadd.f32 0.0, %v2559
      %2561 = vmatmul.bf16.gmra.mxu0 %v2516
      %v2562 = vpop.f32.mrf.mxu0
      %v2563 = vadd.f32 0.0, %v2562
      %v2564 = vpop.f32.mrf.mxu0
      %v2565 = vadd.f32 0.0, %v2564
      %2566 = vdwg.mxu0
      %v2567 = vadd.f32 %v2439, %v2528
      %v2568 = vadd.f32 %v2440, %v2530
      %v2569 = vadd.f32 %v2441, %v2533
      %v2570 = vadd.f32 %v2442, %v2535
      %v2571 = vadd.f32 %v2443, %v2538
      %v2572 = vadd.f32 %v2444, %v2540
      %v2573 = vadd.f32 %v2445, %v2543
      %v2574 = vadd.f32 %v2446, %v2545
      %v2575 = vadd.f32 %v2447, %v2548
      %v2576 = vadd.f32 %v2448, %v2550
      %v2577 = vadd.f32 %v2449, %v2553
      %v2578 = vadd.f32 %v2450, %v2555
      %v2579 = vadd.f32 %v2451, %v2558
      %v2580 = vadd.f32 %v2452, %v2560
      %v2581 = vadd.f32 %v2453, %v2563
      %v2582 = vadd.f32 %v2454, %v2565
      %v2583 = vmax.f32 %v2567, 0.0
      %v2584 = vmax.f32 %v2568, 0.0
      %v2585 = vmax.f32 %v2569, 0.0
      %v2586 = vmax.f32 %v2570, 0.0
      %v2587 = vmax.f32 %v2571, 0.0
      %v2588 = vmax.f32 %v2572, 0.0
      %v2589 = vmax.f32 %v2573, 0.0
      %v2590 = vmax.f32 %v2574, 0.0
      %v2591 = vmax.f32 %v2575, 0.0
      %v2592 = vmax.f32 %v2576, 0.0
      %v2593 = vmax.f32 %v2577, 0.0
      %v2594 = vmax.f32 %v2578, 0.0
      %v2595 = vmax.f32 %v2579, 0.0
      %v2596 = vmax.f32 %v2580, 0.0
      %v2597 = vmax.f32 %v2581, 0.0
      %v2598 = vmax.f32 %v2582, 0.0
      %v2599 = vpack.c.bf16 %v2583, %v2583
      %v2600 = vpack.c.bf16 %v2584, %v2584
      %v2601 = vpack.c.bf16 %v2585, %v2585
      %v2602 = vpack.c.bf16 %v2586, %v2586
      %v2603 = vpack.c.bf16 %v2587, %v2587
      %v2604 = vpack.c.bf16 %v2588, %v2588
      %v2605 = vpack.c.bf16 %v2589, %v2589
      %v2606 = vpack.c.bf16 %v2590, %v2590
      %v2607 = vpack.c.bf16 %v2591, %v2591
      %v2608 = vpack.c.bf16 %v2592, %v2592
      %v2609 = vpack.c.bf16 %v2593, %v2593
      %v2610 = vpack.c.bf16 %v2594, %v2594
      %v2611 = vpack.c.bf16 %v2595, %v2595
      %v2612 = vpack.c.bf16 %v2596, %v2596
      %v2613 = vpack.c.bf16 %v2597, %v2597
      %v2614 = vpack.c.bf16 %v2598, %v2598
      %s2615 = scalar_lea.vmem [#allocation3], 24
      %2616 = vst [vmem:[%s2615 + $0x8] sm:$0xf] %v2599
      %2617 = vst [vmem:[%s2615 + $0xc] sm:$0xf] %v2600
      %2618 = vst [vmem:[%s2615 + $0x20] sm:$0xf] %v2601
      %2619 = vst [vmem:[%s2615 + $0x24] sm:$0xf] %v2602
      %2620 = vst [vmem:[%s2615 + $0x38] sm:$0xf] %v2603
      %2621 = vst [vmem:[%s2615 + $0x3c] sm:$0xf] %v2604
      %2622 = vst [vmem:[%s2615 + $0x50] sm:$0xf] %v2605
      %2623 = vst [vmem:[%s2615 + $0x54] sm:$0xf] %v2606
      %2624 = vst [vmem:[%s2615 + $0x68] sm:$0xf] %v2607
      %2625 = vst [vmem:[%s2615 + $0x6c] sm:$0xf] %v2608
      %2626 = vst [vmem:[%s2615 + $0x80] sm:$0xf] %v2609
      %2627 = vst [vmem:[%s2615 + $0x84] sm:$0xf] %v2610
      %2628 = vst [vmem:[%s2615 + $0x98] sm:$0xf] %v2611
      %2629 = vst [vmem:[%s2615 + $0x9c] sm:$0xf] %v2612
      %2630 = vst [vmem:[%s2615 + $0xb0] sm:$0xf] %v2613
      %2631 = vst [vmem:[%s2615 + $0xb4] sm:$0xf] %v2614
      %v2632 = vld [vmem:[%s4] sm:$0x1]
      %v2634 = vperm.slane %v2632, 0
      %s2636 = scalar_lea.vmem [#allocation2], 192
      %v2637 = vld [vmem:[%s2636 + $0x4] sm:$0x8]
      %v2638 = vld [vmem:[%s2636 + $0x8] sm:$0xf]
      %v2639 = vld [vmem:[%s2636 + $0xc] sm:$0xf]
      %v2640 = vld [vmem:[%s2636 + $0x1c] sm:$0x8]
      %v2641 = vld [vmem:[%s2636 + $0x20] sm:$0xf]
      %v2642 = vld [vmem:[%s2636 + $0x24] sm:$0xf]
      %v2643 = vld [vmem:[%s2636 + $0x34] sm:$0x8]
      %v2644 = vld [vmem:[%s2636 + $0x38] sm:$0xf]
      %v2645 = vld [vmem:[%s2636 + $0x3c] sm:$0xf]
      %v2646 = vld [vmem:[%s2636 + $0x4c] sm:$0x8]
      %v2647 = vld [vmem:[%s2636 + $0x50] sm:$0xf]
      %v2648 = vld [vmem:[%s2636 + $0x54] sm:$0xf]
      %v2649 = vld [vmem:[%s2636 + $0x64] sm:$0x8]
      %v2650 = vld [vmem:[%s2636 + $0x68] sm:$0xf]
      %v2651 = vld [vmem:[%s2636 + $0x6c] sm:$0xf]
      %v2652 = vld [vmem:[%s2636 + $0x7c] sm:$0x8]
      %v2653 = vld [vmem:[%s2636 + $0x80] sm:$0xf]
      %v2654 = vld [vmem:[%s2636 + $0x84] sm:$0xf]
      %v2655 = vld [vmem:[%s2636 + $0x94] sm:$0x8]
      %v2656 = vld [vmem:[%s2636 + $0x98] sm:$0xf]
      %v2657 = vld [vmem:[%s2636 + $0x9c] sm:$0xf]
      %v2658 = vld [vmem:[%s2636 + $0xac] sm:$0x8]
      %v2659 = vld [vmem:[%s2636 + $0xb0] sm:$0xf]
      %v2660 = vld [vmem:[%s2636 + $0xb4] sm:$0xf]
      %v2661 = vld [vmem:[%s2636 + $0xc4] sm:$0x8]
      %v2662 = vld [vmem:[%s2636 + $0xc8] sm:$0xf]
      %v2663 = vld [vmem:[%s2636 + $0xcc] sm:$0xf]
      %v2664 = vld [vmem:[%s2636 + $0xdc] sm:$0x8]
      %v2665 = vld [vmem:[%s2636 + $0xe0] sm:$0xf]
      %v2666 = vld [vmem:[%s2636 + $0xe4] sm:$0xf]
      %v2668 = vshrl.u32 %v2637, 16
      %v2670 = vrot.slane %v2668, 7
      %v2671 = vrot.slane %v2670, 4
      %v2673 = vshrl.u32 %v2638, 16
      %v2675 = vrot.slane %v2673, 7
      %v2676 = vshll.u32 %v2638, 16
      %v2678 = vor.u32 %v2675, %v2676
      %v2679 = vsel %vm1008, %v2671, %v2678
      %v2680 = vrot.slane %v2675, 4
      %v2682 = vshrl.u32 %v2639, 16
      %v2684 = vrot.slane %v2682, 7
      %v2685 = vshll.u32 %v2639, 16
      %v2687 = vor.u32 %v2684, %v2685
      %v2688 = vsel %vm1008, %v2680, %v2687
      %v2690 = vshrl.u32 %v2640, 16
      %v2692 = vrot.slane %v2690, 7
      %v2693 = vrot.slane %v2692, 4
      %v2695 = vshrl.u32 %v2641, 16
      %v2697 = vrot.slane %v2695, 7
      %v2698 = vshll.u32 %v2641, 16
      %v2700 = vor.u32 %v2697, %v2698
      %v2701 = vsel %vm1008, %v2693, %v2700
      %v2702 = vrot.slane %v2697, 4
      %v2704 = vshrl.u32 %v2642, 16
      %v2706 = vrot.slane %v2704, 7
      %v2707 = vshll.u32 %v2642, 16
      %v2709 = vor.u32 %v2706, %v2707
      %v2710 = vsel %vm1008, %v2702, %v2709
      %v2712 = vshrl.u32 %v2643, 16
      %v2714 = vrot.slane %v2712, 7
      %v2715 = vrot.slane %v2714, 4
      %v2717 = vshrl.u32 %v2644, 16
      %v2719 = vrot.slane %v2717, 7
      %v2720 = vshll.u32 %v2644, 16
      %v2722 = vor.u32 %v2719, %v2720
      %v2723 = vsel %vm1008, %v2715, %v2722
      %v2724 = vrot.slane %v2719, 4
      %v2726 = vshrl.u32 %v2645, 16
      %v2728 = vrot.slane %v2726, 7
      %v2729 = vshll.u32 %v2645, 16
      %v2731 = vor.u32 %v2728, %v2729
      %v2732 = vsel %vm1008, %v2724, %v2731
      %v2734 = vshrl.u32 %v2646, 16
      %v2736 = vrot.slane %v2734, 7
      %v2737 = vrot.slane %v2736, 4
      %v2739 = vshrl.u32 %v2647, 16
      %v2741 = vrot.slane %v2739, 7
      %v2742 = vshll.u32 %v2647, 16
      %v2744 = vor.u32 %v2741, %v2742
      %v2745 = vsel %vm1008, %v2737, %v2744
      %v2746 = vrot.slane %v2741, 4
      %v2748 = vshrl.u32 %v2648, 16
      %v2750 = vrot.slane %v2748, 7
      %v2751 = vshll.u32 %v2648, 16
      %v2753 = vor.u32 %v2750, %v2751
      %v2754 = vsel %vm1008, %v2746, %v2753
      %v2756 = vshrl.u32 %v2649, 16
      %v2758 = vrot.slane %v2756, 7
      %v2759 = vrot.slane %v2758, 4
      %v2761 = vshrl.u32 %v2650, 16
      %v2763 = vrot.slane %v2761, 7
      %v2764 = vshll.u32 %v2650, 16
      %v2766 = vor.u32 %v2763, %v2764
      %v2767 = vsel %vm1008, %v2759, %v2766
      %v2768 = vrot.slane %v2763, 4
      %v2770 = vshrl.u32 %v2651, 16
      %v2772 = vrot.slane %v2770, 7
      %v2773 = vshll.u32 %v2651, 16
      %v2775 = vor.u32 %v2772, %v2773
      %v2776 = vsel %vm1008, %v2768, %v2775
      %v2778 = vshrl.u32 %v2652, 16
      %v2780 = vrot.slane %v2778, 7
      %v2781 = vrot.slane %v2780, 4
      %v2783 = vshrl.u32 %v2653, 16
      %v2785 = vrot.slane %v2783, 7
      %v2786 = vshll.u32 %v2653, 16
      %v2788 = vor.u32 %v2785, %v2786
      %v2789 = vsel %vm1008, %v2781, %v2788
      %v2790 = vrot.slane %v2785, 4
      %v2792 = vshrl.u32 %v2654, 16
      %v2794 = vrot.slane %v2792, 7
      %v2795 = vshll.u32 %v2654, 16
      %v2797 = vor.u32 %v2794, %v2795
      %v2798 = vsel %vm1008, %v2790, %v2797
      %v2800 = vshrl.u32 %v2655, 16
      %v2802 = vrot.slane %v2800, 7
      %v2803 = vrot.slane %v2802, 4
      %v2805 = vshrl.u32 %v2656, 16
      %v2807 = vrot.slane %v2805, 7
      %v2808 = vshll.u32 %v2656, 16
      %v2810 = vor.u32 %v2807, %v2808
      %v2811 = vsel %vm1008, %v2803, %v2810
      %v2812 = vrot.slane %v2807, 4
      %v2814 = vshrl.u32 %v2657, 16
      %v2816 = vrot.slane %v2814, 7
      %v2817 = vshll.u32 %v2657, 16
      %v2819 = vor.u32 %v2816, %v2817
      %v2820 = vsel %vm1008, %v2812, %v2819
      %v2822 = vshrl.u32 %v2658, 16
      %v2824 = vrot.slane %v2822, 7
      %v2825 = vrot.slane %v2824, 4
      %v2827 = vshrl.u32 %v2659, 16
      %v2829 = vrot.slane %v2827, 7
      %v2830 = vshll.u32 %v2659, 16
      %v2832 = vor.u32 %v2829, %v2830
      %v2833 = vsel %vm1008, %v2825, %v2832
      %v2834 = vrot.slane %v2829, 4
      %v2836 = vshrl.u32 %v2660, 16
      %v2838 = vrot.slane %v2836, 7
      %v2839 = vshll.u32 %v2660, 16
      %v2841 = vor.u32 %v2838, %v2839
      %v2842 = vsel %vm1008, %v2834, %v2841
      %v2843 = vld [vmem:[%s3] sm:$0xf]
      %v2844 = vld [vmem:[%s3 + $0x4] sm:$0xf]
      %v2845 = vld [vmem:[%s3 + $0x8] sm:$0xf]
      %v2846 = vld [vmem:[%s3 + $0xc] sm:$0xf]
      %v2847 = vld [vmem:[%s3 + $0x10] sm:$0xf]
      %v2848 = vld [vmem:[%s3 + $0x14] sm:$0xf]
      %v2849 = vld [vmem:[%s3 + $0x18] sm:$0xf]
      %v2850 = vld [vmem:[%s3 + $0x1c] sm:$0xf]
      %v2851 = vunpack.c.l.b16 %v2679
      %v2852 = vunpack.c.l.b16 %v2688
      %v2853 = vunpack.c.l.b16 %v2701
      %v2854 = vunpack.c.l.b16 %v2710
      %v2855 = vunpack.c.l.b16 %v2723
      %v2856 = vunpack.c.l.b16 %v2732
      %v2857 = vunpack.c.l.b16 %v2745
      %v2858 = vunpack.c.l.b16 %v2754
      %v2859 = vunpack.c.l.b16 %v2767
      %v2860 = vunpack.c.l.b16 %v2776
      %v2861 = vunpack.c.l.b16 %v2789
      %v2862 = vunpack.c.l.b16 %v2798
      %v2863 = vunpack.c.l.b16 %v2811
      %v2864 = vunpack.c.l.b16 %v2820
      %v2865 = vunpack.c.l.b16 %v2833
      %v2866 = vunpack.c.l.b16 %v2842
      %v2867 = vpack.c.b16 %v2852, %v2851
      %v2868 = vpack.c.b16 %v2854, %v2853
      %v2869 = vpack.c.b16 %v2856, %v2855
      %v2870 = vpack.c.b16 %v2858, %v2857
      %v2871 = vpack.c.b16 %v2860, %v2859
      %v2872 = vpack.c.b16 %v2862, %v2861
      %v2873 = vpack.c.b16 %v2864, %v2863
      %v2874 = vpack.c.b16 %v2866, %v2865
      %v2883 = vunpack.c.l.b16 %v2843
      %v2884 = vunpack.c.l.b16 %v2844
      %v2885 = vunpack.c.l.b16 %v2845
      %v2886 = vunpack.c.l.b16 %v2846
      %v2887 = vunpack.c.l.b16 %v2847
      %v2888 = vunpack.c.l.b16 %v2848
      %v2889 = vunpack.c.l.b16 %v2849
      %v2890 = vunpack.c.l.b16 %v2850
      %v2891 = vpack.c.b16 %v2884, %v2883
      %v2892 = vpack.c.b16 %v2886, %v2885
      %v2893 = vpack.c.b16 %v2888, %v2887
      %v2894 = vpack.c.b16 %v2890, %v2889
      %v2900 = vsel %vm489, %v2867, 0
      %v2903 = vsel %vm489, %v2868, 0
      %v2906 = vsel %vm489, %v2869, 0
      %v2909 = vsel %vm489, %v2870, 0
      %v2912 = vsel %vm489, %v2871, 0
      %v2915 = vsel %vm489, %v2872, 0
      %v2918 = vsel %vm489, %v2873, 0
      %v2921 = vsel %vm489, %v2874, 0
      %2923 = vmatpush.bf16.msra.mxu0 0
      %2924 = vmatpush.bf16.msra.mxu0 0
      %2925 = vmatpush.bf16.msra.mxu0 0
      %2926 = vmatpush.bf16.msra.mxu0 0
      %2927 = vmatpush.bf16.msra.mxu0 %v2894
      %2928 = vmatpush.bf16.msra.mxu0 %v2893
      %2929 = vmatpush.bf16.msra.mxu0 %v2892
      %2930 = vmatpush.bf16.msra.mxu0 %v2891
      %2931 = vmatmul.bf16.gmra.mxu0 %v2900
      %v2932 = vpop.f32.mrf.mxu0
      %v2933 = vadd.f32 0.0, %v2932
      %v2934 = vpop.f32.mrf.mxu0
      %v2935 = vadd.f32 0.0, %v2934
      %2936 = vmatmul.bf16.gmra.mxu0 %v2903
      %v2937 = vpop.f32.mrf.mxu0
      %v2938 = vadd.f32 0.0, %v2937
      %v2939 = vpop.f32.mrf.mxu0
      %v2940 = vadd.f32 0.0, %v2939
      %2941 = vmatmul.bf16.gmra.mxu0 %v2906
      %v2942 = vpop.f32.mrf.mxu0
      %v2943 = vadd.f32 0.0, %v2942
      %v2944 = vpop.f32.mrf.mxu0
      %v2945 = vadd.f32 0.0, %v2944
      %2946 = vmatmul.bf16.gmra.mxu0 %v2909
      %v2947 = vpop.f32.mrf.mxu0
      %v2948 = vadd.f32 0.0, %v2947
      %v2949 = vpop.f32.mrf.mxu0
      %v2950 = vadd.f32 0.0, %v2949
      %2951 = vmatmul.bf16.gmra.mxu0 %v2912
      %v2952 = vpop.f32.mrf.mxu0
      %v2953 = vadd.f32 0.0, %v2952
      %v2954 = vpop.f32.mrf.mxu0
      %v2955 = vadd.f32 0.0, %v2954
      %2956 = vmatmul.bf16.gmra.mxu0 %v2915
      %v2957 = vpop.f32.mrf.mxu0
      %v2958 = vadd.f32 0.0, %v2957
      %v2959 = vpop.f32.mrf.mxu0
      %v2960 = vadd.f32 0.0, %v2959
      %2961 = vmatmul.bf16.gmra.mxu0 %v2918
      %v2962 = vpop.f32.mrf.mxu0
      %v2963 = vadd.f32 0.0, %v2962
      %v2964 = vpop.f32.mrf.mxu0
      %v2965 = vadd.f32 0.0, %v2964
      %2966 = vmatmul.bf16.gmra.mxu0 %v2921
      %v2967 = vpop.f32.mrf.mxu0
      %v2968 = vadd.f32 0.0, %v2967
      %v2969 = vpop.f32.mrf.mxu0
      %v2970 = vadd.f32 0.0, %v2969
      %2971 = vdwg.mxu0
      %v2972 = vadd.f32 %v2634, %v2933
      %v2973 = vadd.f32 %v2634, %v2935
      %v2974 = vadd.f32 %v2634, %v2938
      %v2975 = vadd.f32 %v2634, %v2940
      %v2976 = vadd.f32 %v2634, %v2943
      %v2977 = vadd.f32 %v2634, %v2945
      %v2978 = vadd.f32 %v2634, %v2948
      %v2979 = vadd.f32 %v2634, %v2950
      %v2980 = vadd.f32 %v2634, %v2953
      %v2981 = vadd.f32 %v2634, %v2955
      %v2982 = vadd.f32 %v2634, %v2958
      %v2983 = vadd.f32 %v2634, %v2960
      %v2984 = vadd.f32 %v2634, %v2963
      %v2985 = vadd.f32 %v2634, %v2965
      %v2986 = vadd.f32 %v2634, %v2968
      %v2987 = vadd.f32 %v2634, %v2970
      %v2989 = vshrl.u32 %v2661, 16
      %v2991 = vrot.slane %v2989, 7
      %v2992 = vrot.slane %v2991, 4
      %v2994 = vshrl.u32 %v2662, 16
      %v2996 = vrot.slane %v2994, 7
      %v2997 = vshll.u32 %v2662, 16
      %v2999 = vor.u32 %v2996, %v2997
      %v3000 = vsel %vm1008, %v2992, %v2999
      %v3001 = vrot.slane %v2996, 4
      %v3003 = vshrl.u32 %v2663, 16
      %v3005 = vrot.slane %v3003, 7
      %v3006 = vshll.u32 %v2663, 16
      %v3008 = vor.u32 %v3005, %v3006
      %v3009 = vsel %vm1008, %v3001, %v3008
      %v3010 = vld [vmem:[%s1352] sm:$0xf]
      %v3011 = vld [vmem:[%s1352 + $0x4] sm:$0xf]
      %v3012 = vld [vmem:[%s1352 + $0x8] sm:$0xf]
      %v3013 = vld [vmem:[%s1352 + $0xc] sm:$0xf]
      %v3014 = vld [vmem:[%s1352 + $0x10] sm:$0xf]
      %v3015 = vld [vmem:[%s1352 + $0x14] sm:$0xf]
      %v3016 = vld [vmem:[%s1352 + $0x18] sm:$0xf]
      %v3017 = vld [vmem:[%s1352 + $0x1c] sm:$0xf]
      %v3018 = vunpack.c.l.b16 %v3000
      %v3019 = vunpack.c.l.b16 %v3009
      %v3020 = vpack.c.b16 %v3019, %v3018
      %v3029 = vunpack.c.l.b16 %v3010
      %v3030 = vunpack.c.l.b16 %v3011
      %v3031 = vunpack.c.l.b16 %v3012
      %v3032 = vunpack.c.l.b16 %v3013
      %v3033 = vunpack.c.l.b16 %v3014
      %v3034 = vunpack.c.l.b16 %v3015
      %v3035 = vunpack.c.l.b16 %v3016
      %v3036 = vunpack.c.l.b16 %v3017
      %v3037 = vpack.c.b16 %v3030, %v3029
      %v3038 = vpack.c.b16 %v3032, %v3031
      %v3039 = vpack.c.b16 %v3034, %v3033
      %v3040 = vpack.c.b16 %v3036, %v3035
      %v3046 = vsel %vm489, %v3020, 0
      %3048 = vmatpush.bf16.msra.mxu0 0
      %3049 = vmatpush.bf16.msra.mxu0 0
      %3050 = vmatpush.bf16.msra.mxu0 0
      %3051 = vmatpush.bf16.msra.mxu0 0
      %3052 = vmatpush.bf16.msra.mxu0 %v3040
      %3053 = vmatpush.bf16.msra.mxu0 %v3039
      %3054 = vmatpush.bf16.msra.mxu0 %v3038
      %3055 = vmatpush.bf16.msra.mxu0 %v3037
      %3056 = vmatmul.bf16.gmra.mxu0 %v2903
      %v3057 = vpop.f32.mrf.mxu0
      %v3058 = vadd.f32 0.0, %v3057
      %v3059 = vpop.f32.mrf.mxu0
      %v3060 = vadd.f32 0.0, %v3059
      %3061 = vmatmul.bf16.gmra.mxu0 %v2906
      %v3062 = vpop.f32.mrf.mxu0
      %v3063 = vadd.f32 0.0, %v3062
      %v3064 = vpop.f32.mrf.mxu0
      %v3065 = vadd.f32 0.0, %v3064
      %3066 = vmatmul.bf16.gmra.mxu0 %v2909
      %v3067 = vpop.f32.mrf.mxu0
      %v3068 = vadd.f32 0.0, %v3067
      %v3069 = vpop.f32.mrf.mxu0
      %v3070 = vadd.f32 0.0, %v3069
      %3071 = vmatmul.bf16.gmra.mxu0 %v2912
      %v3072 = vpop.f32.mrf.mxu0
      %v3073 = vadd.f32 0.0, %v3072
      %v3074 = vpop.f32.mrf.mxu0
      %v3075 = vadd.f32 0.0, %v3074
      %3076 = vmatmul.bf16.gmra.mxu0 %v2915
      %v3077 = vpop.f32.mrf.mxu0
      %v3078 = vadd.f32 0.0, %v3077
      %v3079 = vpop.f32.mrf.mxu0
      %v3080 = vadd.f32 0.0, %v3079
      %3081 = vmatmul.bf16.gmra.mxu0 %v2918
      %v3082 = vpop.f32.mrf.mxu0
      %v3083 = vadd.f32 0.0, %v3082
      %v3084 = vpop.f32.mrf.mxu0
      %v3085 = vadd.f32 0.0, %v3084
      %3086 = vmatmul.bf16.gmra.mxu0 %v2921
      %v3087 = vpop.f32.mrf.mxu0
      %v3088 = vadd.f32 0.0, %v3087
      %v3089 = vpop.f32.mrf.mxu0
      %v3090 = vadd.f32 0.0, %v3089
      %3091 = vmatmul.bf16.gmra.mxu0 %v3046
      %v3092 = vpop.f32.mrf.mxu0
      %v3093 = vadd.f32 0.0, %v3092
      %v3094 = vpop.f32.mrf.mxu0
      %v3095 = vadd.f32 0.0, %v3094
      %3096 = vdwg.mxu0
      %v3097 = vadd.f32 %v2972, %v3058
      %v3098 = vadd.f32 %v2973, %v3060
      %v3099 = vadd.f32 %v2974, %v3063
      %v3100 = vadd.f32 %v2975, %v3065
      %v3101 = vadd.f32 %v2976, %v3068
      %v3102 = vadd.f32 %v2977, %v3070
      %v3103 = vadd.f32 %v2978, %v3073
      %v3104 = vadd.f32 %v2979, %v3075
      %v3105 = vadd.f32 %v2980, %v3078
      %v3106 = vadd.f32 %v2981, %v3080
      %v3107 = vadd.f32 %v2982, %v3083
      %v3108 = vadd.f32 %v2983, %v3085
      %v3109 = vadd.f32 %v2984, %v3088
      %v3110 = vadd.f32 %v2985, %v3090
      %v3111 = vadd.f32 %v2986, %v3093
      %v3112 = vadd.f32 %v2987, %v3095
      %v3114 = vshrl.u32 %v2664, 16
      %v3116 = vrot.slane %v3114, 7
      %v3117 = vrot.slane %v3116, 4
      %v3119 = vshrl.u32 %v2665, 16
      %v3121 = vrot.slane %v3119, 7
      %v3122 = vshll.u32 %v2665, 16
      %v3124 = vor.u32 %v3121, %v3122
      %v3125 = vsel %vm1008, %v3117, %v3124
      %v3126 = vrot.slane %v3121, 4
      %v3128 = vshrl.u32 %v2666, 16
      %v3130 = vrot.slane %v3128, 7
      %v3131 = vshll.u32 %v2666, 16
      %v3133 = vor.u32 %v3130, %v3131
      %v3134 = vsel %vm1008, %v3126, %v3133
      %v3135 = vld [vmem:[%s1478] sm:$0xf]
      %v3136 = vld [vmem:[%s1478 + $0x4] sm:$0xf]
      %v3137 = vld [vmem:[%s1478 + $0x8] sm:$0xf]
      %v3138 = vld [vmem:[%s1478 + $0xc] sm:$0xf]
      %v3139 = vld [vmem:[%s1478 + $0x10] sm:$0xf]
      %v3140 = vld [vmem:[%s1478 + $0x14] sm:$0xf]
      %v3141 = vld [vmem:[%s1478 + $0x18] sm:$0xf]
      %v3142 = vld [vmem:[%s1478 + $0x1c] sm:$0xf]
      %v3143 = vunpack.c.l.b16 %v3125
      %v3144 = vunpack.c.l.b16 %v3134
      %v3145 = vpack.c.b16 %v3144, %v3143
      %v3154 = vunpack.c.l.b16 %v3135
      %v3155 = vunpack.c.l.b16 %v3136
      %v3156 = vunpack.c.l.b16 %v3137
      %v3157 = vunpack.c.l.b16 %v3138
      %v3158 = vunpack.c.l.b16 %v3139
      %v3159 = vunpack.c.l.b16 %v3140
      %v3160 = vunpack.c.l.b16 %v3141
      %v3161 = vunpack.c.l.b16 %v3142
      %v3162 = vpack.c.b16 %v3155, %v3154
      %v3163 = vpack.c.b16 %v3157, %v3156
      %v3164 = vpack.c.b16 %v3159, %v3158
      %v3165 = vpack.c.b16 %v3161, %v3160
      %v3171 = vsel %vm489, %v3145, 0
      %3173 = vmatpush.bf16.msra.mxu0 0
      %3174 = vmatpush.bf16.msra.mxu0 0
      %3175 = vmatpush.bf16.msra.mxu0 0
      %3176 = vmatpush.bf16.msra.mxu0 0
      %3177 = vmatpush.bf16.msra.mxu0 %v3165
      %3178 = vmatpush.bf16.msra.mxu0 %v3164
      %3179 = vmatpush.bf16.msra.mxu0 %v3163
      %3180 = vmatpush.bf16.msra.mxu0 %v3162
      %3181 = vmatmul.bf16.gmra.mxu0 %v2906
      %v3182 = vpop.f32.mrf.mxu0
      %v3183 = vadd.f32 0.0, %v3182
      %v3184 = vpop.f32.mrf.mxu0
      %v3185 = vadd.f32 0.0, %v3184
      %3186 = vmatmul.bf16.gmra.mxu0 %v2909
      %v3187 = vpop.f32.mrf.mxu0
      %v3188 = vadd.f32 0.0, %v3187
      %v3189 = vpop.f32.mrf.mxu0
      %v3190 = vadd.f32 0.0, %v3189
      %3191 = vmatmul.bf16.gmra.mxu0 %v2912
      %v3192 = vpop.f32.mrf.mxu0
      %v3193 = vadd.f32 0.0, %v3192
      %v3194 = vpop.f32.mrf.mxu0
      %v3195 = vadd.f32 0.0, %v3194
      %3196 = vmatmul.bf16.gmra.mxu0 %v2915
      %v3197 = vpop.f32.mrf.mxu0
      %v3198 = vadd.f32 0.0, %v3197
      %v3199 = vpop.f32.mrf.mxu0
      %v3200 = vadd.f32 0.0, %v3199
      %3201 = vmatmul.bf16.gmra.mxu0 %v2918
      %v3202 = vpop.f32.mrf.mxu0
      %v3203 = vadd.f32 0.0, %v3202
      %v3204 = vpop.f32.mrf.mxu0
      %v3205 = vadd.f32 0.0, %v3204
      %3206 = vmatmul.bf16.gmra.mxu0 %v2921
      %v3207 = vpop.f32.mrf.mxu0
      %v3208 = vadd.f32 0.0, %v3207
      %v3209 = vpop.f32.mrf.mxu0
      %v3210 = vadd.f32 0.0, %v3209
      %3211 = vmatmul.bf16.gmra.mxu0 %v3046
      %v3212 = vpop.f32.mrf.mxu0
      %v3213 = vadd.f32 0.0, %v3212
      %v3214 = vpop.f32.mrf.mxu0
      %v3215 = vadd.f32 0.0, %v3214
      %3216 = vmatmul.bf16.gmra.mxu0 %v3171
      %v3217 = vpop.f32.mrf.mxu0
      %v3218 = vadd.f32 0.0, %v3217
      %v3219 = vpop.f32.mrf.mxu0
      %v3220 = vadd.f32 0.0, %v3219
      %3221 = vdwg.mxu0
      %v3222 = vadd.f32 %v3097, %v3183
      %v3223 = vadd.f32 %v3098, %v3185
      %v3224 = vadd.f32 %v3099, %v3188
      %v3225 = vadd.f32 %v3100, %v3190
      %v3226 = vadd.f32 %v3101, %v3193
      %v3227 = vadd.f32 %v3102, %v3195
      %v3228 = vadd.f32 %v3103, %v3198
      %v3229 = vadd.f32 %v3104, %v3200
      %v3230 = vadd.f32 %v3105, %v3203
      %v3231 = vadd.f32 %v3106, %v3205
      %v3232 = vadd.f32 %v3107, %v3208
      %v3233 = vadd.f32 %v3108, %v3210
      %v3234 = vadd.f32 %v3109, %v3213
      %v3235 = vadd.f32 %v3110, %v3215
      %v3236 = vadd.f32 %v3111, %v3218
      %v3237 = vadd.f32 %v3112, %v3220
      %v3238 = vld [vmem:[%s1582] sm:$0xf]
      %v3239 = vld [vmem:[%s1582 + $0x4] sm:$0xf]
      %v3240 = vld [vmem:[%s1582 + $0x8] sm:$0xf]
      %v3241 = vld [vmem:[%s1582 + $0xc] sm:$0xf]
      %v3242 = vld [vmem:[%s1582 + $0x10] sm:$0xf]
      %v3243 = vld [vmem:[%s1582 + $0x14] sm:$0xf]
      %v3244 = vld [vmem:[%s1582 + $0x18] sm:$0xf]
      %v3245 = vld [vmem:[%s1582 + $0x1c] sm:$0xf]
      %v3262 = vunpack.c.l.b16 %v2638
      %v3263 = vunpack.c.l.b16 %v2639
      %v3264 = vunpack.c.l.b16 %v2641
      %v3265 = vunpack.c.l.b16 %v2642
      %v3266 = vunpack.c.l.b16 %v2644
      %v3267 = vunpack.c.l.b16 %v2645
      %v3268 = vunpack.c.l.b16 %v2647
      %v3269 = vunpack.c.l.b16 %v2648
      %v3270 = vunpack.c.l.b16 %v2650
      %v3271 = vunpack.c.l.b16 %v2651
      %v3272 = vunpack.c.l.b16 %v2653
      %v3273 = vunpack.c.l.b16 %v2654
      %v3274 = vunpack.c.l.b16 %v2656
      %v3275 = vunpack.c.l.b16 %v2657
      %v3276 = vunpack.c.l.b16 %v2659
      %v3277 = vunpack.c.l.b16 %v2660
      %v3278 = vpack.c.b16 %v3263, %v3262
      %v3279 = vpack.c.b16 %v3265, %v3264
      %v3280 = vpack.c.b16 %v3267, %v3266
      %v3281 = vpack.c.b16 %v3269, %v3268
      %v3282 = vpack.c.b16 %v3271, %v3270
      %v3283 = vpack.c.b16 %v3273, %v3272
      %v3284 = vpack.c.b16 %v3275, %v3274
      %v3285 = vpack.c.b16 %v3277, %v3276
      %v3294 = vunpack.c.l.b16 %v3238
      %v3295 = vunpack.c.l.b16 %v3239
      %v3296 = vunpack.c.l.b16 %v3240
      %v3297 = vunpack.c.l.b16 %v3241
      %v3298 = vunpack.c.l.b16 %v3242
      %v3299 = vunpack.c.l.b16 %v3243
      %v3300 = vunpack.c.l.b16 %v3244
      %v3301 = vunpack.c.l.b16 %v3245
      %v3302 = vpack.c.b16 %v3295, %v3294
      %v3303 = vpack.c.b16 %v3297, %v3296
      %v3304 = vpack.c.b16 %v3299, %v3298
      %v3305 = vpack.c.b16 %v3301, %v3300
      %v3311 = vsel %vm489, %v3278, 0
      %v3314 = vsel %vm489, %v3279, 0
      %v3317 = vsel %vm489, %v3280, 0
      %v3320 = vsel %vm489, %v3281, 0
      %v3323 = vsel %vm489, %v3282, 0
      %v3326 = vsel %vm489, %v3283, 0
      %v3329 = vsel %vm489, %v3284, 0
      %v3332 = vsel %vm489, %v3285, 0
      %3334 = vmatpush.bf16.msra.mxu0 0
      %3335 = vmatpush.bf16.msra.mxu0 0
      %3336 = vmatpush.bf16.msra.mxu0 0
      %3337 = vmatpush.bf16.msra.mxu0 0
      %3338 = vmatpush.bf16.msra.mxu0 %v3305
      %3339 = vmatpush.bf16.msra.mxu0 %v3304
      %3340 = vmatpush.bf16.msra.mxu0 %v3303
      %3341 = vmatpush.bf16.msra.mxu0 %v3302
      %3342 = vmatmul.bf16.gmra.mxu0 %v3311
      %v3343 = vpop.f32.mrf.mxu0
      %v3344 = vadd.f32 0.0, %v3343
      %v3345 = vpop.f32.mrf.mxu0
      %v3346 = vadd.f32 0.0, %v3345
      %3347 = vmatmul.bf16.gmra.mxu0 %v3314
      %v3348 = vpop.f32.mrf.mxu0
      %v3349 = vadd.f32 0.0, %v3348
      %v3350 = vpop.f32.mrf.mxu0
      %v3351 = vadd.f32 0.0, %v3350
      %3352 = vmatmul.bf16.gmra.mxu0 %v3317
      %v3353 = vpop.f32.mrf.mxu0
      %v3354 = vadd.f32 0.0, %v3353
      %v3355 = vpop.f32.mrf.mxu0
      %v3356 = vadd.f32 0.0, %v3355
      %3357 = vmatmul.bf16.gmra.mxu0 %v3320
      %v3358 = vpop.f32.mrf.mxu0
      %v3359 = vadd.f32 0.0, %v3358
      %v3360 = vpop.f32.mrf.mxu0
      %v3361 = vadd.f32 0.0, %v3360
      %3362 = vmatmul.bf16.gmra.mxu0 %v3323
      %v3363 = vpop.f32.mrf.mxu0
      %v3364 = vadd.f32 0.0, %v3363
      %v3365 = vpop.f32.mrf.mxu0
      %v3366 = vadd.f32 0.0, %v3365
      %3367 = vmatmul.bf16.gmra.mxu0 %v3326
      %v3368 = vpop.f32.mrf.mxu0
      %v3369 = vadd.f32 0.0, %v3368
      %v3370 = vpop.f32.mrf.mxu0
      %v3371 = vadd.f32 0.0, %v3370
      %3372 = vmatmul.bf16.gmra.mxu0 %v3329
      %v3373 = vpop.f32.mrf.mxu0
      %v3374 = vadd.f32 0.0, %v3373
      %v3375 = vpop.f32.mrf.mxu0
      %v3376 = vadd.f32 0.0, %v3375
      %3377 = vmatmul.bf16.gmra.mxu0 %v3332
      %v3378 = vpop.f32.mrf.mxu0
      %v3379 = vadd.f32 0.0, %v3378
      %v3380 = vpop.f32.mrf.mxu0
      %v3381 = vadd.f32 0.0, %v3380
      %3382 = vdwg.mxu0
      %v3383 = vadd.f32 %v3222, %v3344
      %v3384 = vadd.f32 %v3223, %v3346
      %v3385 = vadd.f32 %v3224, %v3349
      %v3386 = vadd.f32 %v3225, %v3351
      %v3387 = vadd.f32 %v3226, %v3354
      %v3388 = vadd.f32 %v3227, %v3356
      %v3389 = vadd.f32 %v3228, %v3359
      %v3390 = vadd.f32 %v3229, %v3361
      %v3391 = vadd.f32 %v3230, %v3364
      %v3392 = vadd.f32 %v3231, %v3366
      %v3393 = vadd.f32 %v3232, %v3369
      %v3394 = vadd.f32 %v3233, %v3371
      %v3395 = vadd.f32 %v3234, %v3374
      %v3396 = vadd.f32 %v3235, %v3376
      %v3397 = vadd.f32 %v3236, %v3379
      %v3398 = vadd.f32 %v3237, %v3381
      %v3399 = vld [vmem:[%s1744] sm:$0xf]
      %v3400 = vld [vmem:[%s1744 + $0x4] sm:$0xf]
      %v3401 = vld [vmem:[%s1744 + $0x8] sm:$0xf]
      %v3402 = vld [vmem:[%s1744 + $0xc] sm:$0xf]
      %v3403 = vld [vmem:[%s1744 + $0x10] sm:$0xf]
      %v3404 = vld [vmem:[%s1744 + $0x14] sm:$0xf]
      %v3405 = vld [vmem:[%s1744 + $0x18] sm:$0xf]
      %v3406 = vld [vmem:[%s1744 + $0x1c] sm:$0xf]
      %v3409 = vunpack.c.l.b16 %v2662
      %v3410 = vunpack.c.l.b16 %v2663
      %v3411 = vpack.c.b16 %v3410, %v3409
      %v3420 = vunpack.c.l.b16 %v3399
      %v3421 = vunpack.c.l.b16 %v3400
      %v3422 = vunpack.c.l.b16 %v3401
      %v3423 = vunpack.c.l.b16 %v3402
      %v3424 = vunpack.c.l.b16 %v3403
      %v3425 = vunpack.c.l.b16 %v3404
      %v3426 = vunpack.c.l.b16 %v3405
      %v3427 = vunpack.c.l.b16 %v3406
      %v3428 = vpack.c.b16 %v3421, %v3420
      %v3429 = vpack.c.b16 %v3423, %v3422
      %v3430 = vpack.c.b16 %v3425, %v3424
      %v3431 = vpack.c.b16 %v3427, %v3426
      %v3437 = vsel %vm489, %v3411, 0
      %3439 = vmatpush.bf16.msra.mxu0 0
      %3440 = vmatpush.bf16.msra.mxu0 0
      %3441 = vmatpush.bf16.msra.mxu0 0
      %3442 = vmatpush.bf16.msra.mxu0 0
      %3443 = vmatpush.bf16.msra.mxu0 %v3431
      %3444 = vmatpush.bf16.msra.mxu0 %v3430
      %3445 = vmatpush.bf16.msra.mxu0 %v3429
      %3446 = vmatpush.bf16.msra.mxu0 %v3428
      %3447 = vmatmul.bf16.gmra.mxu0 %v3314
      %v3448 = vpop.f32.mrf.mxu0
      %v3449 = vadd.f32 0.0, %v3448
      %v3450 = vpop.f32.mrf.mxu0
      %v3451 = vadd.f32 0.0, %v3450
      %3452 = vmatmul.bf16.gmra.mxu0 %v3317
      %v3453 = vpop.f32.mrf.mxu0
      %v3454 = vadd.f32 0.0, %v3453
      %v3455 = vpop.f32.mrf.mxu0
      %v3456 = vadd.f32 0.0, %v3455
      %3457 = vmatmul.bf16.gmra.mxu0 %v3320
      %v3458 = vpop.f32.mrf.mxu0
      %v3459 = vadd.f32 0.0, %v3458
      %v3460 = vpop.f32.mrf.mxu0
      %v3461 = vadd.f32 0.0, %v3460
      %3462 = vmatmul.bf16.gmra.mxu0 %v3323
      %v3463 = vpop.f32.mrf.mxu0
      %v3464 = vadd.f32 0.0, %v3463
      %v3465 = vpop.f32.mrf.mxu0
      %v3466 = vadd.f32 0.0, %v3465
      %3467 = vmatmul.bf16.gmra.mxu0 %v3326
      %v3468 = vpop.f32.mrf.mxu0
      %v3469 = vadd.f32 0.0, %v3468
      %v3470 = vpop.f32.mrf.mxu0
      %v3471 = vadd.f32 0.0, %v3470
      %3472 = vmatmul.bf16.gmra.mxu0 %v3329
      %v3473 = vpop.f32.mrf.mxu0
      %v3474 = vadd.f32 0.0, %v3473
      %v3475 = vpop.f32.mrf.mxu0
      %v3476 = vadd.f32 0.0, %v3475
      %3477 = vmatmul.bf16.gmra.mxu0 %v3332
      %v3478 = vpop.f32.mrf.mxu0
      %v3479 = vadd.f32 0.0, %v3478
      %v3480 = vpop.f32.mrf.mxu0
      %v3481 = vadd.f32 0.0, %v3480
      %3482 = vmatmul.bf16.gmra.mxu0 %v3437
      %v3483 = vpop.f32.mrf.mxu0
      %v3484 = vadd.f32 0.0, %v3483
      %v3485 = vpop.f32.mrf.mxu0
      %v3486 = vadd.f32 0.0, %v3485
      %3487 = vdwg.mxu0
      %v3488 = vadd.f32 %v3383, %v3449
      %v3489 = vadd.f32 %v3384, %v3451
      %v3490 = vadd.f32 %v3385, %v3454
      %v3491 = vadd.f32 %v3386, %v3456
      %v3492 = vadd.f32 %v3387, %v3459
      %v3493 = vadd.f32 %v3388, %v3461
      %v3494 = vadd.f32 %v3389, %v3464
      %v3495 = vadd.f32 %v3390, %v3466
      %v3496 = vadd.f32 %v3391, %v3469
      %v3497 = vadd.f32 %v3392, %v3471
      %v3498 = vadd.f32 %v3393, %v3474
      %v3499 = vadd.f32 %v3394, %v3476
      %v3500 = vadd.f32 %v3395, %v3479
      %v3501 = vadd.f32 %v3396, %v3481
      %v3502 = vadd.f32 %v3397, %v3484
      %v3503 = vadd.f32 %v3398, %v3486
      %v3504 = vld [vmem:[%s1850] sm:$0xf]
      %v3505 = vld [vmem:[%s1850 + $0x4] sm:$0xf]
      %v3506 = vld [vmem:[%s1850 + $0x8] sm:$0xf]
      %v3507 = vld [vmem:[%s1850 + $0xc] sm:$0xf]
      %v3508 = vld [vmem:[%s1850 + $0x10] sm:$0xf]
      %v3509 = vld [vmem:[%s1850 + $0x14] sm:$0xf]
      %v3510 = vld [vmem:[%s1850 + $0x18] sm:$0xf]
      %v3511 = vld [vmem:[%s1850 + $0x1c] sm:$0xf]
      %v3514 = vunpack.c.l.b16 %v2665
      %v3515 = vunpack.c.l.b16 %v2666
      %v3516 = vpack.c.b16 %v3515, %v3514
      %v3525 = vunpack.c.l.b16 %v3504
      %v3526 = vunpack.c.l.b16 %v3505
      %v3527 = vunpack.c.l.b16 %v3506
      %v3528 = vunpack.c.l.b16 %v3507
      %v3529 = vunpack.c.l.b16 %v3508
      %v3530 = vunpack.c.l.b16 %v3509
      %v3531 = vunpack.c.l.b16 %v3510
      %v3532 = vunpack.c.l.b16 %v3511
      %v3533 = vpack.c.b16 %v3526, %v3525
      %v3534 = vpack.c.b16 %v3528, %v3527
      %v3535 = vpack.c.b16 %v3530, %v3529
      %v3536 = vpack.c.b16 %v3532, %v3531
      %v3542 = vsel %vm489, %v3516, 0
      %3544 = vmatpush.bf16.msra.mxu0 0
      %3545 = vmatpush.bf16.msra.mxu0 0
      %3546 = vmatpush.bf16.msra.mxu0 0
      %3547 = vmatpush.bf16.msra.mxu0 0
      %3548 = vmatpush.bf16.msra.mxu0 %v3536
      %3549 = vmatpush.bf16.msra.mxu0 %v3535
      %3550 = vmatpush.bf16.msra.mxu0 %v3534
      %3551 = vmatpush.bf16.msra.mxu0 %v3533
      %3552 = vmatmul.bf16.gmra.mxu0 %v3317
      %v3553 = vpop.f32.mrf.mxu0
      %v3554 = vadd.f32 0.0, %v3553
      %v3555 = vpop.f32.mrf.mxu0
      %v3556 = vadd.f32 0.0, %v3555
      %3557 = vmatmul.bf16.gmra.mxu0 %v3320
      %v3558 = vpop.f32.mrf.mxu0
      %v3559 = vadd.f32 0.0, %v3558
      %v3560 = vpop.f32.mrf.mxu0
      %v3561 = vadd.f32 0.0, %v3560
      %3562 = vmatmul.bf16.gmra.mxu0 %v3323
      %v3563 = vpop.f32.mrf.mxu0
      %v3564 = vadd.f32 0.0, %v3563
      %v3565 = vpop.f32.mrf.mxu0
      %v3566 = vadd.f32 0.0, %v3565
      %3567 = vmatmul.bf16.gmra.mxu0 %v3326
      %v3568 = vpop.f32.mrf.mxu0
      %v3569 = vadd.f32 0.0, %v3568
      %v3570 = vpop.f32.mrf.mxu0
      %v3571 = vadd.f32 0.0, %v3570
      %3572 = vmatmul.bf16.gmra.mxu0 %v3329
      %v3573 = vpop.f32.mrf.mxu0
      %v3574 = vadd.f32 0.0, %v3573
      %v3575 = vpop.f32.mrf.mxu0
      %v3576 = vadd.f32 0.0, %v3575
      %3577 = vmatmul.bf16.gmra.mxu0 %v3332
      %v3578 = vpop.f32.mrf.mxu0
      %v3579 = vadd.f32 0.0, %v3578
      %v3580 = vpop.f32.mrf.mxu0
      %v3581 = vadd.f32 0.0, %v3580
      %3582 = vmatmul.bf16.gmra.mxu0 %v3437
      %v3583 = vpop.f32.mrf.mxu0
      %v3584 = vadd.f32 0.0, %v3583
      %v3585 = vpop.f32.mrf.mxu0
      %v3586 = vadd.f32 0.0, %v3585
      %3587 = vmatmul.bf16.gmra.mxu0 %v3542
      %v3588 = vpop.f32.mrf.mxu0
      %v3589 = vadd.f32 0.0, %v3588
      %v3590 = vpop.f32.mrf.mxu0
      %v3591 = vadd.f32 0.0, %v3590
      %3592 = vdwg.mxu0
      %v3593 = vadd.f32 %v3488, %v3554
      %v3594 = vadd.f32 %v3489, %v3556
      %v3595 = vadd.f32 %v3490, %v3559
      %v3596 = vadd.f32 %v3491, %v3561
      %v3597 = vadd.f32 %v3492, %v3564
      %v3598 = vadd.f32 %v3493, %v3566
      %v3599 = vadd.f32 %v3494, %v3569
      %v3600 = vadd.f32 %v3495, %v3571
      %v3601 = vadd.f32 %v3496, %v3574
      %v3602 = vadd.f32 %v3497, %v3576
      %v3603 = vadd.f32 %v3498, %v3579
      %v3604 = vadd.f32 %v3499, %v3581
      %v3605 = vadd.f32 %v3500, %v3584
      %v3606 = vadd.f32 %v3501, %v3586
      %v3607 = vadd.f32 %v3502, %v3589
      %v3608 = vadd.f32 %v3503, %v3591
      %v3609 = vld [vmem:[%s2636 + $0x8] sm:$0xf]
      %v3610 = vld [vmem:[%s2636 + $0xc] sm:$0xf]
      %v3611 = vld [vmem:[%s2636 + $0x10] sm:$0x1]
      %v3612 = vld [vmem:[%s2636 + $0x20] sm:$0xf]
      %v3613 = vld [vmem:[%s2636 + $0x24] sm:$0xf]
      %v3614 = vld [vmem:[%s2636 + $0x28] sm:$0x1]
      %v3615 = vld [vmem:[%s2636 + $0x38] sm:$0xf]
      %v3616 = vld [vmem:[%s2636 + $0x3c] sm:$0xf]
      %v3617 = vld [vmem:[%s2636 + $0x40] sm:$0x1]
      %v3618 = vld [vmem:[%s2636 + $0x50] sm:$0xf]
      %v3619 = vld [vmem:[%s2636 + $0x54] sm:$0xf]
      %v3620 = vld [vmem:[%s2636 + $0x58] sm:$0x1]
      %v3621 = vld [vmem:[%s2636 + $0x68] sm:$0xf]
      %v3622 = vld [vmem:[%s2636 + $0x6c] sm:$0xf]
      %v3623 = vld [vmem:[%s2636 + $0x70] sm:$0x1]
      %v3624 = vld [vmem:[%s2636 + $0x80] sm:$0xf]
      %v3625 = vld [vmem:[%s2636 + $0x84] sm:$0xf]
      %v3626 = vld [vmem:[%s2636 + $0x88] sm:$0x1]
      %v3627 = vld [vmem:[%s2636 + $0x98] sm:$0xf]
      %v3628 = vld [vmem:[%s2636 + $0x9c] sm:$0xf]
      %v3629 = vld [vmem:[%s2636 + $0xa0] sm:$0x1]
      %v3630 = vld [vmem:[%s2636 + $0xb0] sm:$0xf]
      %v3631 = vld [vmem:[%s2636 + $0xb4] sm:$0xf]
      %v3632 = vld [vmem:[%s2636 + $0xb8] sm:$0x1]
      %v3633 = vld [vmem:[%s2636 + $0xc8] sm:$0xf]
      %v3634 = vld [vmem:[%s2636 + $0xcc] sm:$0xf]
      %v3635 = vld [vmem:[%s2636 + $0xd0] sm:$0x1]
      %v3636 = vld [vmem:[%s2636 + $0xe0] sm:$0xf]
      %v3637 = vld [vmem:[%s2636 + $0xe4] sm:$0xf]
      %v3638 = vld [vmem:[%s2636 + $0xe8] sm:$0x1]
      %v3640 = vshrl.u32 %v3609, 16
      %v3642 = vrot.slane %v3640, 4
      %v3643 = vshll.u32 %v3609, 16
      %v3645 = vrot.slane %v3643, 5
      %v3646 = vor.u32 %v3642, %v3645
      %v3647 = vrot.slane %v3646, 4
      %v3649 = vshll.u32 %v3610, 16
      %v3651 = vrot.slane %v3649, 5
      %v3652 = vsel %vm1988, %v3647, %v3651
      %v3653 = vshrl.u32 %v3610, 16
      %v3655 = vrot.slane %v3653, 4
      %v3656 = vor.u32 %v3655, %v3651
      %v3657 = vrot.slane %v3656, 4
      %v3659 = vshll.u32 %v3611, 16
      %v3661 = vrot.slane %v3659, 5
      %v3662 = vsel %vm1988, %v3657, %v3661
      %v3664 = vshrl.u32 %v3612, 16
      %v3666 = vrot.slane %v3664, 4
      %v3667 = vshll.u32 %v3612, 16
      %v3669 = vrot.slane %v3667, 5
      %v3670 = vor.u32 %v3666, %v3669
      %v3671 = vrot.slane %v3670, 4
      %v3673 = vshll.u32 %v3613, 16
      %v3675 = vrot.slane %v3673, 5
      %v3676 = vsel %vm1988, %v3671, %v3675
      %v3677 = vshrl.u32 %v3613, 16
      %v3679 = vrot.slane %v3677, 4
      %v3680 = vor.u32 %v3679, %v3675
      %v3681 = vrot.slane %v3680, 4
      %v3683 = vshll.u32 %v3614, 16
      %v3685 = vrot.slane %v3683, 5
      %v3686 = vsel %vm1988, %v3681, %v3685
      %v3688 = vshrl.u32 %v3615, 16
      %v3690 = vrot.slane %v3688, 4
      %v3691 = vshll.u32 %v3615, 16
      %v3693 = vrot.slane %v3691, 5
      %v3694 = vor.u32 %v3690, %v3693
      %v3695 = vrot.slane %v3694, 4
      %v3697 = vshll.u32 %v3616, 16
      %v3699 = vrot.slane %v3697, 5
      %v3700 = vsel %vm1988, %v3695, %v3699
      %v3701 = vshrl.u32 %v3616, 16
      %v3703 = vrot.slane %v3701, 4
      %v3704 = vor.u32 %v3703, %v3699
      %v3705 = vrot.slane %v3704, 4
      %v3707 = vshll.u32 %v3617, 16
      %v3709 = vrot.slane %v3707, 5
      %v3710 = vsel %vm1988, %v3705, %v3709
      %v3712 = vshrl.u32 %v3618, 16
      %v3714 = vrot.slane %v3712, 4
      %v3715 = vshll.u32 %v3618, 16
      %v3717 = vrot.slane %v3715, 5
      %v3718 = vor.u32 %v3714, %v3717
      %v3719 = vrot.slane %v3718, 4
      %v3721 = vshll.u32 %v3619, 16
      %v3723 = vrot.slane %v3721, 5
      %v3724 = vsel %vm1988, %v3719, %v3723
      %v3725 = vshrl.u32 %v3619, 16
      %v3727 = vrot.slane %v3725, 4
      %v3728 = vor.u32 %v3727, %v3723
      %v3729 = vrot.slane %v3728, 4
      %v3731 = vshll.u32 %v3620, 16
      %v3733 = vrot.slane %v3731, 5
      %v3734 = vsel %vm1988, %v3729, %v3733
      %v3736 = vshrl.u32 %v3621, 16
      %v3738 = vrot.slane %v3736, 4
      %v3739 = vshll.u32 %v3621, 16
      %v3741 = vrot.slane %v3739, 5
      %v3742 = vor.u32 %v3738, %v3741
      %v3743 = vrot.slane %v3742, 4
      %v3745 = vshll.u32 %v3622, 16
      %v3747 = vrot.slane %v3745, 5
      %v3748 = vsel %vm1988, %v3743, %v3747
      %v3749 = vshrl.u32 %v3622, 16
      %v3751 = vrot.slane %v3749, 4
      %v3752 = vor.u32 %v3751, %v3747
      %v3753 = vrot.slane %v3752, 4
      %v3755 = vshll.u32 %v3623, 16
      %v3757 = vrot.slane %v3755, 5
      %v3758 = vsel %vm1988, %v3753, %v3757
      %v3760 = vshrl.u32 %v3624, 16
      %v3762 = vrot.slane %v3760, 4
      %v3763 = vshll.u32 %v3624, 16
      %v3765 = vrot.slane %v3763, 5
      %v3766 = vor.u32 %v3762, %v3765
      %v3767 = vrot.slane %v3766, 4
      %v3769 = vshll.u32 %v3625, 16
      %v3771 = vrot.slane %v3769, 5
      %v3772 = vsel %vm1988, %v3767, %v3771
      %v3773 = vshrl.u32 %v3625, 16
      %v3775 = vrot.slane %v3773, 4
      %v3776 = vor.u32 %v3775, %v3771
      %v3777 = vrot.slane %v3776, 4
      %v3779 = vshll.u32 %v3626, 16
      %v3781 = vrot.slane %v3779, 5
      %v3782 = vsel %vm1988, %v3777, %v3781
      %v3784 = vshrl.u32 %v3627, 16
      %v3786 = vrot.slane %v3784, 4
      %v3787 = vshll.u32 %v3627, 16
      %v3789 = vrot.slane %v3787, 5
      %v3790 = vor.u32 %v3786, %v3789
      %v3791 = vrot.slane %v3790, 4
      %v3793 = vshll.u32 %v3628, 16
      %v3795 = vrot.slane %v3793, 5
      %v3796 = vsel %vm1988, %v3791, %v3795
      %v3797 = vshrl.u32 %v3628, 16
      %v3799 = vrot.slane %v3797, 4
      %v3800 = vor.u32 %v3799, %v3795
      %v3801 = vrot.slane %v3800, 4
      %v3803 = vshll.u32 %v3629, 16
      %v3805 = vrot.slane %v3803, 5
      %v3806 = vsel %vm1988, %v3801, %v3805
      %v3808 = vshrl.u32 %v3630, 16
      %v3810 = vrot.slane %v3808, 4
      %v3811 = vshll.u32 %v3630, 16
      %v3813 = vrot.slane %v3811, 5
      %v3814 = vor.u32 %v3810, %v3813
      %v3815 = vrot.slane %v3814, 4
      %v3817 = vshll.u32 %v3631, 16
      %v3819 = vrot.slane %v3817, 5
      %v3820 = vsel %vm1988, %v3815, %v3819
      %v3821 = vshrl.u32 %v3631, 16
      %v3823 = vrot.slane %v3821, 4
      %v3824 = vor.u32 %v3823, %v3819
      %v3825 = vrot.slane %v3824, 4
      %v3827 = vshll.u32 %v3632, 16
      %v3829 = vrot.slane %v3827, 5
      %v3830 = vsel %vm1988, %v3825, %v3829
      %v3831 = vld [vmem:[%s2181] sm:$0xf]
      %v3832 = vld [vmem:[%s2181 + $0x4] sm:$0xf]
      %v3833 = vld [vmem:[%s2181 + $0x8] sm:$0xf]
      %v3834 = vld [vmem:[%s2181 + $0xc] sm:$0xf]
      %v3835 = vld [vmem:[%s2181 + $0x10] sm:$0xf]
      %v3836 = vld [vmem:[%s2181 + $0x14] sm:$0xf]
      %v3837 = vld [vmem:[%s2181 + $0x18] sm:$0xf]
      %v3838 = vld [vmem:[%s2181 + $0x1c] sm:$0xf]
      %v3839 = vunpack.c.l.b16 %v3652
      %v3840 = vunpack.c.l.b16 %v3662
      %v3841 = vunpack.c.l.b16 %v3676
      %v3842 = vunpack.c.l.b16 %v3686
      %v3843 = vunpack.c.l.b16 %v3700
      %v3844 = vunpack.c.l.b16 %v3710
      %v3845 = vunpack.c.l.b16 %v3724
      %v3846 = vunpack.c.l.b16 %v3734
      %v3847 = vunpack.c.l.b16 %v3748
      %v3848 = vunpack.c.l.b16 %v3758
      %v3849 = vunpack.c.l.b16 %v3772
      %v3850 = vunpack.c.l.b16 %v3782
      %v3851 = vunpack.c.l.b16 %v3796
      %v3852 = vunpack.c.l.b16 %v3806
      %v3853 = vunpack.c.l.b16 %v3820
      %v3854 = vunpack.c.l.b16 %v3830
      %v3855 = vpack.c.b16 %v3840, %v3839
      %v3856 = vpack.c.b16 %v3842, %v3841
      %v3857 = vpack.c.b16 %v3844, %v3843
      %v3858 = vpack.c.b16 %v3846, %v3845
      %v3859 = vpack.c.b16 %v3848, %v3847
      %v3860 = vpack.c.b16 %v3850, %v3849
      %v3861 = vpack.c.b16 %v3852, %v3851
      %v3862 = vpack.c.b16 %v3854, %v3853
      %v3871 = vunpack.c.l.b16 %v3831
      %v3872 = vunpack.c.l.b16 %v3832
      %v3873 = vunpack.c.l.b16 %v3833
      %v3874 = vunpack.c.l.b16 %v3834
      %v3875 = vunpack.c.l.b16 %v3835
      %v3876 = vunpack.c.l.b16 %v3836
      %v3877 = vunpack.c.l.b16 %v3837
      %v3878 = vunpack.c.l.b16 %v3838
      %v3879 = vpack.c.b16 %v3872, %v3871
      %v3880 = vpack.c.b16 %v3874, %v3873
      %v3881 = vpack.c.b16 %v3876, %v3875
      %v3882 = vpack.c.b16 %v3878, %v3877
      %v3888 = vsel %vm489, %v3855, 0
      %v3891 = vsel %vm489, %v3856, 0
      %v3894 = vsel %vm489, %v3857, 0
      %v3897 = vsel %vm489, %v3858, 0
      %v3900 = vsel %vm489, %v3859, 0
      %v3903 = vsel %vm489, %v3860, 0
      %v3906 = vsel %vm489, %v3861, 0
      %v3909 = vsel %vm489, %v3862, 0
      %3911 = vmatpush.bf16.msra.mxu0 0
      %3912 = vmatpush.bf16.msra.mxu0 0
      %3913 = vmatpush.bf16.msra.mxu0 0
      %3914 = vmatpush.bf16.msra.mxu0 0
      %3915 = vmatpush.bf16.msra.mxu0 %v3882
      %3916 = vmatpush.bf16.msra.mxu0 %v3881
      %3917 = vmatpush.bf16.msra.mxu0 %v3880
      %3918 = vmatpush.bf16.msra.mxu0 %v3879
      %3919 = vmatmul.bf16.gmra.mxu0 %v3888
      %v3920 = vpop.f32.mrf.mxu0
      %v3921 = vadd.f32 0.0, %v3920
      %v3922 = vpop.f32.mrf.mxu0
      %v3923 = vadd.f32 0.0, %v3922
      %3924 = vmatmul.bf16.gmra.mxu0 %v3891
      %v3925 = vpop.f32.mrf.mxu0
      %v3926 = vadd.f32 0.0, %v3925
      %v3927 = vpop.f32.mrf.mxu0
      %v3928 = vadd.f32 0.0, %v3927
      %3929 = vmatmul.bf16.gmra.mxu0 %v3894
      %v3930 = vpop.f32.mrf.mxu0
      %v3931 = vadd.f32 0.0, %v3930
      %v3932 = vpop.f32.mrf.mxu0
      %v3933 = vadd.f32 0.0, %v3932
      %3934 = vmatmul.bf16.gmra.mxu0 %v3897
      %v3935 = vpop.f32.mrf.mxu0
      %v3936 = vadd.f32 0.0, %v3935
      %v3937 = vpop.f32.mrf.mxu0
      %v3938 = vadd.f32 0.0, %v3937
      %3939 = vmatmul.bf16.gmra.mxu0 %v3900
      %v3940 = vpop.f32.mrf.mxu0
      %v3941 = vadd.f32 0.0, %v3940
      %v3942 = vpop.f32.mrf.mxu0
      %v3943 = vadd.f32 0.0, %v3942
      %3944 = vmatmul.bf16.gmra.mxu0 %v3903
      %v3945 = vpop.f32.mrf.mxu0
      %v3946 = vadd.f32 0.0, %v3945
      %v3947 = vpop.f32.mrf.mxu0
      %v3948 = vadd.f32 0.0, %v3947
      %3949 = vmatmul.bf16.gmra.mxu0 %v3906
      %v3950 = vpop.f32.mrf.mxu0
      %v3951 = vadd.f32 0.0, %v3950
      %v3952 = vpop.f32.mrf.mxu0
      %v3953 = vadd.f32 0.0, %v3952
      %3954 = vmatmul.bf16.gmra.mxu0 %v3909
      %v3955 = vpop.f32.mrf.mxu0
      %v3956 = vadd.f32 0.0, %v3955
      %v3957 = vpop.f32.mrf.mxu0
      %v3958 = vadd.f32 0.0, %v3957
      %3959 = vdwg.mxu0
      %v3960 = vadd.f32 %v3593, %v3921
      %v3961 = vadd.f32 %v3594, %v3923
      %v3962 = vadd.f32 %v3595, %v3926
      %v3963 = vadd.f32 %v3596, %v3928
      %v3964 = vadd.f32 %v3597, %v3931
      %v3965 = vadd.f32 %v3598, %v3933
      %v3966 = vadd.f32 %v3599, %v3936
      %v3967 = vadd.f32 %v3600, %v3938
      %v3968 = vadd.f32 %v3601, %v3941
      %v3969 = vadd.f32 %v3602, %v3943
      %v3970 = vadd.f32 %v3603, %v3946
      %v3971 = vadd.f32 %v3604, %v3948
      %v3972 = vadd.f32 %v3605, %v3951
      %v3973 = vadd.f32 %v3606, %v3953
      %v3974 = vadd.f32 %v3607, %v3956
      %v3975 = vadd.f32 %v3608, %v3958
      %v3977 = vshrl.u32 %v3633, 16
      %v3979 = vrot.slane %v3977, 4
      %v3980 = vshll.u32 %v3633, 16
      %v3982 = vrot.slane %v3980, 5
      %v3983 = vor.u32 %v3979, %v3982
      %v3984 = vrot.slane %v3983, 4
      %v3986 = vshll.u32 %v3634, 16
      %v3988 = vrot.slane %v3986, 5
      %v3989 = vsel %vm1988, %v3984, %v3988
      %v3990 = vshrl.u32 %v3634, 16
      %v3992 = vrot.slane %v3990, 4
      %v3993 = vor.u32 %v3992, %v3988
      %v3994 = vrot.slane %v3993, 4
      %v3996 = vshll.u32 %v3635, 16
      %v3998 = vrot.slane %v3996, 5
      %v3999 = vsel %vm1988, %v3994, %v3998
      %v4000 = vld [vmem:[%s2351] sm:$0xf]
      %v4001 = vld [vmem:[%s2351 + $0x4] sm:$0xf]
      %v4002 = vld [vmem:[%s2351 + $0x8] sm:$0xf]
      %v4003 = vld [vmem:[%s2351 + $0xc] sm:$0xf]
      %v4004 = vld [vmem:[%s2351 + $0x10] sm:$0xf]
      %v4005 = vld [vmem:[%s2351 + $0x14] sm:$0xf]
      %v4006 = vld [vmem:[%s2351 + $0x18] sm:$0xf]
      %v4007 = vld [vmem:[%s2351 + $0x1c] sm:$0xf]
      %v4008 = vunpack.c.l.b16 %v3989
      %v4009 = vunpack.c.l.b16 %v3999
      %v4010 = vpack.c.b16 %v4009, %v4008
      %v4019 = vunpack.c.l.b16 %v4000
      %v4020 = vunpack.c.l.b16 %v4001
      %v4021 = vunpack.c.l.b16 %v4002
      %v4022 = vunpack.c.l.b16 %v4003
      %v4023 = vunpack.c.l.b16 %v4004
      %v4024 = vunpack.c.l.b16 %v4005
      %v4025 = vunpack.c.l.b16 %v4006
      %v4026 = vunpack.c.l.b16 %v4007
      %v4027 = vpack.c.b16 %v4020, %v4019
      %v4028 = vpack.c.b16 %v4022, %v4021
      %v4029 = vpack.c.b16 %v4024, %v4023
      %v4030 = vpack.c.b16 %v4026, %v4025
      %v4036 = vsel %vm489, %v4010, 0
      %4038 = vmatpush.bf16.msra.mxu0 0
      %4039 = vmatpush.bf16.msra.mxu0 0
      %4040 = vmatpush.bf16.msra.mxu0 0
      %4041 = vmatpush.bf16.msra.mxu0 0
      %4042 = vmatpush.bf16.msra.mxu0 %v4030
      %4043 = vmatpush.bf16.msra.mxu0 %v4029
      %4044 = vmatpush.bf16.msra.mxu0 %v4028
      %4045 = vmatpush.bf16.msra.mxu0 %v4027
      %4046 = vmatmul.bf16.gmra.mxu0 %v3891
      %v4047 = vpop.f32.mrf.mxu0
      %v4048 = vadd.f32 0.0, %v4047
      %v4049 = vpop.f32.mrf.mxu0
      %v4050 = vadd.f32 0.0, %v4049
      %4051 = vmatmul.bf16.gmra.mxu0 %v3894
      %v4052 = vpop.f32.mrf.mxu0
      %v4053 = vadd.f32 0.0, %v4052
      %v4054 = vpop.f32.mrf.mxu0
      %v4055 = vadd.f32 0.0, %v4054
      %4056 = vmatmul.bf16.gmra.mxu0 %v3897
      %v4057 = vpop.f32.mrf.mxu0
      %v4058 = vadd.f32 0.0, %v4057
      %v4059 = vpop.f32.mrf.mxu0
      %v4060 = vadd.f32 0.0, %v4059
      %4061 = vmatmul.bf16.gmra.mxu0 %v3900
      %v4062 = vpop.f32.mrf.mxu0
      %v4063 = vadd.f32 0.0, %v4062
      %v4064 = vpop.f32.mrf.mxu0
      %v4065 = vadd.f32 0.0, %v4064
      %4066 = vmatmul.bf16.gmra.mxu0 %v3903
      %v4067 = vpop.f32.mrf.mxu0
      %v4068 = vadd.f32 0.0, %v4067
      %v4069 = vpop.f32.mrf.mxu0
      %v4070 = vadd.f32 0.0, %v4069
      %4071 = vmatmul.bf16.gmra.mxu0 %v3906
      %v4072 = vpop.f32.mrf.mxu0
      %v4073 = vadd.f32 0.0, %v4072
      %v4074 = vpop.f32.mrf.mxu0
      %v4075 = vadd.f32 0.0, %v4074
      %4076 = vmatmul.bf16.gmra.mxu0 %v3909
      %v4077 = vpop.f32.mrf.mxu0
      %v4078 = vadd.f32 0.0, %v4077
      %v4079 = vpop.f32.mrf.mxu0
      %v4080 = vadd.f32 0.0, %v4079
      %4081 = vmatmul.bf16.gmra.mxu0 %v4036
      %v4082 = vpop.f32.mrf.mxu0
      %v4083 = vadd.f32 0.0, %v4082
      %v4084 = vpop.f32.mrf.mxu0
      %v4085 = vadd.f32 0.0, %v4084
      %4086 = vdwg.mxu0
      %v4087 = vadd.f32 %v3960, %v4048
      %v4088 = vadd.f32 %v3961, %v4050
      %v4089 = vadd.f32 %v3962, %v4053
      %v4090 = vadd.f32 %v3963, %v4055
      %v4091 = vadd.f32 %v3964, %v4058
      %v4092 = vadd.f32 %v3965, %v4060
      %v4093 = vadd.f32 %v3966, %v4063
      %v4094 = vadd.f32 %v3967, %v4065
      %v4095 = vadd.f32 %v3968, %v4068
      %v4096 = vadd.f32 %v3969, %v4070
      %v4097 = vadd.f32 %v3970, %v4073
      %v4098 = vadd.f32 %v3971, %v4075
      %v4099 = vadd.f32 %v3972, %v4078
      %v4100 = vadd.f32 %v3973, %v4080
      %v4101 = vadd.f32 %v3974, %v4083
      %v4102 = vadd.f32 %v3975, %v4085
      %v4104 = vshrl.u32 %v3636, 16
      %v4106 = vrot.slane %v4104, 4
      %v4107 = vshll.u32 %v3636, 16
      %v4109 = vrot.slane %v4107, 5
      %v4110 = vor.u32 %v4106, %v4109
      %v4111 = vrot.slane %v4110, 4
      %v4113 = vshll.u32 %v3637, 16
      %v4115 = vrot.slane %v4113, 5
      %v4116 = vsel %vm1988, %v4111, %v4115
      %v4117 = vshrl.u32 %v3637, 16
      %v4119 = vrot.slane %v4117, 4
      %v4120 = vor.u32 %v4119, %v4115
      %v4121 = vrot.slane %v4120, 4
      %v4123 = vshll.u32 %v3638, 16
      %v4125 = vrot.slane %v4123, 5
      %v4126 = vsel %vm1988, %v4121, %v4125
      %v4127 = vld [vmem:[%s2479] sm:$0xf]
      %v4128 = vld [vmem:[%s2479 + $0x4] sm:$0xf]
      %v4129 = vld [vmem:[%s2479 + $0x8] sm:$0xf]
      %v4130 = vld [vmem:[%s2479 + $0xc] sm:$0xf]
      %v4131 = vld [vmem:[%s2479 + $0x10] sm:$0xf]
      %v4132 = vld [vmem:[%s2479 + $0x14] sm:$0xf]
      %v4133 = vld [vmem:[%s2479 + $0x18] sm:$0xf]
      %v4134 = vld [vmem:[%s2479 + $0x1c] sm:$0xf]
      %v4135 = vunpack.c.l.b16 %v4116
      %v4136 = vunpack.c.l.b16 %v4126
      %v4137 = vpack.c.b16 %v4136, %v4135
      %v4146 = vunpack.c.l.b16 %v4127
      %v4147 = vunpack.c.l.b16 %v4128
      %v4148 = vunpack.c.l.b16 %v4129
      %v4149 = vunpack.c.l.b16 %v4130
      %v4150 = vunpack.c.l.b16 %v4131
      %v4151 = vunpack.c.l.b16 %v4132
      %v4152 = vunpack.c.l.b16 %v4133
      %v4153 = vunpack.c.l.b16 %v4134
      %v4154 = vpack.c.b16 %v4147, %v4146
      %v4155 = vpack.c.b16 %v4149, %v4148
      %v4156 = vpack.c.b16 %v4151, %v4150
      %v4157 = vpack.c.b16 %v4153, %v4152
      %v4163 = vsel %vm489, %v4137, 0
      %4165 = vmatpush.bf16.msra.mxu0 0
      %4166 = vmatpush.bf16.msra.mxu0 0
      %4167 = vmatpush.bf16.msra.mxu0 0
      %4168 = vmatpush.bf16.msra.mxu0 0
      %4169 = vmatpush.bf16.msra.mxu0 %v4157
      %4170 = vmatpush.bf16.msra.mxu0 %v4156
      %4171 = vmatpush.bf16.msra.mxu0 %v4155
      %4172 = vmatpush.bf16.msra.mxu0 %v4154
      %4173 = vmatmul.bf16.gmra.mxu0 %v3894
      %v4174 = vpop.f32.mrf.mxu0
      %v4175 = vadd.f32 0.0, %v4174
      %v4176 = vpop.f32.mrf.mxu0
      %v4177 = vadd.f32 0.0, %v4176
      %4178 = vmatmul.bf16.gmra.mxu0 %v3897
      %v4179 = vpop.f32.mrf.mxu0
      %v4180 = vadd.f32 0.0, %v4179
      %v4181 = vpop.f32.mrf.mxu0
      %v4182 = vadd.f32 0.0, %v4181
      %4183 = vmatmul.bf16.gmra.mxu0 %v3900
      %v4184 = vpop.f32.mrf.mxu0
      %v4185 = vadd.f32 0.0, %v4184
      %v4186 = vpop.f32.mrf.mxu0
      %v4187 = vadd.f32 0.0, %v4186
      %4188 = vmatmul.bf16.gmra.mxu0 %v3903
      %v4189 = vpop.f32.mrf.mxu0
      %v4190 = vadd.f32 0.0, %v4189
      %v4191 = vpop.f32.mrf.mxu0
      %v4192 = vadd.f32 0.0, %v4191
      %4193 = vmatmul.bf16.gmra.mxu0 %v3906
      %v4194 = vpop.f32.mrf.mxu0
      %v4195 = vadd.f32 0.0, %v4194
      %v4196 = vpop.f32.mrf.mxu0
      %v4197 = vadd.f32 0.0, %v4196
      %4198 = vmatmul.bf16.gmra.mxu0 %v3909
      %v4199 = vpop.f32.mrf.mxu0
      %v4200 = vadd.f32 0.0, %v4199
      %v4201 = vpop.f32.mrf.mxu0
      %v4202 = vadd.f32 0.0, %v4201
      %4203 = vmatmul.bf16.gmra.mxu0 %v4036
      %v4204 = vpop.f32.mrf.mxu0
      %v4205 = vadd.f32 0.0, %v4204
      %v4206 = vpop.f32.mrf.mxu0
      %v4207 = vadd.f32 0.0, %v4206
      %4208 = vmatmul.bf16.gmra.mxu0 %v4163
      %v4209 = vpop.f32.mrf.mxu0
      %v4210 = vadd.f32 0.0, %v4209
      %v4211 = vpop.f32.mrf.mxu0
      %v4212 = vadd.f32 0.0, %v4211
      %4213 = vdwg.mxu0
      %v4214 = vadd.f32 %v4087, %v4175
      %v4215 = vadd.f32 %v4088, %v4177
      %v4216 = vadd.f32 %v4089, %v4180
      %v4217 = vadd.f32 %v4090, %v4182
      %v4218 = vadd.f32 %v4091, %v4185
      %v4219 = vadd.f32 %v4092, %v4187
      %v4220 = vadd.f32 %v4093, %v4190
      %v4221 = vadd.f32 %v4094, %v4192
      %v4222 = vadd.f32 %v4095, %v4195
      %v4223 = vadd.f32 %v4096, %v4197
      %v4224 = vadd.f32 %v4097, %v4200
      %v4225 = vadd.f32 %v4098, %v4202
      %v4226 = vadd.f32 %v4099, %v4205
      %v4227 = vadd.f32 %v4100, %v4207
      %v4228 = vadd.f32 %v4101, %v4210
      %v4229 = vadd.f32 %v4102, %v4212
      %v4230 = vmax.f32 %v4214, 0.0
      %v4231 = vmax.f32 %v4215, 0.0
      %v4232 = vmax.f32 %v4216, 0.0
      %v4233 = vmax.f32 %v4217, 0.0
      %v4234 = vmax.f32 %v4218, 0.0
      %v4235 = vmax.f32 %v4219, 0.0
      %v4236 = vmax.f32 %v4220, 0.0
      %v4237 = vmax.f32 %v4221, 0.0
      %v4238 = vmax.f32 %v4222, 0.0
      %v4239 = vmax.f32 %v4223, 0.0
      %v4240 = vmax.f32 %v4224, 0.0
      %v4241 = vmax.f32 %v4225, 0.0
      %v4242 = vmax.f32 %v4226, 0.0
      %v4243 = vmax.f32 %v4227, 0.0
      %v4244 = vmax.f32 %v4228, 0.0
      %v4245 = vmax.f32 %v4229, 0.0
      %v4246 = vpack.c.bf16 %v4230, %v4230
      %v4247 = vpack.c.bf16 %v4231, %v4231
      %v4248 = vpack.c.bf16 %v4232, %v4232
      %v4249 = vpack.c.bf16 %v4233, %v4233
      %v4250 = vpack.c.bf16 %v4234, %v4234
      %v4251 = vpack.c.bf16 %v4235, %v4235
      %v4252 = vpack.c.bf16 %v4236, %v4236
      %v4253 = vpack.c.bf16 %v4237, %v4237
      %v4254 = vpack.c.bf16 %v4238, %v4238
      %v4255 = vpack.c.bf16 %v4239, %v4239
      %v4256 = vpack.c.bf16 %v4240, %v4240
      %v4257 = vpack.c.bf16 %v4241, %v4241
      %v4258 = vpack.c.bf16 %v4242, %v4242
      %v4259 = vpack.c.bf16 %v4243, %v4243
      %v4260 = vpack.c.bf16 %v4244, %v4244
      %v4261 = vpack.c.bf16 %v4245, %v4245
      %s4262 = scalar_lea.vmem [#allocation3], 216
      %4263 = vst [vmem:[%s4262 + $0x8] sm:$0xf] %v4246
      %4264 = vst [vmem:[%s4262 + $0xc] sm:$0xf] %v4247
      %4265 = vst [vmem:[%s4262 + $0x20] sm:$0xf] %v4248
      %4266 = vst [vmem:[%s4262 + $0x24] sm:$0xf] %v4249
      %4267 = vst [vmem:[%s4262 + $0x38] sm:$0xf] %v4250
      %4268 = vst [vmem:[%s4262 + $0x3c] sm:$0xf] %v4251
      %4269 = vst [vmem:[%s4262 + $0x50] sm:$0xf] %v4252
      %4270 = vst [vmem:[%s4262 + $0x54] sm:$0xf] %v4253
      %4271 = vst [vmem:[%s4262 + $0x68] sm:$0xf] %v4254
      %4272 = vst [vmem:[%s4262 + $0x6c] sm:$0xf] %v4255
      %4273 = vst [vmem:[%s4262 + $0x80] sm:$0xf] %v4256
      %4274 = vst [vmem:[%s4262 + $0x84] sm:$0xf] %v4257
      %4275 = vst [vmem:[%s4262 + $0x98] sm:$0xf] %v4258
      %4276 = vst [vmem:[%s4262 + $0x9c] sm:$0xf] %v4259
      %4277 = vst [vmem:[%s4262 + $0xb0] sm:$0xf] %v4260
      %4278 = vst [vmem:[%s4262 + $0xb4] sm:$0xf] %v4261
      %v4279 = vld [vmem:[%s6] sm:$0x1]
      %v4281 = vperm.slane %v4279, 0
      %v4283 = vld [vmem:[#allocation3 + $0x4] sm:$0x8]
      %v4284 = vld [vmem:[#allocation3 + $0x8] sm:$0xf]
      %v4285 = vld [vmem:[#allocation3 + $0xc] sm:$0xf]
      %v4286 = vld [vmem:[#allocation3 + $0x1c] sm:$0x8]
      %v4287 = vld [vmem:[#allocation3 + $0x20] sm:$0xf]
      %v4288 = vld [vmem:[#allocation3 + $0x24] sm:$0xf]
      %v4289 = vld [vmem:[#allocation3 + $0x34] sm:$0x8]
      %v4290 = vld [vmem:[#allocation3 + $0x38] sm:$0xf]
      %v4291 = vld [vmem:[#allocation3 + $0x3c] sm:$0xf]
      %v4292 = vld [vmem:[#allocation3 + $0x4c] sm:$0x8]
      %v4293 = vld [vmem:[#allocation3 + $0x50] sm:$0xf]
      %v4294 = vld [vmem:[#allocation3 + $0x54] sm:$0xf]
      %v4295 = vld [vmem:[#allocation3 + $0x64] sm:$0x8]
      %v4296 = vld [vmem:[#allocation3 + $0x68] sm:$0xf]
      %v4297 = vld [vmem:[#allocation3 + $0x6c] sm:$0xf]
      %v4298 = vld [vmem:[#allocation3 + $0x7c] sm:$0x8]
      %v4299 = vld [vmem:[#allocation3 + $0x80] sm:$0xf]
      %v4300 = vld [vmem:[#allocation3 + $0x84] sm:$0xf]
      %v4301 = vld [vmem:[#allocation3 + $0x94] sm:$0x8]
      %v4302 = vld [vmem:[#allocation3 + $0x98] sm:$0xf]
      %v4303 = vld [vmem:[#allocation3 + $0x9c] sm:$0xf]
      %v4304 = vld [vmem:[#allocation3 + $0xac] sm:$0x8]
      %v4305 = vld [vmem:[#allocation3 + $0xb0] sm:$0xf]
      %v4306 = vld [vmem:[#allocation3 + $0xb4] sm:$0xf]
      %v4307 = vld [vmem:[#allocation3 + $0xc4] sm:$0x8]
      %v4308 = vld [vmem:[#allocation3 + $0xc8] sm:$0xf]
      %v4309 = vld [vmem:[#allocation3 + $0xcc] sm:$0xf]
      %v4310 = vld [vmem:[#allocation3 + $0xdc] sm:$0x8]
      %v4311 = vld [vmem:[#allocation3 + $0xe0] sm:$0xf]
      %v4312 = vld [vmem:[#allocation3 + $0xe4] sm:$0xf]
      %v4314 = vshrl.u32 %v4283, 16
      %v4316 = vrot.slane %v4314, 7
      %v4317 = vrot.slane %v4316, 4
      %v4319 = vshrl.u32 %v4284, 16
      %v4321 = vrot.slane %v4319, 7
      %v4322 = vshll.u32 %v4284, 16
      %v4324 = vor.u32 %v4321, %v4322
      %v4325 = vsel %vm1008, %v4317, %v4324
      %v4326 = vrot.slane %v4321, 4
      %v4328 = vshrl.u32 %v4285, 16
      %v4330 = vrot.slane %v4328, 7
      %v4331 = vshll.u32 %v4285, 16
      %v4333 = vor.u32 %v4330, %v4331
      %v4334 = vsel %vm1008, %v4326, %v4333
      %v4336 = vshrl.u32 %v4286, 16
      %v4338 = vrot.slane %v4336, 7
      %v4339 = vrot.slane %v4338, 4
      %v4341 = vshrl.u32 %v4287, 16
      %v4343 = vrot.slane %v4341, 7
      %v4344 = vshll.u32 %v4287, 16
      %v4346 = vor.u32 %v4343, %v4344
      %v4347 = vsel %vm1008, %v4339, %v4346
      %v4348 = vrot.slane %v4343, 4
      %v4350 = vshrl.u32 %v4288, 16
      %v4352 = vrot.slane %v4350, 7
      %v4353 = vshll.u32 %v4288, 16
      %v4355 = vor.u32 %v4352, %v4353
      %v4356 = vsel %vm1008, %v4348, %v4355
      %v4358 = vshrl.u32 %v4289, 16
      %v4360 = vrot.slane %v4358, 7
      %v4361 = vrot.slane %v4360, 4
      %v4363 = vshrl.u32 %v4290, 16
      %v4365 = vrot.slane %v4363, 7
      %v4366 = vshll.u32 %v4290, 16
      %v4368 = vor.u32 %v4365, %v4366
      %v4369 = vsel %vm1008, %v4361, %v4368
      %v4370 = vrot.slane %v4365, 4
      %v4372 = vshrl.u32 %v4291, 16
      %v4374 = vrot.slane %v4372, 7
      %v4375 = vshll.u32 %v4291, 16
      %v4377 = vor.u32 %v4374, %v4375
      %v4378 = vsel %vm1008, %v4370, %v4377
      %v4380 = vshrl.u32 %v4292, 16
      %v4382 = vrot.slane %v4380, 7
      %v4383 = vrot.slane %v4382, 4
      %v4385 = vshrl.u32 %v4293, 16
      %v4387 = vrot.slane %v4385, 7
      %v4388 = vshll.u32 %v4293, 16
      %v4390 = vor.u32 %v4387, %v4388
      %v4391 = vsel %vm1008, %v4383, %v4390
      %v4392 = vrot.slane %v4387, 4
      %v4394 = vshrl.u32 %v4294, 16
      %v4396 = vrot.slane %v4394, 7
      %v4397 = vshll.u32 %v4294, 16
      %v4399 = vor.u32 %v4396, %v4397
      %v4400 = vsel %vm1008, %v4392, %v4399
      %v4402 = vshrl.u32 %v4295, 16
      %v4404 = vrot.slane %v4402, 7
      %v4405 = vrot.slane %v4404, 4
      %v4407 = vshrl.u32 %v4296, 16
      %v4409 = vrot.slane %v4407, 7
      %v4410 = vshll.u32 %v4296, 16
      %v4412 = vor.u32 %v4409, %v4410
      %v4413 = vsel %vm1008, %v4405, %v4412
      %v4414 = vrot.slane %v4409, 4
      %v4416 = vshrl.u32 %v4297, 16
      %v4418 = vrot.slane %v4416, 7
      %v4419 = vshll.u32 %v4297, 16
      %v4421 = vor.u32 %v4418, %v4419
      %v4422 = vsel %vm1008, %v4414, %v4421
      %v4424 = vshrl.u32 %v4298, 16
      %v4426 = vrot.slane %v4424, 7
      %v4427 = vrot.slane %v4426, 4
      %v4429 = vshrl.u32 %v4299, 16
      %v4431 = vrot.slane %v4429, 7
      %v4432 = vshll.u32 %v4299, 16
      %v4434 = vor.u32 %v4431, %v4432
      %v4435 = vsel %vm1008, %v4427, %v4434
      %v4436 = vrot.slane %v4431, 4
      %v4438 = vshrl.u32 %v4300, 16
      %v4440 = vrot.slane %v4438, 7
      %v4441 = vshll.u32 %v4300, 16
      %v4443 = vor.u32 %v4440, %v4441
      %v4444 = vsel %vm1008, %v4436, %v4443
      %v4446 = vshrl.u32 %v4301, 16
      %v4448 = vrot.slane %v4446, 7
      %v4449 = vrot.slane %v4448, 4
      %v4451 = vshrl.u32 %v4302, 16
      %v4453 = vrot.slane %v4451, 7
      %v4454 = vshll.u32 %v4302, 16
      %v4456 = vor.u32 %v4453, %v4454
      %v4457 = vsel %vm1008, %v4449, %v4456
      %v4458 = vrot.slane %v4453, 4
      %v4460 = vshrl.u32 %v4303, 16
      %v4462 = vrot.slane %v4460, 7
      %v4463 = vshll.u32 %v4303, 16
      %v4465 = vor.u32 %v4462, %v4463
      %v4466 = vsel %vm1008, %v4458, %v4465
      %v4468 = vshrl.u32 %v4304, 16
      %v4470 = vrot.slane %v4468, 7
      %v4471 = vrot.slane %v4470, 4
      %v4473 = vshrl.u32 %v4305, 16
      %v4475 = vrot.slane %v4473, 7
      %v4476 = vshll.u32 %v4305, 16
      %v4478 = vor.u32 %v4475, %v4476
      %v4479 = vsel %vm1008, %v4471, %v4478
      %v4480 = vrot.slane %v4475, 4
      %v4482 = vshrl.u32 %v4306, 16
      %v4484 = vrot.slane %v4482, 7
      %v4485 = vshll.u32 %v4306, 16
      %v4487 = vor.u32 %v4484, %v4485
      %v4488 = vsel %vm1008, %v4480, %v4487
      %v4490 = vshrl.u32 %v4307, 16
      %v4492 = vrot.slane %v4490, 7
      %v4493 = vrot.slane %v4492, 4
      %v4495 = vshrl.u32 %v4308, 16
      %v4497 = vrot.slane %v4495, 7
      %v4498 = vshll.u32 %v4308, 16
      %v4500 = vor.u32 %v4497, %v4498
      %v4501 = vsel %vm1008, %v4493, %v4500
      %v4502 = vrot.slane %v4497, 4
      %v4504 = vshrl.u32 %v4309, 16
      %v4506 = vrot.slane %v4504, 7
      %v4507 = vshll.u32 %v4309, 16
      %v4509 = vor.u32 %v4506, %v4507
      %v4510 = vsel %vm1008, %v4502, %v4509
      %v4512 = vshrl.u32 %v4310, 16
      %v4514 = vrot.slane %v4512, 7
      %v4515 = vrot.slane %v4514, 4
      %v4517 = vshrl.u32 %v4311, 16
      %v4519 = vrot.slane %v4517, 7
      %v4520 = vshll.u32 %v4311, 16
      %v4522 = vor.u32 %v4519, %v4520
      %v4523 = vsel %vm1008, %v4515, %v4522
      %v4524 = vrot.slane %v4519, 4
      %v4526 = vshrl.u32 %v4312, 16
      %v4528 = vrot.slane %v4526, 7
      %v4529 = vshll.u32 %v4312, 16
      %v4531 = vor.u32 %v4528, %v4529
      %v4532 = vsel %vm1008, %v4524, %v4531
      %v4533 = vunpack.c.l.b16 %v4325
      %v4534 = vunpack.c.l.b16 %v4334
      %v4535 = vunpack.c.l.b16 %v4347
      %v4536 = vunpack.c.l.b16 %v4356
      %v4537 = vunpack.c.l.b16 %v4369
      %v4538 = vunpack.c.l.b16 %v4378
      %v4539 = vunpack.c.l.b16 %v4391
      %v4540 = vunpack.c.l.b16 %v4400
      %v4541 = vunpack.c.l.b16 %v4413
      %v4542 = vunpack.c.l.b16 %v4422
      %v4543 = vunpack.c.l.b16 %v4435
      %v4544 = vunpack.c.l.b16 %v4444
      %v4545 = vunpack.c.l.b16 %v4457
      %v4546 = vunpack.c.l.b16 %v4466
      %v4547 = vunpack.c.l.b16 %v4479
      %v4548 = vunpack.c.l.b16 %v4488
      %v4549 = vpack.c.b16 %v4534, %v4533
      %v4550 = vpack.c.b16 %v4536, %v4535
      %v4551 = vpack.c.b16 %v4538, %v4537
      %v4552 = vpack.c.b16 %v4540, %v4539
      %v4553 = vpack.c.b16 %v4542, %v4541
      %v4554 = vpack.c.b16 %v4544, %v4543
      %v4555 = vpack.c.b16 %v4546, %v4545
      %v4556 = vpack.c.b16 %v4548, %v4547
      %v4565 = vunpack.c.l.b16 %v4501
      %v4566 = vunpack.c.l.b16 %v4510
      %v4567 = vpack.c.b16 %v4566, %v4565
      %v4569 = vunpack.c.l.b16 %v4523
      %v4570 = vunpack.c.l.b16 %v4532
      %v4571 = vpack.c.b16 %v4570, %v4569
      %v4573 = vld [vmem:[%s5] sm:$0xf]
      %v4574 = vld [vmem:[%s5 + $0x4] sm:$0xf]
      %v4575 = vld [vmem:[%s5 + $0x8] sm:$0xf]
      %v4576 = vld [vmem:[%s5 + $0xc] sm:$0xf]
      %v4577 = vld [vmem:[%s5 + $0x10] sm:$0xf]
      %v4578 = vld [vmem:[%s5 + $0x14] sm:$0xf]
      %v4579 = vld [vmem:[%s5 + $0x18] sm:$0xf]
      %v4580 = vld [vmem:[%s5 + $0x1c] sm:$0xf]
      %v4581 = vld [vmem:[%s5 + $0x20] sm:$0xf]
      %v4582 = vld [vmem:[%s5 + $0x24] sm:$0xf]
      %v4583 = vld [vmem:[%s5 + $0x28] sm:$0xf]
      %v4584 = vld [vmem:[%s5 + $0x2c] sm:$0xf]
      %v4585 = vld [vmem:[%s5 + $0x30] sm:$0xf]
      %v4586 = vld [vmem:[%s5 + $0x34] sm:$0xf]
      %v4587 = vld [vmem:[%s5 + $0x38] sm:$0xf]
      %v4588 = vld [vmem:[%s5 + $0x3c] sm:$0xf]
      %v4589 = vld [vmem:[%s5 + $0x40] sm:$0xf]
      %v4590 = vld [vmem:[%s5 + $0x44] sm:$0xf]
      %v4591 = vld [vmem:[%s5 + $0x48] sm:$0xf]
      %v4592 = vld [vmem:[%s5 + $0x4c] sm:$0xf]
      %v4593 = vld [vmem:[%s5 + $0x50] sm:$0xf]
      %v4594 = vld [vmem:[%s5 + $0x54] sm:$0xf]
      %v4595 = vld [vmem:[%s5 + $0x58] sm:$0xf]
      %v4596 = vld [vmem:[%s5 + $0x5c] sm:$0xf]
      %v4597 = vld [vmem:[%s5 + $0x60] sm:$0xf]
      %v4598 = vld [vmem:[%s5 + $0x64] sm:$0xf]
      %v4599 = vld [vmem:[%s5 + $0x68] sm:$0xf]
      %v4600 = vld [vmem:[%s5 + $0x6c] sm:$0xf]
      %v4601 = vld [vmem:[%s5 + $0x70] sm:$0xf]
      %v4602 = vld [vmem:[%s5 + $0x74] sm:$0xf]
      %v4603 = vld [vmem:[%s5 + $0x78] sm:$0xf]
      %v4604 = vld [vmem:[%s5 + $0x7c] sm:$0xf]
      %v4605 = vld [vmem:[%s5 + $0x80] sm:$0xf]
      %v4606 = vld [vmem:[%s5 + $0x84] sm:$0xf]
      %v4607 = vld [vmem:[%s5 + $0x88] sm:$0xf]
      %v4608 = vld [vmem:[%s5 + $0x8c] sm:$0xf]
      %v4609 = vld [vmem:[%s5 + $0x90] sm:$0xf]
      %v4610 = vld [vmem:[%s5 + $0x94] sm:$0xf]
      %v4611 = vld [vmem:[%s5 + $0x98] sm:$0xf]
      %v4612 = vld [vmem:[%s5 + $0x9c] sm:$0xf]
      %v4613 = vld [vmem:[%s5 + $0xa0] sm:$0xf]
      %v4614 = vld [vmem:[%s5 + $0xa4] sm:$0xf]
      %v4615 = vld [vmem:[%s5 + $0xa8] sm:$0xf]
      %v4616 = vld [vmem:[%s5 + $0xac] sm:$0xf]
      %v4617 = vld [vmem:[%s5 + $0xb0] sm:$0xf]
      %v4618 = vld [vmem:[%s5 + $0xb4] sm:$0xf]
      %v4619 = vld [vmem:[%s5 + $0xb8] sm:$0xf]
      %v4620 = vld [vmem:[%s5 + $0xbc] sm:$0xf]
      %v4669 = vunpack.c.l.b16 %v4573
      %v4670 = vunpack.c.l.b16 %v4574
      %v4671 = vunpack.c.l.b16 %v4575
      %v4672 = vunpack.c.l.b16 %v4576
      %v4673 = vunpack.c.l.b16 %v4577
      %v4674 = vunpack.c.l.b16 %v4578
      %v4675 = vunpack.c.l.b16 %v4579
      %v4676 = vunpack.c.l.b16 %v4580
      %v4677 = vunpack.c.l.b16 %v4581
      %v4678 = vunpack.c.l.b16 %v4582
      %v4679 = vunpack.c.l.b16 %v4583
      %v4680 = vunpack.c.l.b16 %v4584
      %v4681 = vunpack.c.l.b16 %v4585
      %v4682 = vunpack.c.l.b16 %v4586
      %v4683 = vunpack.c.l.b16 %v4587
      %v4684 = vunpack.c.l.b16 %v4588
      %v4685 = vunpack.c.l.b16 %v4589
      %v4686 = vunpack.c.l.b16 %v4590
      %v4687 = vunpack.c.l.b16 %v4591
      %v4688 = vunpack.c.l.b16 %v4592
      %v4689 = vunpack.c.l.b16 %v4593
      %v4690 = vunpack.c.l.b16 %v4594
      %v4691 = vunpack.c.l.b16 %v4595
      %v4692 = vunpack.c.l.b16 %v4596
      %v4693 = vunpack.c.l.b16 %v4597
      %v4694 = vunpack.c.l.b16 %v4598
      %v4695 = vunpack.c.l.b16 %v4599
      %v4696 = vunpack.c.l.b16 %v4600
      %v4697 = vunpack.c.l.b16 %v4601
      %v4698 = vunpack.c.l.b16 %v4602
      %v4699 = vunpack.c.l.b16 %v4603
      %v4700 = vunpack.c.l.b16 %v4604
      %v4701 = vunpack.c.l.b16 %v4605
      %v4702 = vunpack.c.l.b16 %v4606
      %v4703 = vunpack.c.l.b16 %v4607
      %v4704 = vunpack.c.l.b16 %v4608
      %v4705 = vunpack.c.l.b16 %v4609
      %v4706 = vunpack.c.l.b16 %v4610
      %v4707 = vunpack.c.l.b16 %v4611
      %v4708 = vunpack.c.l.b16 %v4612
      %v4709 = vunpack.c.l.b16 %v4613
      %v4710 = vunpack.c.l.b16 %v4614
      %v4711 = vunpack.c.l.b16 %v4615
      %v4712 = vunpack.c.l.b16 %v4616
      %v4713 = vunpack.c.l.b16 %v4617
      %v4714 = vunpack.c.l.b16 %v4618
      %v4715 = vunpack.c.l.b16 %v4619
      %v4716 = vunpack.c.l.b16 %v4620
      %v4717 = vpack.c.b16 %v4670, %v4669
      %v4718 = vpack.c.b16 %v4672, %v4671
      %v4719 = vpack.c.b16 %v4674, %v4673
      %v4720 = vpack.c.b16 %v4676, %v4675
      %v4721 = vpack.c.b16 %v4678, %v4677
      %v4722 = vpack.c.b16 %v4680, %v4679
      %v4723 = vpack.c.b16 %v4682, %v4681
      %v4724 = vpack.c.b16 %v4684, %v4683
      %v4725 = vpack.c.b16 %v4686, %v4685
      %v4726 = vpack.c.b16 %v4688, %v4687
      %v4727 = vpack.c.b16 %v4690, %v4689
      %v4728 = vpack.c.b16 %v4692, %v4691
      %v4729 = vpack.c.b16 %v4694, %v4693
      %v4730 = vpack.c.b16 %v4696, %v4695
      %v4731 = vpack.c.b16 %v4698, %v4697
      %v4732 = vpack.c.b16 %v4700, %v4699
      %v4733 = vpack.c.b16 %v4702, %v4701
      %v4734 = vpack.c.b16 %v4704, %v4703
      %v4735 = vpack.c.b16 %v4706, %v4705
      %v4736 = vpack.c.b16 %v4708, %v4707
      %v4737 = vpack.c.b16 %v4710, %v4709
      %v4738 = vpack.c.b16 %v4712, %v4711
      %v4739 = vpack.c.b16 %v4714, %v4713
      %v4740 = vpack.c.b16 %v4716, %v4715
      %4765 = vmatpush.bf16.msra.mxu0 %v4724
      %4766 = vmatpush.bf16.msra.mxu0 %v4723
      %4767 = vmatpush.bf16.msra.mxu0 %v4722
      %4768 = vmatpush.bf16.msra.mxu0 %v4721
      %4769 = vmatpush.bf16.msra.mxu0 %v4720
      %4770 = vmatpush.bf16.msra.mxu0 %v4719
      %4771 = vmatpush.bf16.msra.mxu0 %v4718
      %4772 = vmatpush.bf16.msra.mxu0 %v4717
      %4773 = vmatmul.bf16.gmra.mxu0 %v4549
      %v4774 = vpop.f32.mrf.mxu0
      %v4775 = vadd.f32 0.0, %v4774
      %v4776 = vpop.f32.mrf.mxu0
      %v4777 = vadd.f32 0.0, %v4776
      %4778 = vmatmul.bf16.gmra.mxu0 %v4550
      %v4779 = vpop.f32.mrf.mxu0
      %v4780 = vadd.f32 0.0, %v4779
      %v4781 = vpop.f32.mrf.mxu0
      %v4782 = vadd.f32 0.0, %v4781
      %4783 = vmatmul.bf16.gmra.mxu0 %v4551
      %v4784 = vpop.f32.mrf.mxu0
      %v4785 = vadd.f32 0.0, %v4784
      %v4786 = vpop.f32.mrf.mxu0
      %v4787 = vadd.f32 0.0, %v4786
      %4788 = vmatmul.bf16.gmra.mxu0 %v4552
      %v4789 = vpop.f32.mrf.mxu0
      %v4790 = vadd.f32 0.0, %v4789
      %v4791 = vpop.f32.mrf.mxu0
      %v4792 = vadd.f32 0.0, %v4791
      %4793 = vmatmul.bf16.gmra.mxu0 %v4553
      %v4794 = vpop.f32.mrf.mxu0
      %v4795 = vadd.f32 0.0, %v4794
      %v4796 = vpop.f32.mrf.mxu0
      %v4797 = vadd.f32 0.0, %v4796
      %4798 = vmatmul.bf16.gmra.mxu0 %v4554
      %v4799 = vpop.f32.mrf.mxu0
      %v4800 = vadd.f32 0.0, %v4799
      %v4801 = vpop.f32.mrf.mxu0
      %v4802 = vadd.f32 0.0, %v4801
      %4803 = vmatmul.bf16.gmra.mxu0 %v4555
      %v4804 = vpop.f32.mrf.mxu0
      %v4805 = vadd.f32 0.0, %v4804
      %v4806 = vpop.f32.mrf.mxu0
      %v4807 = vadd.f32 0.0, %v4806
      %4808 = vmatmul.bf16.gmra.mxu0 %v4556
      %v4809 = vpop.f32.mrf.mxu0
      %v4810 = vadd.f32 0.0, %v4809
      %v4811 = vpop.f32.mrf.mxu0
      %v4812 = vadd.f32 0.0, %v4811
      %4813 = vdwg.mxu0
      %4814 = vmatpush.bf16.msra.mxu0 %v4732
      %4815 = vmatpush.bf16.msra.mxu0 %v4731
      %4816 = vmatpush.bf16.msra.mxu0 %v4730
      %4817 = vmatpush.bf16.msra.mxu0 %v4729
      %4818 = vmatpush.bf16.msra.mxu0 %v4728
      %4819 = vmatpush.bf16.msra.mxu0 %v4727
      %4820 = vmatpush.bf16.msra.mxu0 %v4726
      %4821 = vmatpush.bf16.msra.mxu0 %v4725
      %4822 = vmatmul.bf16.gmra.mxu0 %v4550
      %v4823 = vpop.f32.mrf.mxu0
      %v4824 = vadd.f32 %v4775, %v4823
      %v4825 = vpop.f32.mrf.mxu0
      %v4826 = vadd.f32 %v4777, %v4825
      %4827 = vmatmul.bf16.gmra.mxu0 %v4551
      %v4828 = vpop.f32.mrf.mxu0
      %v4829 = vadd.f32 %v4780, %v4828
      %v4830 = vpop.f32.mrf.mxu0
      %v4831 = vadd.f32 %v4782, %v4830
      %4832 = vmatmul.bf16.gmra.mxu0 %v4552
      %v4833 = vpop.f32.mrf.mxu0
      %v4834 = vadd.f32 %v4785, %v4833
      %v4835 = vpop.f32.mrf.mxu0
      %v4836 = vadd.f32 %v4787, %v4835
      %4837 = vmatmul.bf16.gmra.mxu0 %v4553
      %v4838 = vpop.f32.mrf.mxu0
      %v4839 = vadd.f32 %v4790, %v4838
      %v4840 = vpop.f32.mrf.mxu0
      %v4841 = vadd.f32 %v4792, %v4840
      %4842 = vmatmul.bf16.gmra.mxu0 %v4554
      %v4843 = vpop.f32.mrf.mxu0
      %v4844 = vadd.f32 %v4795, %v4843
      %v4845 = vpop.f32.mrf.mxu0
      %v4846 = vadd.f32 %v4797, %v4845
      %4847 = vmatmul.bf16.gmra.mxu0 %v4555
      %v4848 = vpop.f32.mrf.mxu0
      %v4849 = vadd.f32 %v4800, %v4848
      %v4850 = vpop.f32.mrf.mxu0
      %v4851 = vadd.f32 %v4802, %v4850
      %4852 = vmatmul.bf16.gmra.mxu0 %v4556
      %v4853 = vpop.f32.mrf.mxu0
      %v4854 = vadd.f32 %v4805, %v4853
      %v4855 = vpop.f32.mrf.mxu0
      %v4856 = vadd.f32 %v4807, %v4855
      %4857 = vmatmul.bf16.gmra.mxu0 %v4567
      %v4858 = vpop.f32.mrf.mxu0
      %v4859 = vadd.f32 %v4810, %v4858
      %v4860 = vpop.f32.mrf.mxu0
      %v4861 = vadd.f32 %v4812, %v4860
      %4862 = vdwg.mxu0
      %4863 = vmatpush.bf16.msra.mxu0 %v4740
      %4864 = vmatpush.bf16.msra.mxu0 %v4739
      %4865 = vmatpush.bf16.msra.mxu0 %v4738
      %4866 = vmatpush.bf16.msra.mxu0 %v4737
      %4867 = vmatpush.bf16.msra.mxu0 %v4736
      %4868 = vmatpush.bf16.msra.mxu0 %v4735
      %4869 = vmatpush.bf16.msra.mxu0 %v4734
      %4870 = vmatpush.bf16.msra.mxu0 %v4733
      %4871 = vmatmul.bf16.gmra.mxu0 %v4551
      %v4872 = vpop.f32.mrf.mxu0
      %v4873 = vadd.f32 %v4824, %v4872
      %v4874 = vpop.f32.mrf.mxu0
      %v4875 = vadd.f32 %v4826, %v4874
      %4876 = vmatmul.bf16.gmra.mxu0 %v4552
      %v4877 = vpop.f32.mrf.mxu0
      %v4878 = vadd.f32 %v4829, %v4877
      %v4879 = vpop.f32.mrf.mxu0
      %v4880 = vadd.f32 %v4831, %v4879
      %4881 = vmatmul.bf16.gmra.mxu0 %v4553
      %v4882 = vpop.f32.mrf.mxu0
      %v4883 = vadd.f32 %v4834, %v4882
      %v4884 = vpop.f32.mrf.mxu0
      %v4885 = vadd.f32 %v4836, %v4884
      %4886 = vmatmul.bf16.gmra.mxu0 %v4554
      %v4887 = vpop.f32.mrf.mxu0
      %v4888 = vadd.f32 %v4839, %v4887
      %v4889 = vpop.f32.mrf.mxu0
      %v4890 = vadd.f32 %v4841, %v4889
      %4891 = vmatmul.bf16.gmra.mxu0 %v4555
      %v4892 = vpop.f32.mrf.mxu0
      %v4893 = vadd.f32 %v4844, %v4892
      %v4894 = vpop.f32.mrf.mxu0
      %v4895 = vadd.f32 %v4846, %v4894
      %4896 = vmatmul.bf16.gmra.mxu0 %v4556
      %v4897 = vpop.f32.mrf.mxu0
      %v4898 = vadd.f32 %v4849, %v4897
      %v4899 = vpop.f32.mrf.mxu0
      %v4900 = vadd.f32 %v4851, %v4899
      %4901 = vmatmul.bf16.gmra.mxu0 %v4567
      %v4902 = vpop.f32.mrf.mxu0
      %v4903 = vadd.f32 %v4854, %v4902
      %v4904 = vpop.f32.mrf.mxu0
      %v4905 = vadd.f32 %v4856, %v4904
      %4906 = vmatmul.bf16.gmra.mxu0 %v4571
      %v4907 = vpop.f32.mrf.mxu0
      %v4908 = vadd.f32 %v4859, %v4907
      %v4909 = vpop.f32.mrf.mxu0
      %v4910 = vadd.f32 %v4861, %v4909
      %4911 = vdwg.mxu0
      %v4912 = vadd.f32 %v4281, %v4873
      %v4913 = vadd.f32 %v4281, %v4875
      %v4914 = vadd.f32 %v4281, %v4878
      %v4915 = vadd.f32 %v4281, %v4880
      %v4916 = vadd.f32 %v4281, %v4883
      %v4917 = vadd.f32 %v4281, %v4885
      %v4918 = vadd.f32 %v4281, %v4888
      %v4919 = vadd.f32 %v4281, %v4890
      %v4920 = vadd.f32 %v4281, %v4893
      %v4921 = vadd.f32 %v4281, %v4895
      %v4922 = vadd.f32 %v4281, %v4898
      %v4923 = vadd.f32 %v4281, %v4900
      %v4924 = vadd.f32 %v4281, %v4903
      %v4925 = vadd.f32 %v4281, %v4905
      %v4926 = vadd.f32 %v4281, %v4908
      %v4927 = vadd.f32 %v4281, %v4910
      %v4944 = vunpack.c.l.b16 %v4284
      %v4945 = vunpack.c.l.b16 %v4285
      %v4946 = vunpack.c.l.b16 %v4287
      %v4947 = vunpack.c.l.b16 %v4288
      %v4948 = vunpack.c.l.b16 %v4290
      %v4949 = vunpack.c.l.b16 %v4291
      %v4950 = vunpack.c.l.b16 %v4293
      %v4951 = vunpack.c.l.b16 %v4294
      %v4952 = vunpack.c.l.b16 %v4296
      %v4953 = vunpack.c.l.b16 %v4297
      %v4954 = vunpack.c.l.b16 %v4299
      %v4955 = vunpack.c.l.b16 %v4300
      %v4956 = vunpack.c.l.b16 %v4302
      %v4957 = vunpack.c.l.b16 %v4303
      %v4958 = vunpack.c.l.b16 %v4305
      %v4959 = vunpack.c.l.b16 %v4306
      %v4960 = vpack.c.b16 %v4945, %v4944
      %v4961 = vpack.c.b16 %v4947, %v4946
      %v4962 = vpack.c.b16 %v4949, %v4948
      %v4963 = vpack.c.b16 %v4951, %v4950
      %v4964 = vpack.c.b16 %v4953, %v4952
      %v4965 = vpack.c.b16 %v4955, %v4954
      %v4966 = vpack.c.b16 %v4957, %v4956
      %v4967 = vpack.c.b16 %v4959, %v4958
      %v4978 = vunpack.c.l.b16 %v4308
      %v4979 = vunpack.c.l.b16 %v4309
      %v4980 = vpack.c.b16 %v4979, %v4978
      %v4984 = vunpack.c.l.b16 %v4311
      %v4985 = vunpack.c.l.b16 %v4312
      %v4986 = vpack.c.b16 %v4985, %v4984
      %s4988 = scalar_lea.vmem %s5, 192
      %v4989 = vld [vmem:[%s4988] sm:$0xf]
      %v4990 = vld [vmem:[%s4988 + $0x4] sm:$0xf]
      %v4991 = vld [vmem:[%s4988 + $0x8] sm:$0xf]
      %v4992 = vld [vmem:[%s4988 + $0xc] sm:$0xf]
      %v4993 = vld [vmem:[%s4988 + $0x10] sm:$0xf]
      %v4994 = vld [vmem:[%s4988 + $0x14] sm:$0xf]
      %v4995 = vld [vmem:[%s4988 + $0x18] sm:$0xf]
      %v4996 = vld [vmem:[%s4988 + $0x1c] sm:$0xf]
      %v4997 = vld [vmem:[%s4988 + $0x20] sm:$0xf]
      %v4998 = vld [vmem:[%s4988 + $0x24] sm:$0xf]
      %v4999 = vld [vmem:[%s4988 + $0x28] sm:$0xf]
      %v5000 = vld [vmem:[%s4988 + $0x2c] sm:$0xf]
      %v5001 = vld [vmem:[%s4988 + $0x30] sm:$0xf]
      %v5002 = vld [vmem:[%s4988 + $0x34] sm:$0xf]
      %v5003 = vld [vmem:[%s4988 + $0x38] sm:$0xf]
      %v5004 = vld [vmem:[%s4988 + $0x3c] sm:$0xf]
      %v5005 = vld [vmem:[%s4988 + $0x40] sm:$0xf]
      %v5006 = vld [vmem:[%s4988 + $0x44] sm:$0xf]
      %v5007 = vld [vmem:[%s4988 + $0x48] sm:$0xf]
      %v5008 = vld [vmem:[%s4988 + $0x4c] sm:$0xf]
      %v5009 = vld [vmem:[%s4988 + $0x50] sm:$0xf]
      %v5010 = vld [vmem:[%s4988 + $0x54] sm:$0xf]
      %v5011 = vld [vmem:[%s4988 + $0x58] sm:$0xf]
      %v5012 = vld [vmem:[%s4988 + $0x5c] sm:$0xf]
      %v5013 = vld [vmem:[%s4988 + $0x60] sm:$0xf]
      %v5014 = vld [vmem:[%s4988 + $0x64] sm:$0xf]
      %v5015 = vld [vmem:[%s4988 + $0x68] sm:$0xf]
      %v5016 = vld [vmem:[%s4988 + $0x6c] sm:$0xf]
      %v5017 = vld [vmem:[%s4988 + $0x70] sm:$0xf]
      %v5018 = vld [vmem:[%s4988 + $0x74] sm:$0xf]
      %v5019 = vld [vmem:[%s4988 + $0x78] sm:$0xf]
      %v5020 = vld [vmem:[%s4988 + $0x7c] sm:$0xf]
      %v5021 = vld [vmem:[%s4988 + $0x80] sm:$0xf]
      %v5022 = vld [vmem:[%s4988 + $0x84] sm:$0xf]
      %v5023 = vld [vmem:[%s4988 + $0x88] sm:$0xf]
      %v5024 = vld [vmem:[%s4988 + $0x8c] sm:$0xf]
      %v5025 = vld [vmem:[%s4988 + $0x90] sm:$0xf]
      %v5026 = vld [vmem:[%s4988 + $0x94] sm:$0xf]
      %v5027 = vld [vmem:[%s4988 + $0x98] sm:$0xf]
      %v5028 = vld [vmem:[%s4988 + $0x9c] sm:$0xf]
      %v5029 = vld [vmem:[%s4988 + $0xa0] sm:$0xf]
      %v5030 = vld [vmem:[%s4988 + $0xa4] sm:$0xf]
      %v5031 = vld [vmem:[%s4988 + $0xa8] sm:$0xf]
      %v5032 = vld [vmem:[%s4988 + $0xac] sm:$0xf]
      %v5033 = vld [vmem:[%s4988 + $0xb0] sm:$0xf]
      %v5034 = vld [vmem:[%s4988 + $0xb4] sm:$0xf]
      %v5035 = vld [vmem:[%s4988 + $0xb8] sm:$0xf]
      %v5036 = vld [vmem:[%s4988 + $0xbc] sm:$0xf]
      %v5085 = vunpack.c.l.b16 %v4989
      %v5086 = vunpack.c.l.b16 %v4990
      %v5087 = vunpack.c.l.b16 %v4991
      %v5088 = vunpack.c.l.b16 %v4992
      %v5089 = vunpack.c.l.b16 %v4993
      %v5090 = vunpack.c.l.b16 %v4994
      %v5091 = vunpack.c.l.b16 %v4995
      %v5092 = vunpack.c.l.b16 %v4996
      %v5093 = vunpack.c.l.b16 %v4997
      %v5094 = vunpack.c.l.b16 %v4998
      %v5095 = vunpack.c.l.b16 %v4999
      %v5096 = vunpack.c.l.b16 %v5000
      %v5097 = vunpack.c.l.b16 %v5001
      %v5098 = vunpack.c.l.b16 %v5002
      %v5099 = vunpack.c.l.b16 %v5003
      %v5100 = vunpack.c.l.b16 %v5004
      %v5101 = vunpack.c.l.b16 %v5005
      %v5102 = vunpack.c.l.b16 %v5006
      %v5103 = vunpack.c.l.b16 %v5007
      %v5104 = vunpack.c.l.b16 %v5008
      %v5105 = vunpack.c.l.b16 %v5009
      %v5106 = vunpack.c.l.b16 %v5010
      %v5107 = vunpack.c.l.b16 %v5011
      %v5108 = vunpack.c.l.b16 %v5012
      %v5109 = vunpack.c.l.b16 %v5013
      %v5110 = vunpack.c.l.b16 %v5014
      %v5111 = vunpack.c.l.b16 %v5015
      %v5112 = vunpack.c.l.b16 %v5016
      %v5113 = vunpack.c.l.b16 %v5017
      %v5114 = vunpack.c.l.b16 %v5018
      %v5115 = vunpack.c.l.b16 %v5019
      %v5116 = vunpack.c.l.b16 %v5020
      %v5117 = vunpack.c.l.b16 %v5021
      %v5118 = vunpack.c.l.b16 %v5022
      %v5119 = vunpack.c.l.b16 %v5023
      %v5120 = vunpack.c.l.b16 %v5024
      %v5121 = vunpack.c.l.b16 %v5025
      %v5122 = vunpack.c.l.b16 %v5026
      %v5123 = vunpack.c.l.b16 %v5027
      %v5124 = vunpack.c.l.b16 %v5028
      %v5125 = vunpack.c.l.b16 %v5029
      %v5126 = vunpack.c.l.b16 %v5030
      %v5127 = vunpack.c.l.b16 %v5031
      %v5128 = vunpack.c.l.b16 %v5032
      %v5129 = vunpack.c.l.b16 %v5033
      %v5130 = vunpack.c.l.b16 %v5034
      %v5131 = vunpack.c.l.b16 %v5035
      %v5132 = vunpack.c.l.b16 %v5036
      %v5133 = vpack.c.b16 %v5086, %v5085
      %v5134 = vpack.c.b16 %v5088, %v5087
      %v5135 = vpack.c.b16 %v5090, %v5089
      %v5136 = vpack.c.b16 %v5092, %v5091
      %v5137 = vpack.c.b16 %v5094, %v5093
      %v5138 = vpack.c.b16 %v5096, %v5095
      %v5139 = vpack.c.b16 %v5098, %v5097
      %v5140 = vpack.c.b16 %v5100, %v5099
      %v5141 = vpack.c.b16 %v5102, %v5101
      %v5142 = vpack.c.b16 %v5104, %v5103
      %v5143 = vpack.c.b16 %v5106, %v5105
      %v5144 = vpack.c.b16 %v5108, %v5107
      %v5145 = vpack.c.b16 %v5110, %v5109
      %v5146 = vpack.c.b16 %v5112, %v5111
      %v5147 = vpack.c.b16 %v5114, %v5113
      %v5148 = vpack.c.b16 %v5116, %v5115
      %v5149 = vpack.c.b16 %v5118, %v5117
      %v5150 = vpack.c.b16 %v5120, %v5119
      %v5151 = vpack.c.b16 %v5122, %v5121
      %v5152 = vpack.c.b16 %v5124, %v5123
      %v5153 = vpack.c.b16 %v5126, %v5125
      %v5154 = vpack.c.b16 %v5128, %v5127
      %v5155 = vpack.c.b16 %v5130, %v5129
      %v5156 = vpack.c.b16 %v5132, %v5131
      %5181 = vmatpush.bf16.msra.mxu0 %v5140
      %5182 = vmatpush.bf16.msra.mxu0 %v5139
      %5183 = vmatpush.bf16.msra.mxu0 %v5138
      %5184 = vmatpush.bf16.msra.mxu0 %v5137
      %5185 = vmatpush.bf16.msra.mxu0 %v5136
      %5186 = vmatpush.bf16.msra.mxu0 %v5135
      %5187 = vmatpush.bf16.msra.mxu0 %v5134
      %5188 = vmatpush.bf16.msra.mxu0 %v5133
      %5189 = vmatmul.bf16.gmra.mxu0 %v4960
      %v5190 = vpop.f32.mrf.mxu0
      %v5191 = vadd.f32 0.0, %v5190
      %v5192 = vpop.f32.mrf.mxu0
      %v5193 = vadd.f32 0.0, %v5192
      %5194 = vmatmul.bf16.gmra.mxu0 %v4961
      %v5195 = vpop.f32.mrf.mxu0
      %v5196 = vadd.f32 0.0, %v5195
      %v5197 = vpop.f32.mrf.mxu0
      %v5198 = vadd.f32 0.0, %v5197
      %5199 = vmatmul.bf16.gmra.mxu0 %v4962
      %v5200 = vpop.f32.mrf.mxu0
      %v5201 = vadd.f32 0.0, %v5200
      %v5202 = vpop.f32.mrf.mxu0
      %v5203 = vadd.f32 0.0, %v5202
      %5204 = vmatmul.bf16.gmra.mxu0 %v4963
      %v5205 = vpop.f32.mrf.mxu0
      %v5206 = vadd.f32 0.0, %v5205
      %v5207 = vpop.f32.mrf.mxu0
      %v5208 = vadd.f32 0.0, %v5207
      %5209 = vmatmul.bf16.gmra.mxu0 %v4964
      %v5210 = vpop.f32.mrf.mxu0
      %v5211 = vadd.f32 0.0, %v5210
      %v5212 = vpop.f32.mrf.mxu0
      %v5213 = vadd.f32 0.0, %v5212
      %5214 = vmatmul.bf16.gmra.mxu0 %v4965
      %v5215 = vpop.f32.mrf.mxu0
      %v5216 = vadd.f32 0.0, %v5215
      %v5217 = vpop.f32.mrf.mxu0
      %v5218 = vadd.f32 0.0, %v5217
      %5219 = vmatmul.bf16.gmra.mxu0 %v4966
      %v5220 = vpop.f32.mrf.mxu0
      %v5221 = vadd.f32 0.0, %v5220
      %v5222 = vpop.f32.mrf.mxu0
      %v5223 = vadd.f32 0.0, %v5222
      %5224 = vmatmul.bf16.gmra.mxu0 %v4967
      %v5225 = vpop.f32.mrf.mxu0
      %v5226 = vadd.f32 0.0, %v5225
      %v5227 = vpop.f32.mrf.mxu0
      %v5228 = vadd.f32 0.0, %v5227
      %5229 = vdwg.mxu0
      %5230 = vmatpush.bf16.msra.mxu0 %v5148
      %5231 = vmatpush.bf16.msra.mxu0 %v5147
      %5232 = vmatpush.bf16.msra.mxu0 %v5146
      %5233 = vmatpush.bf16.msra.mxu0 %v5145
      %5234 = vmatpush.bf16.msra.mxu0 %v5144
      %5235 = vmatpush.bf16.msra.mxu0 %v5143
      %5236 = vmatpush.bf16.msra.mxu0 %v5142
      %5237 = vmatpush.bf16.msra.mxu0 %v5141
      %5238 = vmatmul.bf16.gmra.mxu0 %v4961
      %v5239 = vpop.f32.mrf.mxu0
      %v5240 = vadd.f32 %v5191, %v5239
      %v5241 = vpop.f32.mrf.mxu0
      %v5242 = vadd.f32 %v5193, %v5241
      %5243 = vmatmul.bf16.gmra.mxu0 %v4962
      %v5244 = vpop.f32.mrf.mxu0
      %v5245 = vadd.f32 %v5196, %v5244
      %v5246 = vpop.f32.mrf.mxu0
      %v5247 = vadd.f32 %v5198, %v5246
      %5248 = vmatmul.bf16.gmra.mxu0 %v4963
      %v5249 = vpop.f32.mrf.mxu0
      %v5250 = vadd.f32 %v5201, %v5249
      %v5251 = vpop.f32.mrf.mxu0
      %v5252 = vadd.f32 %v5203, %v5251
      %5253 = vmatmul.bf16.gmra.mxu0 %v4964
      %v5254 = vpop.f32.mrf.mxu0
      %v5255 = vadd.f32 %v5206, %v5254
      %v5256 = vpop.f32.mrf.mxu0
      %v5257 = vadd.f32 %v5208, %v5256
      %5258 = vmatmul.bf16.gmra.mxu0 %v4965
      %v5259 = vpop.f32.mrf.mxu0
      %v5260 = vadd.f32 %v5211, %v5259
      %v5261 = vpop.f32.mrf.mxu0
      %v5262 = vadd.f32 %v5213, %v5261
      %5263 = vmatmul.bf16.gmra.mxu0 %v4966
      %v5264 = vpop.f32.mrf.mxu0
      %v5265 = vadd.f32 %v5216, %v5264
      %v5266 = vpop.f32.mrf.mxu0
      %v5267 = vadd.f32 %v5218, %v5266
      %5268 = vmatmul.bf16.gmra.mxu0 %v4967
      %v5269 = vpop.f32.mrf.mxu0
      %v5270 = vadd.f32 %v5221, %v5269
      %v5271 = vpop.f32.mrf.mxu0
      %v5272 = vadd.f32 %v5223, %v5271
      %5273 = vmatmul.bf16.gmra.mxu0 %v4980
      %v5274 = vpop.f32.mrf.mxu0
      %v5275 = vadd.f32 %v5226, %v5274
      %v5276 = vpop.f32.mrf.mxu0
      %v5277 = vadd.f32 %v5228, %v5276
      %5278 = vdwg.mxu0
      %5279 = vmatpush.bf16.msra.mxu0 %v5156
      %5280 = vmatpush.bf16.msra.mxu0 %v5155
      %5281 = vmatpush.bf16.msra.mxu0 %v5154
      %5282 = vmatpush.bf16.msra.mxu0 %v5153
      %5283 = vmatpush.bf16.msra.mxu0 %v5152
      %5284 = vmatpush.bf16.msra.mxu0 %v5151
      %5285 = vmatpush.bf16.msra.mxu0 %v5150
      %5286 = vmatpush.bf16.msra.mxu0 %v5149
      %5287 = vmatmul.bf16.gmra.mxu0 %v4962
      %v5288 = vpop.f32.mrf.mxu0
      %v5289 = vadd.f32 %v5240, %v5288
      %v5290 = vpop.f32.mrf.mxu0
      %v5291 = vadd.f32 %v5242, %v5290
      %5292 = vmatmul.bf16.gmra.mxu0 %v4963
      %v5293 = vpop.f32.mrf.mxu0
      %v5294 = vadd.f32 %v5245, %v5293
      %v5295 = vpop.f32.mrf.mxu0
      %v5296 = vadd.f32 %v5247, %v5295
      %5297 = vmatmul.bf16.gmra.mxu0 %v4964
      %v5298 = vpop.f32.mrf.mxu0
      %v5299 = vadd.f32 %v5250, %v5298
      %v5300 = vpop.f32.mrf.mxu0
      %v5301 = vadd.f32 %v5252, %v5300
      %5302 = vmatmul.bf16.gmra.mxu0 %v4965
      %v5303 = vpop.f32.mrf.mxu0
      %v5304 = vadd.f32 %v5255, %v5303
      %v5305 = vpop.f32.mrf.mxu0
      %v5306 = vadd.f32 %v5257, %v5305
      %5307 = vmatmul.bf16.gmra.mxu0 %v4966
      %v5308 = vpop.f32.mrf.mxu0
      %v5309 = vadd.f32 %v5260, %v5308
      %v5310 = vpop.f32.mrf.mxu0
      %v5311 = vadd.f32 %v5262, %v5310
      %5312 = vmatmul.bf16.gmra.mxu0 %v4967
      %v5313 = vpop.f32.mrf.mxu0
      %v5314 = vadd.f32 %v5265, %v5313
      %v5315 = vpop.f32.mrf.mxu0
      %v5316 = vadd.f32 %v5267, %v5315
      %5317 = vmatmul.bf16.gmra.mxu0 %v4980
      %v5318 = vpop.f32.mrf.mxu0
      %v5319 = vadd.f32 %v5270, %v5318
      %v5320 = vpop.f32.mrf.mxu0
      %v5321 = vadd.f32 %v5272, %v5320
      %5322 = vmatmul.bf16.gmra.mxu0 %v4986
      %v5323 = vpop.f32.mrf.mxu0
      %v5324 = vadd.f32 %v5275, %v5323
      %v5325 = vpop.f32.mrf.mxu0
      %v5326 = vadd.f32 %v5277, %v5325
      %5327 = vdwg.mxu0
      %v5328 = vadd.f32 %v4912, %v5289
      %v5329 = vadd.f32 %v4913, %v5291
      %v5330 = vadd.f32 %v4914, %v5294
      %v5331 = vadd.f32 %v4915, %v5296
      %v5332 = vadd.f32 %v4916, %v5299
      %v5333 = vadd.f32 %v4917, %v5301
      %v5334 = vadd.f32 %v4918, %v5304
      %v5335 = vadd.f32 %v4919, %v5306
      %v5336 = vadd.f32 %v4920, %v5309
      %v5337 = vadd.f32 %v4921, %v5311
      %v5338 = vadd.f32 %v4922, %v5314
      %v5339 = vadd.f32 %v4923, %v5316
      %v5340 = vadd.f32 %v4924, %v5319
      %v5341 = vadd.f32 %v4925, %v5321
      %v5342 = vadd.f32 %v4926, %v5324
      %v5343 = vadd.f32 %v4927, %v5326
      %v5344 = vld [vmem:[#allocation3 + $0x8] sm:$0xf]
      %v5345 = vld [vmem:[#allocation3 + $0xc] sm:$0xf]
      %v5346 = vld [vmem:[#allocation3 + $0x10] sm:$0x1]
      %v5347 = vld [vmem:[#allocation3 + $0x20] sm:$0xf]
      %v5348 = vld [vmem:[#allocation3 + $0x24] sm:$0xf]
      %v5349 = vld [vmem:[#allocation3 + $0x28] sm:$0x1]
      %v5350 = vld [vmem:[#allocation3 + $0x38] sm:$0xf]
      %v5351 = vld [vmem:[#allocation3 + $0x3c] sm:$0xf]
      %v5352 = vld [vmem:[#allocation3 + $0x40] sm:$0x1]
      %v5353 = vld [vmem:[#allocation3 + $0x50] sm:$0xf]
      %v5354 = vld [vmem:[#allocation3 + $0x54] sm:$0xf]
      %v5355 = vld [vmem:[#allocation3 + $0x58] sm:$0x1]
      %v5356 = vld [vmem:[#allocation3 + $0x68] sm:$0xf]
      %v5357 = vld [vmem:[#allocation3 + $0x6c] sm:$0xf]
      %v5358 = vld [vmem:[#allocation3 + $0x70] sm:$0x1]
      %v5359 = vld [vmem:[#allocation3 + $0x80] sm:$0xf]
      %v5360 = vld [vmem:[#allocation3 + $0x84] sm:$0xf]
      %v5361 = vld [vmem:[#allocation3 + $0x88] sm:$0x1]
      %v5362 = vld [vmem:[#allocation3 + $0x98] sm:$0xf]
      %v5363 = vld [vmem:[#allocation3 + $0x9c] sm:$0xf]
      %v5364 = vld [vmem:[#allocation3 + $0xa0] sm:$0x1]
      %v5365 = vld [vmem:[#allocation3 + $0xb0] sm:$0xf]
      %v5366 = vld [vmem:[#allocation3 + $0xb4] sm:$0xf]
      %v5367 = vld [vmem:[#allocation3 + $0xb8] sm:$0x1]
      %v5368 = vld [vmem:[#allocation3 + $0xc8] sm:$0xf]
      %v5369 = vld [vmem:[#allocation3 + $0xcc] sm:$0xf]
      %v5370 = vld [vmem:[#allocation3 + $0xd0] sm:$0x1]
      %v5371 = vld [vmem:[#allocation3 + $0xe0] sm:$0xf]
      %v5372 = vld [vmem:[#allocation3 + $0xe4] sm:$0xf]
      %v5373 = vld [vmem:[#allocation3 + $0xe8] sm:$0x1]
      %v5375 = vshrl.u32 %v5344, 16
      %v5377 = vrot.slane %v5375, 4
      %v5378 = vshll.u32 %v5344, 16
      %v5380 = vrot.slane %v5378, 5
      %v5381 = vor.u32 %v5377, %v5380
      %v5382 = vrot.slane %v5381, 4
      %v5384 = vshll.u32 %v5345, 16
      %v5386 = vrot.slane %v5384, 5
      %v5387 = vsel %vm1988, %v5382, %v5386
      %v5388 = vshrl.u32 %v5345, 16
      %v5390 = vrot.slane %v5388, 4
      %v5391 = vor.u32 %v5390, %v5386
      %v5392 = vrot.slane %v5391, 4
      %v5394 = vshll.u32 %v5346, 16
      %v5396 = vrot.slane %v5394, 5
      %v5397 = vsel %vm1988, %v5392, %v5396
      %v5399 = vshrl.u32 %v5347, 16
      %v5401 = vrot.slane %v5399, 4
      %v5402 = vshll.u32 %v5347, 16
      %v5404 = vrot.slane %v5402, 5
      %v5405 = vor.u32 %v5401, %v5404
      %v5406 = vrot.slane %v5405, 4
      %v5408 = vshll.u32 %v5348, 16
      %v5410 = vrot.slane %v5408, 5
      %v5411 = vsel %vm1988, %v5406, %v5410
      %v5412 = vshrl.u32 %v5348, 16
      %v5414 = vrot.slane %v5412, 4
      %v5415 = vor.u32 %v5414, %v5410
      %v5416 = vrot.slane %v5415, 4
      %v5418 = vshll.u32 %v5349, 16
      %v5420 = vrot.slane %v5418, 5
      %v5421 = vsel %vm1988, %v5416, %v5420
      %v5423 = vshrl.u32 %v5350, 16
      %v5425 = vrot.slane %v5423, 4
      %v5426 = vshll.u32 %v5350, 16
      %v5428 = vrot.slane %v5426, 5
      %v5429 = vor.u32 %v5425, %v5428
      %v5430 = vrot.slane %v5429, 4
      %v5432 = vshll.u32 %v5351, 16
      %v5434 = vrot.slane %v5432, 5
      %v5435 = vsel %vm1988, %v5430, %v5434
      %v5436 = vshrl.u32 %v5351, 16
      %v5438 = vrot.slane %v5436, 4
      %v5439 = vor.u32 %v5438, %v5434
      %v5440 = vrot.slane %v5439, 4
      %v5442 = vshll.u32 %v5352, 16
      %v5444 = vrot.slane %v5442, 5
      %v5445 = vsel %vm1988, %v5440, %v5444
      %v5447 = vshrl.u32 %v5353, 16
      %v5449 = vrot.slane %v5447, 4
      %v5450 = vshll.u32 %v5353, 16
      %v5452 = vrot.slane %v5450, 5
      %v5453 = vor.u32 %v5449, %v5452
      %v5454 = vrot.slane %v5453, 4
      %v5456 = vshll.u32 %v5354, 16
      %v5458 = vrot.slane %v5456, 5
      %v5459 = vsel %vm1988, %v5454, %v5458
      %v5460 = vshrl.u32 %v5354, 16
      %v5462 = vrot.slane %v5460, 4
      %v5463 = vor.u32 %v5462, %v5458
      %v5464 = vrot.slane %v5463, 4
      %v5466 = vshll.u32 %v5355, 16
      %v5468 = vrot.slane %v5466, 5
      %v5469 = vsel %vm1988, %v5464, %v5468
      %v5471 = vshrl.u32 %v5356, 16
      %v5473 = vrot.slane %v5471, 4
      %v5474 = vshll.u32 %v5356, 16
      %v5476 = vrot.slane %v5474, 5
      %v5477 = vor.u32 %v5473, %v5476
      %v5478 = vrot.slane %v5477, 4
      %v5480 = vshll.u32 %v5357, 16
      %v5482 = vrot.slane %v5480, 5
      %v5483 = vsel %vm1988, %v5478, %v5482
      %v5484 = vshrl.u32 %v5357, 16
      %v5486 = vrot.slane %v5484, 4
      %v5487 = vor.u32 %v5486, %v5482
      %v5488 = vrot.slane %v5487, 4
      %v5490 = vshll.u32 %v5358, 16
      %v5492 = vrot.slane %v5490, 5
      %v5493 = vsel %vm1988, %v5488, %v5492
      %v5495 = vshrl.u32 %v5359, 16
      %v5497 = vrot.slane %v5495, 4
      %v5498 = vshll.u32 %v5359, 16
      %v5500 = vrot.slane %v5498, 5
      %v5501 = vor.u32 %v5497, %v5500
      %v5502 = vrot.slane %v5501, 4
      %v5504 = vshll.u32 %v5360, 16
      %v5506 = vrot.slane %v5504, 5
      %v5507 = vsel %vm1988, %v5502, %v5506
      %v5508 = vshrl.u32 %v5360, 16
      %v5510 = vrot.slane %v5508, 4
      %v5511 = vor.u32 %v5510, %v5506
      %v5512 = vrot.slane %v5511, 4
      %v5514 = vshll.u32 %v5361, 16
      %v5516 = vrot.slane %v5514, 5
      %v5517 = vsel %vm1988, %v5512, %v5516
      %v5519 = vshrl.u32 %v5362, 16
      %v5521 = vrot.slane %v5519, 4
      %v5522 = vshll.u32 %v5362, 16
      %v5524 = vrot.slane %v5522, 5
      %v5525 = vor.u32 %v5521, %v5524
      %v5526 = vrot.slane %v5525, 4
      %v5528 = vshll.u32 %v5363, 16
      %v5530 = vrot.slane %v5528, 5
      %v5531 = vsel %vm1988, %v5526, %v5530
      %v5532 = vshrl.u32 %v5363, 16
      %v5534 = vrot.slane %v5532, 4
      %v5535 = vor.u32 %v5534, %v5530
      %v5536 = vrot.slane %v5535, 4
      %v5538 = vshll.u32 %v5364, 16
      %v5540 = vrot.slane %v5538, 5
      %v5541 = vsel %vm1988, %v5536, %v5540
      %v5543 = vshrl.u32 %v5365, 16
      %v5545 = vrot.slane %v5543, 4
      %v5546 = vshll.u32 %v5365, 16
      %v5548 = vrot.slane %v5546, 5
      %v5549 = vor.u32 %v5545, %v5548
      %v5550 = vrot.slane %v5549, 4
      %v5552 = vshll.u32 %v5366, 16
      %v5554 = vrot.slane %v5552, 5
      %v5555 = vsel %vm1988, %v5550, %v5554
      %v5556 = vshrl.u32 %v5366, 16
      %v5558 = vrot.slane %v5556, 4
      %v5559 = vor.u32 %v5558, %v5554
      %v5560 = vrot.slane %v5559, 4
      %v5562 = vshll.u32 %v5367, 16
      %v5564 = vrot.slane %v5562, 5
      %v5565 = vsel %vm1988, %v5560, %v5564
      %v5567 = vshrl.u32 %v5368, 16
      %v5569 = vrot.slane %v5567, 4
      %v5570 = vshll.u32 %v5368, 16
      %v5572 = vrot.slane %v5570, 5
      %v5573 = vor.u32 %v5569, %v5572
      %v5574 = vrot.slane %v5573, 4
      %v5576 = vshll.u32 %v5369, 16
      %v5578 = vrot.slane %v5576, 5
      %v5579 = vsel %vm1988, %v5574, %v5578
      %v5580 = vshrl.u32 %v5369, 16
      %v5582 = vrot.slane %v5580, 4
      %v5583 = vor.u32 %v5582, %v5578
      %v5584 = vrot.slane %v5583, 4
      %v5586 = vshll.u32 %v5370, 16
      %v5588 = vrot.slane %v5586, 5
      %v5589 = vsel %vm1988, %v5584, %v5588
      %v5591 = vshrl.u32 %v5371, 16
      %v5593 = vrot.slane %v5591, 4
      %v5594 = vshll.u32 %v5371, 16
      %v5596 = vrot.slane %v5594, 5
      %v5597 = vor.u32 %v5593, %v5596
      %v5598 = vrot.slane %v5597, 4
      %v5600 = vshll.u32 %v5372, 16
      %v5602 = vrot.slane %v5600, 5
      %v5603 = vsel %vm1988, %v5598, %v5602
      %v5604 = vshrl.u32 %v5372, 16
      %v5606 = vrot.slane %v5604, 4
      %v5607 = vor.u32 %v5606, %v5602
      %v5608 = vrot.slane %v5607, 4
      %v5610 = vshll.u32 %v5373, 16
      %v5612 = vrot.slane %v5610, 5
      %v5613 = vsel %vm1988, %v5608, %v5612
      %v5614 = vunpack.c.l.b16 %v5387
      %v5615 = vunpack.c.l.b16 %v5397
      %v5616 = vunpack.c.l.b16 %v5411
      %v5617 = vunpack.c.l.b16 %v5421
      %v5618 = vunpack.c.l.b16 %v5435
      %v5619 = vunpack.c.l.b16 %v5445
      %v5620 = vunpack.c.l.b16 %v5459
      %v5621 = vunpack.c.l.b16 %v5469
      %v5622 = vunpack.c.l.b16 %v5483
      %v5623 = vunpack.c.l.b16 %v5493
      %v5624 = vunpack.c.l.b16 %v5507
      %v5625 = vunpack.c.l.b16 %v5517
      %v5626 = vunpack.c.l.b16 %v5531
      %v5627 = vunpack.c.l.b16 %v5541
      %v5628 = vunpack.c.l.b16 %v5555
      %v5629 = vunpack.c.l.b16 %v5565
      %v5630 = vpack.c.b16 %v5615, %v5614
      %v5631 = vpack.c.b16 %v5617, %v5616
      %v5632 = vpack.c.b16 %v5619, %v5618
      %v5633 = vpack.c.b16 %v5621, %v5620
      %v5634 = vpack.c.b16 %v5623, %v5622
      %v5635 = vpack.c.b16 %v5625, %v5624
      %v5636 = vpack.c.b16 %v5627, %v5626
      %v5637 = vpack.c.b16 %v5629, %v5628
      %v5646 = vunpack.c.l.b16 %v5579
      %v5647 = vunpack.c.l.b16 %v5589
      %v5648 = vpack.c.b16 %v5647, %v5646
      %v5650 = vunpack.c.l.b16 %v5603
      %v5651 = vunpack.c.l.b16 %v5613
      %v5652 = vpack.c.b16 %v5651, %v5650
      %s5654 = scalar_lea.vmem %s5, 384
      %v5655 = vld [vmem:[%s5654] sm:$0xf]
      %v5656 = vld [vmem:[%s5654 + $0x4] sm:$0xf]
      %v5657 = vld [vmem:[%s5654 + $0x8] sm:$0xf]
      %v5658 = vld [vmem:[%s5654 + $0xc] sm:$0xf]
      %v5659 = vld [vmem:[%s5654 + $0x10] sm:$0xf]
      %v5660 = vld [vmem:[%s5654 + $0x14] sm:$0xf]
      %v5661 = vld [vmem:[%s5654 + $0x18] sm:$0xf]
      %v5662 = vld [vmem:[%s5654 + $0x1c] sm:$0xf]
      %v5663 = vld [vmem:[%s5654 + $0x20] sm:$0xf]
      %v5664 = vld [vmem:[%s5654 + $0x24] sm:$0xf]
      %v5665 = vld [vmem:[%s5654 + $0x28] sm:$0xf]
      %v5666 = vld [vmem:[%s5654 + $0x2c] sm:$0xf]
      %v5667 = vld [vmem:[%s5654 + $0x30] sm:$0xf]
      %v5668 = vld [vmem:[%s5654 + $0x34] sm:$0xf]
      %v5669 = vld [vmem:[%s5654 + $0x38] sm:$0xf]
      %v5670 = vld [vmem:[%s5654 + $0x3c] sm:$0xf]
      %v5671 = vld [vmem:[%s5654 + $0x40] sm:$0xf]
      %v5672 = vld [vmem:[%s5654 + $0x44] sm:$0xf]
      %v5673 = vld [vmem:[%s5654 + $0x48] sm:$0xf]
      %v5674 = vld [vmem:[%s5654 + $0x4c] sm:$0xf]
      %v5675 = vld [vmem:[%s5654 + $0x50] sm:$0xf]
      %v5676 = vld [vmem:[%s5654 + $0x54] sm:$0xf]
      %v5677 = vld [vmem:[%s5654 + $0x58] sm:$0xf]
      %v5678 = vld [vmem:[%s5654 + $0x5c] sm:$0xf]
      %v5679 = vld [vmem:[%s5654 + $0x60] sm:$0xf]
      %v5680 = vld [vmem:[%s5654 + $0x64] sm:$0xf]
      %v5681 = vld [vmem:[%s5654 + $0x68] sm:$0xf]
      %v5682 = vld [vmem:[%s5654 + $0x6c] sm:$0xf]
      %v5683 = vld [vmem:[%s5654 + $0x70] sm:$0xf]
      %v5684 = vld [vmem:[%s5654 + $0x74] sm:$0xf]
      %v5685 = vld [vmem:[%s5654 + $0x78] sm:$0xf]
      %v5686 = vld [vmem:[%s5654 + $0x7c] sm:$0xf]
      %v5687 = vld [vmem:[%s5654 + $0x80] sm:$0xf]
      %v5688 = vld [vmem:[%s5654 + $0x84] sm:$0xf]
      %v5689 = vld [vmem:[%s5654 + $0x88] sm:$0xf]
      %v5690 = vld [vmem:[%s5654 + $0x8c] sm:$0xf]
      %v5691 = vld [vmem:[%s5654 + $0x90] sm:$0xf]
      %v5692 = vld [vmem:[%s5654 + $0x94] sm:$0xf]
      %v5693 = vld [vmem:[%s5654 + $0x98] sm:$0xf]
      %v5694 = vld [vmem:[%s5654 + $0x9c] sm:$0xf]
      %v5695 = vld [vmem:[%s5654 + $0xa0] sm:$0xf]
      %v5696 = vld [vmem:[%s5654 + $0xa4] sm:$0xf]
      %v5697 = vld [vmem:[%s5654 + $0xa8] sm:$0xf]
      %v5698 = vld [vmem:[%s5654 + $0xac] sm:$0xf]
      %v5699 = vld [vmem:[%s5654 + $0xb0] sm:$0xf]
      %v5700 = vld [vmem:[%s5654 + $0xb4] sm:$0xf]
      %v5701 = vld [vmem:[%s5654 + $0xb8] sm:$0xf]
      %v5702 = vld [vmem:[%s5654 + $0xbc] sm:$0xf]
      %v5751 = vunpack.c.l.b16 %v5655
      %v5752 = vunpack.c.l.b16 %v5656
      %v5753 = vunpack.c.l.b16 %v5657
      %v5754 = vunpack.c.l.b16 %v5658
      %v5755 = vunpack.c.l.b16 %v5659
      %v5756 = vunpack.c.l.b16 %v5660
      %v5757 = vunpack.c.l.b16 %v5661
      %v5758 = vunpack.c.l.b16 %v5662
      %v5759 = vunpack.c.l.b16 %v5663
      %v5760 = vunpack.c.l.b16 %v5664
      %v5761 = vunpack.c.l.b16 %v5665
      %v5762 = vunpack.c.l.b16 %v5666
      %v5763 = vunpack.c.l.b16 %v5667
      %v5764 = vunpack.c.l.b16 %v5668
      %v5765 = vunpack.c.l.b16 %v5669
      %v5766 = vunpack.c.l.b16 %v5670
      %v5767 = vunpack.c.l.b16 %v5671
      %v5768 = vunpack.c.l.b16 %v5672
      %v5769 = vunpack.c.l.b16 %v5673
      %v5770 = vunpack.c.l.b16 %v5674
      %v5771 = vunpack.c.l.b16 %v5675
      %v5772 = vunpack.c.l.b16 %v5676
      %v5773 = vunpack.c.l.b16 %v5677
      %v5774 = vunpack.c.l.b16 %v5678
      %v5775 = vunpack.c.l.b16 %v5679
      %v5776 = vunpack.c.l.b16 %v5680
      %v5777 = vunpack.c.l.b16 %v5681
      %v5778 = vunpack.c.l.b16 %v5682
      %v5779 = vunpack.c.l.b16 %v5683
      %v5780 = vunpack.c.l.b16 %v5684
      %v5781 = vunpack.c.l.b16 %v5685
      %v5782 = vunpack.c.l.b16 %v5686
      %v5783 = vunpack.c.l.b16 %v5687
      %v5784 = vunpack.c.l.b16 %v5688
      %v5785 = vunpack.c.l.b16 %v5689
      %v5786 = vunpack.c.l.b16 %v5690
      %v5787 = vunpack.c.l.b16 %v5691
      %v5788 = vunpack.c.l.b16 %v5692
      %v5789 = vunpack.c.l.b16 %v5693
      %v5790 = vunpack.c.l.b16 %v5694
      %v5791 = vunpack.c.l.b16 %v5695
      %v5792 = vunpack.c.l.b16 %v5696
      %v5793 = vunpack.c.l.b16 %v5697
      %v5794 = vunpack.c.l.b16 %v5698
      %v5795 = vunpack.c.l.b16 %v5699
      %v5796 = vunpack.c.l.b16 %v5700
      %v5797 = vunpack.c.l.b16 %v5701
      %v5798 = vunpack.c.l.b16 %v5702
      %v5799 = vpack.c.b16 %v5752, %v5751
      %v5800 = vpack.c.b16 %v5754, %v5753
      %v5801 = vpack.c.b16 %v5756, %v5755
      %v5802 = vpack.c.b16 %v5758, %v5757
      %v5803 = vpack.c.b16 %v5760, %v5759
      %v5804 = vpack.c.b16 %v5762, %v5761
      %v5805 = vpack.c.b16 %v5764, %v5763
      %v5806 = vpack.c.b16 %v5766, %v5765
      %v5807 = vpack.c.b16 %v5768, %v5767
      %v5808 = vpack.c.b16 %v5770, %v5769
      %v5809 = vpack.c.b16 %v5772, %v5771
      %v5810 = vpack.c.b16 %v5774, %v5773
      %v5811 = vpack.c.b16 %v5776, %v5775
      %v5812 = vpack.c.b16 %v5778, %v5777
      %v5813 = vpack.c.b16 %v5780, %v5779
      %v5814 = vpack.c.b16 %v5782, %v5781
      %v5815 = vpack.c.b16 %v5784, %v5783
      %v5816 = vpack.c.b16 %v5786, %v5785
      %v5817 = vpack.c.b16 %v5788, %v5787
      %v5818 = vpack.c.b16 %v5790, %v5789
      %v5819 = vpack.c.b16 %v5792, %v5791
      %v5820 = vpack.c.b16 %v5794, %v5793
      %v5821 = vpack.c.b16 %v5796, %v5795
      %v5822 = vpack.c.b16 %v5798, %v5797
      %5847 = vmatpush.bf16.msra.mxu0 %v5806
      %5848 = vmatpush.bf16.msra.mxu0 %v5805
      %5849 = vmatpush.bf16.msra.mxu0 %v5804
      %5850 = vmatpush.bf16.msra.mxu0 %v5803
      %5851 = vmatpush.bf16.msra.mxu0 %v5802
      %5852 = vmatpush.bf16.msra.mxu0 %v5801
      %5853 = vmatpush.bf16.msra.mxu0 %v5800
      %5854 = vmatpush.bf16.msra.mxu0 %v5799
      %5855 = vmatmul.bf16.gmra.mxu0 %v5630
      %v5856 = vpop.f32.mrf.mxu0
      %v5857 = vadd.f32 0.0, %v5856
      %v5858 = vpop.f32.mrf.mxu0
      %v5859 = vadd.f32 0.0, %v5858
      %5860 = vmatmul.bf16.gmra.mxu0 %v5631
      %v5861 = vpop.f32.mrf.mxu0
      %v5862 = vadd.f32 0.0, %v5861
      %v5863 = vpop.f32.mrf.mxu0
      %v5864 = vadd.f32 0.0, %v5863
      %5865 = vmatmul.bf16.gmra.mxu0 %v5632
      %v5866 = vpop.f32.mrf.mxu0
      %v5867 = vadd.f32 0.0, %v5866
      %v5868 = vpop.f32.mrf.mxu0
      %v5869 = vadd.f32 0.0, %v5868
      %5870 = vmatmul.bf16.gmra.mxu0 %v5633
      %v5871 = vpop.f32.mrf.mxu0
      %v5872 = vadd.f32 0.0, %v5871
      %v5873 = vpop.f32.mrf.mxu0
      %v5874 = vadd.f32 0.0, %v5873
      %5875 = vmatmul.bf16.gmra.mxu0 %v5634
      %v5876 = vpop.f32.mrf.mxu0
      %v5877 = vadd.f32 0.0, %v5876
      %v5878 = vpop.f32.mrf.mxu0
      %v5879 = vadd.f32 0.0, %v5878
      %5880 = vmatmul.bf16.gmra.mxu0 %v5635
      %v5881 = vpop.f32.mrf.mxu0
      %v5882 = vadd.f32 0.0, %v5881
      %v5883 = vpop.f32.mrf.mxu0
      %v5884 = vadd.f32 0.0, %v5883
      %5885 = vmatmul.bf16.gmra.mxu0 %v5636
      %v5886 = vpop.f32.mrf.mxu0
      %v5887 = vadd.f32 0.0, %v5886
      %v5888 = vpop.f32.mrf.mxu0
      %v5889 = vadd.f32 0.0, %v5888
      %5890 = vmatmul.bf16.gmra.mxu0 %v5637
      %v5891 = vpop.f32.mrf.mxu0
      %v5892 = vadd.f32 0.0, %v5891
      %v5893 = vpop.f32.mrf.mxu0
      %v5894 = vadd.f32 0.0, %v5893
      %5895 = vdwg.mxu0
      %5896 = vmatpush.bf16.msra.mxu0 %v5814
      %5897 = vmatpush.bf16.msra.mxu0 %v5813
      %5898 = vmatpush.bf16.msra.mxu0 %v5812
      %5899 = vmatpush.bf16.msra.mxu0 %v5811
      %5900 = vmatpush.bf16.msra.mxu0 %v5810
      %5901 = vmatpush.bf16.msra.mxu0 %v5809
      %5902 = vmatpush.bf16.msra.mxu0 %v5808
      %5903 = vmatpush.bf16.msra.mxu0 %v5807
      %5904 = vmatmul.bf16.gmra.mxu0 %v5631
      %v5905 = vpop.f32.mrf.mxu0
      %v5906 = vadd.f32 %v5857, %v5905
      %v5907 = vpop.f32.mrf.mxu0
      %v5908 = vadd.f32 %v5859, %v5907
      %5909 = vmatmul.bf16.gmra.mxu0 %v5632
      %v5910 = vpop.f32.mrf.mxu0
      %v5911 = vadd.f32 %v5862, %v5910
      %v5912 = vpop.f32.mrf.mxu0
      %v5913 = vadd.f32 %v5864, %v5912
      %5914 = vmatmul.bf16.gmra.mxu0 %v5633
      %v5915 = vpop.f32.mrf.mxu0
      %v5916 = vadd.f32 %v5867, %v5915
      %v5917 = vpop.f32.mrf.mxu0
      %v5918 = vadd.f32 %v5869, %v5917
      %5919 = vmatmul.bf16.gmra.mxu0 %v5634
      %v5920 = vpop.f32.mrf.mxu0
      %v5921 = vadd.f32 %v5872, %v5920
      %v5922 = vpop.f32.mrf.mxu0
      %v5923 = vadd.f32 %v5874, %v5922
      %5924 = vmatmul.bf16.gmra.mxu0 %v5635
      %v5925 = vpop.f32.mrf.mxu0
      %v5926 = vadd.f32 %v5877, %v5925
      %v5927 = vpop.f32.mrf.mxu0
      %v5928 = vadd.f32 %v5879, %v5927
      %5929 = vmatmul.bf16.gmra.mxu0 %v5636
      %v5930 = vpop.f32.mrf.mxu0
      %v5931 = vadd.f32 %v5882, %v5930
      %v5932 = vpop.f32.mrf.mxu0
      %v5933 = vadd.f32 %v5884, %v5932
      %5934 = vmatmul.bf16.gmra.mxu0 %v5637
      %v5935 = vpop.f32.mrf.mxu0
      %v5936 = vadd.f32 %v5887, %v5935
      %v5937 = vpop.f32.mrf.mxu0
      %v5938 = vadd.f32 %v5889, %v5937
      %5939 = vmatmul.bf16.gmra.mxu0 %v5648
      %v5940 = vpop.f32.mrf.mxu0
      %v5941 = vadd.f32 %v5892, %v5940
      %v5942 = vpop.f32.mrf.mxu0
      %v5943 = vadd.f32 %v5894, %v5942
      %5944 = vdwg.mxu0
      %5945 = vmatpush.bf16.msra.mxu0 %v5822
      %5946 = vmatpush.bf16.msra.mxu0 %v5821
      %5947 = vmatpush.bf16.msra.mxu0 %v5820
      %5948 = vmatpush.bf16.msra.mxu0 %v5819
      %5949 = vmatpush.bf16.msra.mxu0 %v5818
      %5950 = vmatpush.bf16.msra.mxu0 %v5817
      %5951 = vmatpush.bf16.msra.mxu0 %v5816
      %5952 = vmatpush.bf16.msra.mxu0 %v5815
      %5953 = vmatmul.bf16.gmra.mxu0 %v5632
      %v5954 = vpop.f32.mrf.mxu0
      %v5955 = vadd.f32 %v5906, %v5954
      %v5956 = vpop.f32.mrf.mxu0
      %v5957 = vadd.f32 %v5908, %v5956
      %5958 = vmatmul.bf16.gmra.mxu0 %v5633
      %v5959 = vpop.f32.mrf.mxu0
      %v5960 = vadd.f32 %v5911, %v5959
      %v5961 = vpop.f32.mrf.mxu0
      %v5962 = vadd.f32 %v5913, %v5961
      %5963 = vmatmul.bf16.gmra.mxu0 %v5634
      %v5964 = vpop.f32.mrf.mxu0
      %v5965 = vadd.f32 %v5916, %v5964
      %v5966 = vpop.f32.mrf.mxu0
      %v5967 = vadd.f32 %v5918, %v5966
      %5968 = vmatmul.bf16.gmra.mxu0 %v5635
      %v5969 = vpop.f32.mrf.mxu0
      %v5970 = vadd.f32 %v5921, %v5969
      %v5971 = vpop.f32.mrf.mxu0
      %v5972 = vadd.f32 %v5923, %v5971
      %5973 = vmatmul.bf16.gmra.mxu0 %v5636
      %v5974 = vpop.f32.mrf.mxu0
      %v5975 = vadd.f32 %v5926, %v5974
      %v5976 = vpop.f32.mrf.mxu0
      %v5977 = vadd.f32 %v5928, %v5976
      %5978 = vmatmul.bf16.gmra.mxu0 %v5637
      %v5979 = vpop.f32.mrf.mxu0
      %v5980 = vadd.f32 %v5931, %v5979
      %v5981 = vpop.f32.mrf.mxu0
      %v5982 = vadd.f32 %v5933, %v5981
      %5983 = vmatmul.bf16.gmra.mxu0 %v5648
      %v5984 = vpop.f32.mrf.mxu0
      %v5985 = vadd.f32 %v5936, %v5984
      %v5986 = vpop.f32.mrf.mxu0
      %v5987 = vadd.f32 %v5938, %v5986
      %5988 = vmatmul.bf16.gmra.mxu0 %v5652
      %v5989 = vpop.f32.mrf.mxu0
      %v5990 = vadd.f32 %v5941, %v5989
      %v5991 = vpop.f32.mrf.mxu0
      %v5992 = vadd.f32 %v5943, %v5991
      %5993 = vdwg.mxu0
      %v5994 = vadd.f32 %v5328, %v5955
      %v5995 = vadd.f32 %v5329, %v5957
      %v5996 = vadd.f32 %v5330, %v5960
      %v5997 = vadd.f32 %v5331, %v5962
      %v5998 = vadd.f32 %v5332, %v5965
      %v5999 = vadd.f32 %v5333, %v5967
      %v6000 = vadd.f32 %v5334, %v5970
      %v6001 = vadd.f32 %v5335, %v5972
      %v6002 = vadd.f32 %v5336, %v5975
      %v6003 = vadd.f32 %v5337, %v5977
      %v6004 = vadd.f32 %v5338, %v5980
      %v6005 = vadd.f32 %v5339, %v5982
      %v6006 = vadd.f32 %v5340, %v5985
      %v6007 = vadd.f32 %v5341, %v5987
      %v6008 = vadd.f32 %v5342, %v5990
      %v6009 = vadd.f32 %v5343, %v5992
      %v6010 = vmax.f32 %v5994, 0.0
      %v6011 = vmax.f32 %v5995, 0.0
      %v6012 = vmax.f32 %v5996, 0.0
      %v6013 = vmax.f32 %v5997, 0.0
      %v6014 = vmax.f32 %v5998, 0.0
      %v6015 = vmax.f32 %v5999, 0.0
      %v6016 = vmax.f32 %v6000, 0.0
      %v6017 = vmax.f32 %v6001, 0.0
      %v6018 = vmax.f32 %v6002, 0.0
      %v6019 = vmax.f32 %v6003, 0.0
      %v6020 = vmax.f32 %v6004, 0.0
      %v6021 = vmax.f32 %v6005, 0.0
      %v6022 = vmax.f32 %v6006, 0.0
      %v6023 = vmax.f32 %v6007, 0.0
      %v6024 = vmax.f32 %v6008, 0.0
      %v6025 = vmax.f32 %v6009, 0.0
      %s6026 = scalar_lea.vmem [#allocation4], 48
      %6027 = vst.msk [vmem:[%s6026 + $0x10] sm:$0xff] %vm489, %v6010
      %6028 = vst.msk [vmem:[%s6026 + $0x18] sm:$0xff] %vm489, %v6011
      %6029 = vst.msk [vmem:[%s6026 + $0x40] sm:$0xff] %vm489, %v6012
      %6030 = vst.msk [vmem:[%s6026 + $0x48] sm:$0xff] %vm489, %v6013
      %6031 = vst.msk [vmem:[%s6026 + $0x70] sm:$0xff] %vm489, %v6014
      %6032 = vst.msk [vmem:[%s6026 + $0x78] sm:$0xff] %vm489, %v6015
      %6033 = vst.msk [vmem:[%s6026 + $0xa0] sm:$0xff] %vm489, %v6016
      %6034 = vst.msk [vmem:[%s6026 + $0xa8] sm:$0xff] %vm489, %v6017
      %6035 = vst.msk [vmem:[%s6026 + $0xd0] sm:$0xff] %vm489, %v6018
      %6036 = vst.msk [vmem:[%s6026 + $0xd8] sm:$0xff] %vm489, %v6019
      %6037 = vst.msk [vmem:[%s6026 + $0x100] sm:$0xff] %vm489, %v6020
      %6038 = vst.msk [vmem:[%s6026 + $0x108] sm:$0xff] %vm489, %v6021
      %6039 = vst.msk [vmem:[%s6026 + $0x130] sm:$0xff] %vm489, %v6022
      %6040 = vst.msk [vmem:[%s6026 + $0x138] sm:$0xff] %vm489, %v6023
      %6041 = vst.msk [vmem:[%s6026 + $0x160] sm:$0xff] %vm489, %v6024
      %6042 = vst.msk [vmem:[%s6026 + $0x168] sm:$0xff] %vm489, %v6025
      %v6043 = vld [vmem:[%s6] sm:$0x1]
      %v6045 = vperm.slane %v6043, 0
      %s6047 = scalar_lea.vmem [#allocation3], 192
      %v6048 = vld [vmem:[%s6047 + $0x4] sm:$0x8]
      %v6049 = vld [vmem:[%s6047 + $0x8] sm:$0xf]
      %v6050 = vld [vmem:[%s6047 + $0xc] sm:$0xf]
      %v6051 = vld [vmem:[%s6047 + $0x1c] sm:$0x8]
      %v6052 = vld [vmem:[%s6047 + $0x20] sm:$0xf]
      %v6053 = vld [vmem:[%s6047 + $0x24] sm:$0xf]
      %v6054 = vld [vmem:[%s6047 + $0x34] sm:$0x8]
      %v6055 = vld [vmem:[%s6047 + $0x38] sm:$0xf]
      %v6056 = vld [vmem:[%s6047 + $0x3c] sm:$0xf]
      %v6057 = vld [vmem:[%s6047 + $0x4c] sm:$0x8]
      %v6058 = vld [vmem:[%s6047 + $0x50] sm:$0xf]
      %v6059 = vld [vmem:[%s6047 + $0x54] sm:$0xf]
      %v6060 = vld [vmem:[%s6047 + $0x64] sm:$0x8]
      %v6061 = vld [vmem:[%s6047 + $0x68] sm:$0xf]
      %v6062 = vld [vmem:[%s6047 + $0x6c] sm:$0xf]
      %v6063 = vld [vmem:[%s6047 + $0x7c] sm:$0x8]
      %v6064 = vld [vmem:[%s6047 + $0x80] sm:$0xf]
      %v6065 = vld [vmem:[%s6047 + $0x84] sm:$0xf]
      %v6066 = vld [vmem:[%s6047 + $0x94] sm:$0x8]
      %v6067 = vld [vmem:[%s6047 + $0x98] sm:$0xf]
      %v6068 = vld [vmem:[%s6047 + $0x9c] sm:$0xf]
      %v6069 = vld [vmem:[%s6047 + $0xac] sm:$0x8]
      %v6070 = vld [vmem:[%s6047 + $0xb0] sm:$0xf]
      %v6071 = vld [vmem:[%s6047 + $0xb4] sm:$0xf]
      %v6072 = vld [vmem:[%s6047 + $0xc4] sm:$0x8]
      %v6073 = vld [vmem:[%s6047 + $0xc8] sm:$0xf]
      %v6074 = vld [vmem:[%s6047 + $0xcc] sm:$0xf]
      %v6075 = vld [vmem:[%s6047 + $0xdc] sm:$0x8]
      %v6076 = vld [vmem:[%s6047 + $0xe0] sm:$0xf]
      %v6077 = vld [vmem:[%s6047 + $0xe4] sm:$0xf]
      %v6079 = vshrl.u32 %v6048, 16
      %v6081 = vrot.slane %v6079, 7
      %v6082 = vrot.slane %v6081, 4
      %v6084 = vshrl.u32 %v6049, 16
      %v6086 = vrot.slane %v6084, 7
      %v6087 = vshll.u32 %v6049, 16
      %v6089 = vor.u32 %v6086, %v6087
      %v6090 = vsel %vm1008, %v6082, %v6089
      %v6091 = vrot.slane %v6086, 4
      %v6093 = vshrl.u32 %v6050, 16
      %v6095 = vrot.slane %v6093, 7
      %v6096 = vshll.u32 %v6050, 16
      %v6098 = vor.u32 %v6095, %v6096
      %v6099 = vsel %vm1008, %v6091, %v6098
      %v6101 = vshrl.u32 %v6051, 16
      %v6103 = vrot.slane %v6101, 7
      %v6104 = vrot.slane %v6103, 4
      %v6106 = vshrl.u32 %v6052, 16
      %v6108 = vrot.slane %v6106, 7
      %v6109 = vshll.u32 %v6052, 16
      %v6111 = vor.u32 %v6108, %v6109
      %v6112 = vsel %vm1008, %v6104, %v6111
      %v6113 = vrot.slane %v6108, 4
      %v6115 = vshrl.u32 %v6053, 16
      %v6117 = vrot.slane %v6115, 7
      %v6118 = vshll.u32 %v6053, 16
      %v6120 = vor.u32 %v6117, %v6118
      %v6121 = vsel %vm1008, %v6113, %v6120
      %v6123 = vshrl.u32 %v6054, 16
      %v6125 = vrot.slane %v6123, 7
      %v6126 = vrot.slane %v6125, 4
      %v6128 = vshrl.u32 %v6055, 16
      %v6130 = vrot.slane %v6128, 7
      %v6131 = vshll.u32 %v6055, 16
      %v6133 = vor.u32 %v6130, %v6131
      %v6134 = vsel %vm1008, %v6126, %v6133
      %v6135 = vrot.slane %v6130, 4
      %v6137 = vshrl.u32 %v6056, 16
      %v6139 = vrot.slane %v6137, 7
      %v6140 = vshll.u32 %v6056, 16
      %v6142 = vor.u32 %v6139, %v6140
      %v6143 = vsel %vm1008, %v6135, %v6142
      %v6145 = vshrl.u32 %v6057, 16
      %v6147 = vrot.slane %v6145, 7
      %v6148 = vrot.slane %v6147, 4
      %v6150 = vshrl.u32 %v6058, 16
      %v6152 = vrot.slane %v6150, 7
      %v6153 = vshll.u32 %v6058, 16
      %v6155 = vor.u32 %v6152, %v6153
      %v6156 = vsel %vm1008, %v6148, %v6155
      %v6157 = vrot.slane %v6152, 4
      %v6159 = vshrl.u32 %v6059, 16
      %v6161 = vrot.slane %v6159, 7
      %v6162 = vshll.u32 %v6059, 16
      %v6164 = vor.u32 %v6161, %v6162
      %v6165 = vsel %vm1008, %v6157, %v6164
      %v6167 = vshrl.u32 %v6060, 16
      %v6169 = vrot.slane %v6167, 7
      %v6170 = vrot.slane %v6169, 4
      %v6172 = vshrl.u32 %v6061, 16
      %v6174 = vrot.slane %v6172, 7
      %v6175 = vshll.u32 %v6061, 16
      %v6177 = vor.u32 %v6174, %v6175
      %v6178 = vsel %vm1008, %v6170, %v6177
      %v6179 = vrot.slane %v6174, 4
      %v6181 = vshrl.u32 %v6062, 16
      %v6183 = vrot.slane %v6181, 7
      %v6184 = vshll.u32 %v6062, 16
      %v6186 = vor.u32 %v6183, %v6184
      %v6187 = vsel %vm1008, %v6179, %v6186
      %v6189 = vshrl.u32 %v6063, 16
      %v6191 = vrot.slane %v6189, 7
      %v6192 = vrot.slane %v6191, 4
      %v6194 = vshrl.u32 %v6064, 16
      %v6196 = vrot.slane %v6194, 7
      %v6197 = vshll.u32 %v6064, 16
      %v6199 = vor.u32 %v6196, %v6197
      %v6200 = vsel %vm1008, %v6192, %v6199
      %v6201 = vrot.slane %v6196, 4
      %v6203 = vshrl.u32 %v6065, 16
      %v6205 = vrot.slane %v6203, 7
      %v6206 = vshll.u32 %v6065, 16
      %v6208 = vor.u32 %v6205, %v6206
      %v6209 = vsel %vm1008, %v6201, %v6208
      %v6211 = vshrl.u32 %v6066, 16
      %v6213 = vrot.slane %v6211, 7
      %v6214 = vrot.slane %v6213, 4
      %v6216 = vshrl.u32 %v6067, 16
      %v6218 = vrot.slane %v6216, 7
      %v6219 = vshll.u32 %v6067, 16
      %v6221 = vor.u32 %v6218, %v6219
      %v6222 = vsel %vm1008, %v6214, %v6221
      %v6223 = vrot.slane %v6218, 4
      %v6225 = vshrl.u32 %v6068, 16
      %v6227 = vrot.slane %v6225, 7
      %v6228 = vshll.u32 %v6068, 16
      %v6230 = vor.u32 %v6227, %v6228
      %v6231 = vsel %vm1008, %v6223, %v6230
      %v6233 = vshrl.u32 %v6069, 16
      %v6235 = vrot.slane %v6233, 7
      %v6236 = vrot.slane %v6235, 4
      %v6238 = vshrl.u32 %v6070, 16
      %v6240 = vrot.slane %v6238, 7
      %v6241 = vshll.u32 %v6070, 16
      %v6243 = vor.u32 %v6240, %v6241
      %v6244 = vsel %vm1008, %v6236, %v6243
      %v6245 = vrot.slane %v6240, 4
      %v6247 = vshrl.u32 %v6071, 16
      %v6249 = vrot.slane %v6247, 7
      %v6250 = vshll.u32 %v6071, 16
      %v6252 = vor.u32 %v6249, %v6250
      %v6253 = vsel %vm1008, %v6245, %v6252
      %v6255 = vshrl.u32 %v6072, 16
      %v6257 = vrot.slane %v6255, 7
      %v6258 = vrot.slane %v6257, 4
      %v6260 = vshrl.u32 %v6073, 16
      %v6262 = vrot.slane %v6260, 7
      %v6263 = vshll.u32 %v6073, 16
      %v6265 = vor.u32 %v6262, %v6263
      %v6266 = vsel %vm1008, %v6258, %v6265
      %v6267 = vrot.slane %v6262, 4
      %v6269 = vshrl.u32 %v6074, 16
      %v6271 = vrot.slane %v6269, 7
      %v6272 = vshll.u32 %v6074, 16
      %v6274 = vor.u32 %v6271, %v6272
      %v6275 = vsel %vm1008, %v6267, %v6274
      %v6277 = vshrl.u32 %v6075, 16
      %v6279 = vrot.slane %v6277, 7
      %v6280 = vrot.slane %v6279, 4
      %v6282 = vshrl.u32 %v6076, 16
      %v6284 = vrot.slane %v6282, 7
      %v6285 = vshll.u32 %v6076, 16
      %v6287 = vor.u32 %v6284, %v6285
      %v6288 = vsel %vm1008, %v6280, %v6287
      %v6289 = vrot.slane %v6284, 4
      %v6291 = vshrl.u32 %v6077, 16
      %v6293 = vrot.slane %v6291, 7
      %v6294 = vshll.u32 %v6077, 16
      %v6296 = vor.u32 %v6293, %v6294
      %v6297 = vsel %vm1008, %v6289, %v6296
      %v6298 = vunpack.c.l.b16 %v6090
      %v6299 = vunpack.c.l.b16 %v6099
      %v6300 = vunpack.c.l.b16 %v6112
      %v6301 = vunpack.c.l.b16 %v6121
      %v6302 = vunpack.c.l.b16 %v6134
      %v6303 = vunpack.c.l.b16 %v6143
      %v6304 = vunpack.c.l.b16 %v6156
      %v6305 = vunpack.c.l.b16 %v6165
      %v6306 = vunpack.c.l.b16 %v6178
      %v6307 = vunpack.c.l.b16 %v6187
      %v6308 = vunpack.c.l.b16 %v6200
      %v6309 = vunpack.c.l.b16 %v6209
      %v6310 = vunpack.c.l.b16 %v6222
      %v6311 = vunpack.c.l.b16 %v6231
      %v6312 = vunpack.c.l.b16 %v6244
      %v6313 = vunpack.c.l.b16 %v6253
      %v6314 = vpack.c.b16 %v6299, %v6298
      %v6315 = vpack.c.b16 %v6301, %v6300
      %v6316 = vpack.c.b16 %v6303, %v6302
      %v6317 = vpack.c.b16 %v6305, %v6304
      %v6318 = vpack.c.b16 %v6307, %v6306
      %v6319 = vpack.c.b16 %v6309, %v6308
      %v6320 = vpack.c.b16 %v6311, %v6310
      %v6321 = vpack.c.b16 %v6313, %v6312
      %v6330 = vunpack.c.l.b16 %v6266
      %v6331 = vunpack.c.l.b16 %v6275
      %v6332 = vpack.c.b16 %v6331, %v6330
      %v6334 = vunpack.c.l.b16 %v6288
      %v6335 = vunpack.c.l.b16 %v6297
      %v6336 = vpack.c.b16 %v6335, %v6334
      %v6338 = vld [vmem:[%s5] sm:$0xf]
      %v6339 = vld [vmem:[%s5 + $0x4] sm:$0xf]
      %v6340 = vld [vmem:[%s5 + $0x8] sm:$0xf]
      %v6341 = vld [vmem:[%s5 + $0xc] sm:$0xf]
      %v6342 = vld [vmem:[%s5 + $0x10] sm:$0xf]
      %v6343 = vld [vmem:[%s5 + $0x14] sm:$0xf]
      %v6344 = vld [vmem:[%s5 + $0x18] sm:$0xf]
      %v6345 = vld [vmem:[%s5 + $0x1c] sm:$0xf]
      %v6346 = vld [vmem:[%s5 + $0x20] sm:$0xf]
      %v6347 = vld [vmem:[%s5 + $0x24] sm:$0xf]
      %v6348 = vld [vmem:[%s5 + $0x28] sm:$0xf]
      %v6349 = vld [vmem:[%s5 + $0x2c] sm:$0xf]
      %v6350 = vld [vmem:[%s5 + $0x30] sm:$0xf]
      %v6351 = vld [vmem:[%s5 + $0x34] sm:$0xf]
      %v6352 = vld [vmem:[%s5 + $0x38] sm:$0xf]
      %v6353 = vld [vmem:[%s5 + $0x3c] sm:$0xf]
      %v6354 = vld [vmem:[%s5 + $0x40] sm:$0xf]
      %v6355 = vld [vmem:[%s5 + $0x44] sm:$0xf]
      %v6356 = vld [vmem:[%s5 + $0x48] sm:$0xf]
      %v6357 = vld [vmem:[%s5 + $0x4c] sm:$0xf]
      %v6358 = vld [vmem:[%s5 + $0x50] sm:$0xf]
      %v6359 = vld [vmem:[%s5 + $0x54] sm:$0xf]
      %v6360 = vld [vmem:[%s5 + $0x58] sm:$0xf]
      %v6361 = vld [vmem:[%s5 + $0x5c] sm:$0xf]
      %v6362 = vld [vmem:[%s5 + $0x60] sm:$0xf]
      %v6363 = vld [vmem:[%s5 + $0x64] sm:$0xf]
      %v6364 = vld [vmem:[%s5 + $0x68] sm:$0xf]
      %v6365 = vld [vmem:[%s5 + $0x6c] sm:$0xf]
      %v6366 = vld [vmem:[%s5 + $0x70] sm:$0xf]
      %v6367 = vld [vmem:[%s5 + $0x74] sm:$0xf]
      %v6368 = vld [vmem:[%s5 + $0x78] sm:$0xf]
      %v6369 = vld [vmem:[%s5 + $0x7c] sm:$0xf]
      %v6370 = vld [vmem:[%s5 + $0x80] sm:$0xf]
      %v6371 = vld [vmem:[%s5 + $0x84] sm:$0xf]
      %v6372 = vld [vmem:[%s5 + $0x88] sm:$0xf]
      %v6373 = vld [vmem:[%s5 + $0x8c] sm:$0xf]
      %v6374 = vld [vmem:[%s5 + $0x90] sm:$0xf]
      %v6375 = vld [vmem:[%s5 + $0x94] sm:$0xf]
      %v6376 = vld [vmem:[%s5 + $0x98] sm:$0xf]
      %v6377 = vld [vmem:[%s5 + $0x9c] sm:$0xf]
      %v6378 = vld [vmem:[%s5 + $0xa0] sm:$0xf]
      %v6379 = vld [vmem:[%s5 + $0xa4] sm:$0xf]
      %v6380 = vld [vmem:[%s5 + $0xa8] sm:$0xf]
      %v6381 = vld [vmem:[%s5 + $0xac] sm:$0xf]
      %v6382 = vld [vmem:[%s5 + $0xb0] sm:$0xf]
      %v6383 = vld [vmem:[%s5 + $0xb4] sm:$0xf]
      %v6384 = vld [vmem:[%s5 + $0xb8] sm:$0xf]
      %v6385 = vld [vmem:[%s5 + $0xbc] sm:$0xf]
      %v6434 = vunpack.c.l.b16 %v6338
      %v6435 = vunpack.c.l.b16 %v6339
      %v6436 = vunpack.c.l.b16 %v6340
      %v6437 = vunpack.c.l.b16 %v6341
      %v6438 = vunpack.c.l.b16 %v6342
      %v6439 = vunpack.c.l.b16 %v6343
      %v6440 = vunpack.c.l.b16 %v6344
      %v6441 = vunpack.c.l.b16 %v6345
      %v6442 = vunpack.c.l.b16 %v6346
      %v6443 = vunpack.c.l.b16 %v6347
      %v6444 = vunpack.c.l.b16 %v6348
      %v6445 = vunpack.c.l.b16 %v6349
      %v6446 = vunpack.c.l.b16 %v6350
      %v6447 = vunpack.c.l.b16 %v6351
      %v6448 = vunpack.c.l.b16 %v6352
      %v6449 = vunpack.c.l.b16 %v6353
      %v6450 = vunpack.c.l.b16 %v6354
      %v6451 = vunpack.c.l.b16 %v6355
      %v6452 = vunpack.c.l.b16 %v6356
      %v6453 = vunpack.c.l.b16 %v6357
      %v6454 = vunpack.c.l.b16 %v6358
      %v6455 = vunpack.c.l.b16 %v6359
      %v6456 = vunpack.c.l.b16 %v6360
      %v6457 = vunpack.c.l.b16 %v6361
      %v6458 = vunpack.c.l.b16 %v6362
      %v6459 = vunpack.c.l.b16 %v6363
      %v6460 = vunpack.c.l.b16 %v6364
      %v6461 = vunpack.c.l.b16 %v6365
      %v6462 = vunpack.c.l.b16 %v6366
      %v6463 = vunpack.c.l.b16 %v6367
      %v6464 = vunpack.c.l.b16 %v6368
      %v6465 = vunpack.c.l.b16 %v6369
      %v6466 = vunpack.c.l.b16 %v6370
      %v6467 = vunpack.c.l.b16 %v6371
      %v6468 = vunpack.c.l.b16 %v6372
      %v6469 = vunpack.c.l.b16 %v6373
      %v6470 = vunpack.c.l.b16 %v6374
      %v6471 = vunpack.c.l.b16 %v6375
      %v6472 = vunpack.c.l.b16 %v6376
      %v6473 = vunpack.c.l.b16 %v6377
      %v6474 = vunpack.c.l.b16 %v6378
      %v6475 = vunpack.c.l.b16 %v6379
      %v6476 = vunpack.c.l.b16 %v6380
      %v6477 = vunpack.c.l.b16 %v6381
      %v6478 = vunpack.c.l.b16 %v6382
      %v6479 = vunpack.c.l.b16 %v6383
      %v6480 = vunpack.c.l.b16 %v6384
      %v6481 = vunpack.c.l.b16 %v6385
      %v6482 = vpack.c.b16 %v6435, %v6434
      %v6483 = vpack.c.b16 %v6437, %v6436
      %v6484 = vpack.c.b16 %v6439, %v6438
      %v6485 = vpack.c.b16 %v6441, %v6440
      %v6486 = vpack.c.b16 %v6443, %v6442
      %v6487 = vpack.c.b16 %v6445, %v6444
      %v6488 = vpack.c.b16 %v6447, %v6446
      %v6489 = vpack.c.b16 %v6449, %v6448
      %v6490 = vpack.c.b16 %v6451, %v6450
      %v6491 = vpack.c.b16 %v6453, %v6452
      %v6492 = vpack.c.b16 %v6455, %v6454
      %v6493 = vpack.c.b16 %v6457, %v6456
      %v6494 = vpack.c.b16 %v6459, %v6458
      %v6495 = vpack.c.b16 %v6461, %v6460
      %v6496 = vpack.c.b16 %v6463, %v6462
      %v6497 = vpack.c.b16 %v6465, %v6464
      %v6498 = vpack.c.b16 %v6467, %v6466
      %v6499 = vpack.c.b16 %v6469, %v6468
      %v6500 = vpack.c.b16 %v6471, %v6470
      %v6501 = vpack.c.b16 %v6473, %v6472
      %v6502 = vpack.c.b16 %v6475, %v6474
      %v6503 = vpack.c.b16 %v6477, %v6476
      %v6504 = vpack.c.b16 %v6479, %v6478
      %v6505 = vpack.c.b16 %v6481, %v6480
      %6530 = vmatpush.bf16.msra.mxu0 %v6489
      %6531 = vmatpush.bf16.msra.mxu0 %v6488
      %6532 = vmatpush.bf16.msra.mxu0 %v6487
      %6533 = vmatpush.bf16.msra.mxu0 %v6486
      %6534 = vmatpush.bf16.msra.mxu0 %v6485
      %6535 = vmatpush.bf16.msra.mxu0 %v6484
      %6536 = vmatpush.bf16.msra.mxu0 %v6483
      %6537 = vmatpush.bf16.msra.mxu0 %v6482
      %6538 = vmatmul.bf16.gmra.mxu0 %v6314
      %v6539 = vpop.f32.mrf.mxu0
      %v6540 = vadd.f32 0.0, %v6539
      %v6541 = vpop.f32.mrf.mxu0
      %v6542 = vadd.f32 0.0, %v6541
      %6543 = vmatmul.bf16.gmra.mxu0 %v6315
      %v6544 = vpop.f32.mrf.mxu0
      %v6545 = vadd.f32 0.0, %v6544
      %v6546 = vpop.f32.mrf.mxu0
      %v6547 = vadd.f32 0.0, %v6546
      %6548 = vmatmul.bf16.gmra.mxu0 %v6316
      %v6549 = vpop.f32.mrf.mxu0
      %v6550 = vadd.f32 0.0, %v6549
      %v6551 = vpop.f32.mrf.mxu0
      %v6552 = vadd.f32 0.0, %v6551
      %6553 = vmatmul.bf16.gmra.mxu0 %v6317
      %v6554 = vpop.f32.mrf.mxu0
      %v6555 = vadd.f32 0.0, %v6554
      %v6556 = vpop.f32.mrf.mxu0
      %v6557 = vadd.f32 0.0, %v6556
      %6558 = vmatmul.bf16.gmra.mxu0 %v6318
      %v6559 = vpop.f32.mrf.mxu0
      %v6560 = vadd.f32 0.0, %v6559
      %v6561 = vpop.f32.mrf.mxu0
      %v6562 = vadd.f32 0.0, %v6561
      %6563 = vmatmul.bf16.gmra.mxu0 %v6319
      %v6564 = vpop.f32.mrf.mxu0
      %v6565 = vadd.f32 0.0, %v6564
      %v6566 = vpop.f32.mrf.mxu0
      %v6567 = vadd.f32 0.0, %v6566
      %6568 = vmatmul.bf16.gmra.mxu0 %v6320
      %v6569 = vpop.f32.mrf.mxu0
      %v6570 = vadd.f32 0.0, %v6569
      %v6571 = vpop.f32.mrf.mxu0
      %v6572 = vadd.f32 0.0, %v6571
      %6573 = vmatmul.bf16.gmra.mxu0 %v6321
      %v6574 = vpop.f32.mrf.mxu0
      %v6575 = vadd.f32 0.0, %v6574
      %v6576 = vpop.f32.mrf.mxu0
      %v6577 = vadd.f32 0.0, %v6576
      %6578 = vdwg.mxu0
      %6579 = vmatpush.bf16.msra.mxu0 %v6497
      %6580 = vmatpush.bf16.msra.mxu0 %v6496
      %6581 = vmatpush.bf16.msra.mxu0 %v6495
      %6582 = vmatpush.bf16.msra.mxu0 %v6494
      %6583 = vmatpush.bf16.msra.mxu0 %v6493
      %6584 = vmatpush.bf16.msra.mxu0 %v6492
      %6585 = vmatpush.bf16.msra.mxu0 %v6491
      %6586 = vmatpush.bf16.msra.mxu0 %v6490
      %6587 = vmatmul.bf16.gmra.mxu0 %v6315
      %v6588 = vpop.f32.mrf.mxu0
      %v6589 = vadd.f32 %v6540, %v6588
      %v6590 = vpop.f32.mrf.mxu0
      %v6591 = vadd.f32 %v6542, %v6590
      %6592 = vmatmul.bf16.gmra.mxu0 %v6316
      %v6593 = vpop.f32.mrf.mxu0
      %v6594 = vadd.f32 %v6545, %v6593
      %v6595 = vpop.f32.mrf.mxu0
      %v6596 = vadd.f32 %v6547, %v6595
      %6597 = vmatmul.bf16.gmra.mxu0 %v6317
      %v6598 = vpop.f32.mrf.mxu0
      %v6599 = vadd.f32 %v6550, %v6598
      %v6600 = vpop.f32.mrf.mxu0
      %v6601 = vadd.f32 %v6552, %v6600
      %6602 = vmatmul.bf16.gmra.mxu0 %v6318
      %v6603 = vpop.f32.mrf.mxu0
      %v6604 = vadd.f32 %v6555, %v6603
      %v6605 = vpop.f32.mrf.mxu0
      %v6606 = vadd.f32 %v6557, %v6605
      %6607 = vmatmul.bf16.gmra.mxu0 %v6319
      %v6608 = vpop.f32.mrf.mxu0
      %v6609 = vadd.f32 %v6560, %v6608
      %v6610 = vpop.f32.mrf.mxu0
      %v6611 = vadd.f32 %v6562, %v6610
      %6612 = vmatmul.bf16.gmra.mxu0 %v6320
      %v6613 = vpop.f32.mrf.mxu0
      %v6614 = vadd.f32 %v6565, %v6613
      %v6615 = vpop.f32.mrf.mxu0
      %v6616 = vadd.f32 %v6567, %v6615
      %6617 = vmatmul.bf16.gmra.mxu0 %v6321
      %v6618 = vpop.f32.mrf.mxu0
      %v6619 = vadd.f32 %v6570, %v6618
      %v6620 = vpop.f32.mrf.mxu0
      %v6621 = vadd.f32 %v6572, %v6620
      %6622 = vmatmul.bf16.gmra.mxu0 %v6332
      %v6623 = vpop.f32.mrf.mxu0
      %v6624 = vadd.f32 %v6575, %v6623
      %v6625 = vpop.f32.mrf.mxu0
      %v6626 = vadd.f32 %v6577, %v6625
      %6627 = vdwg.mxu0
      %6628 = vmatpush.bf16.msra.mxu0 %v6505
      %6629 = vmatpush.bf16.msra.mxu0 %v6504
      %6630 = vmatpush.bf16.msra.mxu0 %v6503
      %6631 = vmatpush.bf16.msra.mxu0 %v6502
      %6632 = vmatpush.bf16.msra.mxu0 %v6501
      %6633 = vmatpush.bf16.msra.mxu0 %v6500
      %6634 = vmatpush.bf16.msra.mxu0 %v6499
      %6635 = vmatpush.bf16.msra.mxu0 %v6498
      %6636 = vmatmul.bf16.gmra.mxu0 %v6316
      %v6637 = vpop.f32.mrf.mxu0
      %v6638 = vadd.f32 %v6589, %v6637
      %v6639 = vpop.f32.mrf.mxu0
      %v6640 = vadd.f32 %v6591, %v6639
      %6641 = vmatmul.bf16.gmra.mxu0 %v6317
      %v6642 = vpop.f32.mrf.mxu0
      %v6643 = vadd.f32 %v6594, %v6642
      %v6644 = vpop.f32.mrf.mxu0
      %v6645 = vadd.f32 %v6596, %v6644
      %6646 = vmatmul.bf16.gmra.mxu0 %v6318
      %v6647 = vpop.f32.mrf.mxu0
      %v6648 = vadd.f32 %v6599, %v6647
      %v6649 = vpop.f32.mrf.mxu0
      %v6650 = vadd.f32 %v6601, %v6649
      %6651 = vmatmul.bf16.gmra.mxu0 %v6319
      %v6652 = vpop.f32.mrf.mxu0
      %v6653 = vadd.f32 %v6604, %v6652
      %v6654 = vpop.f32.mrf.mxu0
      %v6655 = vadd.f32 %v6606, %v6654
      %6656 = vmatmul.bf16.gmra.mxu0 %v6320
      %v6657 = vpop.f32.mrf.mxu0
      %v6658 = vadd.f32 %v6609, %v6657
      %v6659 = vpop.f32.mrf.mxu0
      %v6660 = vadd.f32 %v6611, %v6659
      %6661 = vmatmul.bf16.gmra.mxu0 %v6321
      %v6662 = vpop.f32.mrf.mxu0
      %v6663 = vadd.f32 %v6614, %v6662
      %v6664 = vpop.f32.mrf.mxu0
      %v6665 = vadd.f32 %v6616, %v6664
      %6666 = vmatmul.bf16.gmra.mxu0 %v6332
      %v6667 = vpop.f32.mrf.mxu0
      %v6668 = vadd.f32 %v6619, %v6667
      %v6669 = vpop.f32.mrf.mxu0
      %v6670 = vadd.f32 %v6621, %v6669
      %6671 = vmatmul.bf16.gmra.mxu0 %v6336
      %v6672 = vpop.f32.mrf.mxu0
      %v6673 = vadd.f32 %v6624, %v6672
      %v6674 = vpop.f32.mrf.mxu0
      %v6675 = vadd.f32 %v6626, %v6674
      %6676 = vdwg.mxu0
      %v6677 = vadd.f32 %v6045, %v6638
      %v6678 = vadd.f32 %v6045, %v6640
      %v6679 = vadd.f32 %v6045, %v6643
      %v6680 = vadd.f32 %v6045, %v6645
      %v6681 = vadd.f32 %v6045, %v6648
      %v6682 = vadd.f32 %v6045, %v6650
      %v6683 = vadd.f32 %v6045, %v6653
      %v6684 = vadd.f32 %v6045, %v6655
      %v6685 = vadd.f32 %v6045, %v6658
      %v6686 = vadd.f32 %v6045, %v6660
      %v6687 = vadd.f32 %v6045, %v6663
      %v6688 = vadd.f32 %v6045, %v6665
      %v6689 = vadd.f32 %v6045, %v6668
      %v6690 = vadd.f32 %v6045, %v6670
      %v6691 = vadd.f32 %v6045, %v6673
      %v6692 = vadd.f32 %v6045, %v6675
      %v6709 = vunpack.c.l.b16 %v6049
      %v6710 = vunpack.c.l.b16 %v6050
      %v6711 = vunpack.c.l.b16 %v6052
      %v6712 = vunpack.c.l.b16 %v6053
      %v6713 = vunpack.c.l.b16 %v6055
      %v6714 = vunpack.c.l.b16 %v6056
      %v6715 = vunpack.c.l.b16 %v6058
      %v6716 = vunpack.c.l.b16 %v6059
      %v6717 = vunpack.c.l.b16 %v6061
      %v6718 = vunpack.c.l.b16 %v6062
      %v6719 = vunpack.c.l.b16 %v6064
      %v6720 = vunpack.c.l.b16 %v6065
      %v6721 = vunpack.c.l.b16 %v6067
      %v6722 = vunpack.c.l.b16 %v6068
      %v6723 = vunpack.c.l.b16 %v6070
      %v6724 = vunpack.c.l.b16 %v6071
      %v6725 = vpack.c.b16 %v6710, %v6709
      %v6726 = vpack.c.b16 %v6712, %v6711
      %v6727 = vpack.c.b16 %v6714, %v6713
      %v6728 = vpack.c.b16 %v6716, %v6715
      %v6729 = vpack.c.b16 %v6718, %v6717
      %v6730 = vpack.c.b16 %v6720, %v6719
      %v6731 = vpack.c.b16 %v6722, %v6721
      %v6732 = vpack.c.b16 %v6724, %v6723
      %v6743 = vunpack.c.l.b16 %v6073
      %v6744 = vunpack.c.l.b16 %v6074
      %v6745 = vpack.c.b16 %v6744, %v6743
      %v6749 = vunpack.c.l.b16 %v6076
      %v6750 = vunpack.c.l.b16 %v6077
      %v6751 = vpack.c.b16 %v6750, %v6749
      %v6753 = vld [vmem:[%s4988] sm:$0xf]
      %v6754 = vld [vmem:[%s4988 + $0x4] sm:$0xf]
      %v6755 = vld [vmem:[%s4988 + $0x8] sm:$0xf]
      %v6756 = vld [vmem:[%s4988 + $0xc] sm:$0xf]
      %v6757 = vld [vmem:[%s4988 + $0x10] sm:$0xf]
      %v6758 = vld [vmem:[%s4988 + $0x14] sm:$0xf]
      %v6759 = vld [vmem:[%s4988 + $0x18] sm:$0xf]
      %v6760 = vld [vmem:[%s4988 + $0x1c] sm:$0xf]
      %v6761 = vld [vmem:[%s4988 + $0x20] sm:$0xf]
      %v6762 = vld [vmem:[%s4988 + $0x24] sm:$0xf]
      %v6763 = vld [vmem:[%s4988 + $0x28] sm:$0xf]
      %v6764 = vld [vmem:[%s4988 + $0x2c] sm:$0xf]
      %v6765 = vld [vmem:[%s4988 + $0x30] sm:$0xf]
      %v6766 = vld [vmem:[%s4988 + $0x34] sm:$0xf]
      %v6767 = vld [vmem:[%s4988 + $0x38] sm:$0xf]
      %v6768 = vld [vmem:[%s4988 + $0x3c] sm:$0xf]
      %v6769 = vld [vmem:[%s4988 + $0x40] sm:$0xf]
      %v6770 = vld [vmem:[%s4988 + $0x44] sm:$0xf]
      %v6771 = vld [vmem:[%s4988 + $0x48] sm:$0xf]
      %v6772 = vld [vmem:[%s4988 + $0x4c] sm:$0xf]
      %v6773 = vld [vmem:[%s4988 + $0x50] sm:$0xf]
      %v6774 = vld [vmem:[%s4988 + $0x54] sm:$0xf]
      %v6775 = vld [vmem:[%s4988 + $0x58] sm:$0xf]
      %v6776 = vld [vmem:[%s4988 + $0x5c] sm:$0xf]
      %v6777 = vld [vmem:[%s4988 + $0x60] sm:$0xf]
      %v6778 = vld [vmem:[%s4988 + $0x64] sm:$0xf]
      %v6779 = vld [vmem:[%s4988 + $0x68] sm:$0xf]
      %v6780 = vld [vmem:[%s4988 + $0x6c] sm:$0xf]
      %v6781 = vld [vmem:[%s4988 + $0x70] sm:$0xf]
      %v6782 = vld [vmem:[%s4988 + $0x74] sm:$0xf]
      %v6783 = vld [vmem:[%s4988 + $0x78] sm:$0xf]
      %v6784 = vld [vmem:[%s4988 + $0x7c] sm:$0xf]
      %v6785 = vld [vmem:[%s4988 + $0x80] sm:$0xf]
      %v6786 = vld [vmem:[%s4988 + $0x84] sm:$0xf]
      %v6787 = vld [vmem:[%s4988 + $0x88] sm:$0xf]
      %v6788 = vld [vmem:[%s4988 + $0x8c] sm:$0xf]
      %v6789 = vld [vmem:[%s4988 + $0x90] sm:$0xf]
      %v6790 = vld [vmem:[%s4988 + $0x94] sm:$0xf]
      %v6791 = vld [vmem:[%s4988 + $0x98] sm:$0xf]
      %v6792 = vld [vmem:[%s4988 + $0x9c] sm:$0xf]
      %v6793 = vld [vmem:[%s4988 + $0xa0] sm:$0xf]
      %v6794 = vld [vmem:[%s4988 + $0xa4] sm:$0xf]
      %v6795 = vld [vmem:[%s4988 + $0xa8] sm:$0xf]
      %v6796 = vld [vmem:[%s4988 + $0xac] sm:$0xf]
      %v6797 = vld [vmem:[%s4988 + $0xb0] sm:$0xf]
      %v6798 = vld [vmem:[%s4988 + $0xb4] sm:$0xf]
      %v6799 = vld [vmem:[%s4988 + $0xb8] sm:$0xf]
      %v6800 = vld [vmem:[%s4988 + $0xbc] sm:$0xf]
      %v6849 = vunpack.c.l.b16 %v6753
      %v6850 = vunpack.c.l.b16 %v6754
      %v6851 = vunpack.c.l.b16 %v6755
      %v6852 = vunpack.c.l.b16 %v6756
      %v6853 = vunpack.c.l.b16 %v6757
      %v6854 = vunpack.c.l.b16 %v6758
      %v6855 = vunpack.c.l.b16 %v6759
      %v6856 = vunpack.c.l.b16 %v6760
      %v6857 = vunpack.c.l.b16 %v6761
      %v6858 = vunpack.c.l.b16 %v6762
      %v6859 = vunpack.c.l.b16 %v6763
      %v6860 = vunpack.c.l.b16 %v6764
      %v6861 = vunpack.c.l.b16 %v6765
      %v6862 = vunpack.c.l.b16 %v6766
      %v6863 = vunpack.c.l.b16 %v6767
      %v6864 = vunpack.c.l.b16 %v6768
      %v6865 = vunpack.c.l.b16 %v6769
      %v6866 = vunpack.c.l.b16 %v6770
      %v6867 = vunpack.c.l.b16 %v6771
      %v6868 = vunpack.c.l.b16 %v6772
      %v6869 = vunpack.c.l.b16 %v6773
      %v6870 = vunpack.c.l.b16 %v6774
      %v6871 = vunpack.c.l.b16 %v6775
      %v6872 = vunpack.c.l.b16 %v6776
      %v6873 = vunpack.c.l.b16 %v6777
      %v6874 = vunpack.c.l.b16 %v6778
      %v6875 = vunpack.c.l.b16 %v6779
      %v6876 = vunpack.c.l.b16 %v6780
      %v6877 = vunpack.c.l.b16 %v6781
      %v6878 = vunpack.c.l.b16 %v6782
      %v6879 = vunpack.c.l.b16 %v6783
      %v6880 = vunpack.c.l.b16 %v6784
      %v6881 = vunpack.c.l.b16 %v6785
      %v6882 = vunpack.c.l.b16 %v6786
      %v6883 = vunpack.c.l.b16 %v6787
      %v6884 = vunpack.c.l.b16 %v6788
      %v6885 = vunpack.c.l.b16 %v6789
      %v6886 = vunpack.c.l.b16 %v6790
      %v6887 = vunpack.c.l.b16 %v6791
      %v6888 = vunpack.c.l.b16 %v6792
      %v6889 = vunpack.c.l.b16 %v6793
      %v6890 = vunpack.c.l.b16 %v6794
      %v6891 = vunpack.c.l.b16 %v6795
      %v6892 = vunpack.c.l.b16 %v6796
      %v6893 = vunpack.c.l.b16 %v6797
      %v6894 = vunpack.c.l.b16 %v6798
      %v6895 = vunpack.c.l.b16 %v6799
      %v6896 = vunpack.c.l.b16 %v6800
      %v6897 = vpack.c.b16 %v6850, %v6849
      %v6898 = vpack.c.b16 %v6852, %v6851
      %v6899 = vpack.c.b16 %v6854, %v6853
      %v6900 = vpack.c.b16 %v6856, %v6855
      %v6901 = vpack.c.b16 %v6858, %v6857
      %v6902 = vpack.c.b16 %v6860, %v6859
      %v6903 = vpack.c.b16 %v6862, %v6861
      %v6904 = vpack.c.b16 %v6864, %v6863
      %v6905 = vpack.c.b16 %v6866, %v6865
      %v6906 = vpack.c.b16 %v6868, %v6867
      %v6907 = vpack.c.b16 %v6870, %v6869
      %v6908 = vpack.c.b16 %v6872, %v6871
      %v6909 = vpack.c.b16 %v6874, %v6873
      %v6910 = vpack.c.b16 %v6876, %v6875
      %v6911 = vpack.c.b16 %v6878, %v6877
      %v6912 = vpack.c.b16 %v6880, %v6879
      %v6913 = vpack.c.b16 %v6882, %v6881
      %v6914 = vpack.c.b16 %v6884, %v6883
      %v6915 = vpack.c.b16 %v6886, %v6885
      %v6916 = vpack.c.b16 %v6888, %v6887
      %v6917 = vpack.c.b16 %v6890, %v6889
      %v6918 = vpack.c.b16 %v6892, %v6891
      %v6919 = vpack.c.b16 %v6894, %v6893
      %v6920 = vpack.c.b16 %v6896, %v6895
      %6945 = vmatpush.bf16.msra.mxu0 %v6904
      %6946 = vmatpush.bf16.msra.mxu0 %v6903
      %6947 = vmatpush.bf16.msra.mxu0 %v6902
      %6948 = vmatpush.bf16.msra.mxu0 %v6901
      %6949 = vmatpush.bf16.msra.mxu0 %v6900
      %6950 = vmatpush.bf16.msra.mxu0 %v6899
      %6951 = vmatpush.bf16.msra.mxu0 %v6898
      %6952 = vmatpush.bf16.msra.mxu0 %v6897
      %6953 = vmatmul.bf16.gmra.mxu0 %v6725
      %v6954 = vpop.f32.mrf.mxu0
      %v6955 = vadd.f32 0.0, %v6954
      %v6956 = vpop.f32.mrf.mxu0
      %v6957 = vadd.f32 0.0, %v6956
      %6958 = vmatmul.bf16.gmra.mxu0 %v6726
      %v6959 = vpop.f32.mrf.mxu0
      %v6960 = vadd.f32 0.0, %v6959
      %v6961 = vpop.f32.mrf.mxu0
      %v6962 = vadd.f32 0.0, %v6961
      %6963 = vmatmul.bf16.gmra.mxu0 %v6727
      %v6964 = vpop.f32.mrf.mxu0
      %v6965 = vadd.f32 0.0, %v6964
      %v6966 = vpop.f32.mrf.mxu0
      %v6967 = vadd.f32 0.0, %v6966
      %6968 = vmatmul.bf16.gmra.mxu0 %v6728
      %v6969 = vpop.f32.mrf.mxu0
      %v6970 = vadd.f32 0.0, %v6969
      %v6971 = vpop.f32.mrf.mxu0
      %v6972 = vadd.f32 0.0, %v6971
      %6973 = vmatmul.bf16.gmra.mxu0 %v6729
      %v6974 = vpop.f32.mrf.mxu0
      %v6975 = vadd.f32 0.0, %v6974
      %v6976 = vpop.f32.mrf.mxu0
      %v6977 = vadd.f32 0.0, %v6976
      %6978 = vmatmul.bf16.gmra.mxu0 %v6730
      %v6979 = vpop.f32.mrf.mxu0
      %v6980 = vadd.f32 0.0, %v6979
      %v6981 = vpop.f32.mrf.mxu0
      %v6982 = vadd.f32 0.0, %v6981
      %6983 = vmatmul.bf16.gmra.mxu0 %v6731
      %v6984 = vpop.f32.mrf.mxu0
      %v6985 = vadd.f32 0.0, %v6984
      %v6986 = vpop.f32.mrf.mxu0
      %v6987 = vadd.f32 0.0, %v6986
      %6988 = vmatmul.bf16.gmra.mxu0 %v6732
      %v6989 = vpop.f32.mrf.mxu0
      %v6990 = vadd.f32 0.0, %v6989
      %v6991 = vpop.f32.mrf.mxu0
      %v6992 = vadd.f32 0.0, %v6991
      %6993 = vdwg.mxu0
      %6994 = vmatpush.bf16.msra.mxu0 %v6912
      %6995 = vmatpush.bf16.msra.mxu0 %v6911
      %6996 = vmatpush.bf16.msra.mxu0 %v6910
      %6997 = vmatpush.bf16.msra.mxu0 %v6909
      %6998 = vmatpush.bf16.msra.mxu0 %v6908
      %6999 = vmatpush.bf16.msra.mxu0 %v6907
      %7000 = vmatpush.bf16.msra.mxu0 %v6906
      %7001 = vmatpush.bf16.msra.mxu0 %v6905
      %7002 = vmatmul.bf16.gmra.mxu0 %v6726
      %v7003 = vpop.f32.mrf.mxu0
      %v7004 = vadd.f32 %v6955, %v7003
      %v7005 = vpop.f32.mrf.mxu0
      %v7006 = vadd.f32 %v6957, %v7005
      %7007 = vmatmul.bf16.gmra.mxu0 %v6727
      %v7008 = vpop.f32.mrf.mxu0
      %v7009 = vadd.f32 %v6960, %v7008
      %v7010 = vpop.f32.mrf.mxu0
      %v7011 = vadd.f32 %v6962, %v7010
      %7012 = vmatmul.bf16.gmra.mxu0 %v6728
      %v7013 = vpop.f32.mrf.mxu0
      %v7014 = vadd.f32 %v6965, %v7013
      %v7015 = vpop.f32.mrf.mxu0
      %v7016 = vadd.f32 %v6967, %v7015
      %7017 = vmatmul.bf16.gmra.mxu0 %v6729
      %v7018 = vpop.f32.mrf.mxu0
      %v7019 = vadd.f32 %v6970, %v7018
      %v7020 = vpop.f32.mrf.mxu0
      %v7021 = vadd.f32 %v6972, %v7020
      %7022 = vmatmul.bf16.gmra.mxu0 %v6730
      %v7023 = vpop.f32.mrf.mxu0
      %v7024 = vadd.f32 %v6975, %v7023
      %v7025 = vpop.f32.mrf.mxu0
      %v7026 = vadd.f32 %v6977, %v7025
      %7027 = vmatmul.bf16.gmra.mxu0 %v6731
      %v7028 = vpop.f32.mrf.mxu0
      %v7029 = vadd.f32 %v6980, %v7028
      %v7030 = vpop.f32.mrf.mxu0
      %v7031 = vadd.f32 %v6982, %v7030
      %7032 = vmatmul.bf16.gmra.mxu0 %v6732
      %v7033 = vpop.f32.mrf.mxu0
      %v7034 = vadd.f32 %v6985, %v7033
      %v7035 = vpop.f32.mrf.mxu0
      %v7036 = vadd.f32 %v6987, %v7035
      %7037 = vmatmul.bf16.gmra.mxu0 %v6745
      %v7038 = vpop.f32.mrf.mxu0
      %v7039 = vadd.f32 %v6990, %v7038
      %v7040 = vpop.f32.mrf.mxu0
      %v7041 = vadd.f32 %v6992, %v7040
      %7042 = vdwg.mxu0
      %7043 = vmatpush.bf16.msra.mxu0 %v6920
      %7044 = vmatpush.bf16.msra.mxu0 %v6919
      %7045 = vmatpush.bf16.msra.mxu0 %v6918
      %7046 = vmatpush.bf16.msra.mxu0 %v6917
      %7047 = vmatpush.bf16.msra.mxu0 %v6916
      %7048 = vmatpush.bf16.msra.mxu0 %v6915
      %7049 = vmatpush.bf16.msra.mxu0 %v6914
      %7050 = vmatpush.bf16.msra.mxu0 %v6913
      %7051 = vmatmul.bf16.gmra.mxu0 %v6727
      %v7052 = vpop.f32.mrf.mxu0
      %v7053 = vadd.f32 %v7004, %v7052
      %v7054 = vpop.f32.mrf.mxu0
      %v7055 = vadd.f32 %v7006, %v7054
      %7056 = vmatmul.bf16.gmra.mxu0 %v6728
      %v7057 = vpop.f32.mrf.mxu0
      %v7058 = vadd.f32 %v7009, %v7057
      %v7059 = vpop.f32.mrf.mxu0
      %v7060 = vadd.f32 %v7011, %v7059
      %7061 = vmatmul.bf16.gmra.mxu0 %v6729
      %v7062 = vpop.f32.mrf.mxu0
      %v7063 = vadd.f32 %v7014, %v7062
      %v7064 = vpop.f32.mrf.mxu0
      %v7065 = vadd.f32 %v7016, %v7064
      %7066 = vmatmul.bf16.gmra.mxu0 %v6730
      %v7067 = vpop.f32.mrf.mxu0
      %v7068 = vadd.f32 %v7019, %v7067
      %v7069 = vpop.f32.mrf.mxu0
      %v7070 = vadd.f32 %v7021, %v7069
      %7071 = vmatmul.bf16.gmra.mxu0 %v6731
      %v7072 = vpop.f32.mrf.mxu0
      %v7073 = vadd.f32 %v7024, %v7072
      %v7074 = vpop.f32.mrf.mxu0
      %v7075 = vadd.f32 %v7026, %v7074
      %7076 = vmatmul.bf16.gmra.mxu0 %v6732
      %v7077 = vpop.f32.mrf.mxu0
      %v7078 = vadd.f32 %v7029, %v7077
      %v7079 = vpop.f32.mrf.mxu0
      %v7080 = vadd.f32 %v7031, %v7079
      %7081 = vmatmul.bf16.gmra.mxu0 %v6745
      %v7082 = vpop.f32.mrf.mxu0
      %v7083 = vadd.f32 %v7034, %v7082
      %v7084 = vpop.f32.mrf.mxu0
      %v7085 = vadd.f32 %v7036, %v7084
      %7086 = vmatmul.bf16.gmra.mxu0 %v6751
      %v7087 = vpop.f32.mrf.mxu0
      %v7088 = vadd.f32 %v7039, %v7087
      %v7089 = vpop.f32.mrf.mxu0
      %v7090 = vadd.f32 %v7041, %v7089
      %7091 = vdwg.mxu0
      %v7092 = vadd.f32 %v6677, %v7053
      %v7093 = vadd.f32 %v6678, %v7055
      %v7094 = vadd.f32 %v6679, %v7058
      %v7095 = vadd.f32 %v6680, %v7060
      %v7096 = vadd.f32 %v6681, %v7063
      %v7097 = vadd.f32 %v6682, %v7065
      %v7098 = vadd.f32 %v6683, %v7068
      %v7099 = vadd.f32 %v6684, %v7070
      %v7100 = vadd.f32 %v6685, %v7073
      %v7101 = vadd.f32 %v6686, %v7075
      %v7102 = vadd.f32 %v6687, %v7078
      %v7103 = vadd.f32 %v6688, %v7080
      %v7104 = vadd.f32 %v6689, %v7083
      %v7105 = vadd.f32 %v6690, %v7085
      %v7106 = vadd.f32 %v6691, %v7088
      %v7107 = vadd.f32 %v6692, %v7090
      %v7108 = vld [vmem:[%s6047 + $0x8] sm:$0xf]
      %v7109 = vld [vmem:[%s6047 + $0xc] sm:$0xf]
      %v7110 = vld [vmem:[%s6047 + $0x10] sm:$0x1]
      %v7111 = vld [vmem:[%s6047 + $0x20] sm:$0xf]
      %v7112 = vld [vmem:[%s6047 + $0x24] sm:$0xf]
      %v7113 = vld [vmem:[%s6047 + $0x28] sm:$0x1]
      %v7114 = vld [vmem:[%s6047 + $0x38] sm:$0xf]
      %v7115 = vld [vmem:[%s6047 + $0x3c] sm:$0xf]
      %v7116 = vld [vmem:[%s6047 + $0x40] sm:$0x1]
      %v7117 = vld [vmem:[%s6047 + $0x50] sm:$0xf]
      %v7118 = vld [vmem:[%s6047 + $0x54] sm:$0xf]
      %v7119 = vld [vmem:[%s6047 + $0x58] sm:$0x1]
      %v7120 = vld [vmem:[%s6047 + $0x68] sm:$0xf]
      %v7121 = vld [vmem:[%s6047 + $0x6c] sm:$0xf]
      %v7122 = vld [vmem:[%s6047 + $0x70] sm:$0x1]
      %v7123 = vld [vmem:[%s6047 + $0x80] sm:$0xf]
      %v7124 = vld [vmem:[%s6047 + $0x84] sm:$0xf]
      %v7125 = vld [vmem:[%s6047 + $0x88] sm:$0x1]
      %v7126 = vld [vmem:[%s6047 + $0x98] sm:$0xf]
      %v7127 = vld [vmem:[%s6047 + $0x9c] sm:$0xf]
      %v7128 = vld [vmem:[%s6047 + $0xa0] sm:$0x1]
      %v7129 = vld [vmem:[%s6047 + $0xb0] sm:$0xf]
      %v7130 = vld [vmem:[%s6047 + $0xb4] sm:$0xf]
      %v7131 = vld [vmem:[%s6047 + $0xb8] sm:$0x1]
      %v7132 = vld [vmem:[%s6047 + $0xc8] sm:$0xf]
      %v7133 = vld [vmem:[%s6047 + $0xcc] sm:$0xf]
      %v7134 = vld [vmem:[%s6047 + $0xd0] sm:$0x1]
      %v7135 = vld [vmem:[%s6047 + $0xe0] sm:$0xf]
      %v7136 = vld [vmem:[%s6047 + $0xe4] sm:$0xf]
      %v7137 = vld [vmem:[%s6047 + $0xe8] sm:$0x1]
      %v7139 = vshrl.u32 %v7108, 16
      %v7141 = vrot.slane %v7139, 4
      %v7142 = vshll.u32 %v7108, 16
      %v7144 = vrot.slane %v7142, 5
      %v7145 = vor.u32 %v7141, %v7144
      %v7146 = vrot.slane %v7145, 4
      %v7148 = vshll.u32 %v7109, 16
      %v7150 = vrot.slane %v7148, 5
      %v7151 = vsel %vm1988, %v7146, %v7150
      %v7152 = vshrl.u32 %v7109, 16
      %v7154 = vrot.slane %v7152, 4
      %v7155 = vor.u32 %v7154, %v7150
      %v7156 = vrot.slane %v7155, 4
      %v7158 = vshll.u32 %v7110, 16
      %v7160 = vrot.slane %v7158, 5
      %v7161 = vsel %vm1988, %v7156, %v7160
      %v7163 = vshrl.u32 %v7111, 16
      %v7165 = vrot.slane %v7163, 4
      %v7166 = vshll.u32 %v7111, 16
      %v7168 = vrot.slane %v7166, 5
      %v7169 = vor.u32 %v7165, %v7168
      %v7170 = vrot.slane %v7169, 4
      %v7172 = vshll.u32 %v7112, 16
      %v7174 = vrot.slane %v7172, 5
      %v7175 = vsel %vm1988, %v7170, %v7174
      %v7176 = vshrl.u32 %v7112, 16
      %v7178 = vrot.slane %v7176, 4
      %v7179 = vor.u32 %v7178, %v7174
      %v7180 = vrot.slane %v7179, 4
      %v7182 = vshll.u32 %v7113, 16
      %v7184 = vrot.slane %v7182, 5
      %v7185 = vsel %vm1988, %v7180, %v7184
      %v7187 = vshrl.u32 %v7114, 16
      %v7189 = vrot.slane %v7187, 4
      %v7190 = vshll.u32 %v7114, 16
      %v7192 = vrot.slane %v7190, 5
      %v7193 = vor.u32 %v7189, %v7192
      %v7194 = vrot.slane %v7193, 4
      %v7196 = vshll.u32 %v7115, 16
      %v7198 = vrot.slane %v7196, 5
      %v7199 = vsel %vm1988, %v7194, %v7198
      %v7200 = vshrl.u32 %v7115, 16
      %v7202 = vrot.slane %v7200, 4
      %v7203 = vor.u32 %v7202, %v7198
      %v7204 = vrot.slane %v7203, 4
      %v7206 = vshll.u32 %v7116, 16
      %v7208 = vrot.slane %v7206, 5
      %v7209 = vsel %vm1988, %v7204, %v7208
      %v7211 = vshrl.u32 %v7117, 16
      %v7213 = vrot.slane %v7211, 4
      %v7214 = vshll.u32 %v7117, 16
      %v7216 = vrot.slane %v7214, 5
      %v7217 = vor.u32 %v7213, %v7216
      %v7218 = vrot.slane %v7217, 4
      %v7220 = vshll.u32 %v7118, 16
      %v7222 = vrot.slane %v7220, 5
      %v7223 = vsel %vm1988, %v7218, %v7222
      %v7224 = vshrl.u32 %v7118, 16
      %v7226 = vrot.slane %v7224, 4
      %v7227 = vor.u32 %v7226, %v7222
      %v7228 = vrot.slane %v7227, 4
      %v7230 = vshll.u32 %v7119, 16
      %v7232 = vrot.slane %v7230, 5
      %v7233 = vsel %vm1988, %v7228, %v7232
      %v7235 = vshrl.u32 %v7120, 16
      %v7237 = vrot.slane %v7235, 4
      %v7238 = vshll.u32 %v7120, 16
      %v7240 = vrot.slane %v7238, 5
      %v7241 = vor.u32 %v7237, %v7240
      %v7242 = vrot.slane %v7241, 4
      %v7244 = vshll.u32 %v7121, 16
      %v7246 = vrot.slane %v7244, 5
      %v7247 = vsel %vm1988, %v7242, %v7246
      %v7248 = vshrl.u32 %v7121, 16
      %v7250 = vrot.slane %v7248, 4
      %v7251 = vor.u32 %v7250, %v7246
      %v7252 = vrot.slane %v7251, 4
      %v7254 = vshll.u32 %v7122, 16
      %v7256 = vrot.slane %v7254, 5
      %v7257 = vsel %vm1988, %v7252, %v7256
      %v7259 = vshrl.u32 %v7123, 16
      %v7261 = vrot.slane %v7259, 4
      %v7262 = vshll.u32 %v7123, 16
      %v7264 = vrot.slane %v7262, 5
      %v7265 = vor.u32 %v7261, %v7264
      %v7266 = vrot.slane %v7265, 4
      %v7268 = vshll.u32 %v7124, 16
      %v7270 = vrot.slane %v7268, 5
      %v7271 = vsel %vm1988, %v7266, %v7270
      %v7272 = vshrl.u32 %v7124, 16
      %v7274 = vrot.slane %v7272, 4
      %v7275 = vor.u32 %v7274, %v7270
      %v7276 = vrot.slane %v7275, 4
      %v7278 = vshll.u32 %v7125, 16
      %v7280 = vrot.slane %v7278, 5
      %v7281 = vsel %vm1988, %v7276, %v7280
      %v7283 = vshrl.u32 %v7126, 16
      %v7285 = vrot.slane %v7283, 4
      %v7286 = vshll.u32 %v7126, 16
      %v7288 = vrot.slane %v7286, 5
      %v7289 = vor.u32 %v7285, %v7288
      %v7290 = vrot.slane %v7289, 4
      %v7292 = vshll.u32 %v7127, 16
      %v7294 = vrot.slane %v7292, 5
      %v7295 = vsel %vm1988, %v7290, %v7294
      %v7296 = vshrl.u32 %v7127, 16
      %v7298 = vrot.slane %v7296, 4
      %v7299 = vor.u32 %v7298, %v7294
      %v7300 = vrot.slane %v7299, 4
      %v7302 = vshll.u32 %v7128, 16
      %v7304 = vrot.slane %v7302, 5
      %v7305 = vsel %vm1988, %v7300, %v7304
      %v7307 = vshrl.u32 %v7129, 16
      %v7309 = vrot.slane %v7307, 4
      %v7310 = vshll.u32 %v7129, 16
      %v7312 = vrot.slane %v7310, 5
      %v7313 = vor.u32 %v7309, %v7312
      %v7314 = vrot.slane %v7313, 4
      %v7316 = vshll.u32 %v7130, 16
      %v7318 = vrot.slane %v7316, 5
      %v7319 = vsel %vm1988, %v7314, %v7318
      %v7320 = vshrl.u32 %v7130, 16
      %v7322 = vrot.slane %v7320, 4
      %v7323 = vor.u32 %v7322, %v7318
      %v7324 = vrot.slane %v7323, 4
      %v7326 = vshll.u32 %v7131, 16
      %v7328 = vrot.slane %v7326, 5
      %v7329 = vsel %vm1988, %v7324, %v7328
      %v7331 = vshrl.u32 %v7132, 16
      %v7333 = vrot.slane %v7331, 4
      %v7334 = vshll.u32 %v7132, 16
      %v7336 = vrot.slane %v7334, 5
      %v7337 = vor.u32 %v7333, %v7336
      %v7338 = vrot.slane %v7337, 4
      %v7340 = vshll.u32 %v7133, 16
      %v7342 = vrot.slane %v7340, 5
      %v7343 = vsel %vm1988, %v7338, %v7342
      %v7344 = vshrl.u32 %v7133, 16
      %v7346 = vrot.slane %v7344, 4
      %v7347 = vor.u32 %v7346, %v7342
      %v7348 = vrot.slane %v7347, 4
      %v7350 = vshll.u32 %v7134, 16
      %v7352 = vrot.slane %v7350, 5
      %v7353 = vsel %vm1988, %v7348, %v7352
      %v7355 = vshrl.u32 %v7135, 16
      %v7357 = vrot.slane %v7355, 4
      %v7358 = vshll.u32 %v7135, 16
      %v7360 = vrot.slane %v7358, 5
      %v7361 = vor.u32 %v7357, %v7360
      %v7362 = vrot.slane %v7361, 4
      %v7364 = vshll.u32 %v7136, 16
      %v7366 = vrot.slane %v7364, 5
      %v7367 = vsel %vm1988, %v7362, %v7366
      %v7368 = vshrl.u32 %v7136, 16
      %v7370 = vrot.slane %v7368, 4
      %v7371 = vor.u32 %v7370, %v7366
      %v7372 = vrot.slane %v7371, 4
      %v7374 = vshll.u32 %v7137, 16
      %v7376 = vrot.slane %v7374, 5
      %v7377 = vsel %vm1988, %v7372, %v7376
      %v7378 = vunpack.c.l.b16 %v7151
      %v7379 = vunpack.c.l.b16 %v7161
      %v7380 = vunpack.c.l.b16 %v7175
      %v7381 = vunpack.c.l.b16 %v7185
      %v7382 = vunpack.c.l.b16 %v7199
      %v7383 = vunpack.c.l.b16 %v7209
      %v7384 = vunpack.c.l.b16 %v7223
      %v7385 = vunpack.c.l.b16 %v7233
      %v7386 = vunpack.c.l.b16 %v7247
      %v7387 = vunpack.c.l.b16 %v7257
      %v7388 = vunpack.c.l.b16 %v7271
      %v7389 = vunpack.c.l.b16 %v7281
      %v7390 = vunpack.c.l.b16 %v7295
      %v7391 = vunpack.c.l.b16 %v7305
      %v7392 = vunpack.c.l.b16 %v7319
      %v7393 = vunpack.c.l.b16 %v7329
      %v7394 = vpack.c.b16 %v7379, %v7378
      %v7395 = vpack.c.b16 %v7381, %v7380
      %v7396 = vpack.c.b16 %v7383, %v7382
      %v7397 = vpack.c.b16 %v7385, %v7384
      %v7398 = vpack.c.b16 %v7387, %v7386
      %v7399 = vpack.c.b16 %v7389, %v7388
      %v7400 = vpack.c.b16 %v7391, %v7390
      %v7401 = vpack.c.b16 %v7393, %v7392
      %v7410 = vunpack.c.l.b16 %v7343
      %v7411 = vunpack.c.l.b16 %v7353
      %v7412 = vpack.c.b16 %v7411, %v7410
      %v7414 = vunpack.c.l.b16 %v7367
      %v7415 = vunpack.c.l.b16 %v7377
      %v7416 = vpack.c.b16 %v7415, %v7414
      %v7418 = vld [vmem:[%s5654] sm:$0xf]
      %v7419 = vld [vmem:[%s5654 + $0x4] sm:$0xf]
      %v7420 = vld [vmem:[%s5654 + $0x8] sm:$0xf]
      %v7421 = vld [vmem:[%s5654 + $0xc] sm:$0xf]
      %v7422 = vld [vmem:[%s5654 + $0x10] sm:$0xf]
      %v7423 = vld [vmem:[%s5654 + $0x14] sm:$0xf]
      %v7424 = vld [vmem:[%s5654 + $0x18] sm:$0xf]
      %v7425 = vld [vmem:[%s5654 + $0x1c] sm:$0xf]
      %v7426 = vld [vmem:[%s5654 + $0x20] sm:$0xf]
      %v7427 = vld [vmem:[%s5654 + $0x24] sm:$0xf]
      %v7428 = vld [vmem:[%s5654 + $0x28] sm:$0xf]
      %v7429 = vld [vmem:[%s5654 + $0x2c] sm:$0xf]
      %v7430 = vld [vmem:[%s5654 + $0x30] sm:$0xf]
      %v7431 = vld [vmem:[%s5654 + $0x34] sm:$0xf]
      %v7432 = vld [vmem:[%s5654 + $0x38] sm:$0xf]
      %v7433 = vld [vmem:[%s5654 + $0x3c] sm:$0xf]
      %v7434 = vld [vmem:[%s5654 + $0x40] sm:$0xf]
      %v7435 = vld [vmem:[%s5654 + $0x44] sm:$0xf]
      %v7436 = vld [vmem:[%s5654 + $0x48] sm:$0xf]
      %v7437 = vld [vmem:[%s5654 + $0x4c] sm:$0xf]
      %v7438 = vld [vmem:[%s5654 + $0x50] sm:$0xf]
      %v7439 = vld [vmem:[%s5654 + $0x54] sm:$0xf]
      %v7440 = vld [vmem:[%s5654 + $0x58] sm:$0xf]
      %v7441 = vld [vmem:[%s5654 + $0x5c] sm:$0xf]
      %v7442 = vld [vmem:[%s5654 + $0x60] sm:$0xf]
      %v7443 = vld [vmem:[%s5654 + $0x64] sm:$0xf]
      %v7444 = vld [vmem:[%s5654 + $0x68] sm:$0xf]
      %v7445 = vld [vmem:[%s5654 + $0x6c] sm:$0xf]
      %v7446 = vld [vmem:[%s5654 + $0x70] sm:$0xf]
      %v7447 = vld [vmem:[%s5654 + $0x74] sm:$0xf]
      %v7448 = vld [vmem:[%s5654 + $0x78] sm:$0xf]
      %v7449 = vld [vmem:[%s5654 + $0x7c] sm:$0xf]
      %v7450 = vld [vmem:[%s5654 + $0x80] sm:$0xf]
      %v7451 = vld [vmem:[%s5654 + $0x84] sm:$0xf]
      %v7452 = vld [vmem:[%s5654 + $0x88] sm:$0xf]
      %v7453 = vld [vmem:[%s5654 + $0x8c] sm:$0xf]
      %v7454 = vld [vmem:[%s5654 + $0x90] sm:$0xf]
      %v7455 = vld [vmem:[%s5654 + $0x94] sm:$0xf]
      %v7456 = vld [vmem:[%s5654 + $0x98] sm:$0xf]
      %v7457 = vld [vmem:[%s5654 + $0x9c] sm:$0xf]
      %v7458 = vld [vmem:[%s5654 + $0xa0] sm:$0xf]
      %v7459 = vld [vmem:[%s5654 + $0xa4] sm:$0xf]
      %v7460 = vld [vmem:[%s5654 + $0xa8] sm:$0xf]
      %v7461 = vld [vmem:[%s5654 + $0xac] sm:$0xf]
      %v7462 = vld [vmem:[%s5654 + $0xb0] sm:$0xf]
      %v7463 = vld [vmem:[%s5654 + $0xb4] sm:$0xf]
      %v7464 = vld [vmem:[%s5654 + $0xb8] sm:$0xf]
      %v7465 = vld [vmem:[%s5654 + $0xbc] sm:$0xf]
      %v7514 = vunpack.c.l.b16 %v7418
      %v7515 = vunpack.c.l.b16 %v7419
      %v7516 = vunpack.c.l.b16 %v7420
      %v7517 = vunpack.c.l.b16 %v7421
      %v7518 = vunpack.c.l.b16 %v7422
      %v7519 = vunpack.c.l.b16 %v7423
      %v7520 = vunpack.c.l.b16 %v7424
      %v7521 = vunpack.c.l.b16 %v7425
      %v7522 = vunpack.c.l.b16 %v7426
      %v7523 = vunpack.c.l.b16 %v7427
      %v7524 = vunpack.c.l.b16 %v7428
      %v7525 = vunpack.c.l.b16 %v7429
      %v7526 = vunpack.c.l.b16 %v7430
      %v7527 = vunpack.c.l.b16 %v7431
      %v7528 = vunpack.c.l.b16 %v7432
      %v7529 = vunpack.c.l.b16 %v7433
      %v7530 = vunpack.c.l.b16 %v7434
      %v7531 = vunpack.c.l.b16 %v7435
      %v7532 = vunpack.c.l.b16 %v7436
      %v7533 = vunpack.c.l.b16 %v7437
      %v7534 = vunpack.c.l.b16 %v7438
      %v7535 = vunpack.c.l.b16 %v7439
      %v7536 = vunpack.c.l.b16 %v7440
      %v7537 = vunpack.c.l.b16 %v7441
      %v7538 = vunpack.c.l.b16 %v7442
      %v7539 = vunpack.c.l.b16 %v7443
      %v7540 = vunpack.c.l.b16 %v7444
      %v7541 = vunpack.c.l.b16 %v7445
      %v7542 = vunpack.c.l.b16 %v7446
      %v7543 = vunpack.c.l.b16 %v7447
      %v7544 = vunpack.c.l.b16 %v7448
      %v7545 = vunpack.c.l.b16 %v7449
      %v7546 = vunpack.c.l.b16 %v7450
      %v7547 = vunpack.c.l.b16 %v7451
      %v7548 = vunpack.c.l.b16 %v7452
      %v7549 = vunpack.c.l.b16 %v7453
      %v7550 = vunpack.c.l.b16 %v7454
      %v7551 = vunpack.c.l.b16 %v7455
      %v7552 = vunpack.c.l.b16 %v7456
      %v7553 = vunpack.c.l.b16 %v7457
      %v7554 = vunpack.c.l.b16 %v7458
      %v7555 = vunpack.c.l.b16 %v7459
      %v7556 = vunpack.c.l.b16 %v7460
      %v7557 = vunpack.c.l.b16 %v7461
      %v7558 = vunpack.c.l.b16 %v7462
      %v7559 = vunpack.c.l.b16 %v7463
      %v7560 = vunpack.c.l.b16 %v7464
      %v7561 = vunpack.c.l.b16 %v7465
      %v7562 = vpack.c.b16 %v7515, %v7514
      %v7563 = vpack.c.b16 %v7517, %v7516
      %v7564 = vpack.c.b16 %v7519, %v7518
      %v7565 = vpack.c.b16 %v7521, %v7520
      %v7566 = vpack.c.b16 %v7523, %v7522
      %v7567 = vpack.c.b16 %v7525, %v7524
      %v7568 = vpack.c.b16 %v7527, %v7526
      %v7569 = vpack.c.b16 %v7529, %v7528
      %v7570 = vpack.c.b16 %v7531, %v7530
      %v7571 = vpack.c.b16 %v7533, %v7532
      %v7572 = vpack.c.b16 %v7535, %v7534
      %v7573 = vpack.c.b16 %v7537, %v7536
      %v7574 = vpack.c.b16 %v7539, %v7538
      %v7575 = vpack.c.b16 %v7541, %v7540
      %v7576 = vpack.c.b16 %v7543, %v7542
      %v7577 = vpack.c.b16 %v7545, %v7544
      %v7578 = vpack.c.b16 %v7547, %v7546
      %v7579 = vpack.c.b16 %v7549, %v7548
      %v7580 = vpack.c.b16 %v7551, %v7550
      %v7581 = vpack.c.b16 %v7553, %v7552
      %v7582 = vpack.c.b16 %v7555, %v7554
      %v7583 = vpack.c.b16 %v7557, %v7556
      %v7584 = vpack.c.b16 %v7559, %v7558
      %v7585 = vpack.c.b16 %v7561, %v7560
      %7610 = vmatpush.bf16.msra.mxu0 %v7569
      %7611 = vmatpush.bf16.msra.mxu0 %v7568
      %7612 = vmatpush.bf16.msra.mxu0 %v7567
      %7613 = vmatpush.bf16.msra.mxu0 %v7566
      %7614 = vmatpush.bf16.msra.mxu0 %v7565
      %7615 = vmatpush.bf16.msra.mxu0 %v7564
      %7616 = vmatpush.bf16.msra.mxu0 %v7563
      %7617 = vmatpush.bf16.msra.mxu0 %v7562
      %7618 = vmatmul.bf16.gmra.mxu0 %v7394
      %v7619 = vpop.f32.mrf.mxu0
      %v7620 = vadd.f32 0.0, %v7619
      %v7621 = vpop.f32.mrf.mxu0
      %v7622 = vadd.f32 0.0, %v7621
      %7623 = vmatmul.bf16.gmra.mxu0 %v7395
      %v7624 = vpop.f32.mrf.mxu0
      %v7625 = vadd.f32 0.0, %v7624
      %v7626 = vpop.f32.mrf.mxu0
      %v7627 = vadd.f32 0.0, %v7626
      %7628 = vmatmul.bf16.gmra.mxu0 %v7396
      %v7629 = vpop.f32.mrf.mxu0
      %v7630 = vadd.f32 0.0, %v7629
      %v7631 = vpop.f32.mrf.mxu0
      %v7632 = vadd.f32 0.0, %v7631
      %7633 = vmatmul.bf16.gmra.mxu0 %v7397
      %v7634 = vpop.f32.mrf.mxu0
      %v7635 = vadd.f32 0.0, %v7634
      %v7636 = vpop.f32.mrf.mxu0
      %v7637 = vadd.f32 0.0, %v7636
      %7638 = vmatmul.bf16.gmra.mxu0 %v7398
      %v7639 = vpop.f32.mrf.mxu0
      %v7640 = vadd.f32 0.0, %v7639
      %v7641 = vpop.f32.mrf.mxu0
      %v7642 = vadd.f32 0.0, %v7641
      %7643 = vmatmul.bf16.gmra.mxu0 %v7399
      %v7644 = vpop.f32.mrf.mxu0
      %v7645 = vadd.f32 0.0, %v7644
      %v7646 = vpop.f32.mrf.mxu0
      %v7647 = vadd.f32 0.0, %v7646
      %7648 = vmatmul.bf16.gmra.mxu0 %v7400
      %v7649 = vpop.f32.mrf.mxu0
      %v7650 = vadd.f32 0.0, %v7649
      %v7651 = vpop.f32.mrf.mxu0
      %v7652 = vadd.f32 0.0, %v7651
      %7653 = vmatmul.bf16.gmra.mxu0 %v7401
      %v7654 = vpop.f32.mrf.mxu0
      %v7655 = vadd.f32 0.0, %v7654
      %v7656 = vpop.f32.mrf.mxu0
      %v7657 = vadd.f32 0.0, %v7656
      %7658 = vdwg.mxu0
      %7659 = vmatpush.bf16.msra.mxu0 %v7577
      %7660 = vmatpush.bf16.msra.mxu0 %v7576
      %7661 = vmatpush.bf16.msra.mxu0 %v7575
      %7662 = vmatpush.bf16.msra.mxu0 %v7574
      %7663 = vmatpush.bf16.msra.mxu0 %v7573
      %7664 = vmatpush.bf16.msra.mxu0 %v7572
      %7665 = vmatpush.bf16.msra.mxu0 %v7571
      %7666 = vmatpush.bf16.msra.mxu0 %v7570
      %7667 = vmatmul.bf16.gmra.mxu0 %v7395
      %v7668 = vpop.f32.mrf.mxu0
      %v7669 = vadd.f32 %v7620, %v7668
      %v7670 = vpop.f32.mrf.mxu0
      %v7671 = vadd.f32 %v7622, %v7670
      %7672 = vmatmul.bf16.gmra.mxu0 %v7396
      %v7673 = vpop.f32.mrf.mxu0
      %v7674 = vadd.f32 %v7625, %v7673
      %v7675 = vpop.f32.mrf.mxu0
      %v7676 = vadd.f32 %v7627, %v7675
      %7677 = vmatmul.bf16.gmra.mxu0 %v7397
      %v7678 = vpop.f32.mrf.mxu0
      %v7679 = vadd.f32 %v7630, %v7678
      %v7680 = vpop.f32.mrf.mxu0
      %v7681 = vadd.f32 %v7632, %v7680
      %7682 = vmatmul.bf16.gmra.mxu0 %v7398
      %v7683 = vpop.f32.mrf.mxu0
      %v7684 = vadd.f32 %v7635, %v7683
      %v7685 = vpop.f32.mrf.mxu0
      %v7686 = vadd.f32 %v7637, %v7685
      %7687 = vmatmul.bf16.gmra.mxu0 %v7399
      %v7688 = vpop.f32.mrf.mxu0
      %v7689 = vadd.f32 %v7640, %v7688
      %v7690 = vpop.f32.mrf.mxu0
      %v7691 = vadd.f32 %v7642, %v7690
      %7692 = vmatmul.bf16.gmra.mxu0 %v7400
      %v7693 = vpop.f32.mrf.mxu0
      %v7694 = vadd.f32 %v7645, %v7693
      %v7695 = vpop.f32.mrf.mxu0
      %v7696 = vadd.f32 %v7647, %v7695
      %7697 = vmatmul.bf16.gmra.mxu0 %v7401
      %v7698 = vpop.f32.mrf.mxu0
      %v7699 = vadd.f32 %v7650, %v7698
      %v7700 = vpop.f32.mrf.mxu0
      %v7701 = vadd.f32 %v7652, %v7700
      %7702 = vmatmul.bf16.gmra.mxu0 %v7412
      %v7703 = vpop.f32.mrf.mxu0
      %v7704 = vadd.f32 %v7655, %v7703
      %v7705 = vpop.f32.mrf.mxu0
      %v7706 = vadd.f32 %v7657, %v7705
      %7707 = vdwg.mxu0
      %7708 = vmatpush.bf16.msra.mxu0 %v7585
      %7709 = vmatpush.bf16.msra.mxu0 %v7584
      %7710 = vmatpush.bf16.msra.mxu0 %v7583
      %7711 = vmatpush.bf16.msra.mxu0 %v7582
      %7712 = vmatpush.bf16.msra.mxu0 %v7581
      %7713 = vmatpush.bf16.msra.mxu0 %v7580
      %7714 = vmatpush.bf16.msra.mxu0 %v7579
      %7715 = vmatpush.bf16.msra.mxu0 %v7578
      %7716 = vmatmul.bf16.gmra.mxu0 %v7396
      %v7717 = vpop.f32.mrf.mxu0
      %v7718 = vadd.f32 %v7669, %v7717
      %v7719 = vpop.f32.mrf.mxu0
      %v7720 = vadd.f32 %v7671, %v7719
      %7721 = vmatmul.bf16.gmra.mxu0 %v7397
      %v7722 = vpop.f32.mrf.mxu0
      %v7723 = vadd.f32 %v7674, %v7722
      %v7724 = vpop.f32.mrf.mxu0
      %v7725 = vadd.f32 %v7676, %v7724
      %7726 = vmatmul.bf16.gmra.mxu0 %v7398
      %v7727 = vpop.f32.mrf.mxu0
      %v7728 = vadd.f32 %v7679, %v7727
      %v7729 = vpop.f32.mrf.mxu0
      %v7730 = vadd.f32 %v7681, %v7729
      %7731 = vmatmul.bf16.gmra.mxu0 %v7399
      %v7732 = vpop.f32.mrf.mxu0
      %v7733 = vadd.f32 %v7684, %v7732
      %v7734 = vpop.f32.mrf.mxu0
      %v7735 = vadd.f32 %v7686, %v7734
      %7736 = vmatmul.bf16.gmra.mxu0 %v7400
      %v7737 = vpop.f32.mrf.mxu0
      %v7738 = vadd.f32 %v7689, %v7737
      %v7739 = vpop.f32.mrf.mxu0
      %v7740 = vadd.f32 %v7691, %v7739
      %7741 = vmatmul.bf16.gmra.mxu0 %v7401
      %v7742 = vpop.f32.mrf.mxu0
      %v7743 = vadd.f32 %v7694, %v7742
      %v7744 = vpop.f32.mrf.mxu0
      %v7745 = vadd.f32 %v7696, %v7744
      %7746 = vmatmul.bf16.gmra.mxu0 %v7412
      %v7747 = vpop.f32.mrf.mxu0
      %v7748 = vadd.f32 %v7699, %v7747
      %v7749 = vpop.f32.mrf.mxu0
      %v7750 = vadd.f32 %v7701, %v7749
      %7751 = vmatmul.bf16.gmra.mxu0 %v7416
      %v7752 = vpop.f32.mrf.mxu0
      %v7753 = vadd.f32 %v7704, %v7752
      %v7754 = vpop.f32.mrf.mxu0
      %v7755 = vadd.f32 %v7706, %v7754
      %7756 = vdwg.mxu0
      %v7757 = vadd.f32 %v7092, %v7718
      %v7758 = vadd.f32 %v7093, %v7720
      %v7759 = vadd.f32 %v7094, %v7723
      %v7760 = vadd.f32 %v7095, %v7725
      %v7761 = vadd.f32 %v7096, %v7728
      %v7762 = vadd.f32 %v7097, %v7730
      %v7763 = vadd.f32 %v7098, %v7733
      %v7764 = vadd.f32 %v7099, %v7735
      %v7765 = vadd.f32 %v7100, %v7738
      %v7766 = vadd.f32 %v7101, %v7740
      %v7767 = vadd.f32 %v7102, %v7743
      %v7768 = vadd.f32 %v7103, %v7745
      %v7769 = vadd.f32 %v7104, %v7748
      %v7770 = vadd.f32 %v7105, %v7750
      %v7771 = vadd.f32 %v7106, %v7753
      %v7772 = vadd.f32 %v7107, %v7755
      %v7773 = vmax.f32 %v7757, 0.0
      %v7774 = vmax.f32 %v7758, 0.0
      %v7775 = vmax.f32 %v7759, 0.0
      %v7776 = vmax.f32 %v7760, 0.0
      %v7777 = vmax.f32 %v7761, 0.0
      %v7778 = vmax.f32 %v7762, 0.0
      %v7779 = vmax.f32 %v7763, 0.0
      %v7780 = vmax.f32 %v7764, 0.0
      %v7781 = vmax.f32 %v7765, 0.0
      %v7782 = vmax.f32 %v7766, 0.0
      %v7783 = vmax.f32 %v7767, 0.0
      %v7784 = vmax.f32 %v7768, 0.0
      %v7785 = vmax.f32 %v7769, 0.0
      %v7786 = vmax.f32 %v7770, 0.0
      %v7787 = vmax.f32 %v7771, 0.0
      %v7788 = vmax.f32 %v7772, 0.0
      %s7789 = scalar_lea.vmem [#allocation4], 432
      %7790 = vst.msk [vmem:[%s7789 + $0x10] sm:$0xff] %vm489, %v7773
      %7791 = vst.msk [vmem:[%s7789 + $0x18] sm:$0xff] %vm489, %v7774
      %7792 = vst.msk [vmem:[%s7789 + $0x40] sm:$0xff] %vm489, %v7775
      %7793 = vst.msk [vmem:[%s7789 + $0x48] sm:$0xff] %vm489, %v7776
      %7794 = vst.msk [vmem:[%s7789 + $0x70] sm:$0xff] %vm489, %v7777
      %7795 = vst.msk [vmem:[%s7789 + $0x78] sm:$0xff] %vm489, %v7778
      %7796 = vst.msk [vmem:[%s7789 + $0xa0] sm:$0xff] %vm489, %v7779
      %7797 = vst.msk [vmem:[%s7789 + $0xa8] sm:$0xff] %vm489, %v7780
      %7798 = vst.msk [vmem:[%s7789 + $0xd0] sm:$0xff] %vm489, %v7781
      %7799 = vst.msk [vmem:[%s7789 + $0xd8] sm:$0xff] %vm489, %v7782
      %7800 = vst.msk [vmem:[%s7789 + $0x100] sm:$0xff] %vm489, %v7783
      %7801 = vst.msk [vmem:[%s7789 + $0x108] sm:$0xff] %vm489, %v7784
      %7802 = vst.msk [vmem:[%s7789 + $0x130] sm:$0xff] %vm489, %v7785
      %7803 = vst.msk [vmem:[%s7789 + $0x138] sm:$0xff] %vm489, %v7786
      %7804 = vst.msk [vmem:[%s7789 + $0x160] sm:$0xff] %vm489, %v7787
      %7805 = vst.msk [vmem:[%s7789 + $0x168] sm:$0xff] %vm489, %v7788
      %v7806 = vld [vmem:[#allocation4 + $0xf] sm:$0xff]
      %v7807 = vld [vmem:[#allocation4 + $0x17] sm:$0xff]
      %v7808 = vld [vmem:[#allocation4 + $0x3f] sm:$0xff]
      %v7809 = vld [vmem:[#allocation4 + $0x47] sm:$0xff]
      %v7810 = vld [vmem:[#allocation4 + $0x6f] sm:$0xff]
      %v7811 = vld [vmem:[#allocation4 + $0x77] sm:$0xff]
      %v7812 = vld [vmem:[#allocation4 + $0x9f] sm:$0xff]
      %v7813 = vld [vmem:[#allocation4 + $0xa7] sm:$0xff]
      %v7814 = vld [vmem:[#allocation4 + $0xcf] sm:$0xff]
      %v7815 = vld [vmem:[#allocation4 + $0xd7] sm:$0xff]
      %v7816 = vld [vmem:[#allocation4 + $0xff] sm:$0xff]
      %v7817 = vld [vmem:[#allocation4 + $0x107] sm:$0xff]
      %v7818 = vld [vmem:[#allocation4 + $0x12f] sm:$0xff]
      %v7819 = vld [vmem:[#allocation4 + $0x137] sm:$0xff]
      %v7820 = vld [vmem:[#allocation4 + $0x15f] sm:$0xff]
      %v7821 = vld [vmem:[#allocation4 + $0x167] sm:$0xff]
      %v7822 = vld [vmem:[#allocation4 + $0x18f] sm:$0xff]
      %v7823 = vld [vmem:[#allocation4 + $0x197] sm:$0xff]
      %v7824 = vld [vmem:[#allocation4 + $0x1bf] sm:$0xff]
      %v7825 = vld [vmem:[#allocation4 + $0x1c7] sm:$0xff]
      %v7826 = vld [vmem:[#allocation4 + $0x1ef] sm:$0xff]
      %v7827 = vld [vmem:[#allocation4 + $0x1f7] sm:$0xff]
      %v7828 = vld [vmem:[#allocation4 + $0x21f] sm:$0xff]
      %v7829 = vld [vmem:[#allocation4 + $0x227] sm:$0xff]
      %v7830 = vld [vmem:[#allocation4 + $0x24f] sm:$0xff]
      %v7831 = vld [vmem:[#allocation4 + $0x257] sm:$0xff]
      %v7832 = vld [vmem:[#allocation4 + $0x27f] sm:$0xff]
      %v7833 = vld [vmem:[#allocation4 + $0x287] sm:$0xff]
      %v7834 = vld [vmem:[#allocation4 + $0x2af] sm:$0xff]
      %v7835 = vld [vmem:[#allocation4 + $0x2b7] sm:$0xff]
      %v7836 = vld [vmem:[#allocation4 + $0x2df] sm:$0xff]
      %v7837 = vld [vmem:[#allocation4 + $0x2e7] sm:$0xff]
      %v7838 = vld [vmem:[#allocation4 + $0x30f] sm:$0xff]
      %v7839 = vld [vmem:[#allocation4 + $0x317] sm:$0xff]
      %v7840 = vld [vmem:[#allocation4 + $0x33f] sm:$0xff]
      %v7841 = vld [vmem:[#allocation4 + $0x347] sm:$0xff]
      %v7842 = vld [vmem:[%s7] sm:$0x1]
      %v7844 = vperm.slane %v7842, 0
      %v7846 = vmul.f32 %v7806, %v7844
      %v7847 = vmul.f32 %v7807, %v7844
      %v7848 = vmul.f32 %v7808, %v7844
      %v7849 = vmul.f32 %v7809, %v7844
      %v7850 = vmul.f32 %v7810, %v7844
      %v7851 = vmul.f32 %v7811, %v7844
      %v7852 = vmul.f32 %v7812, %v7844
      %v7853 = vmul.f32 %v7813, %v7844
      %v7854 = vmul.f32 %v7814, %v7844
      %v7855 = vmul.f32 %v7815, %v7844
      %v7856 = vmul.f32 %v7816, %v7844
      %v7857 = vmul.f32 %v7817, %v7844
      %v7858 = vmul.f32 %v7818, %v7844
      %v7859 = vmul.f32 %v7819, %v7844
      %v7860 = vmul.f32 %v7820, %v7844
      %v7861 = vmul.f32 %v7821, %v7844
      %v7862 = vmul.f32 %v7822, %v7844
      %v7863 = vmul.f32 %v7823, %v7844
      %v7864 = vmul.f32 %v7824, %v7844
      %v7865 = vmul.f32 %v7825, %v7844
      %v7866 = vmul.f32 %v7826, %v7844
      %v7867 = vmul.f32 %v7827, %v7844
      %v7868 = vmul.f32 %v7828, %v7844
      %v7869 = vmul.f32 %v7829, %v7844
      %v7870 = vmul.f32 %v7830, %v7844
      %v7871 = vmul.f32 %v7831, %v7844
      %v7872 = vmul.f32 %v7832, %v7844
      %v7873 = vmul.f32 %v7833, %v7844
      %v7874 = vmul.f32 %v7834, %v7844
      %v7875 = vmul.f32 %v7835, %v7844
      %v7876 = vmul.f32 %v7836, %v7844
      %v7877 = vmul.f32 %v7837, %v7844
      %v7878 = vsel %vm489, %v7846, 0.0
      %7879 = vadd.xlane.f32.xlu0 %v7878
      %v7880 = vpop.xlane.xlu0 %7879
      %v7881 = vsel %vm489, %v7847, 0.0
      %7882 = vadd.xlane.f32.xlu0 %v7881
      %v7883 = vpop.xlane.xlu0 %7882
      %v7884 = vsel %vm489, %v7848, 0.0
      %7885 = vadd.xlane.f32.xlu0 %v7884
      %v7886 = vpop.xlane.xlu0 %7885
      %v7887 = vsel %vm489, %v7849, 0.0
      %7888 = vadd.xlane.f32.xlu0 %v7887
      %v7889 = vpop.xlane.xlu0 %7888
      %v7890 = vsel %vm489, %v7850, 0.0
      %7891 = vadd.xlane.f32.xlu0 %v7890
      %v7892 = vpop.xlane.xlu0 %7891
      %v7893 = vsel %vm489, %v7851, 0.0
      %7894 = vadd.xlane.f32.xlu0 %v7893
      %v7895 = vpop.xlane.xlu0 %7894
      %v7896 = vsel %vm489, %v7852, 0.0
      %7897 = vadd.xlane.f32.xlu0 %v7896
      %v7898 = vpop.xlane.xlu0 %7897
      %v7899 = vsel %vm489, %v7853, 0.0
      %7900 = vadd.xlane.f32.xlu0 %v7899
      %v7901 = vpop.xlane.xlu0 %7900
      %v7902 = vsel %vm489, %v7854, 0.0
      %7903 = vadd.xlane.f32.xlu0 %v7902
      %v7904 = vpop.xlane.xlu0 %7903
      %v7905 = vsel %vm489, %v7855, 0.0
      %7906 = vadd.xlane.f32.xlu0 %v7905
      %v7907 = vpop.xlane.xlu0 %7906
      %v7908 = vsel %vm489, %v7856, 0.0
      %7909 = vadd.xlane.f32.xlu0 %v7908
      %v7910 = vpop.xlane.xlu0 %7909
      %v7911 = vsel %vm489, %v7857, 0.0
      %7912 = vadd.xlane.f32.xlu0 %v7911
      %v7913 = vpop.xlane.xlu0 %7912
      %v7914 = vsel %vm489, %v7858, 0.0
      %7915 = vadd.xlane.f32.xlu0 %v7914
      %v7916 = vpop.xlane.xlu0 %7915
      %v7917 = vsel %vm489, %v7859, 0.0
      %7918 = vadd.xlane.f32.xlu0 %v7917
      %v7919 = vpop.xlane.xlu0 %7918
      %v7920 = vsel %vm489, %v7860, 0.0
      %7921 = vadd.xlane.f32.xlu0 %v7920
      %v7922 = vpop.xlane.xlu0 %7921
      %v7923 = vsel %vm489, %v7861, 0.0
      %7924 = vadd.xlane.f32.xlu0 %v7923
      %v7925 = vpop.xlane.xlu0 %7924
      %v7926 = vsel %vm489, %v7862, 0.0
      %7927 = vadd.xlane.f32.xlu0 %v7926
      %v7928 = vpop.xlane.xlu0 %7927
      %v7929 = vsel %vm489, %v7863, 0.0
      %7930 = vadd.xlane.f32.xlu0 %v7929
      %v7931 = vpop.xlane.xlu0 %7930
      %v7932 = vsel %vm489, %v7864, 0.0
      %7933 = vadd.xlane.f32.xlu0 %v7932
      %v7934 = vpop.xlane.xlu0 %7933
      %v7935 = vsel %vm489, %v7865, 0.0
      %7936 = vadd.xlane.f32.xlu0 %v7935
      %v7937 = vpop.xlane.xlu0 %7936
      %v7938 = vsel %vm489, %v7866, 0.0
      %7939 = vadd.xlane.f32.xlu0 %v7938
      %v7940 = vpop.xlane.xlu0 %7939
      %v7941 = vsel %vm489, %v7867, 0.0
      %7942 = vadd.xlane.f32.xlu0 %v7941
      %v7943 = vpop.xlane.xlu0 %7942
      %v7944 = vsel %vm489, %v7868, 0.0
      %7945 = vadd.xlane.f32.xlu0 %v7944
      %v7946 = vpop.xlane.xlu0 %7945
      %v7947 = vsel %vm489, %v7869, 0.0
      %7948 = vadd.xlane.f32.xlu0 %v7947
      %v7949 = vpop.xlane.xlu0 %7948
      %v7950 = vsel %vm489, %v7870, 0.0
      %7951 = vadd.xlane.f32.xlu0 %v7950
      %v7952 = vpop.xlane.xlu0 %7951
      %v7953 = vsel %vm489, %v7871, 0.0
      %7954 = vadd.xlane.f32.xlu0 %v7953
      %v7955 = vpop.xlane.xlu0 %7954
      %v7956 = vsel %vm489, %v7872, 0.0
      %7957 = vadd.xlane.f32.xlu0 %v7956
      %v7958 = vpop.xlane.xlu0 %7957
      %v7959 = vsel %vm489, %v7873, 0.0
      %7960 = vadd.xlane.f32.xlu0 %v7959
      %v7961 = vpop.xlane.xlu0 %7960
      %v7962 = vsel %vm489, %v7874, 0.0
      %7963 = vadd.xlane.f32.xlu0 %v7962
      %v7964 = vpop.xlane.xlu0 %7963
      %v7965 = vsel %vm489, %v7875, 0.0
      %7966 = vadd.xlane.f32.xlu0 %v7965
      %v7967 = vpop.xlane.xlu0 %7966
      %v7968 = vsel %vm489, %v7876, 0.0
      %7969 = vadd.xlane.f32.xlu0 %v7968
      %v7970 = vpop.xlane.xlu0 %7969
      %v7971 = vsel %vm489, %v7877, 0.0
      %7972 = vadd.xlane.f32.xlu0 %v7971
      %v7973 = vpop.xlane.xlu0 %7972
      %v7974 = vadd.f32 %v7880, 0.0
      %v7975 = vadd.f32 %v7883, 0.0
      %v7976 = vadd.f32 %v7886, 0.0
      %v7977 = vadd.f32 %v7889, 0.0
      %v7978 = vadd.f32 %v7892, 0.0
      %v7979 = vadd.f32 %v7895, 0.0
      %v7980 = vadd.f32 %v7898, 0.0
      %v7981 = vadd.f32 %v7901, 0.0
      %v7982 = vadd.f32 %v7904, 0.0
      %v7983 = vadd.f32 %v7907, 0.0
      %v7984 = vadd.f32 %v7910, 0.0
      %v7985 = vadd.f32 %v7913, 0.0
      %v7986 = vadd.f32 %v7916, 0.0
      %v7987 = vadd.f32 %v7919, 0.0
      %v7988 = vadd.f32 %v7922, 0.0
      %v7989 = vadd.f32 %v7925, 0.0
      %v7990 = vadd.f32 %v7928, 0.0
      %v7991 = vadd.f32 %v7931, 0.0
      %v7992 = vadd.f32 %v7934, 0.0
      %v7993 = vadd.f32 %v7937, 0.0
      %v7994 = vadd.f32 %v7940, 0.0
      %v7995 = vadd.f32 %v7943, 0.0
      %v7996 = vadd.f32 %v7946, 0.0
      %v7997 = vadd.f32 %v7949, 0.0
      %v7998 = vadd.f32 %v7952, 0.0
      %v7999 = vadd.f32 %v7955, 0.0
      %v8000 = vadd.f32 %v7958, 0.0
      %v8001 = vadd.f32 %v7961, 0.0
      %v8002 = vadd.f32 %v7964, 0.0
      %v8003 = vadd.f32 %v7967, 0.0
      %v8004 = vadd.f32 %v7970, 0.0
      %v8005 = vadd.f32 %v7973, 0.0
      %s8006 = scalar_lea.vmem %s7, 3
      %v8007 = vld [vmem:[%s8006] sm:$0x1]
      %v8009 = vperm.slane %v8007, 0
      %v8011 = vmul.f32 %v7808, %v8009
      %v8012 = vmul.f32 %v7809, %v8009
      %v8013 = vmul.f32 %v7810, %v8009
      %v8014 = vmul.f32 %v7811, %v8009
      %v8015 = vmul.f32 %v7812, %v8009
      %v8016 = vmul.f32 %v7813, %v8009
      %v8017 = vmul.f32 %v7814, %v8009
      %v8018 = vmul.f32 %v7815, %v8009
      %v8019 = vmul.f32 %v7816, %v8009
      %v8020 = vmul.f32 %v7817, %v8009
      %v8021 = vmul.f32 %v7818, %v8009
      %v8022 = vmul.f32 %v7819, %v8009
      %v8023 = vmul.f32 %v7820, %v8009
      %v8024 = vmul.f32 %v7821, %v8009
      %v8025 = vmul.f32 %v7822, %v8009
      %v8026 = vmul.f32 %v7823, %v8009
      %v8027 = vmul.f32 %v7824, %v8009
      %v8028 = vmul.f32 %v7825, %v8009
      %v8029 = vmul.f32 %v7826, %v8009
      %v8030 = vmul.f32 %v7827, %v8009
      %v8031 = vmul.f32 %v7828, %v8009
      %v8032 = vmul.f32 %v7829, %v8009
      %v8033 = vmul.f32 %v7830, %v8009
      %v8034 = vmul.f32 %v7831, %v8009
      %v8035 = vmul.f32 %v7832, %v8009
      %v8036 = vmul.f32 %v7833, %v8009
      %v8037 = vmul.f32 %v7834, %v8009
      %v8038 = vmul.f32 %v7835, %v8009
      %v8039 = vmul.f32 %v7836, %v8009
      %v8040 = vmul.f32 %v7837, %v8009
      %v8041 = vmul.f32 %v7838, %v8009
      %v8042 = vmul.f32 %v7839, %v8009
      %v8043 = vsel %vm489, %v8011, 0.0
      %8044 = vadd.xlane.f32.xlu0 %v8043
      %v8045 = vpop.xlane.xlu0 %8044
      %v8046 = vsel %vm489, %v8012, 0.0
      %8047 = vadd.xlane.f32.xlu0 %v8046
      %v8048 = vpop.xlane.xlu0 %8047
      %v8049 = vsel %vm489, %v8013, 0.0
      %8050 = vadd.xlane.f32.xlu0 %v8049
      %v8051 = vpop.xlane.xlu0 %8050
      %v8052 = vsel %vm489, %v8014, 0.0
      %8053 = vadd.xlane.f32.xlu0 %v8052
      %v8054 = vpop.xlane.xlu0 %8053
      %v8055 = vsel %vm489, %v8015, 0.0
      %8056 = vadd.xlane.f32.xlu0 %v8055
      %v8057 = vpop.xlane.xlu0 %8056
      %v8058 = vsel %vm489, %v8016, 0.0
      %8059 = vadd.xlane.f32.xlu0 %v8058
      %v8060 = vpop.xlane.xlu0 %8059
      %v8061 = vsel %vm489, %v8017, 0.0
      %8062 = vadd.xlane.f32.xlu0 %v8061
      %v8063 = vpop.xlane.xlu0 %8062
      %v8064 = vsel %vm489, %v8018, 0.0
      %8065 = vadd.xlane.f32.xlu0 %v8064
      %v8066 = vpop.xlane.xlu0 %8065
      %v8067 = vsel %vm489, %v8019, 0.0
      %8068 = vadd.xlane.f32.xlu0 %v8067
      %v8069 = vpop.xlane.xlu0 %8068
      %v8070 = vsel %vm489, %v8020, 0.0
      %8071 = vadd.xlane.f32.xlu0 %v8070
      %v8072 = vpop.xlane.xlu0 %8071
      %v8073 = vsel %vm489, %v8021, 0.0
      %8074 = vadd.xlane.f32.xlu0 %v8073
      %v8075 = vpop.xlane.xlu0 %8074
      %v8076 = vsel %vm489, %v8022, 0.0
      %8077 = vadd.xlane.f32.xlu0 %v8076
      %v8078 = vpop.xlane.xlu0 %8077
      %v8079 = vsel %vm489, %v8023, 0.0
      %8080 = vadd.xlane.f32.xlu0 %v8079
      %v8081 = vpop.xlane.xlu0 %8080
      %v8082 = vsel %vm489, %v8024, 0.0
      %8083 = vadd.xlane.f32.xlu0 %v8082
      %v8084 = vpop.xlane.xlu0 %8083
      %v8085 = vsel %vm489, %v8025, 0.0
      %8086 = vadd.xlane.f32.xlu0 %v8085
      %v8087 = vpop.xlane.xlu0 %8086
      %v8088 = vsel %vm489, %v8026, 0.0
      %8089 = vadd.xlane.f32.xlu0 %v8088
      %v8090 = vpop.xlane.xlu0 %8089
      %v8091 = vsel %vm489, %v8027, 0.0
      %8092 = vadd.xlane.f32.xlu0 %v8091
      %v8093 = vpop.xlane.xlu0 %8092
      %v8094 = vsel %vm489, %v8028, 0.0
      %8095 = vadd.xlane.f32.xlu0 %v8094
      %v8096 = vpop.xlane.xlu0 %8095
      %v8097 = vsel %vm489, %v8029, 0.0
      %8098 = vadd.xlane.f32.xlu0 %v8097
      %v8099 = vpop.xlane.xlu0 %8098
      %v8100 = vsel %vm489, %v8030, 0.0
      %8101 = vadd.xlane.f32.xlu0 %v8100
      %v8102 = vpop.xlane.xlu0 %8101
      %v8103 = vsel %vm489, %v8031, 0.0
      %8104 = vadd.xlane.f32.xlu0 %v8103
      %v8105 = vpop.xlane.xlu0 %8104
      %v8106 = vsel %vm489, %v8032, 0.0
      %8107 = vadd.xlane.f32.xlu0 %v8106
      %v8108 = vpop.xlane.xlu0 %8107
      %v8109 = vsel %vm489, %v8033, 0.0
      %8110 = vadd.xlane.f32.xlu0 %v8109
      %v8111 = vpop.xlane.xlu0 %8110
      %v8112 = vsel %vm489, %v8034, 0.0
      %8113 = vadd.xlane.f32.xlu0 %v8112
      %v8114 = vpop.xlane.xlu0 %8113
      %v8115 = vsel %vm489, %v8035, 0.0
      %8116 = vadd.xlane.f32.xlu0 %v8115
      %v8117 = vpop.xlane.xlu0 %8116
      %v8118 = vsel %vm489, %v8036, 0.0
      %8119 = vadd.xlane.f32.xlu0 %v8118
      %v8120 = vpop.xlane.xlu0 %8119
      %v8121 = vsel %vm489, %v8037, 0.0
      %8122 = vadd.xlane.f32.xlu0 %v8121
      %v8123 = vpop.xlane.xlu0 %8122
      %v8124 = vsel %vm489, %v8038, 0.0
      %8125 = vadd.xlane.f32.xlu0 %v8124
      %v8126 = vpop.xlane.xlu0 %8125
      %v8127 = vsel %vm489, %v8039, 0.0
      %8128 = vadd.xlane.f32.xlu0 %v8127
      %v8129 = vpop.xlane.xlu0 %8128
      %v8130 = vsel %vm489, %v8040, 0.0
      %8131 = vadd.xlane.f32.xlu0 %v8130
      %v8132 = vpop.xlane.xlu0 %8131
      %v8133 = vsel %vm489, %v8041, 0.0
      %8134 = vadd.xlane.f32.xlu0 %v8133
      %v8135 = vpop.xlane.xlu0 %8134
      %v8136 = vsel %vm489, %v8042, 0.0
      %8137 = vadd.xlane.f32.xlu0 %v8136
      %v8138 = vpop.xlane.xlu0 %8137
      %v8139 = vadd.f32 %v7974, %v8045
      %v8140 = vadd.f32 %v7975, %v8048
      %v8141 = vadd.f32 %v7976, %v8051
      %v8142 = vadd.f32 %v7977, %v8054
      %v8143 = vadd.f32 %v7978, %v8057
      %v8144 = vadd.f32 %v7979, %v8060
      %v8145 = vadd.f32 %v7980, %v8063
      %v8146 = vadd.f32 %v7981, %v8066
      %v8147 = vadd.f32 %v7982, %v8069
      %v8148 = vadd.f32 %v7983, %v8072
      %v8149 = vadd.f32 %v7984, %v8075
      %v8150 = vadd.f32 %v7985, %v8078
      %v8151 = vadd.f32 %v7986, %v8081
      %v8152 = vadd.f32 %v7987, %v8084
      %v8153 = vadd.f32 %v7988, %v8087
      %v8154 = vadd.f32 %v7989, %v8090
      %v8155 = vadd.f32 %v7990, %v8093
      %v8156 = vadd.f32 %v7991, %v8096
      %v8157 = vadd.f32 %v7992, %v8099
      %v8158 = vadd.f32 %v7993, %v8102
      %v8159 = vadd.f32 %v7994, %v8105
      %v8160 = vadd.f32 %v7995, %v8108
      %v8161 = vadd.f32 %v7996, %v8111
      %v8162 = vadd.f32 %v7997, %v8114
      %v8163 = vadd.f32 %v7998, %v8117
      %v8164 = vadd.f32 %v7999, %v8120
      %v8165 = vadd.f32 %v8000, %v8123
      %v8166 = vadd.f32 %v8001, %v8126
      %v8167 = vadd.f32 %v8002, %v8129
      %v8168 = vadd.f32 %v8003, %v8132
      %v8169 = vadd.f32 %v8004, %v8135
      %v8170 = vadd.f32 %v8005, %v8138
      %s8171 = scalar_lea.vmem %s7, 6
      %v8172 = vld [vmem:[%s8171] sm:$0x1]
      %v8174 = vperm.slane %v8172, 0
      %v8176 = vmul.f32 %v7810, %v8174
      %v8177 = vmul.f32 %v7811, %v8174
      %v8178 = vmul.f32 %v7812, %v8174
      %v8179 = vmul.f32 %v7813, %v8174
      %v8180 = vmul.f32 %v7814, %v8174
      %v8181 = vmul.f32 %v7815, %v8174
      %v8182 = vmul.f32 %v7816, %v8174
      %v8183 = vmul.f32 %v7817, %v8174
      %v8184 = vmul.f32 %v7818, %v8174
      %v8185 = vmul.f32 %v7819, %v8174
      %v8186 = vmul.f32 %v7820, %v8174
      %v8187 = vmul.f32 %v7821, %v8174
      %v8188 = vmul.f32 %v7822, %v8174
      %v8189 = vmul.f32 %v7823, %v8174
      %v8190 = vmul.f32 %v7824, %v8174
      %v8191 = vmul.f32 %v7825, %v8174
      %v8192 = vmul.f32 %v7826, %v8174
      %v8193 = vmul.f32 %v7827, %v8174
      %v8194 = vmul.f32 %v7828, %v8174
      %v8195 = vmul.f32 %v7829, %v8174
      %v8196 = vmul.f32 %v7830, %v8174
      %v8197 = vmul.f32 %v7831, %v8174
      %v8198 = vmul.f32 %v7832, %v8174
      %v8199 = vmul.f32 %v7833, %v8174
      %v8200 = vmul.f32 %v7834, %v8174
      %v8201 = vmul.f32 %v7835, %v8174
      %v8202 = vmul.f32 %v7836, %v8174
      %v8203 = vmul.f32 %v7837, %v8174
      %v8204 = vmul.f32 %v7838, %v8174
      %v8205 = vmul.f32 %v7839, %v8174
      %v8206 = vmul.f32 %v7840, %v8174
      %v8207 = vmul.f32 %v7841, %v8174
      %v8208 = vsel %vm489, %v8176, 0.0
      %8209 = vadd.xlane.f32.xlu0 %v8208
      %v8210 = vpop.xlane.xlu0 %8209
      %v8211 = vsel %vm489, %v8177, 0.0
      %8212 = vadd.xlane.f32.xlu0 %v8211
      %v8213 = vpop.xlane.xlu0 %8212
      %v8214 = vsel %vm489, %v8178, 0.0
      %8215 = vadd.xlane.f32.xlu0 %v8214
      %v8216 = vpop.xlane.xlu0 %8215
      %v8217 = vsel %vm489, %v8179, 0.0
      %8218 = vadd.xlane.f32.xlu0 %v8217
      %v8219 = vpop.xlane.xlu0 %8218
      %v8220 = vsel %vm489, %v8180, 0.0
      %8221 = vadd.xlane.f32.xlu0 %v8220
      %v8222 = vpop.xlane.xlu0 %8221
      %v8223 = vsel %vm489, %v8181, 0.0
      %8224 = vadd.xlane.f32.xlu0 %v8223
      %v8225 = vpop.xlane.xlu0 %8224
      %v8226 = vsel %vm489, %v8182, 0.0
      %8227 = vadd.xlane.f32.xlu0 %v8226
      %v8228 = vpop.xlane.xlu0 %8227
      %v8229 = vsel %vm489, %v8183, 0.0
      %8230 = vadd.xlane.f32.xlu0 %v8229
      %v8231 = vpop.xlane.xlu0 %8230
      %v8232 = vsel %vm489, %v8184, 0.0
      %8233 = vadd.xlane.f32.xlu0 %v8232
      %v8234 = vpop.xlane.xlu0 %8233
      %v8235 = vsel %vm489, %v8185, 0.0
      %8236 = vadd.xlane.f32.xlu0 %v8235
      %v8237 = vpop.xlane.xlu0 %8236
      %v8238 = vsel %vm489, %v8186, 0.0
      %8239 = vadd.xlane.f32.xlu0 %v8238
      %v8240 = vpop.xlane.xlu0 %8239
      %v8241 = vsel %vm489, %v8187, 0.0
      %8242 = vadd.xlane.f32.xlu0 %v8241
      %v8243 = vpop.xlane.xlu0 %8242
      %v8244 = vsel %vm489, %v8188, 0.0
      %8245 = vadd.xlane.f32.xlu0 %v8244
      %v8246 = vpop.xlane.xlu0 %8245
      %v8247 = vsel %vm489, %v8189, 0.0
      %8248 = vadd.xlane.f32.xlu0 %v8247
      %v8249 = vpop.xlane.xlu0 %8248
      %v8250 = vsel %vm489, %v8190, 0.0
      %8251 = vadd.xlane.f32.xlu0 %v8250
      %v8252 = vpop.xlane.xlu0 %8251
      %v8253 = vsel %vm489, %v8191, 0.0
      %8254 = vadd.xlane.f32.xlu0 %v8253
      %v8255 = vpop.xlane.xlu0 %8254
      %v8256 = vsel %vm489, %v8192, 0.0
      %8257 = vadd.xlane.f32.xlu0 %v8256
      %v8258 = vpop.xlane.xlu0 %8257
      %v8259 = vsel %vm489, %v8193, 0.0
      %8260 = vadd.xlane.f32.xlu0 %v8259
      %v8261 = vpop.xlane.xlu0 %8260
      %v8262 = vsel %vm489, %v8194, 0.0
      %8263 = vadd.xlane.f32.xlu0 %v8262
      %v8264 = vpop.xlane.xlu0 %8263
      %v8265 = vsel %vm489, %v8195, 0.0
      %8266 = vadd.xlane.f32.xlu0 %v8265
      %v8267 = vpop.xlane.xlu0 %8266
      %v8268 = vsel %vm489, %v8196, 0.0
      %8269 = vadd.xlane.f32.xlu0 %v8268
      %v8270 = vpop.xlane.xlu0 %8269
      %v8271 = vsel %vm489, %v8197, 0.0
      %8272 = vadd.xlane.f32.xlu0 %v8271
      %v8273 = vpop.xlane.xlu0 %8272
      %v8274 = vsel %vm489, %v8198, 0.0
      %8275 = vadd.xlane.f32.xlu0 %v8274
      %v8276 = vpop.xlane.xlu0 %8275
      %v8277 = vsel %vm489, %v8199, 0.0
      %8278 = vadd.xlane.f32.xlu0 %v8277
      %v8279 = vpop.xlane.xlu0 %8278
      %v8280 = vsel %vm489, %v8200, 0.0
      %8281 = vadd.xlane.f32.xlu0 %v8280
      %v8282 = vpop.xlane.xlu0 %8281
      %v8283 = vsel %vm489, %v8201, 0.0
      %8284 = vadd.xlane.f32.xlu0 %v8283
      %v8285 = vpop.xlane.xlu0 %8284
      %v8286 = vsel %vm489, %v8202, 0.0
      %8287 = vadd.xlane.f32.xlu0 %v8286
      %v8288 = vpop.xlane.xlu0 %8287
      %v8289 = vsel %vm489, %v8203, 0.0
      %8290 = vadd.xlane.f32.xlu0 %v8289
      %v8291 = vpop.xlane.xlu0 %8290
      %v8292 = vsel %vm489, %v8204, 0.0
      %8293 = vadd.xlane.f32.xlu0 %v8292
      %v8294 = vpop.xlane.xlu0 %8293
      %v8295 = vsel %vm489, %v8205, 0.0
      %8296 = vadd.xlane.f32.xlu0 %v8295
      %v8297 = vpop.xlane.xlu0 %8296
      %v8298 = vsel %vm489, %v8206, 0.0
      %8299 = vadd.xlane.f32.xlu0 %v8298
      %v8300 = vpop.xlane.xlu0 %8299
      %v8301 = vsel %vm489, %v8207, 0.0
      %8302 = vadd.xlane.f32.xlu0 %v8301
      %v8303 = vpop.xlane.xlu0 %8302
      %v8304 = vadd.f32 %v8139, %v8210
      %v8305 = vadd.f32 %v8140, %v8213
      %v8306 = vadd.f32 %v8141, %v8216
      %v8307 = vadd.f32 %v8142, %v8219
      %v8308 = vadd.f32 %v8143, %v8222
      %v8309 = vadd.f32 %v8144, %v8225
      %v8310 = vadd.f32 %v8145, %v8228
      %v8311 = vadd.f32 %v8146, %v8231
      %v8312 = vadd.f32 %v8147, %v8234
      %v8313 = vadd.f32 %v8148, %v8237
      %v8314 = vadd.f32 %v8149, %v8240
      %v8315 = vadd.f32 %v8150, %v8243
      %v8316 = vadd.f32 %v8151, %v8246
      %v8317 = vadd.f32 %v8152, %v8249
      %v8318 = vadd.f32 %v8153, %v8252
      %v8319 = vadd.f32 %v8154, %v8255
      %v8320 = vadd.f32 %v8155, %v8258
      %v8321 = vadd.f32 %v8156, %v8261
      %v8322 = vadd.f32 %v8157, %v8264
      %v8323 = vadd.f32 %v8158, %v8267
      %v8324 = vadd.f32 %v8159, %v8270
      %v8325 = vadd.f32 %v8160, %v8273
      %v8326 = vadd.f32 %v8161, %v8276
      %v8327 = vadd.f32 %v8162, %v8279
      %v8328 = vadd.f32 %v8163, %v8282
      %v8329 = vadd.f32 %v8164, %v8285
      %v8330 = vadd.f32 %v8165, %v8288
      %v8331 = vadd.f32 %v8166, %v8291
      %v8332 = vadd.f32 %v8167, %v8294
      %v8333 = vadd.f32 %v8168, %v8297
      %v8334 = vadd.f32 %v8169, %v8300
      %v8335 = vadd.f32 %v8170, %v8303
      %v8336 = vld [vmem:[#allocation4 + $0x10] sm:$0xff]
      %v8337 = vld [vmem:[#allocation4 + $0x18] sm:$0xff]
      %v8338 = vld [vmem:[#allocation4 + $0x40] sm:$0xff]
      %v8339 = vld [vmem:[#allocation4 + $0x48] sm:$0xff]
      %v8340 = vld [vmem:[#allocation4 + $0x70] sm:$0xff]
      %v8341 = vld [vmem:[#allocation4 + $0x78] sm:$0xff]
      %v8342 = vld [vmem:[#allocation4 + $0xa0] sm:$0xff]
      %v8343 = vld [vmem:[#allocation4 + $0xa8] sm:$0xff]
      %v8344 = vld [vmem:[#allocation4 + $0xd0] sm:$0xff]
      %v8345 = vld [vmem:[#allocation4 + $0xd8] sm:$0xff]
      %v8346 = vld [vmem:[#allocation4 + $0x100] sm:$0xff]
      %v8347 = vld [vmem:[#allocation4 + $0x108] sm:$0xff]
      %v8348 = vld [vmem:[#allocation4 + $0x130] sm:$0xff]
      %v8349 = vld [vmem:[#allocation4 + $0x138] sm:$0xff]
      %v8350 = vld [vmem:[#allocation4 + $0x160] sm:$0xff]
      %v8351 = vld [vmem:[#allocation4 + $0x168] sm:$0xff]
      %v8352 = vld [vmem:[#allocation4 + $0x190] sm:$0xff]
      %v8353 = vld [vmem:[#allocation4 + $0x198] sm:$0xff]
      %v8354 = vld [vmem:[#allocation4 + $0x1c0] sm:$0xff]
      %v8355 = vld [vmem:[#allocation4 + $0x1c8] sm:$0xff]
      %v8356 = vld [vmem:[#allocation4 + $0x1f0] sm:$0xff]
      %v8357 = vld [vmem:[#allocation4 + $0x1f8] sm:$0xff]
      %v8358 = vld [vmem:[#allocation4 + $0x220] sm:$0xff]
      %v8359 = vld [vmem:[#allocation4 + $0x228] sm:$0xff]
      %v8360 = vld [vmem:[#allocation4 + $0x250] sm:$0xff]
      %v8361 = vld [vmem:[#allocation4 + $0x258] sm:$0xff]
      %v8362 = vld [vmem:[#allocation4 + $0x280] sm:$0xff]
      %v8363 = vld [vmem:[#allocation4 + $0x288] sm:$0xff]
      %v8364 = vld [vmem:[#allocation4 + $0x2b0] sm:$0xff]
      %v8365 = vld [vmem:[#allocation4 + $0x2b8] sm:$0xff]
      %v8366 = vld [vmem:[#allocation4 + $0x2e0] sm:$0xff]
      %v8367 = vld [vmem:[#allocation4 + $0x2e8] sm:$0xff]
      %v8368 = vld [vmem:[#allocation4 + $0x310] sm:$0xff]
      %v8369 = vld [vmem:[#allocation4 + $0x318] sm:$0xff]
      %v8370 = vld [vmem:[#allocation4 + $0x340] sm:$0xff]
      %v8371 = vld [vmem:[#allocation4 + $0x348] sm:$0xff]
      %s8372 = scalar_lea.vmem %s7, 1
      %v8373 = vld [vmem:[%s8372] sm:$0x1]
      %v8375 = vperm.slane %v8373, 0
      %v8377 = vmul.f32 %v8336, %v8375
      %v8378 = vmul.f32 %v8337, %v8375
      %v8379 = vmul.f32 %v8338, %v8375
      %v8380 = vmul.f32 %v8339, %v8375
      %v8381 = vmul.f32 %v8340, %v8375
      %v8382 = vmul.f32 %v8341, %v8375
      %v8383 = vmul.f32 %v8342, %v8375
      %v8384 = vmul.f32 %v8343, %v8375
      %v8385 = vmul.f32 %v8344, %v8375
      %v8386 = vmul.f32 %v8345, %v8375
      %v8387 = vmul.f32 %v8346, %v8375
      %v8388 = vmul.f32 %v8347, %v8375
      %v8389 = vmul.f32 %v8348, %v8375
      %v8390 = vmul.f32 %v8349, %v8375
      %v8391 = vmul.f32 %v8350, %v8375
      %v8392 = vmul.f32 %v8351, %v8375
      %v8393 = vmul.f32 %v8352, %v8375
      %v8394 = vmul.f32 %v8353, %v8375
      %v8395 = vmul.f32 %v8354, %v8375
      %v8396 = vmul.f32 %v8355, %v8375
      %v8397 = vmul.f32 %v8356, %v8375
      %v8398 = vmul.f32 %v8357, %v8375
      %v8399 = vmul.f32 %v8358, %v8375
      %v8400 = vmul.f32 %v8359, %v8375
      %v8401 = vmul.f32 %v8360, %v8375
      %v8402 = vmul.f32 %v8361, %v8375
      %v8403 = vmul.f32 %v8362, %v8375
      %v8404 = vmul.f32 %v8363, %v8375
      %v8405 = vmul.f32 %v8364, %v8375
      %v8406 = vmul.f32 %v8365, %v8375
      %v8407 = vmul.f32 %v8366, %v8375
      %v8408 = vmul.f32 %v8367, %v8375
      %v8409 = vsel %vm489, %v8377, 0.0
      %8410 = vadd.xlane.f32.xlu0 %v8409
      %v8411 = vpop.xlane.xlu0 %8410
      %v8412 = vsel %vm489, %v8378, 0.0
      %8413 = vadd.xlane.f32.xlu0 %v8412
      %v8414 = vpop.xlane.xlu0 %8413
      %v8415 = vsel %vm489, %v8379, 0.0
      %8416 = vadd.xlane.f32.xlu0 %v8415
      %v8417 = vpop.xlane.xlu0 %8416
      %v8418 = vsel %vm489, %v8380, 0.0
      %8419 = vadd.xlane.f32.xlu0 %v8418
      %v8420 = vpop.xlane.xlu0 %8419
      %v8421 = vsel %vm489, %v8381, 0.0
      %8422 = vadd.xlane.f32.xlu0 %v8421
      %v8423 = vpop.xlane.xlu0 %8422
      %v8424 = vsel %vm489, %v8382, 0.0
      %8425 = vadd.xlane.f32.xlu0 %v8424
      %v8426 = vpop.xlane.xlu0 %8425
      %v8427 = vsel %vm489, %v8383, 0.0
      %8428 = vadd.xlane.f32.xlu0 %v8427
      %v8429 = vpop.xlane.xlu0 %8428
      %v8430 = vsel %vm489, %v8384, 0.0
      %8431 = vadd.xlane.f32.xlu0 %v8430
      %v8432 = vpop.xlane.xlu0 %8431
      %v8433 = vsel %vm489, %v8385, 0.0
      %8434 = vadd.xlane.f32.xlu0 %v8433
      %v8435 = vpop.xlane.xlu0 %8434
      %v8436 = vsel %vm489, %v8386, 0.0
      %8437 = vadd.xlane.f32.xlu0 %v8436
      %v8438 = vpop.xlane.xlu0 %8437
      %v8439 = vsel %vm489, %v8387, 0.0
      %8440 = vadd.xlane.f32.xlu0 %v8439
      %v8441 = vpop.xlane.xlu0 %8440
      %v8442 = vsel %vm489, %v8388, 0.0
      %8443 = vadd.xlane.f32.xlu0 %v8442
      %v8444 = vpop.xlane.xlu0 %8443
      %v8445 = vsel %vm489, %v8389, 0.0
      %8446 = vadd.xlane.f32.xlu0 %v8445
      %v8447 = vpop.xlane.xlu0 %8446
      %v8448 = vsel %vm489, %v8390, 0.0
      %8449 = vadd.xlane.f32.xlu0 %v8448
      %v8450 = vpop.xlane.xlu0 %8449
      %v8451 = vsel %vm489, %v8391, 0.0
      %8452 = vadd.xlane.f32.xlu0 %v8451
      %v8453 = vpop.xlane.xlu0 %8452
      %v8454 = vsel %vm489, %v8392, 0.0
      %8455 = vadd.xlane.f32.xlu0 %v8454
      %v8456 = vpop.xlane.xlu0 %8455
      %v8457 = vsel %vm489, %v8393, 0.0
      %8458 = vadd.xlane.f32.xlu0 %v8457
      %v8459 = vpop.xlane.xlu0 %8458
      %v8460 = vsel %vm489, %v8394, 0.0
      %8461 = vadd.xlane.f32.xlu0 %v8460
      %v8462 = vpop.xlane.xlu0 %8461
      %v8463 = vsel %vm489, %v8395, 0.0
      %8464 = vadd.xlane.f32.xlu0 %v8463
      %v8465 = vpop.xlane.xlu0 %8464
      %v8466 = vsel %vm489, %v8396, 0.0
      %8467 = vadd.xlane.f32.xlu0 %v8466
      %v8468 = vpop.xlane.xlu0 %8467
      %v8469 = vsel %vm489, %v8397, 0.0
      %8470 = vadd.xlane.f32.xlu0 %v8469
      %v8471 = vpop.xlane.xlu0 %8470
      %v8472 = vsel %vm489, %v8398, 0.0
      %8473 = vadd.xlane.f32.xlu0 %v8472
      %v8474 = vpop.xlane.xlu0 %8473
      %v8475 = vsel %vm489, %v8399, 0.0
      %8476 = vadd.xlane.f32.xlu0 %v8475
      %v8477 = vpop.xlane.xlu0 %8476
      %v8478 = vsel %vm489, %v8400, 0.0
      %8479 = vadd.xlane.f32.xlu0 %v8478
      %v8480 = vpop.xlane.xlu0 %8479
      %v8481 = vsel %vm489, %v8401, 0.0
      %8482 = vadd.xlane.f32.xlu0 %v8481
      %v8483 = vpop.xlane.xlu0 %8482
      %v8484 = vsel %vm489, %v8402, 0.0
      %8485 = vadd.xlane.f32.xlu0 %v8484
      %v8486 = vpop.xlane.xlu0 %8485
      %v8487 = vsel %vm489, %v8403, 0.0
      %8488 = vadd.xlane.f32.xlu0 %v8487
      %v8489 = vpop.xlane.xlu0 %8488
      %v8490 = vsel %vm489, %v8404, 0.0
      %8491 = vadd.xlane.f32.xlu0 %v8490
      %v8492 = vpop.xlane.xlu0 %8491
      %v8493 = vsel %vm489, %v8405, 0.0
      %8494 = vadd.xlane.f32.xlu0 %v8493
      %v8495 = vpop.xlane.xlu0 %8494
      %v8496 = vsel %vm489, %v8406, 0.0
      %8497 = vadd.xlane.f32.xlu0 %v8496
      %v8498 = vpop.xlane.xlu0 %8497
      %v8499 = vsel %vm489, %v8407, 0.0
      %8500 = vadd.xlane.f32.xlu0 %v8499
      %v8501 = vpop.xlane.xlu0 %8500
      %v8502 = vsel %vm489, %v8408, 0.0
      %8503 = vadd.xlane.f32.xlu0 %v8502
      %v8504 = vpop.xlane.xlu0 %8503
      %v8505 = vadd.f32 %v8304, %v8411
      %v8506 = vadd.f32 %v8305, %v8414
      %v8507 = vadd.f32 %v8306, %v8417
      %v8508 = vadd.f32 %v8307, %v8420
      %v8509 = vadd.f32 %v8308, %v8423
      %v8510 = vadd.f32 %v8309, %v8426
      %v8511 = vadd.f32 %v8310, %v8429
      %v8512 = vadd.f32 %v8311, %v8432
      %v8513 = vadd.f32 %v8312, %v8435
      %v8514 = vadd.f32 %v8313, %v8438
      %v8515 = vadd.f32 %v8314, %v8441
      %v8516 = vadd.f32 %v8315, %v8444
      %v8517 = vadd.f32 %v8316, %v8447
      %v8518 = vadd.f32 %v8317, %v8450
      %v8519 = vadd.f32 %v8318, %v8453
      %v8520 = vadd.f32 %v8319, %v8456
      %v8521 = vadd.f32 %v8320, %v8459
      %v8522 = vadd.f32 %v8321, %v8462
      %v8523 = vadd.f32 %v8322, %v8465
      %v8524 = vadd.f32 %v8323, %v8468
      %v8525 = vadd.f32 %v8324, %v8471
      %v8526 = vadd.f32 %v8325, %v8474
      %v8527 = vadd.f32 %v8326, %v8477
      %v8528 = vadd.f32 %v8327, %v8480
      %v8529 = vadd.f32 %v8328, %v8483
      %v8530 = vadd.f32 %v8329, %v8486
      %v8531 = vadd.f32 %v8330, %v8489
      %v8532 = vadd.f32 %v8331, %v8492
      %v8533 = vadd.f32 %v8332, %v8495
      %v8534 = vadd.f32 %v8333, %v8498
      %v8535 = vadd.f32 %v8334, %v8501
      %v8536 = vadd.f32 %v8335, %v8504
      %s8537 = scalar_lea.vmem %s7, 4
      %v8538 = vld [vmem:[%s8537] sm:$0x1]
      %v8540 = vperm.slane %v8538, 0
      %v8542 = vmul.f32 %v8338, %v8540
      %v8543 = vmul.f32 %v8339, %v8540
      %v8544 = vmul.f32 %v8340, %v8540
      %v8545 = vmul.f32 %v8341, %v8540
      %v8546 = vmul.f32 %v8342, %v8540
      %v8547 = vmul.f32 %v8343, %v8540
      %v8548 = vmul.f32 %v8344, %v8540
      %v8549 = vmul.f32 %v8345, %v8540
      %v8550 = vmul.f32 %v8346, %v8540
      %v8551 = vmul.f32 %v8347, %v8540
      %v8552 = vmul.f32 %v8348, %v8540
      %v8553 = vmul.f32 %v8349, %v8540
      %v8554 = vmul.f32 %v8350, %v8540
      %v8555 = vmul.f32 %v8351, %v8540
      %v8556 = vmul.f32 %v8352, %v8540
      %v8557 = vmul.f32 %v8353, %v8540
      %v8558 = vmul.f32 %v8354, %v8540
      %v8559 = vmul.f32 %v8355, %v8540
      %v8560 = vmul.f32 %v8356, %v8540
      %v8561 = vmul.f32 %v8357, %v8540
      %v8562 = vmul.f32 %v8358, %v8540
      %v8563 = vmul.f32 %v8359, %v8540
      %v8564 = vmul.f32 %v8360, %v8540
      %v8565 = vmul.f32 %v8361, %v8540
      %v8566 = vmul.f32 %v8362, %v8540
      %v8567 = vmul.f32 %v8363, %v8540
      %v8568 = vmul.f32 %v8364, %v8540
      %v8569 = vmul.f32 %v8365, %v8540
      %v8570 = vmul.f32 %v8366, %v8540
      %v8571 = vmul.f32 %v8367, %v8540
      %v8572 = vmul.f32 %v8368, %v8540
      %v8573 = vmul.f32 %v8369, %v8540
      %v8574 = vsel %vm489, %v8542, 0.0
      %8575 = vadd.xlane.f32.xlu0 %v8574
      %v8576 = vpop.xlane.xlu0 %8575
      %v8577 = vsel %vm489, %v8543, 0.0
      %8578 = vadd.xlane.f32.xlu0 %v8577
      %v8579 = vpop.xlane.xlu0 %8578
      %v8580 = vsel %vm489, %v8544, 0.0
      %8581 = vadd.xlane.f32.xlu0 %v8580
      %v8582 = vpop.xlane.xlu0 %8581
      %v8583 = vsel %vm489, %v8545, 0.0
      %8584 = vadd.xlane.f32.xlu0 %v8583
      %v8585 = vpop.xlane.xlu0 %8584
      %v8586 = vsel %vm489, %v8546, 0.0
      %8587 = vadd.xlane.f32.xlu0 %v8586
      %v8588 = vpop.xlane.xlu0 %8587
      %v8589 = vsel %vm489, %v8547, 0.0
      %8590 = vadd.xlane.f32.xlu0 %v8589
      %v8591 = vpop.xlane.xlu0 %8590
      %v8592 = vsel %vm489, %v8548, 0.0
      %8593 = vadd.xlane.f32.xlu0 %v8592
      %v8594 = vpop.xlane.xlu0 %8593
      %v8595 = vsel %vm489, %v8549, 0.0
      %8596 = vadd.xlane.f32.xlu0 %v8595
      %v8597 = vpop.xlane.xlu0 %8596
      %v8598 = vsel %vm489, %v8550, 0.0
      %8599 = vadd.xlane.f32.xlu0 %v8598
      %v8600 = vpop.xlane.xlu0 %8599
      %v8601 = vsel %vm489, %v8551, 0.0
      %8602 = vadd.xlane.f32.xlu0 %v8601
      %v8603 = vpop.xlane.xlu0 %8602
      %v8604 = vsel %vm489, %v8552, 0.0
      %8605 = vadd.xlane.f32.xlu0 %v8604
      %v8606 = vpop.xlane.xlu0 %8605
      %v8607 = vsel %vm489, %v8553, 0.0
      %8608 = vadd.xlane.f32.xlu0 %v8607
      %v8609 = vpop.xlane.xlu0 %8608
      %v8610 = vsel %vm489, %v8554, 0.0
      %8611 = vadd.xlane.f32.xlu0 %v8610
      %v8612 = vpop.xlane.xlu0 %8611
      %v8613 = vsel %vm489, %v8555, 0.0
      %8614 = vadd.xlane.f32.xlu0 %v8613
      %v8615 = vpop.xlane.xlu0 %8614
      %v8616 = vsel %vm489, %v8556, 0.0
      %8617 = vadd.xlane.f32.xlu0 %v8616
      %v8618 = vpop.xlane.xlu0 %8617
      %v8619 = vsel %vm489, %v8557, 0.0
      %8620 = vadd.xlane.f32.xlu0 %v8619
      %v8621 = vpop.xlane.xlu0 %8620
      %v8622 = vsel %vm489, %v8558, 0.0
      %8623 = vadd.xlane.f32.xlu0 %v8622
      %v8624 = vpop.xlane.xlu0 %8623
      %v8625 = vsel %vm489, %v8559, 0.0
      %8626 = vadd.xlane.f32.xlu0 %v8625
      %v8627 = vpop.xlane.xlu0 %8626
      %v8628 = vsel %vm489, %v8560, 0.0
      %8629 = vadd.xlane.f32.xlu0 %v8628
      %v8630 = vpop.xlane.xlu0 %8629
      %v8631 = vsel %vm489, %v8561, 0.0
      %8632 = vadd.xlane.f32.xlu0 %v8631
      %v8633 = vpop.xlane.xlu0 %8632
      %v8634 = vsel %vm489, %v8562, 0.0
      %8635 = vadd.xlane.f32.xlu0 %v8634
      %v8636 = vpop.xlane.xlu0 %8635
      %v8637 = vsel %vm489, %v8563, 0.0
      %8638 = vadd.xlane.f32.xlu0 %v8637
      %v8639 = vpop.xlane.xlu0 %8638
      %v8640 = vsel %vm489, %v8564, 0.0
      %8641 = vadd.xlane.f32.xlu0 %v8640
      %v8642 = vpop.xlane.xlu0 %8641
      %v8643 = vsel %vm489, %v8565, 0.0
      %8644 = vadd.xlane.f32.xlu0 %v8643
      %v8645 = vpop.xlane.xlu0 %8644
      %v8646 = vsel %vm489, %v8566, 0.0
      %8647 = vadd.xlane.f32.xlu0 %v8646
      %v8648 = vpop.xlane.xlu0 %8647
      %v8649 = vsel %vm489, %v8567, 0.0
      %8650 = vadd.xlane.f32.xlu0 %v8649
      %v8651 = vpop.xlane.xlu0 %8650
      %v8652 = vsel %vm489, %v8568, 0.0
      %8653 = vadd.xlane.f32.xlu0 %v8652
      %v8654 = vpop.xlane.xlu0 %8653
      %v8655 = vsel %vm489, %v8569, 0.0
      %8656 = vadd.xlane.f32.xlu0 %v8655
      %v8657 = vpop.xlane.xlu0 %8656
      %v8658 = vsel %vm489, %v8570, 0.0
      %8659 = vadd.xlane.f32.xlu0 %v8658
      %v8660 = vpop.xlane.xlu0 %8659
      %v8661 = vsel %vm489, %v8571, 0.0
      %8662 = vadd.xlane.f32.xlu0 %v8661
      %v8663 = vpop.xlane.xlu0 %8662
      %v8664 = vsel %vm489, %v8572, 0.0
      %8665 = vadd.xlane.f32.xlu0 %v8664
      %v8666 = vpop.xlane.xlu0 %8665
      %v8667 = vsel %vm489, %v8573, 0.0
      %8668 = vadd.xlane.f32.xlu0 %v8667
      %v8669 = vpop.xlane.xlu0 %8668
      %v8670 = vadd.f32 %v8505, %v8576
      %v8671 = vadd.f32 %v8506, %v8579
      %v8672 = vadd.f32 %v8507, %v8582
      %v8673 = vadd.f32 %v8508, %v8585
      %v8674 = vadd.f32 %v8509, %v8588
      %v8675 = vadd.f32 %v8510, %v8591
      %v8676 = vadd.f32 %v8511, %v8594
      %v8677 = vadd.f32 %v8512, %v8597
      %v8678 = vadd.f32 %v8513, %v8600
      %v8679 = vadd.f32 %v8514, %v8603
      %v8680 = vadd.f32 %v8515, %v8606
      %v8681 = vadd.f32 %v8516, %v8609
      %v8682 = vadd.f32 %v8517, %v8612
      %v8683 = vadd.f32 %v8518, %v8615
      %v8684 = vadd.f32 %v8519, %v8618
      %v8685 = vadd.f32 %v8520, %v8621
      %v8686 = vadd.f32 %v8521, %v8624
      %v8687 = vadd.f32 %v8522, %v8627
      %v8688 = vadd.f32 %v8523, %v8630
      %v8689 = vadd.f32 %v8524, %v8633
      %v8690 = vadd.f32 %v8525, %v8636
      %v8691 = vadd.f32 %v8526, %v8639
      %v8692 = vadd.f32 %v8527, %v8642
      %v8693 = vadd.f32 %v8528, %v8645
      %v8694 = vadd.f32 %v8529, %v8648
      %v8695 = vadd.f32 %v8530, %v8651
      %v8696 = vadd.f32 %v8531, %v8654
      %v8697 = vadd.f32 %v8532, %v8657
      %v8698 = vadd.f32 %v8533, %v8660
      %v8699 = vadd.f32 %v8534, %v8663
      %v8700 = vadd.f32 %v8535, %v8666
      %v8701 = vadd.f32 %v8536, %v8669
      %s8702 = scalar_lea.vmem %s7, 7
      %v8703 = vld [vmem:[%s8702] sm:$0x1]
      %v8705 = vperm.slane %v8703, 0
      %v8707 = vmul.f32 %v8340, %v8705
      %v8708 = vmul.f32 %v8341, %v8705
      %v8709 = vmul.f32 %v8342, %v8705
      %v8710 = vmul.f32 %v8343, %v8705
      %v8711 = vmul.f32 %v8344, %v8705
      %v8712 = vmul.f32 %v8345, %v8705
      %v8713 = vmul.f32 %v8346, %v8705
      %v8714 = vmul.f32 %v8347, %v8705
      %v8715 = vmul.f32 %v8348, %v8705
      %v8716 = vmul.f32 %v8349, %v8705
      %v8717 = vmul.f32 %v8350, %v8705
      %v8718 = vmul.f32 %v8351, %v8705
      %v8719 = vmul.f32 %v8352, %v8705
      %v8720 = vmul.f32 %v8353, %v8705
      %v8721 = vmul.f32 %v8354, %v8705
      %v8722 = vmul.f32 %v8355, %v8705
      %v8723 = vmul.f32 %v8356, %v8705
      %v8724 = vmul.f32 %v8357, %v8705
      %v8725 = vmul.f32 %v8358, %v8705
      %v8726 = vmul.f32 %v8359, %v8705
      %v8727 = vmul.f32 %v8360, %v8705
      %v8728 = vmul.f32 %v8361, %v8705
      %v8729 = vmul.f32 %v8362, %v8705
      %v8730 = vmul.f32 %v8363, %v8705
      %v8731 = vmul.f32 %v8364, %v8705
      %v8732 = vmul.f32 %v8365, %v8705
      %v8733 = vmul.f32 %v8366, %v8705
      %v8734 = vmul.f32 %v8367, %v8705
      %v8735 = vmul.f32 %v8368, %v8705
      %v8736 = vmul.f32 %v8369, %v8705
      %v8737 = vmul.f32 %v8370, %v8705
      %v8738 = vmul.f32 %v8371, %v8705
      %v8739 = vsel %vm489, %v8707, 0.0
      %8740 = vadd.xlane.f32.xlu0 %v8739
      %v8741 = vpop.xlane.xlu0 %8740
      %v8742 = vsel %vm489, %v8708, 0.0
      %8743 = vadd.xlane.f32.xlu0 %v8742
      %v8744 = vpop.xlane.xlu0 %8743
      %v8745 = vsel %vm489, %v8709, 0.0
      %8746 = vadd.xlane.f32.xlu0 %v8745
      %v8747 = vpop.xlane.xlu0 %8746
      %v8748 = vsel %vm489, %v8710, 0.0
      %8749 = vadd.xlane.f32.xlu0 %v8748
      %v8750 = vpop.xlane.xlu0 %8749
      %v8751 = vsel %vm489, %v8711, 0.0
      %8752 = vadd.xlane.f32.xlu0 %v8751
      %v8753 = vpop.xlane.xlu0 %8752
      %v8754 = vsel %vm489, %v8712, 0.0
      %8755 = vadd.xlane.f32.xlu0 %v8754
      %v8756 = vpop.xlane.xlu0 %8755
      %v8757 = vsel %vm489, %v8713, 0.0
      %8758 = vadd.xlane.f32.xlu0 %v8757
      %v8759 = vpop.xlane.xlu0 %8758
      %v8760 = vsel %vm489, %v8714, 0.0
      %8761 = vadd.xlane.f32.xlu0 %v8760
      %v8762 = vpop.xlane.xlu0 %8761
      %v8763 = vsel %vm489, %v8715, 0.0
      %8764 = vadd.xlane.f32.xlu0 %v8763
      %v8765 = vpop.xlane.xlu0 %8764
      %v8766 = vsel %vm489, %v8716, 0.0
      %8767 = vadd.xlane.f32.xlu0 %v8766
      %v8768 = vpop.xlane.xlu0 %8767
      %v8769 = vsel %vm489, %v8717, 0.0
      %8770 = vadd.xlane.f32.xlu0 %v8769
      %v8771 = vpop.xlane.xlu0 %8770
      %v8772 = vsel %vm489, %v8718, 0.0
      %8773 = vadd.xlane.f32.xlu0 %v8772
      %v8774 = vpop.xlane.xlu0 %8773
      %v8775 = vsel %vm489, %v8719, 0.0
      %8776 = vadd.xlane.f32.xlu0 %v8775
      %v8777 = vpop.xlane.xlu0 %8776
      %v8778 = vsel %vm489, %v8720, 0.0
      %8779 = vadd.xlane.f32.xlu0 %v8778
      %v8780 = vpop.xlane.xlu0 %8779
      %v8781 = vsel %vm489, %v8721, 0.0
      %8782 = vadd.xlane.f32.xlu0 %v8781
      %v8783 = vpop.xlane.xlu0 %8782
      %v8784 = vsel %vm489, %v8722, 0.0
      %8785 = vadd.xlane.f32.xlu0 %v8784
      %v8786 = vpop.xlane.xlu0 %8785
      %v8787 = vsel %vm489, %v8723, 0.0
      %8788 = vadd.xlane.f32.xlu0 %v8787
      %v8789 = vpop.xlane.xlu0 %8788
      %v8790 = vsel %vm489, %v8724, 0.0
      %8791 = vadd.xlane.f32.xlu0 %v8790
      %v8792 = vpop.xlane.xlu0 %8791
      %v8793 = vsel %vm489, %v8725, 0.0
      %8794 = vadd.xlane.f32.xlu0 %v8793
      %v8795 = vpop.xlane.xlu0 %8794
      %v8796 = vsel %vm489, %v8726, 0.0
      %8797 = vadd.xlane.f32.xlu0 %v8796
      %v8798 = vpop.xlane.xlu0 %8797
      %v8799 = vsel %vm489, %v8727, 0.0
      %8800 = vadd.xlane.f32.xlu0 %v8799
      %v8801 = vpop.xlane.xlu0 %8800
      %v8802 = vsel %vm489, %v8728, 0.0
      %8803 = vadd.xlane.f32.xlu0 %v8802
      %v8804 = vpop.xlane.xlu0 %8803
      %v8805 = vsel %vm489, %v8729, 0.0
      %8806 = vadd.xlane.f32.xlu0 %v8805
      %v8807 = vpop.xlane.xlu0 %8806
      %v8808 = vsel %vm489, %v8730, 0.0
      %8809 = vadd.xlane.f32.xlu0 %v8808
      %v8810 = vpop.xlane.xlu0 %8809
      %v8811 = vsel %vm489, %v8731, 0.0
      %8812 = vadd.xlane.f32.xlu0 %v8811
      %v8813 = vpop.xlane.xlu0 %8812
      %v8814 = vsel %vm489, %v8732, 0.0
      %8815 = vadd.xlane.f32.xlu0 %v8814
      %v8816 = vpop.xlane.xlu0 %8815
      %v8817 = vsel %vm489, %v8733, 0.0
      %8818 = vadd.xlane.f32.xlu0 %v8817
      %v8819 = vpop.xlane.xlu0 %8818
      %v8820 = vsel %vm489, %v8734, 0.0
      %8821 = vadd.xlane.f32.xlu0 %v8820
      %v8822 = vpop.xlane.xlu0 %8821
      %v8823 = vsel %vm489, %v8735, 0.0
      %8824 = vadd.xlane.f32.xlu0 %v8823
      %v8825 = vpop.xlane.xlu0 %8824
      %v8826 = vsel %vm489, %v8736, 0.0
      %8827 = vadd.xlane.f32.xlu0 %v8826
      %v8828 = vpop.xlane.xlu0 %8827
      %v8829 = vsel %vm489, %v8737, 0.0
      %8830 = vadd.xlane.f32.xlu0 %v8829
      %v8831 = vpop.xlane.xlu0 %8830
      %v8832 = vsel %vm489, %v8738, 0.0
      %8833 = vadd.xlane.f32.xlu0 %v8832
      %v8834 = vpop.xlane.xlu0 %8833
      %v8835 = vadd.f32 %v8670, %v8741
      %v8836 = vadd.f32 %v8671, %v8744
      %v8837 = vadd.f32 %v8672, %v8747
      %v8838 = vadd.f32 %v8673, %v8750
      %v8839 = vadd.f32 %v8674, %v8753
      %v8840 = vadd.f32 %v8675, %v8756
      %v8841 = vadd.f32 %v8676, %v8759
      %v8842 = vadd.f32 %v8677, %v8762
      %v8843 = vadd.f32 %v8678, %v8765
      %v8844 = vadd.f32 %v8679, %v8768
      %v8845 = vadd.f32 %v8680, %v8771
      %v8846 = vadd.f32 %v8681, %v8774
      %v8847 = vadd.f32 %v8682, %v8777
      %v8848 = vadd.f32 %v8683, %v8780
      %v8849 = vadd.f32 %v8684, %v8783
      %v8850 = vadd.f32 %v8685, %v8786
      %v8851 = vadd.f32 %v8686, %v8789
      %v8852 = vadd.f32 %v8687, %v8792
      %v8853 = vadd.f32 %v8688, %v8795
      %v8854 = vadd.f32 %v8689, %v8798
      %v8855 = vadd.f32 %v8690, %v8801
      %v8856 = vadd.f32 %v8691, %v8804
      %v8857 = vadd.f32 %v8692, %v8807
      %v8858 = vadd.f32 %v8693, %v8810
      %v8859 = vadd.f32 %v8694, %v8813
      %v8860 = vadd.f32 %v8695, %v8816
      %v8861 = vadd.f32 %v8696, %v8819
      %v8862 = vadd.f32 %v8697, %v8822
      %v8863 = vadd.f32 %v8698, %v8825
      %v8864 = vadd.f32 %v8699, %v8828
      %v8865 = vadd.f32 %v8700, %v8831
      %v8866 = vadd.f32 %v8701, %v8834
      %v8867 = vld [vmem:[#allocation4 + $0x11] sm:$0xff]
      %v8868 = vld [vmem:[#allocation4 + $0x19] sm:$0xff]
      %v8869 = vld [vmem:[#allocation4 + $0x41] sm:$0xff]
      %v8870 = vld [vmem:[#allocation4 + $0x49] sm:$0xff]
      %v8871 = vld [vmem:[#allocation4 + $0x71] sm:$0xff]
      %v8872 = vld [vmem:[#allocation4 + $0x79] sm:$0xff]
      %v8873 = vld [vmem:[#allocation4 + $0xa1] sm:$0xff]
      %v8874 = vld [vmem:[#allocation4 + $0xa9] sm:$0xff]
      %v8875 = vld [vmem:[#allocation4 + $0xd1] sm:$0xff]
      %v8876 = vld [vmem:[#allocation4 + $0xd9] sm:$0xff]
      %v8877 = vld [vmem:[#allocation4 + $0x101] sm:$0xff]
      %v8878 = vld [vmem:[#allocation4 + $0x109] sm:$0xff]
      %v8879 = vld [vmem:[#allocation4 + $0x131] sm:$0xff]
      %v8880 = vld [vmem:[#allocation4 + $0x139] sm:$0xff]
      %v8881 = vld [vmem:[#allocation4 + $0x161] sm:$0xff]
      %v8882 = vld [vmem:[#allocation4 + $0x169] sm:$0xff]
      %v8883 = vld [vmem:[#allocation4 + $0x191] sm:$0xff]
      %v8884 = vld [vmem:[#allocation4 + $0x199] sm:$0xff]
      %v8885 = vld [vmem:[#allocation4 + $0x1c1] sm:$0xff]
      %v8886 = vld [vmem:[#allocation4 + $0x1c9] sm:$0xff]
      %v8887 = vld [vmem:[#allocation4 + $0x1f1] sm:$0xff]
      %v8888 = vld [vmem:[#allocation4 + $0x1f9] sm:$0xff]
      %v8889 = vld [vmem:[#allocation4 + $0x221] sm:$0xff]
      %v8890 = vld [vmem:[#allocation4 + $0x229] sm:$0xff]
      %v8891 = vld [vmem:[#allocation4 + $0x251] sm:$0xff]
      %v8892 = vld [vmem:[#allocation4 + $0x259] sm:$0xff]
      %v8893 = vld [vmem:[#allocation4 + $0x281] sm:$0xff]
      %v8894 = vld [vmem:[#allocation4 + $0x289] sm:$0xff]
      %v8895 = vld [vmem:[#allocation4 + $0x2b1] sm:$0xff]
      %v8896 = vld [vmem:[#allocation4 + $0x2b9] sm:$0xff]
      %v8897 = vld [vmem:[#allocation4 + $0x2e1] sm:$0xff]
      %v8898 = vld [vmem:[#allocation4 + $0x2e9] sm:$0xff]
      %v8899 = vld [vmem:[#allocation4 + $0x311] sm:$0xff]
      %v8900 = vld [vmem:[#allocation4 + $0x319] sm:$0xff]
      %v8901 = vld [vmem:[#allocation4 + $0x341] sm:$0xff]
      %v8902 = vld [vmem:[#allocation4 + $0x349] sm:$0xff]
      %s8903 = scalar_lea.vmem %s7, 2
      %v8904 = vld [vmem:[%s8903] sm:$0x1]
      %v8906 = vperm.slane %v8904, 0
      %v8908 = vmul.f32 %v8867, %v8906
      %v8909 = vmul.f32 %v8868, %v8906
      %v8910 = vmul.f32 %v8869, %v8906
      %v8911 = vmul.f32 %v8870, %v8906
      %v8912 = vmul.f32 %v8871, %v8906
      %v8913 = vmul.f32 %v8872, %v8906
      %v8914 = vmul.f32 %v8873, %v8906
      %v8915 = vmul.f32 %v8874, %v8906
      %v8916 = vmul.f32 %v8875, %v8906
      %v8917 = vmul.f32 %v8876, %v8906
      %v8918 = vmul.f32 %v8877, %v8906
      %v8919 = vmul.f32 %v8878, %v8906
      %v8920 = vmul.f32 %v8879, %v8906
      %v8921 = vmul.f32 %v8880, %v8906
      %v8922 = vmul.f32 %v8881, %v8906
      %v8923 = vmul.f32 %v8882, %v8906
      %v8924 = vmul.f32 %v8883, %v8906
      %v8925 = vmul.f32 %v8884, %v8906
      %v8926 = vmul.f32 %v8885, %v8906
      %v8927 = vmul.f32 %v8886, %v8906
      %v8928 = vmul.f32 %v8887, %v8906
      %v8929 = vmul.f32 %v8888, %v8906
      %v8930 = vmul.f32 %v8889, %v8906
      %v8931 = vmul.f32 %v8890, %v8906
      %v8932 = vmul.f32 %v8891, %v8906
      %v8933 = vmul.f32 %v8892, %v8906
      %v8934 = vmul.f32 %v8893, %v8906
      %v8935 = vmul.f32 %v8894, %v8906
      %v8936 = vmul.f32 %v8895, %v8906
      %v8937 = vmul.f32 %v8896, %v8906
      %v8938 = vmul.f32 %v8897, %v8906
      %v8939 = vmul.f32 %v8898, %v8906
      %v8940 = vsel %vm489, %v8908, 0.0
      %8941 = vadd.xlane.f32.xlu0 %v8940
      %v8942 = vpop.xlane.xlu0 %8941
      %v8943 = vsel %vm489, %v8909, 0.0
      %8944 = vadd.xlane.f32.xlu0 %v8943
      %v8945 = vpop.xlane.xlu0 %8944
      %v8946 = vsel %vm489, %v8910, 0.0
      %8947 = vadd.xlane.f32.xlu0 %v8946
      %v8948 = vpop.xlane.xlu0 %8947
      %v8949 = vsel %vm489, %v8911, 0.0
      %8950 = vadd.xlane.f32.xlu0 %v8949
      %v8951 = vpop.xlane.xlu0 %8950
      %v8952 = vsel %vm489, %v8912, 0.0
      %8953 = vadd.xlane.f32.xlu0 %v8952
      %v8954 = vpop.xlane.xlu0 %8953
      %v8955 = vsel %vm489, %v8913, 0.0
      %8956 = vadd.xlane.f32.xlu0 %v8955
      %v8957 = vpop.xlane.xlu0 %8956
      %v8958 = vsel %vm489, %v8914, 0.0
      %8959 = vadd.xlane.f32.xlu0 %v8958
      %v8960 = vpop.xlane.xlu0 %8959
      %v8961 = vsel %vm489, %v8915, 0.0
      %8962 = vadd.xlane.f32.xlu0 %v8961
      %v8963 = vpop.xlane.xlu0 %8962
      %v8964 = vsel %vm489, %v8916, 0.0
      %8965 = vadd.xlane.f32.xlu0 %v8964
      %v8966 = vpop.xlane.xlu0 %8965
      %v8967 = vsel %vm489, %v8917, 0.0
      %8968 = vadd.xlane.f32.xlu0 %v8967
      %v8969 = vpop.xlane.xlu0 %8968
      %v8970 = vsel %vm489, %v8918, 0.0
      %8971 = vadd.xlane.f32.xlu0 %v8970
      %v8972 = vpop.xlane.xlu0 %8971
      %v8973 = vsel %vm489, %v8919, 0.0
      %8974 = vadd.xlane.f32.xlu0 %v8973
      %v8975 = vpop.xlane.xlu0 %8974
      %v8976 = vsel %vm489, %v8920, 0.0
      %8977 = vadd.xlane.f32.xlu0 %v8976
      %v8978 = vpop.xlane.xlu0 %8977
      %v8979 = vsel %vm489, %v8921, 0.0
      %8980 = vadd.xlane.f32.xlu0 %v8979
      %v8981 = vpop.xlane.xlu0 %8980
      %v8982 = vsel %vm489, %v8922, 0.0
      %8983 = vadd.xlane.f32.xlu0 %v8982
      %v8984 = vpop.xlane.xlu0 %8983
      %v8985 = vsel %vm489, %v8923, 0.0
      %8986 = vadd.xlane.f32.xlu0 %v8985
      %v8987 = vpop.xlane.xlu0 %8986
      %v8988 = vsel %vm489, %v8924, 0.0
      %8989 = vadd.xlane.f32.xlu0 %v8988
      %v8990 = vpop.xlane.xlu0 %8989
      %v8991 = vsel %vm489, %v8925, 0.0
      %8992 = vadd.xlane.f32.xlu0 %v8991
      %v8993 = vpop.xlane.xlu0 %8992
      %v8994 = vsel %vm489, %v8926, 0.0
      %8995 = vadd.xlane.f32.xlu0 %v8994
      %v8996 = vpop.xlane.xlu0 %8995
      %v8997 = vsel %vm489, %v8927, 0.0
      %8998 = vadd.xlane.f32.xlu0 %v8997
      %v8999 = vpop.xlane.xlu0 %8998
      %v9000 = vsel %vm489, %v8928, 0.0
      %9001 = vadd.xlane.f32.xlu0 %v9000
      %v9002 = vpop.xlane.xlu0 %9001
      %v9003 = vsel %vm489, %v8929, 0.0
      %9004 = vadd.xlane.f32.xlu0 %v9003
      %v9005 = vpop.xlane.xlu0 %9004
      %v9006 = vsel %vm489, %v8930, 0.0
      %9007 = vadd.xlane.f32.xlu0 %v9006
      %v9008 = vpop.xlane.xlu0 %9007
      %v9009 = vsel %vm489, %v8931, 0.0
      %9010 = vadd.xlane.f32.xlu0 %v9009
      %v9011 = vpop.xlane.xlu0 %9010
      %v9012 = vsel %vm489, %v8932, 0.0
      %9013 = vadd.xlane.f32.xlu0 %v9012
      %v9014 = vpop.xlane.xlu0 %9013
      %v9015 = vsel %vm489, %v8933, 0.0
      %9016 = vadd.xlane.f32.xlu0 %v9015
      %v9017 = vpop.xlane.xlu0 %9016
      %v9018 = vsel %vm489, %v8934, 0.0
      %9019 = vadd.xlane.f32.xlu0 %v9018
      %v9020 = vpop.xlane.xlu0 %9019
      %v9021 = vsel %vm489, %v8935, 0.0
      %9022 = vadd.xlane.f32.xlu0 %v9021
      %v9023 = vpop.xlane.xlu0 %9022
      %v9024 = vsel %vm489, %v8936, 0.0
      %9025 = vadd.xlane.f32.xlu0 %v9024
      %v9026 = vpop.xlane.xlu0 %9025
      %v9027 = vsel %vm489, %v8937, 0.0
      %9028 = vadd.xlane.f32.xlu0 %v9027
      %v9029 = vpop.xlane.xlu0 %9028
      %v9030 = vsel %vm489, %v8938, 0.0
      %9031 = vadd.xlane.f32.xlu0 %v9030
      %v9032 = vpop.xlane.xlu0 %9031
      %v9033 = vsel %vm489, %v8939, 0.0
      %9034 = vadd.xlane.f32.xlu0 %v9033
      %v9035 = vpop.xlane.xlu0 %9034
      %v9036 = vadd.f32 %v8835, %v8942
      %v9037 = vadd.f32 %v8836, %v8945
      %v9038 = vadd.f32 %v8837, %v8948
      %v9039 = vadd.f32 %v8838, %v8951
      %v9040 = vadd.f32 %v8839, %v8954
      %v9041 = vadd.f32 %v8840, %v8957
      %v9042 = vadd.f32 %v8841, %v8960
      %v9043 = vadd.f32 %v8842, %v8963
      %v9044 = vadd.f32 %v8843, %v8966
      %v9045 = vadd.f32 %v8844, %v8969
      %v9046 = vadd.f32 %v8845, %v8972
      %v9047 = vadd.f32 %v8846, %v8975
      %v9048 = vadd.f32 %v8847, %v8978
      %v9049 = vadd.f32 %v8848, %v8981
      %v9050 = vadd.f32 %v8849, %v8984
      %v9051 = vadd.f32 %v8850, %v8987
      %v9052 = vadd.f32 %v8851, %v8990
      %v9053 = vadd.f32 %v8852, %v8993
      %v9054 = vadd.f32 %v8853, %v8996
      %v9055 = vadd.f32 %v8854, %v8999
      %v9056 = vadd.f32 %v8855, %v9002
      %v9057 = vadd.f32 %v8856, %v9005
      %v9058 = vadd.f32 %v8857, %v9008
      %v9059 = vadd.f32 %v8858, %v9011
      %v9060 = vadd.f32 %v8859, %v9014
      %v9061 = vadd.f32 %v8860, %v9017
      %v9062 = vadd.f32 %v8861, %v9020
      %v9063 = vadd.f32 %v8862, %v9023
      %v9064 = vadd.f32 %v8863, %v9026
      %v9065 = vadd.f32 %v8864, %v9029
      %v9066 = vadd.f32 %v8865, %v9032
      %v9067 = vadd.f32 %v8866, %v9035
      %s9068 = scalar_lea.vmem %s7, 5
      %v9069 = vld [vmem:[%s9068] sm:$0x1]
      %v9071 = vperm.slane %v9069, 0
      %v9073 = vmul.f32 %v8869, %v9071
      %v9074 = vmul.f32 %v8870, %v9071
      %v9075 = vmul.f32 %v8871, %v9071
      %v9076 = vmul.f32 %v8872, %v9071
      %v9077 = vmul.f32 %v8873, %v9071
      %v9078 = vmul.f32 %v8874, %v9071
      %v9079 = vmul.f32 %v8875, %v9071
      %v9080 = vmul.f32 %v8876, %v9071
      %v9081 = vmul.f32 %v8877, %v9071
      %v9082 = vmul.f32 %v8878, %v9071
      %v9083 = vmul.f32 %v8879, %v9071
      %v9084 = vmul.f32 %v8880, %v9071
      %v9085 = vmul.f32 %v8881, %v9071
      %v9086 = vmul.f32 %v8882, %v9071
      %v9087 = vmul.f32 %v8883, %v9071
      %v9088 = vmul.f32 %v8884, %v9071
      %v9089 = vmul.f32 %v8885, %v9071
      %v9090 = vmul.f32 %v8886, %v9071
      %v9091 = vmul.f32 %v8887, %v9071
      %v9092 = vmul.f32 %v8888, %v9071
      %v9093 = vmul.f32 %v8889, %v9071
      %v9094 = vmul.f32 %v8890, %v9071
      %v9095 = vmul.f32 %v8891, %v9071
      %v9096 = vmul.f32 %v8892, %v9071
      %v9097 = vmul.f32 %v8893, %v9071
      %v9098 = vmul.f32 %v8894, %v9071
      %v9099 = vmul.f32 %v8895, %v9071
      %v9100 = vmul.f32 %v8896, %v9071
      %v9101 = vmul.f32 %v8897, %v9071
      %v9102 = vmul.f32 %v8898, %v9071
      %v9103 = vmul.f32 %v8899, %v9071
      %v9104 = vmul.f32 %v8900, %v9071
      %v9105 = vsel %vm489, %v9073, 0.0
      %9106 = vadd.xlane.f32.xlu0 %v9105
      %v9107 = vpop.xlane.xlu0 %9106
      %v9108 = vsel %vm489, %v9074, 0.0
      %9109 = vadd.xlane.f32.xlu0 %v9108
      %v9110 = vpop.xlane.xlu0 %9109
      %v9111 = vsel %vm489, %v9075, 0.0
      %9112 = vadd.xlane.f32.xlu0 %v9111
      %v9113 = vpop.xlane.xlu0 %9112
      %v9114 = vsel %vm489, %v9076, 0.0
      %9115 = vadd.xlane.f32.xlu0 %v9114
      %v9116 = vpop.xlane.xlu0 %9115
      %v9117 = vsel %vm489, %v9077, 0.0
      %9118 = vadd.xlane.f32.xlu0 %v9117
      %v9119 = vpop.xlane.xlu0 %9118
      %v9120 = vsel %vm489, %v9078, 0.0
      %9121 = vadd.xlane.f32.xlu0 %v9120
      %v9122 = vpop.xlane.xlu0 %9121
      %v9123 = vsel %vm489, %v9079, 0.0
      %9124 = vadd.xlane.f32.xlu0 %v9123
      %v9125 = vpop.xlane.xlu0 %9124
      %v9126 = vsel %vm489, %v9080, 0.0
      %9127 = vadd.xlane.f32.xlu0 %v9126
      %v9128 = vpop.xlane.xlu0 %9127
      %v9129 = vsel %vm489, %v9081, 0.0
      %9130 = vadd.xlane.f32.xlu0 %v9129
      %v9131 = vpop.xlane.xlu0 %9130
      %v9132 = vsel %vm489, %v9082, 0.0
      %9133 = vadd.xlane.f32.xlu0 %v9132
      %v9134 = vpop.xlane.xlu0 %9133
      %v9135 = vsel %vm489, %v9083, 0.0
      %9136 = vadd.xlane.f32.xlu0 %v9135
      %v9137 = vpop.xlane.xlu0 %9136
      %v9138 = vsel %vm489, %v9084, 0.0
      %9139 = vadd.xlane.f32.xlu0 %v9138
      %v9140 = vpop.xlane.xlu0 %9139
      %v9141 = vsel %vm489, %v9085, 0.0
      %9142 = vadd.xlane.f32.xlu0 %v9141
      %v9143 = vpop.xlane.xlu0 %9142
      %v9144 = vsel %vm489, %v9086, 0.0
      %9145 = vadd.xlane.f32.xlu0 %v9144
      %v9146 = vpop.xlane.xlu0 %9145
      %v9147 = vsel %vm489, %v9087, 0.0
      %9148 = vadd.xlane.f32.xlu0 %v9147
      %v9149 = vpop.xlane.xlu0 %9148
      %v9150 = vsel %vm489, %v9088, 0.0
      %9151 = vadd.xlane.f32.xlu0 %v9150
      %v9152 = vpop.xlane.xlu0 %9151
      %v9153 = vsel %vm489, %v9089, 0.0
      %9154 = vadd.xlane.f32.xlu0 %v9153
      %v9155 = vpop.xlane.xlu0 %9154
      %v9156 = vsel %vm489, %v9090, 0.0
      %9157 = vadd.xlane.f32.xlu0 %v9156
      %v9158 = vpop.xlane.xlu0 %9157
      %v9159 = vsel %vm489, %v9091, 0.0
      %9160 = vadd.xlane.f32.xlu0 %v9159
      %v9161 = vpop.xlane.xlu0 %9160
      %v9162 = vsel %vm489, %v9092, 0.0
      %9163 = vadd.xlane.f32.xlu0 %v9162
      %v9164 = vpop.xlane.xlu0 %9163
      %v9165 = vsel %vm489, %v9093, 0.0
      %9166 = vadd.xlane.f32.xlu0 %v9165
      %v9167 = vpop.xlane.xlu0 %9166
      %v9168 = vsel %vm489, %v9094, 0.0
      %9169 = vadd.xlane.f32.xlu0 %v9168
      %v9170 = vpop.xlane.xlu0 %9169
      %v9171 = vsel %vm489, %v9095, 0.0
      %9172 = vadd.xlane.f32.xlu0 %v9171
      %v9173 = vpop.xlane.xlu0 %9172
      %v9174 = vsel %vm489, %v9096, 0.0
      %9175 = vadd.xlane.f32.xlu0 %v9174
      %v9176 = vpop.xlane.xlu0 %9175
      %v9177 = vsel %vm489, %v9097, 0.0
      %9178 = vadd.xlane.f32.xlu0 %v9177
      %v9179 = vpop.xlane.xlu0 %9178
      %v9180 = vsel %vm489, %v9098, 0.0
      %9181 = vadd.xlane.f32.xlu0 %v9180
      %v9182 = vpop.xlane.xlu0 %9181
      %v9183 = vsel %vm489, %v9099, 0.0
      %9184 = vadd.xlane.f32.xlu0 %v9183
      %v9185 = vpop.xlane.xlu0 %9184
      %v9186 = vsel %vm489, %v9100, 0.0
      %9187 = vadd.xlane.f32.xlu0 %v9186
      %v9188 = vpop.xlane.xlu0 %9187
      %v9189 = vsel %vm489, %v9101, 0.0
      %9190 = vadd.xlane.f32.xlu0 %v9189
      %v9191 = vpop.xlane.xlu0 %9190
      %v9192 = vsel %vm489, %v9102, 0.0
      %9193 = vadd.xlane.f32.xlu0 %v9192
      %v9194 = vpop.xlane.xlu0 %9193
      %v9195 = vsel %vm489, %v9103, 0.0
      %9196 = vadd.xlane.f32.xlu0 %v9195
      %v9197 = vpop.xlane.xlu0 %9196
      %v9198 = vsel %vm489, %v9104, 0.0
      %9199 = vadd.xlane.f32.xlu0 %v9198
      %v9200 = vpop.xlane.xlu0 %9199
      %v9201 = vadd.f32 %v9036, %v9107
      %v9202 = vadd.f32 %v9037, %v9110
      %v9203 = vadd.f32 %v9038, %v9113
      %v9204 = vadd.f32 %v9039, %v9116
      %v9205 = vadd.f32 %v9040, %v9119
      %v9206 = vadd.f32 %v9041, %v9122
      %v9207 = vadd.f32 %v9042, %v9125
      %v9208 = vadd.f32 %v9043, %v9128
      %v9209 = vadd.f32 %v9044, %v9131
      %v9210 = vadd.f32 %v9045, %v9134
      %v9211 = vadd.f32 %v9046, %v9137
      %v9212 = vadd.f32 %v9047, %v9140
      %v9213 = vadd.f32 %v9048, %v9143
      %v9214 = vadd.f32 %v9049, %v9146
      %v9215 = vadd.f32 %v9050, %v9149
      %v9216 = vadd.f32 %v9051, %v9152
      %v9217 = vadd.f32 %v9052, %v9155
      %v9218 = vadd.f32 %v9053, %v9158
      %v9219 = vadd.f32 %v9054, %v9161
      %v9220 = vadd.f32 %v9055, %v9164
      %v9221 = vadd.f32 %v9056, %v9167
      %v9222 = vadd.f32 %v9057, %v9170
      %v9223 = vadd.f32 %v9058, %v9173
      %v9224 = vadd.f32 %v9059, %v9176
      %v9225 = vadd.f32 %v9060, %v9179
      %v9226 = vadd.f32 %v9061, %v9182
      %v9227 = vadd.f32 %v9062, %v9185
      %v9228 = vadd.f32 %v9063, %v9188
      %v9229 = vadd.f32 %v9064, %v9191
      %v9230 = vadd.f32 %v9065, %v9194
      %v9231 = vadd.f32 %v9066, %v9197
      %v9232 = vadd.f32 %v9067, %v9200
      %s9233 = scalar_lea.vmem %s7, 8
      %v9234 = vld [vmem:[%s9233] sm:$0x1]
      %v9236 = vperm.slane %v9234, 0
      %v9238 = vmul.f32 %v8871, %v9236
      %v9239 = vmul.f32 %v8872, %v9236
      %v9240 = vmul.f32 %v8873, %v9236
      %v9241 = vmul.f32 %v8874, %v9236
      %v9242 = vmul.f32 %v8875, %v9236
      %v9243 = vmul.f32 %v8876, %v9236
      %v9244 = vmul.f32 %v8877, %v9236
      %v9245 = vmul.f32 %v8878, %v9236
      %v9246 = vmul.f32 %v8879, %v9236
      %v9247 = vmul.f32 %v8880, %v9236
      %v9248 = vmul.f32 %v8881, %v9236
      %v9249 = vmul.f32 %v8882, %v9236
      %v9250 = vmul.f32 %v8883, %v9236
      %v9251 = vmul.f32 %v8884, %v9236
      %v9252 = vmul.f32 %v8885, %v9236
      %v9253 = vmul.f32 %v8886, %v9236
      %v9254 = vmul.f32 %v8887, %v9236
      %v9255 = vmul.f32 %v8888, %v9236
      %v9256 = vmul.f32 %v8889, %v9236
      %v9257 = vmul.f32 %v8890, %v9236
      %v9258 = vmul.f32 %v8891, %v9236
      %v9259 = vmul.f32 %v8892, %v9236
      %v9260 = vmul.f32 %v8893, %v9236
      %v9261 = vmul.f32 %v8894, %v9236
      %v9262 = vmul.f32 %v8895, %v9236
      %v9263 = vmul.f32 %v8896, %v9236
      %v9264 = vmul.f32 %v8897, %v9236
      %v9265 = vmul.f32 %v8898, %v9236
      %v9266 = vmul.f32 %v8899, %v9236
      %v9267 = vmul.f32 %v8900, %v9236
      %v9268 = vmul.f32 %v8901, %v9236
      %v9269 = vmul.f32 %v8902, %v9236
      %v9270 = vsel %vm489, %v9238, 0.0
      %9271 = vadd.xlane.f32.xlu0 %v9270
      %v9272 = vpop.xlane.xlu0 %9271
      %v9273 = vsel %vm489, %v9239, 0.0
      %9274 = vadd.xlane.f32.xlu0 %v9273
      %v9275 = vpop.xlane.xlu0 %9274
      %v9276 = vsel %vm489, %v9240, 0.0
      %9277 = vadd.xlane.f32.xlu0 %v9276
      %v9278 = vpop.xlane.xlu0 %9277
      %v9279 = vsel %vm489, %v9241, 0.0
      %9280 = vadd.xlane.f32.xlu0 %v9279
      %v9281 = vpop.xlane.xlu0 %9280
      %v9282 = vsel %vm489, %v9242, 0.0
      %9283 = vadd.xlane.f32.xlu0 %v9282
      %v9284 = vpop.xlane.xlu0 %9283
      %v9285 = vsel %vm489, %v9243, 0.0
      %9286 = vadd.xlane.f32.xlu0 %v9285
      %v9287 = vpop.xlane.xlu0 %9286
      %v9288 = vsel %vm489, %v9244, 0.0
      %9289 = vadd.xlane.f32.xlu0 %v9288
      %v9290 = vpop.xlane.xlu0 %9289
      %v9291 = vsel %vm489, %v9245, 0.0
      %9292 = vadd.xlane.f32.xlu0 %v9291
      %v9293 = vpop.xlane.xlu0 %9292
      %v9294 = vsel %vm489, %v9246, 0.0
      %9295 = vadd.xlane.f32.xlu0 %v9294
      %v9296 = vpop.xlane.xlu0 %9295
      %v9297 = vsel %vm489, %v9247, 0.0
      %9298 = vadd.xlane.f32.xlu0 %v9297
      %v9299 = vpop.xlane.xlu0 %9298
      %v9300 = vsel %vm489, %v9248, 0.0
      %9301 = vadd.xlane.f32.xlu0 %v9300
      %v9302 = vpop.xlane.xlu0 %9301
      %v9303 = vsel %vm489, %v9249, 0.0
      %9304 = vadd.xlane.f32.xlu0 %v9303
      %v9305 = vpop.xlane.xlu0 %9304
      %v9306 = vsel %vm489, %v9250, 0.0
      %9307 = vadd.xlane.f32.xlu0 %v9306
      %v9308 = vpop.xlane.xlu0 %9307
      %v9309 = vsel %vm489, %v9251, 0.0
      %9310 = vadd.xlane.f32.xlu0 %v9309
      %v9311 = vpop.xlane.xlu0 %9310
      %v9312 = vsel %vm489, %v9252, 0.0
      %9313 = vadd.xlane.f32.xlu0 %v9312
      %v9314 = vpop.xlane.xlu0 %9313
      %v9315 = vsel %vm489, %v9253, 0.0
      %9316 = vadd.xlane.f32.xlu0 %v9315
      %v9317 = vpop.xlane.xlu0 %9316
      %v9318 = vsel %vm489, %v9254, 0.0
      %9319 = vadd.xlane.f32.xlu0 %v9318
      %v9320 = vpop.xlane.xlu0 %9319
      %v9321 = vsel %vm489, %v9255, 0.0
      %9322 = vadd.xlane.f32.xlu0 %v9321
      %v9323 = vpop.xlane.xlu0 %9322
      %v9324 = vsel %vm489, %v9256, 0.0
      %9325 = vadd.xlane.f32.xlu0 %v9324
      %v9326 = vpop.xlane.xlu0 %9325
      %v9327 = vsel %vm489, %v9257, 0.0
      %9328 = vadd.xlane.f32.xlu0 %v9327
      %v9329 = vpop.xlane.xlu0 %9328
      %v9330 = vsel %vm489, %v9258, 0.0
      %9331 = vadd.xlane.f32.xlu0 %v9330
      %v9332 = vpop.xlane.xlu0 %9331
      %v9333 = vsel %vm489, %v9259, 0.0
      %9334 = vadd.xlane.f32.xlu0 %v9333
      %v9335 = vpop.xlane.xlu0 %9334
      %v9336 = vsel %vm489, %v9260, 0.0
      %9337 = vadd.xlane.f32.xlu0 %v9336
      %v9338 = vpop.xlane.xlu0 %9337
      %v9339 = vsel %vm489, %v9261, 0.0
      %9340 = vadd.xlane.f32.xlu0 %v9339
      %v9341 = vpop.xlane.xlu0 %9340
      %v9342 = vsel %vm489, %v9262, 0.0
      %9343 = vadd.xlane.f32.xlu0 %v9342
      %v9344 = vpop.xlane.xlu0 %9343
      %v9345 = vsel %vm489, %v9263, 0.0
      %9346 = vadd.xlane.f32.xlu0 %v9345
      %v9347 = vpop.xlane.xlu0 %9346
      %v9348 = vsel %vm489, %v9264, 0.0
      %9349 = vadd.xlane.f32.xlu0 %v9348
      %v9350 = vpop.xlane.xlu0 %9349
      %v9351 = vsel %vm489, %v9265, 0.0
      %9352 = vadd.xlane.f32.xlu0 %v9351
      %v9353 = vpop.xlane.xlu0 %9352
      %v9354 = vsel %vm489, %v9266, 0.0
      %9355 = vadd.xlane.f32.xlu0 %v9354
      %v9356 = vpop.xlane.xlu0 %9355
      %v9357 = vsel %vm489, %v9267, 0.0
      %9358 = vadd.xlane.f32.xlu0 %v9357
      %v9359 = vpop.xlane.xlu0 %9358
      %v9360 = vsel %vm489, %v9268, 0.0
      %9361 = vadd.xlane.f32.xlu0 %v9360
      %v9362 = vpop.xlane.xlu0 %9361
      %v9363 = vsel %vm489, %v9269, 0.0
      %9364 = vadd.xlane.f32.xlu0 %v9363
      %v9365 = vpop.xlane.xlu0 %9364
      %v9366 = vadd.f32 %v9201, %v9272
      %v9367 = vadd.f32 %v9202, %v9275
      %v9368 = vadd.f32 %v9203, %v9278
      %v9369 = vadd.f32 %v9204, %v9281
      %v9370 = vadd.f32 %v9205, %v9284
      %v9371 = vadd.f32 %v9206, %v9287
      %v9372 = vadd.f32 %v9207, %v9290
      %v9373 = vadd.f32 %v9208, %v9293
      %v9374 = vadd.f32 %v9209, %v9296
      %v9375 = vadd.f32 %v9210, %v9299
      %v9376 = vadd.f32 %v9211, %v9302
      %v9377 = vadd.f32 %v9212, %v9305
      %v9378 = vadd.f32 %v9213, %v9308
      %v9379 = vadd.f32 %v9214, %v9311
      %v9380 = vadd.f32 %v9215, %v9314
      %v9381 = vadd.f32 %v9216, %v9317
      %v9382 = vadd.f32 %v9217, %v9320
      %v9383 = vadd.f32 %v9218, %v9323
      %v9384 = vadd.f32 %v9219, %v9326
      %v9385 = vadd.f32 %v9220, %v9329
      %v9386 = vadd.f32 %v9221, %v9332
      %v9387 = vadd.f32 %v9222, %v9335
      %v9388 = vadd.f32 %v9223, %v9338
      %v9389 = vadd.f32 %v9224, %v9341
      %v9390 = vadd.f32 %v9225, %v9344
      %v9391 = vadd.f32 %v9226, %v9347
      %v9392 = vadd.f32 %v9227, %v9350
      %v9393 = vadd.f32 %v9228, %v9353
      %v9394 = vadd.f32 %v9229, %v9356
      %v9395 = vadd.f32 %v9230, %v9359
      %v9396 = vadd.f32 %v9231, %v9362
      %v9397 = vadd.f32 %v9232, %v9365
      %v9398 = vld [vmem:[#allocation5] sm:$0x1]
      %v9400 = vperm.slane %v9398, 0
      %9401 = vset.pattern.permute.xlu0 0
      %9402 = vperm.xlu0 %9401, %v9400
      %v9403 = vpop.permute.xlu0 %9402
      %v9405 = vadd.f32 %v9366, %v9403
      %v9406 = vadd.f32 %v9367, %v9403
      %v9407 = vadd.f32 %v9368, %v9403
      %v9408 = vadd.f32 %v9369, %v9403
      %v9409 = vadd.f32 %v9370, %v9403
      %v9410 = vadd.f32 %v9371, %v9403
      %v9411 = vadd.f32 %v9372, %v9403
      %v9412 = vadd.f32 %v9373, %v9403
      %v9413 = vadd.f32 %v9374, %v9403
      %v9414 = vadd.f32 %v9375, %v9403
      %v9415 = vadd.f32 %v9376, %v9403
      %v9416 = vadd.f32 %v9377, %v9403
      %v9417 = vadd.f32 %v9378, %v9403
      %v9418 = vadd.f32 %v9379, %v9403
      %v9419 = vadd.f32 %v9380, %v9403
      %v9420 = vadd.f32 %v9381, %v9403
      %v9421 = vadd.f32 %v9382, %v9403
      %v9422 = vadd.f32 %v9383, %v9403
      %v9423 = vadd.f32 %v9384, %v9403
      %v9424 = vadd.f32 %v9385, %v9403
      %v9425 = vadd.f32 %v9386, %v9403
      %v9426 = vadd.f32 %v9387, %v9403
      %v9427 = vadd.f32 %v9388, %v9403
      %v9428 = vadd.f32 %v9389, %v9403
      %v9429 = vadd.f32 %v9390, %v9403
      %v9430 = vadd.f32 %v9391, %v9403
      %v9431 = vadd.f32 %v9392, %v9403
      %v9432 = vadd.f32 %v9393, %v9403
      %v9433 = vadd.f32 %v9394, %v9403
      %v9434 = vadd.f32 %v9395, %v9403
      %v9435 = vadd.f32 %v9396, %v9403
      %v9436 = vadd.f32 %v9397, %v9403
      %v9437 = vxor.u32 %v9405, 2147483648
      %v9438 = vxor.u32 %v9406, 2147483648
      %v9439 = vxor.u32 %v9407, 2147483648
      %v9440 = vxor.u32 %v9408, 2147483648
      %v9441 = vxor.u32 %v9409, 2147483648
      %v9442 = vxor.u32 %v9410, 2147483648
      %v9443 = vxor.u32 %v9411, 2147483648
      %v9444 = vxor.u32 %v9412, 2147483648
      %v9445 = vxor.u32 %v9413, 2147483648
      %v9446 = vxor.u32 %v9414, 2147483648
      %v9447 = vxor.u32 %v9415, 2147483648
      %v9448 = vxor.u32 %v9416, 2147483648
      %v9449 = vxor.u32 %v9417, 2147483648
      %v9450 = vxor.u32 %v9418, 2147483648
      %v9451 = vxor.u32 %v9419, 2147483648
      %v9452 = vxor.u32 %v9420, 2147483648
      %v9453 = vxor.u32 %v9421, 2147483648
      %v9454 = vxor.u32 %v9422, 2147483648
      %v9455 = vxor.u32 %v9423, 2147483648
      %v9456 = vxor.u32 %v9424, 2147483648
      %v9457 = vxor.u32 %v9425, 2147483648
      %v9458 = vxor.u32 %v9426, 2147483648
      %v9459 = vxor.u32 %v9427, 2147483648
      %v9460 = vxor.u32 %v9428, 2147483648
      %v9461 = vxor.u32 %v9429, 2147483648
      %v9462 = vxor.u32 %v9430, 2147483648
      %v9463 = vxor.u32 %v9431, 2147483648
      %v9464 = vxor.u32 %v9432, 2147483648
      %v9465 = vxor.u32 %v9433, 2147483648
      %v9466 = vxor.u32 %v9434, 2147483648
      %v9467 = vxor.u32 %v9435, 2147483648
      %v9468 = vxor.u32 %v9436, 2147483648
      %v9469 = vmul.f32 %v9437, 1.442695
      %v9470 = vpow.pop %v9469
      %v9471 = vmul.f32 %v9438, 1.442695
      %v9472 = vpow.pop %v9471
      %v9473 = vmul.f32 %v9439, 1.442695
      %v9474 = vpow.pop %v9473
      %v9475 = vmul.f32 %v9440, 1.442695
      %v9476 = vpow.pop %v9475
      %v9477 = vmul.f32 %v9441, 1.442695
      %v9478 = vpow.pop %v9477
      %v9479 = vmul.f32 %v9442, 1.442695
      %v9480 = vpow.pop %v9479
      %v9481 = vmul.f32 %v9443, 1.442695
      %v9482 = vpow.pop %v9481
      %v9483 = vmul.f32 %v9444, 1.442695
      %v9484 = vpow.pop %v9483
      %v9485 = vmul.f32 %v9445, 1.442695
      %v9486 = vpow.pop %v9485
      %v9487 = vmul.f32 %v9446, 1.442695
      %v9488 = vpow.pop %v9487
      %v9489 = vmul.f32 %v9447, 1.442695
      %v9490 = vpow.pop %v9489
      %v9491 = vmul.f32 %v9448, 1.442695
      %v9492 = vpow.pop %v9491
      %v9493 = vmul.f32 %v9449, 1.442695
      %v9494 = vpow.pop %v9493
      %v9495 = vmul.f32 %v9450, 1.442695
      %v9496 = vpow.pop %v9495
      %v9497 = vmul.f32 %v9451, 1.442695
      %v9498 = vpow.pop %v9497
      %v9499 = vmul.f32 %v9452, 1.442695
      %v9500 = vpow.pop %v9499
      %v9501 = vmul.f32 %v9453, 1.442695
      %v9502 = vpow.pop %v9501
      %v9503 = vmul.f32 %v9454, 1.442695
      %v9504 = vpow.pop %v9503
      %v9505 = vmul.f32 %v9455, 1.442695
      %v9506 = vpow.pop %v9505
      %v9507 = vmul.f32 %v9456, 1.442695
      %v9508 = vpow.pop %v9507
      %v9509 = vmul.f32 %v9457, 1.442695
      %v9510 = vpow.pop %v9509
      %v9511 = vmul.f32 %v9458, 1.442695
      %v9512 = vpow.pop %v9511
      %v9513 = vmul.f32 %v9459, 1.442695
      %v9514 = vpow.pop %v9513
      %v9515 = vmul.f32 %v9460, 1.442695
      %v9516 = vpow.pop %v9515
      %v9517 = vmul.f32 %v9461, 1.442695
      %v9518 = vpow.pop %v9517
      %v9519 = vmul.f32 %v9462, 1.442695
      %v9520 = vpow.pop %v9519
      %v9521 = vmul.f32 %v9463, 1.442695
      %v9522 = vpow.pop %v9521
      %v9523 = vmul.f32 %v9464, 1.442695
      %v9524 = vpow.pop %v9523
      %v9525 = vmul.f32 %v9465, 1.442695
      %v9526 = vpow.pop %v9525
      %v9527 = vmul.f32 %v9466, 1.442695
      %v9528 = vpow.pop %v9527
      %v9529 = vmul.f32 %v9467, 1.442695
      %v9530 = vpow.pop %v9529
      %v9531 = vmul.f32 %v9468, 1.442695
      %v9532 = vpow.pop %v9531
      %v9533 = vadd.f32 %v9470, 1.0
      %v9534 = vadd.f32 %v9472, 1.0
      %v9535 = vadd.f32 %v9474, 1.0
      %v9536 = vadd.f32 %v9476, 1.0
      %v9537 = vadd.f32 %v9478, 1.0
      %v9538 = vadd.f32 %v9480, 1.0
      %v9539 = vadd.f32 %v9482, 1.0
      %v9540 = vadd.f32 %v9484, 1.0
      %v9541 = vadd.f32 %v9486, 1.0
      %v9542 = vadd.f32 %v9488, 1.0
      %v9543 = vadd.f32 %v9490, 1.0
      %v9544 = vadd.f32 %v9492, 1.0
      %v9545 = vadd.f32 %v9494, 1.0
      %v9546 = vadd.f32 %v9496, 1.0
      %v9547 = vadd.f32 %v9498, 1.0
      %v9548 = vadd.f32 %v9500, 1.0
      %v9549 = vadd.f32 %v9502, 1.0
      %v9550 = vadd.f32 %v9504, 1.0
      %v9551 = vadd.f32 %v9506, 1.0
      %v9552 = vadd.f32 %v9508, 1.0
      %v9553 = vadd.f32 %v9510, 1.0
      %v9554 = vadd.f32 %v9512, 1.0
      %v9555 = vadd.f32 %v9514, 1.0
      %v9556 = vadd.f32 %v9516, 1.0
      %v9557 = vadd.f32 %v9518, 1.0
      %v9558 = vadd.f32 %v9520, 1.0
      %v9559 = vadd.f32 %v9522, 1.0
      %v9560 = vadd.f32 %v9524, 1.0
      %v9561 = vadd.f32 %v9526, 1.0
      %v9562 = vadd.f32 %v9528, 1.0
      %v9563 = vadd.f32 %v9530, 1.0
      %v9564 = vadd.f32 %v9532, 1.0
      %v9565 = vrcp.pop %v9533
      %v9566 = vmul.f32 %v9533, %v9565
      %v9567 = vsub.f32 1.0, %v9566
      %v9568 = vmul.f32 %v9565, %v9567
      %v9569 = vadd.f32 %v9565, %v9568
      %vm9570 = vweird.f32 %v9533
      %vm9571 = vweird.f32 %v9565
      %vm9572 = vmor %vm9570, %vm9571
      %v9573 = vsel %vm9572, %v9565, %v9569
      %v9574 = vand.u32 2147483647, %v9533
      %vm9575 = vcmp.eq.f32.partialorder %v9574, 8.507059e+37
      %v9576 = vand.u32 %v9533, 2147483648
      %v9577 = vor.u32 1.1754944e-38, %v9576
      %v9578 = vsel %vm9575, %v9577, %v9573
      %v9579 = vmul.f32 1.0, %v9578
      %v9580 = vrcp.pop %v9534
      %v9581 = vmul.f32 %v9534, %v9580
      %v9582 = vsub.f32 1.0, %v9581
      %v9583 = vmul.f32 %v9580, %v9582
      %v9584 = vadd.f32 %v9580, %v9583
      %vm9585 = vweird.f32 %v9534
      %vm9586 = vweird.f32 %v9580
      %vm9587 = vmor %vm9585, %vm9586
      %v9588 = vsel %vm9587, %v9580, %v9584
      %v9589 = vand.u32 2147483647, %v9534
      %vm9590 = vcmp.eq.f32.partialorder %v9589, 8.507059e+37
      %v9591 = vand.u32 %v9534, 2147483648
      %v9592 = vor.u32 1.1754944e-38, %v9591
      %v9593 = vsel %vm9590, %v9592, %v9588
      %v9594 = vmul.f32 1.0, %v9593
      %v9595 = vrcp.pop %v9535
      %v9596 = vmul.f32 %v9535, %v9595
      %v9597 = vsub.f32 1.0, %v9596
      %v9598 = vmul.f32 %v9595, %v9597
      %v9599 = vadd.f32 %v9595, %v9598
      %vm9600 = vweird.f32 %v9535
      %vm9601 = vweird.f32 %v9595
      %vm9602 = vmor %vm9600, %vm9601
      %v9603 = vsel %vm9602, %v9595, %v9599
      %v9604 = vand.u32 2147483647, %v9535
      %vm9605 = vcmp.eq.f32.partialorder %v9604, 8.507059e+37
      %v9606 = vand.u32 %v9535, 2147483648
      %v9607 = vor.u32 1.1754944e-38, %v9606
      %v9608 = vsel %vm9605, %v9607, %v9603
      %v9609 = vmul.f32 1.0, %v9608
      %v9610 = vrcp.pop %v9536
      %v9611 = vmul.f32 %v9536, %v9610
      %v9612 = vsub.f32 1.0, %v9611
      %v9613 = vmul.f32 %v9610, %v9612
      %v9614 = vadd.f32 %v9610, %v9613
      %vm9615 = vweird.f32 %v9536
      %vm9616 = vweird.f32 %v9610
      %vm9617 = vmor %vm9615, %vm9616
      %v9618 = vsel %vm9617, %v9610, %v9614
      %v9619 = vand.u32 2147483647, %v9536
      %vm9620 = vcmp.eq.f32.partialorder %v9619, 8.507059e+37
      %v9621 = vand.u32 %v9536, 2147483648
      %v9622 = vor.u32 1.1754944e-38, %v9621
      %v9623 = vsel %vm9620, %v9622, %v9618
      %v9624 = vmul.f32 1.0, %v9623
      %v9625 = vrcp.pop %v9537
      %v9626 = vmul.f32 %v9537, %v9625
      %v9627 = vsub.f32 1.0, %v9626
      %v9628 = vmul.f32 %v9625, %v9627
      %v9629 = vadd.f32 %v9625, %v9628
      %vm9630 = vweird.f32 %v9537
      %vm9631 = vweird.f32 %v9625
      %vm9632 = vmor %vm9630, %vm9631
      %v9633 = vsel %vm9632, %v9625, %v9629
      %v9634 = vand.u32 2147483647, %v9537
      %vm9635 = vcmp.eq.f32.partialorder %v9634, 8.507059e+37
      %v9636 = vand.u32 %v9537, 2147483648
      %v9637 = vor.u32 1.1754944e-38, %v9636
      %v9638 = vsel %vm9635, %v9637, %v9633
      %v9639 = vmul.f32 1.0, %v9638
      %v9640 = vrcp.pop %v9538
      %v9641 = vmul.f32 %v9538, %v9640
      %v9642 = vsub.f32 1.0, %v9641
      %v9643 = vmul.f32 %v9640, %v9642
      %v9644 = vadd.f32 %v9640, %v9643
      %vm9645 = vweird.f32 %v9538
      %vm9646 = vweird.f32 %v9640
      %vm9647 = vmor %vm9645, %vm9646
      %v9648 = vsel %vm9647, %v9640, %v9644
      %v9649 = vand.u32 2147483647, %v9538
      %vm9650 = vcmp.eq.f32.partialorder %v9649, 8.507059e+37
      %v9651 = vand.u32 %v9538, 2147483648
      %v9652 = vor.u32 1.1754944e-38, %v9651
      %v9653 = vsel %vm9650, %v9652, %v9648
      %v9654 = vmul.f32 1.0, %v9653
      %v9655 = vrcp.pop %v9539
      %v9656 = vmul.f32 %v9539, %v9655
      %v9657 = vsub.f32 1.0, %v9656
      %v9658 = vmul.f32 %v9655, %v9657
      %v9659 = vadd.f32 %v9655, %v9658
      %vm9660 = vweird.f32 %v9539
      %vm9661 = vweird.f32 %v9655
      %vm9662 = vmor %vm9660, %vm9661
      %v9663 = vsel %vm9662, %v9655, %v9659
      %v9664 = vand.u32 2147483647, %v9539
      %vm9665 = vcmp.eq.f32.partialorder %v9664, 8.507059e+37
      %v9666 = vand.u32 %v9539, 2147483648
      %v9667 = vor.u32 1.1754944e-38, %v9666
      %v9668 = vsel %vm9665, %v9667, %v9663
      %v9669 = vmul.f32 1.0, %v9668
      %v9670 = vrcp.pop %v9540
      %v9671 = vmul.f32 %v9540, %v9670
      %v9672 = vsub.f32 1.0, %v9671
      %v9673 = vmul.f32 %v9670, %v9672
      %v9674 = vadd.f32 %v9670, %v9673
      %vm9675 = vweird.f32 %v9540
      %vm9676 = vweird.f32 %v9670
      %vm9677 = vmor %vm9675, %vm9676
      %v9678 = vsel %vm9677, %v9670, %v9674
      %v9679 = vand.u32 2147483647, %v9540
      %vm9680 = vcmp.eq.f32.partialorder %v9679, 8.507059e+37
      %v9681 = vand.u32 %v9540, 2147483648
      %v9682 = vor.u32 1.1754944e-38, %v9681
      %v9683 = vsel %vm9680, %v9682, %v9678
      %v9684 = vmul.f32 1.0, %v9683
      %v9685 = vrcp.pop %v9541
      %v9686 = vmul.f32 %v9541, %v9685
      %v9687 = vsub.f32 1.0, %v9686
      %v9688 = vmul.f32 %v9685, %v9687
      %v9689 = vadd.f32 %v9685, %v9688
      %vm9690 = vweird.f32 %v9541
      %vm9691 = vweird.f32 %v9685
      %vm9692 = vmor %vm9690, %vm9691
      %v9693 = vsel %vm9692, %v9685, %v9689
      %v9694 = vand.u32 2147483647, %v9541
      %vm9695 = vcmp.eq.f32.partialorder %v9694, 8.507059e+37
      %v9696 = vand.u32 %v9541, 2147483648
      %v9697 = vor.u32 1.1754944e-38, %v9696
      %v9698 = vsel %vm9695, %v9697, %v9693
      %v9699 = vmul.f32 1.0, %v9698
      %v9700 = vrcp.pop %v9542
      %v9701 = vmul.f32 %v9542, %v9700
      %v9702 = vsub.f32 1.0, %v9701
      %v9703 = vmul.f32 %v9700, %v9702
      %v9704 = vadd.f32 %v9700, %v9703
      %vm9705 = vweird.f32 %v9542
      %vm9706 = vweird.f32 %v9700
      %vm9707 = vmor %vm9705, %vm9706
      %v9708 = vsel %vm9707, %v9700, %v9704
      %v9709 = vand.u32 2147483647, %v9542
      %vm9710 = vcmp.eq.f32.partialorder %v9709, 8.507059e+37
      %v9711 = vand.u32 %v9542, 2147483648
      %v9712 = vor.u32 1.1754944e-38, %v9711
      %v9713 = vsel %vm9710, %v9712, %v9708
      %v9714 = vmul.f32 1.0, %v9713
      %v9715 = vrcp.pop %v9543
      %v9716 = vmul.f32 %v9543, %v9715
      %v9717 = vsub.f32 1.0, %v9716
      %v9718 = vmul.f32 %v9715, %v9717
      %v9719 = vadd.f32 %v9715, %v9718
      %vm9720 = vweird.f32 %v9543
      %vm9721 = vweird.f32 %v9715
      %vm9722 = vmor %vm9720, %vm9721
      %v9723 = vsel %vm9722, %v9715, %v9719
      %v9724 = vand.u32 2147483647, %v9543
      %vm9725 = vcmp.eq.f32.partialorder %v9724, 8.507059e+37
      %v9726 = vand.u32 %v9543, 2147483648
      %v9727 = vor.u32 1.1754944e-38, %v9726
      %v9728 = vsel %vm9725, %v9727, %v9723
      %v9729 = vmul.f32 1.0, %v9728
      %v9730 = vrcp.pop %v9544
      %v9731 = vmul.f32 %v9544, %v9730
      %v9732 = vsub.f32 1.0, %v9731
      %v9733 = vmul.f32 %v9730, %v9732
      %v9734 = vadd.f32 %v9730, %v9733
      %vm9735 = vweird.f32 %v9544
      %vm9736 = vweird.f32 %v9730
      %vm9737 = vmor %vm9735, %vm9736
      %v9738 = vsel %vm9737, %v9730, %v9734
      %v9739 = vand.u32 2147483647, %v9544
      %vm9740 = vcmp.eq.f32.partialorder %v9739, 8.507059e+37
      %v9741 = vand.u32 %v9544, 2147483648
      %v9742 = vor.u32 1.1754944e-38, %v9741
      %v9743 = vsel %vm9740, %v9742, %v9738
      %v9744 = vmul.f32 1.0, %v9743
      %v9745 = vrcp.pop %v9545
      %v9746 = vmul.f32 %v9545, %v9745
      %v9747 = vsub.f32 1.0, %v9746
      %v9748 = vmul.f32 %v9745, %v9747
      %v9749 = vadd.f32 %v9745, %v9748
      %vm9750 = vweird.f32 %v9545
      %vm9751 = vweird.f32 %v9745
      %vm9752 = vmor %vm9750, %vm9751
      %v9753 = vsel %vm9752, %v9745, %v9749
      %v9754 = vand.u32 2147483647, %v9545
      %vm9755 = vcmp.eq.f32.partialorder %v9754, 8.507059e+37
      %v9756 = vand.u32 %v9545, 2147483648
      %v9757 = vor.u32 1.1754944e-38, %v9756
      %v9758 = vsel %vm9755, %v9757, %v9753
      %v9759 = vmul.f32 1.0, %v9758
      %v9760 = vrcp.pop %v9546
      %v9761 = vmul.f32 %v9546, %v9760
      %v9762 = vsub.f32 1.0, %v9761
      %v9763 = vmul.f32 %v9760, %v9762
      %v9764 = vadd.f32 %v9760, %v9763
      %vm9765 = vweird.f32 %v9546
      %vm9766 = vweird.f32 %v9760
      %vm9767 = vmor %vm9765, %vm9766
      %v9768 = vsel %vm9767, %v9760, %v9764
      %v9769 = vand.u32 2147483647, %v9546
      %vm9770 = vcmp.eq.f32.partialorder %v9769, 8.507059e+37
      %v9771 = vand.u32 %v9546, 2147483648
      %v9772 = vor.u32 1.1754944e-38, %v9771
      %v9773 = vsel %vm9770, %v9772, %v9768
      %v9774 = vmul.f32 1.0, %v9773
      %v9775 = vrcp.pop %v9547
      %v9776 = vmul.f32 %v9547, %v9775
      %v9777 = vsub.f32 1.0, %v9776
      %v9778 = vmul.f32 %v9775, %v9777
      %v9779 = vadd.f32 %v9775, %v9778
      %vm9780 = vweird.f32 %v9547
      %vm9781 = vweird.f32 %v9775
      %vm9782 = vmor %vm9780, %vm9781
      %v9783 = vsel %vm9782, %v9775, %v9779
      %v9784 = vand.u32 2147483647, %v9547
      %vm9785 = vcmp.eq.f32.partialorder %v9784, 8.507059e+37
      %v9786 = vand.u32 %v9547, 2147483648
      %v9787 = vor.u32 1.1754944e-38, %v9786
      %v9788 = vsel %vm9785, %v9787, %v9783
      %v9789 = vmul.f32 1.0, %v9788
      %v9790 = vrcp.pop %v9548
      %v9791 = vmul.f32 %v9548, %v9790
      %v9792 = vsub.f32 1.0, %v9791
      %v9793 = vmul.f32 %v9790, %v9792
      %v9794 = vadd.f32 %v9790, %v9793
      %vm9795 = vweird.f32 %v9548
      %vm9796 = vweird.f32 %v9790
      %vm9797 = vmor %vm9795, %vm9796
      %v9798 = vsel %vm9797, %v9790, %v9794
      %v9799 = vand.u32 2147483647, %v9548
      %vm9800 = vcmp.eq.f32.partialorder %v9799, 8.507059e+37
      %v9801 = vand.u32 %v9548, 2147483648
      %v9802 = vor.u32 1.1754944e-38, %v9801
      %v9803 = vsel %vm9800, %v9802, %v9798
      %v9804 = vmul.f32 1.0, %v9803
      %v9805 = vrcp.pop %v9549
      %v9806 = vmul.f32 %v9549, %v9805
      %v9807 = vsub.f32 1.0, %v9806
      %v9808 = vmul.f32 %v9805, %v9807
      %v9809 = vadd.f32 %v9805, %v9808
      %vm9810 = vweird.f32 %v9549
      %vm9811 = vweird.f32 %v9805
      %vm9812 = vmor %vm9810, %vm9811
      %v9813 = vsel %vm9812, %v9805, %v9809
      %v9814 = vand.u32 2147483647, %v9549
      %vm9815 = vcmp.eq.f32.partialorder %v9814, 8.507059e+37
      %v9816 = vand.u32 %v9549, 2147483648
      %v9817 = vor.u32 1.1754944e-38, %v9816
      %v9818 = vsel %vm9815, %v9817, %v9813
      %v9819 = vmul.f32 1.0, %v9818
      %v9820 = vrcp.pop %v9550
      %v9821 = vmul.f32 %v9550, %v9820
      %v9822 = vsub.f32 1.0, %v9821
      %v9823 = vmul.f32 %v9820, %v9822
      %v9824 = vadd.f32 %v9820, %v9823
      %vm9825 = vweird.f32 %v9550
      %vm9826 = vweird.f32 %v9820
      %vm9827 = vmor %vm9825, %vm9826
      %v9828 = vsel %vm9827, %v9820, %v9824
      %v9829 = vand.u32 2147483647, %v9550
      %vm9830 = vcmp.eq.f32.partialorder %v9829, 8.507059e+37
      %v9831 = vand.u32 %v9550, 2147483648
      %v9832 = vor.u32 1.1754944e-38, %v9831
      %v9833 = vsel %vm9830, %v9832, %v9828
      %v9834 = vmul.f32 1.0, %v9833
      %v9835 = vrcp.pop %v9551
      %v9836 = vmul.f32 %v9551, %v9835
      %v9837 = vsub.f32 1.0, %v9836
      %v9838 = vmul.f32 %v9835, %v9837
      %v9839 = vadd.f32 %v9835, %v9838
      %vm9840 = vweird.f32 %v9551
      %vm9841 = vweird.f32 %v9835
      %vm9842 = vmor %vm9840, %vm9841
      %v9843 = vsel %vm9842, %v9835, %v9839
      %v9844 = vand.u32 2147483647, %v9551
      %vm9845 = vcmp.eq.f32.partialorder %v9844, 8.507059e+37
      %v9846 = vand.u32 %v9551, 2147483648
      %v9847 = vor.u32 1.1754944e-38, %v9846
      %v9848 = vsel %vm9845, %v9847, %v9843
      %v9849 = vmul.f32 1.0, %v9848
      %v9850 = vrcp.pop %v9552
      %v9851 = vmul.f32 %v9552, %v9850
      %v9852 = vsub.f32 1.0, %v9851
      %v9853 = vmul.f32 %v9850, %v9852
      %v9854 = vadd.f32 %v9850, %v9853
      %vm9855 = vweird.f32 %v9552
      %vm9856 = vweird.f32 %v9850
      %vm9857 = vmor %vm9855, %vm9856
      %v9858 = vsel %vm9857, %v9850, %v9854
      %v9859 = vand.u32 2147483647, %v9552
      %vm9860 = vcmp.eq.f32.partialorder %v9859, 8.507059e+37
      %v9861 = vand.u32 %v9552, 2147483648
      %v9862 = vor.u32 1.1754944e-38, %v9861
      %v9863 = vsel %vm9860, %v9862, %v9858
      %v9864 = vmul.f32 1.0, %v9863
      %v9865 = vrcp.pop %v9553
      %v9866 = vmul.f32 %v9553, %v9865
      %v9867 = vsub.f32 1.0, %v9866
      %v9868 = vmul.f32 %v9865, %v9867
      %v9869 = vadd.f32 %v9865, %v9868
      %vm9870 = vweird.f32 %v9553
      %vm9871 = vweird.f32 %v9865
      %vm9872 = vmor %vm9870, %vm9871
      %v9873 = vsel %vm9872, %v9865, %v9869
      %v9874 = vand.u32 2147483647, %v9553
      %vm9875 = vcmp.eq.f32.partialorder %v9874, 8.507059e+37
      %v9876 = vand.u32 %v9553, 2147483648
      %v9877 = vor.u32 1.1754944e-38, %v9876
      %v9878 = vsel %vm9875, %v9877, %v9873
      %v9879 = vmul.f32 1.0, %v9878
      %v9880 = vrcp.pop %v9554
      %v9881 = vmul.f32 %v9554, %v9880
      %v9882 = vsub.f32 1.0, %v9881
      %v9883 = vmul.f32 %v9880, %v9882
      %v9884 = vadd.f32 %v9880, %v9883
      %vm9885 = vweird.f32 %v9554
      %vm9886 = vweird.f32 %v9880
      %vm9887 = vmor %vm9885, %vm9886
      %v9888 = vsel %vm9887, %v9880, %v9884
      %v9889 = vand.u32 2147483647, %v9554
      %vm9890 = vcmp.eq.f32.partialorder %v9889, 8.507059e+37
      %v9891 = vand.u32 %v9554, 2147483648
      %v9892 = vor.u32 1.1754944e-38, %v9891
      %v9893 = vsel %vm9890, %v9892, %v9888
      %v9894 = vmul.f32 1.0, %v9893
      %v9895 = vrcp.pop %v9555
      %v9896 = vmul.f32 %v9555, %v9895
      %v9897 = vsub.f32 1.0, %v9896
      %v9898 = vmul.f32 %v9895, %v9897
      %v9899 = vadd.f32 %v9895, %v9898
      %vm9900 = vweird.f32 %v9555
      %vm9901 = vweird.f32 %v9895
      %vm9902 = vmor %vm9900, %vm9901
      %v9903 = vsel %vm9902, %v9895, %v9899
      %v9904 = vand.u32 2147483647, %v9555
      %vm9905 = vcmp.eq.f32.partialorder %v9904, 8.507059e+37
      %v9906 = vand.u32 %v9555, 2147483648
      %v9907 = vor.u32 1.1754944e-38, %v9906
      %v9908 = vsel %vm9905, %v9907, %v9903
      %v9909 = vmul.f32 1.0, %v9908
      %v9910 = vrcp.pop %v9556
      %v9911 = vmul.f32 %v9556, %v9910
      %v9912 = vsub.f32 1.0, %v9911
      %v9913 = vmul.f32 %v9910, %v9912
      %v9914 = vadd.f32 %v9910, %v9913
      %vm9915 = vweird.f32 %v9556
      %vm9916 = vweird.f32 %v9910
      %vm9917 = vmor %vm9915, %vm9916
      %v9918 = vsel %vm9917, %v9910, %v9914
      %v9919 = vand.u32 2147483647, %v9556
      %vm9920 = vcmp.eq.f32.partialorder %v9919, 8.507059e+37
      %v9921 = vand.u32 %v9556, 2147483648
      %v9922 = vor.u32 1.1754944e-38, %v9921
      %v9923 = vsel %vm9920, %v9922, %v9918
      %v9924 = vmul.f32 1.0, %v9923
      %v9925 = vrcp.pop %v9557
      %v9926 = vmul.f32 %v9557, %v9925
      %v9927 = vsub.f32 1.0, %v9926
      %v9928 = vmul.f32 %v9925, %v9927
      %v9929 = vadd.f32 %v9925, %v9928
      %vm9930 = vweird.f32 %v9557
      %vm9931 = vweird.f32 %v9925
      %vm9932 = vmor %vm9930, %vm9931
      %v9933 = vsel %vm9932, %v9925, %v9929
      %v9934 = vand.u32 2147483647, %v9557
      %vm9935 = vcmp.eq.f32.partialorder %v9934, 8.507059e+37
      %v9936 = vand.u32 %v9557, 2147483648
      %v9937 = vor.u32 1.1754944e-38, %v9936
      %v9938 = vsel %vm9935, %v9937, %v9933
      %v9939 = vmul.f32 1.0, %v9938
      %v9940 = vrcp.pop %v9558
      %v9941 = vmul.f32 %v9558, %v9940
      %v9942 = vsub.f32 1.0, %v9941
      %v9943 = vmul.f32 %v9940, %v9942
      %v9944 = vadd.f32 %v9940, %v9943
      %vm9945 = vweird.f32 %v9558
      %vm9946 = vweird.f32 %v9940
      %vm9947 = vmor %vm9945, %vm9946
      %v9948 = vsel %vm9947, %v9940, %v9944
      %v9949 = vand.u32 2147483647, %v9558
      %vm9950 = vcmp.eq.f32.partialorder %v9949, 8.507059e+37
      %v9951 = vand.u32 %v9558, 2147483648
      %v9952 = vor.u32 1.1754944e-38, %v9951
      %v9953 = vsel %vm9950, %v9952, %v9948
      %v9954 = vmul.f32 1.0, %v9953
      %v9955 = vrcp.pop %v9559
      %v9956 = vmul.f32 %v9559, %v9955
      %v9957 = vsub.f32 1.0, %v9956
      %v9958 = vmul.f32 %v9955, %v9957
      %v9959 = vadd.f32 %v9955, %v9958
      %vm9960 = vweird.f32 %v9559
      %vm9961 = vweird.f32 %v9955
      %vm9962 = vmor %vm9960, %vm9961
      %v9963 = vsel %vm9962, %v9955, %v9959
      %v9964 = vand.u32 2147483647, %v9559
      %vm9965 = vcmp.eq.f32.partialorder %v9964, 8.507059e+37
      %v9966 = vand.u32 %v9559, 2147483648
      %v9967 = vor.u32 1.1754944e-38, %v9966
      %v9968 = vsel %vm9965, %v9967, %v9963
      %v9969 = vmul.f32 1.0, %v9968
      %v9970 = vrcp.pop %v9560
      %v9971 = vmul.f32 %v9560, %v9970
      %v9972 = vsub.f32 1.0, %v9971
      %v9973 = vmul.f32 %v9970, %v9972
      %v9974 = vadd.f32 %v9970, %v9973
      %vm9975 = vweird.f32 %v9560
      %vm9976 = vweird.f32 %v9970
      %vm9977 = vmor %vm9975, %vm9976
      %v9978 = vsel %vm9977, %v9970, %v9974
      %v9979 = vand.u32 2147483647, %v9560
      %vm9980 = vcmp.eq.f32.partialorder %v9979, 8.507059e+37
      %v9981 = vand.u32 %v9560, 2147483648
      %v9982 = vor.u32 1.1754944e-38, %v9981
      %v9983 = vsel %vm9980, %v9982, %v9978
      %v9984 = vmul.f32 1.0, %v9983
      %v9985 = vrcp.pop %v9561
      %v9986 = vmul.f32 %v9561, %v9985
      %v9987 = vsub.f32 1.0, %v9986
      %v9988 = vmul.f32 %v9985, %v9987
      %v9989 = vadd.f32 %v9985, %v9988
      %vm9990 = vweird.f32 %v9561
      %vm9991 = vweird.f32 %v9985
      %vm9992 = vmor %vm9990, %vm9991
      %v9993 = vsel %vm9992, %v9985, %v9989
      %v9994 = vand.u32 2147483647, %v9561
      %vm9995 = vcmp.eq.f32.partialorder %v9994, 8.507059e+37
      %v9996 = vand.u32 %v9561, 2147483648
      %v9997 = vor.u32 1.1754944e-38, %v9996
      %v9998 = vsel %vm9995, %v9997, %v9993
      %v9999 = vmul.f32 1.0, %v9998
      %v10000 = vrcp.pop %v9562
      %v10001 = vmul.f32 %v9562, %v10000
      %v10002 = vsub.f32 1.0, %v10001
      %v10003 = vmul.f32 %v10000, %v10002
      %v10004 = vadd.f32 %v10000, %v10003
      %vm10005 = vweird.f32 %v9562
      %vm10006 = vweird.f32 %v10000
      %vm10007 = vmor %vm10005, %vm10006
      %v10008 = vsel %vm10007, %v10000, %v10004
      %v10009 = vand.u32 2147483647, %v9562
      %vm10010 = vcmp.eq.f32.partialorder %v10009, 8.507059e+37
      %v10011 = vand.u32 %v9562, 2147483648
      %v10012 = vor.u32 1.1754944e-38, %v10011
      %v10013 = vsel %vm10010, %v10012, %v10008
      %v10014 = vmul.f32 1.0, %v10013
      %v10015 = vrcp.pop %v9563
      %v10016 = vmul.f32 %v9563, %v10015
      %v10017 = vsub.f32 1.0, %v10016
      %v10018 = vmul.f32 %v10015, %v10017
      %v10019 = vadd.f32 %v10015, %v10018
      %vm10020 = vweird.f32 %v9563
      %vm10021 = vweird.f32 %v10015
      %vm10022 = vmor %vm10020, %vm10021
      %v10023 = vsel %vm10022, %v10015, %v10019
      %v10024 = vand.u32 2147483647, %v9563
      %vm10025 = vcmp.eq.f32.partialorder %v10024, 8.507059e+37
      %v10026 = vand.u32 %v9563, 2147483648
      %v10027 = vor.u32 1.1754944e-38, %v10026
      %v10028 = vsel %vm10025, %v10027, %v10023
      %v10029 = vmul.f32 1.0, %v10028
      %v10030 = vrcp.pop %v9564
      %v10031 = vmul.f32 %v9564, %v10030
      %v10032 = vsub.f32 1.0, %v10031
      %v10033 = vmul.f32 %v10030, %v10032
      %v10034 = vadd.f32 %v10030, %v10033
      %vm10035 = vweird.f32 %v9564
      %vm10036 = vweird.f32 %v10030
      %vm10037 = vmor %vm10035, %vm10036
      %v10038 = vsel %vm10037, %v10030, %v10034
      %v10039 = vand.u32 2147483647, %v9564
      %vm10040 = vcmp.eq.f32.partialorder %v10039, 8.507059e+37
      %v10041 = vand.u32 %v9564, 2147483648
      %v10042 = vor.u32 1.1754944e-38, %v10041
      %v10043 = vsel %vm10040, %v10042, %v10038
      %v10044 = vmul.f32 1.0, %v10043
      %v10077 = vperm.slane %v9579, 0
      %v10078 = vperm.slane %v9579, 1
      %v10079 = vperm.slane %v9579, 2
      %v10080 = vperm.slane %v9579, 3
      %v10081 = vperm.slane %v9579, 4
      %v10082 = vperm.slane %v9579, 5
      %v10083 = vperm.slane %v9579, 6
      %v10084 = vperm.slane %v9579, 7
      %v10085 = vperm.slane %v9594, 0
      %v10086 = vperm.slane %v9594, 1
      %v10087 = vperm.slane %v9594, 2
      %v10088 = vperm.slane %v9594, 3
      %v10089 = vperm.slane %v9594, 4
      %v10090 = vperm.slane %v9594, 5
      %v10091 = vperm.slane %v9594, 6
      %v10092 = vperm.slane %v9594, 7
      %v10093 = vperm.slane %v9609, 0
      %v10094 = vperm.slane %v9609, 1
      %v10095 = vperm.slane %v9609, 2
      %v10096 = vperm.slane %v9609, 3
      %v10097 = vperm.slane %v9609, 4
      %v10098 = vperm.slane %v9609, 5
      %v10099 = vperm.slane %v9609, 6
      %v10100 = vperm.slane %v9609, 7
      %v10101 = vperm.slane %v9624, 0
      %v10102 = vperm.slane %v9624, 1
      %v10103 = vperm.slane %v9624, 2
      %v10104 = vperm.slane %v9624, 3
      %v10105 = vperm.slane %v9624, 4
      %v10106 = vperm.slane %v9624, 5
      %v10107 = vperm.slane %v9624, 6
      %v10108 = vperm.slane %v9624, 7
      %v10109 = vperm.slane %v9639, 0
      %v10110 = vperm.slane %v9639, 1
      %v10111 = vperm.slane %v9639, 2
      %v10112 = vperm.slane %v9639, 3
      %v10113 = vperm.slane %v9639, 4
      %v10114 = vperm.slane %v9639, 5
      %v10115 = vperm.slane %v9639, 6
      %v10116 = vperm.slane %v9639, 7
      %v10117 = vperm.slane %v9654, 0
      %v10118 = vperm.slane %v9654, 1
      %v10119 = vperm.slane %v9654, 2
      %v10120 = vperm.slane %v9654, 3
      %v10121 = vperm.slane %v9654, 4
      %v10122 = vperm.slane %v9654, 5
      %v10123 = vperm.slane %v9654, 6
      %v10124 = vperm.slane %v9654, 7
      %v10125 = vperm.slane %v9669, 0
      %v10126 = vperm.slane %v9669, 1
      %v10127 = vperm.slane %v9669, 2
      %v10128 = vperm.slane %v9669, 3
      %v10129 = vperm.slane %v9669, 4
      %v10130 = vperm.slane %v9669, 5
      %v10131 = vperm.slane %v9669, 6
      %v10132 = vperm.slane %v9669, 7
      %v10133 = vperm.slane %v9684, 0
      %v10134 = vperm.slane %v9684, 1
      %v10135 = vperm.slane %v9684, 2
      %v10136 = vperm.slane %v9684, 3
      %v10137 = vperm.slane %v9684, 4
      %v10138 = vperm.slane %v9684, 5
      %v10139 = vperm.slane %v9684, 6
      %v10140 = vperm.slane %v9684, 7
      %v10141 = vperm.slane %v9699, 0
      %v10142 = vperm.slane %v9699, 1
      %v10143 = vperm.slane %v9699, 2
      %v10144 = vperm.slane %v9699, 3
      %v10145 = vperm.slane %v9699, 4
      %v10146 = vperm.slane %v9699, 5
      %v10147 = vperm.slane %v9699, 6
      %v10148 = vperm.slane %v9699, 7
      %v10149 = vperm.slane %v9714, 0
      %v10150 = vperm.slane %v9714, 1
      %v10151 = vperm.slane %v9714, 2
      %v10152 = vperm.slane %v9714, 3
      %v10153 = vperm.slane %v9714, 4
      %v10154 = vperm.slane %v9714, 5
      %v10155 = vperm.slane %v9714, 6
      %v10156 = vperm.slane %v9714, 7
      %v10157 = vperm.slane %v9729, 0
      %v10158 = vperm.slane %v9729, 1
      %v10159 = vperm.slane %v9729, 2
      %v10160 = vperm.slane %v9729, 3
      %v10161 = vperm.slane %v9729, 4
      %v10162 = vperm.slane %v9729, 5
      %v10163 = vperm.slane %v9729, 6
      %v10164 = vperm.slane %v9729, 7
      %v10165 = vperm.slane %v9744, 0
      %v10166 = vperm.slane %v9744, 1
      %v10167 = vperm.slane %v9744, 2
      %v10168 = vperm.slane %v9744, 3
      %v10169 = vperm.slane %v9744, 4
      %v10170 = vperm.slane %v9744, 5
      %v10171 = vperm.slane %v9744, 6
      %v10172 = vperm.slane %v9744, 7
      %v10173 = vperm.slane %v9759, 0
      %v10174 = vperm.slane %v9759, 1
      %v10175 = vperm.slane %v9759, 2
      %v10176 = vperm.slane %v9759, 3
      %v10177 = vperm.slane %v9759, 4
      %v10178 = vperm.slane %v9759, 5
      %v10179 = vperm.slane %v9759, 6
      %v10180 = vperm.slane %v9759, 7
      %v10181 = vperm.slane %v9774, 0
      %v10182 = vperm.slane %v9774, 1
      %v10183 = vperm.slane %v9774, 2
      %v10184 = vperm.slane %v9774, 3
      %v10185 = vperm.slane %v9774, 4
      %v10186 = vperm.slane %v9774, 5
      %v10187 = vperm.slane %v9774, 6
      %v10188 = vperm.slane %v9774, 7
      %v10189 = vperm.slane %v9789, 0
      %v10190 = vperm.slane %v9789, 1
      %v10191 = vperm.slane %v9789, 2
      %v10192 = vperm.slane %v9789, 3
      %v10193 = vperm.slane %v9789, 4
      %v10194 = vperm.slane %v9789, 5
      %v10195 = vperm.slane %v9789, 6
      %v10196 = vperm.slane %v9789, 7
      %v10197 = vperm.slane %v9804, 0
      %v10198 = vperm.slane %v9804, 1
      %v10199 = vperm.slane %v9804, 2
      %v10200 = vperm.slane %v9804, 3
      %v10201 = vperm.slane %v9804, 4
      %v10202 = vperm.slane %v9804, 5
      %v10203 = vperm.slane %v9804, 6
      %v10204 = vperm.slane %v9804, 7
      %v10205 = vperm.slane %v9819, 0
      %v10206 = vperm.slane %v9819, 1
      %v10207 = vperm.slane %v9819, 2
      %v10208 = vperm.slane %v9819, 3
      %v10209 = vperm.slane %v9819, 4
      %v10210 = vperm.slane %v9819, 5
      %v10211 = vperm.slane %v9819, 6
      %v10212 = vperm.slane %v9819, 7
      %v10213 = vperm.slane %v9834, 0
      %v10214 = vperm.slane %v9834, 1
      %v10215 = vperm.slane %v9834, 2
      %v10216 = vperm.slane %v9834, 3
      %v10217 = vperm.slane %v9834, 4
      %v10218 = vperm.slane %v9834, 5
      %v10219 = vperm.slane %v9834, 6
      %v10220 = vperm.slane %v9834, 7
      %v10221 = vperm.slane %v9849, 0
      %v10222 = vperm.slane %v9849, 1
      %v10223 = vperm.slane %v9849, 2
      %v10224 = vperm.slane %v9849, 3
      %v10225 = vperm.slane %v9849, 4
      %v10226 = vperm.slane %v9849, 5
      %v10227 = vperm.slane %v9849, 6
      %v10228 = vperm.slane %v9849, 7
      %v10229 = vperm.slane %v9864, 0
      %v10230 = vperm.slane %v9864, 1
      %v10231 = vperm.slane %v9864, 2
      %v10232 = vperm.slane %v9864, 3
      %v10233 = vperm.slane %v9864, 4
      %v10234 = vperm.slane %v9864, 5
      %v10235 = vperm.slane %v9864, 6
      %v10236 = vperm.slane %v9864, 7
      %v10237 = vperm.slane %v9879, 0
      %v10238 = vperm.slane %v9879, 1
      %v10239 = vperm.slane %v9879, 2
      %v10240 = vperm.slane %v9879, 3
      %v10241 = vperm.slane %v9879, 4
      %v10242 = vperm.slane %v9879, 5
      %v10243 = vperm.slane %v9879, 6
      %v10244 = vperm.slane %v9879, 7
      %v10245 = vperm.slane %v9894, 0
      %v10246 = vperm.slane %v9894, 1
      %v10247 = vperm.slane %v9894, 2
      %v10248 = vperm.slane %v9894, 3
      %v10249 = vperm.slane %v9894, 4
      %v10250 = vperm.slane %v9894, 5
      %v10251 = vperm.slane %v9894, 6
      %v10252 = vperm.slane %v9894, 7
      %v10253 = vperm.slane %v9909, 0
      %v10254 = vperm.slane %v9909, 1
      %v10255 = vperm.slane %v9909, 2
      %v10256 = vperm.slane %v9909, 3
      %v10257 = vperm.slane %v9909, 4
      %v10258 = vperm.slane %v9909, 5
      %v10259 = vperm.slane %v9909, 6
      %v10260 = vperm.slane %v9909, 7
      %v10261 = vperm.slane %v9924, 0
      %v10262 = vperm.slane %v9924, 1
      %v10263 = vperm.slane %v9924, 2
      %v10264 = vperm.slane %v9924, 3
      %v10265 = vperm.slane %v9924, 4
      %v10266 = vperm.slane %v9924, 5
      %v10267 = vperm.slane %v9924, 6
      %v10268 = vperm.slane %v9924, 7
      %v10269 = vperm.slane %v9939, 0
      %v10270 = vperm.slane %v9939, 1
      %v10271 = vperm.slane %v9939, 2
      %v10272 = vperm.slane %v9939, 3
      %v10273 = vperm.slane %v9939, 4
      %v10274 = vperm.slane %v9939, 5
      %v10275 = vperm.slane %v9939, 6
      %v10276 = vperm.slane %v9939, 7
      %v10277 = vperm.slane %v9954, 0
      %v10278 = vperm.slane %v9954, 1
      %v10279 = vperm.slane %v9954, 2
      %v10280 = vperm.slane %v9954, 3
      %v10281 = vperm.slane %v9954, 4
      %v10282 = vperm.slane %v9954, 5
      %v10283 = vperm.slane %v9954, 6
      %v10284 = vperm.slane %v9954, 7
      %v10285 = vperm.slane %v9969, 0
      %v10286 = vperm.slane %v9969, 1
      %v10287 = vperm.slane %v9969, 2
      %v10288 = vperm.slane %v9969, 3
      %v10289 = vperm.slane %v9969, 4
      %v10290 = vperm.slane %v9969, 5
      %v10291 = vperm.slane %v9969, 6
      %v10292 = vperm.slane %v9969, 7
      %v10293 = vperm.slane %v9984, 0
      %v10294 = vperm.slane %v9984, 1
      %v10295 = vperm.slane %v9984, 2
      %v10296 = vperm.slane %v9984, 3
      %v10297 = vperm.slane %v9984, 4
      %v10298 = vperm.slane %v9984, 5
      %v10299 = vperm.slane %v9984, 6
      %v10300 = vperm.slane %v9984, 7
      %v10301 = vperm.slane %v9999, 0
      %v10302 = vperm.slane %v9999, 1
      %v10303 = vperm.slane %v9999, 2
      %v10304 = vperm.slane %v9999, 3
      %v10305 = vperm.slane %v9999, 4
      %v10306 = vperm.slane %v9999, 5
      %v10307 = vperm.slane %v9999, 6
      %v10308 = vperm.slane %v9999, 7
      %v10309 = vperm.slane %v10014, 0
      %v10310 = vperm.slane %v10014, 1
      %v10311 = vperm.slane %v10014, 2
      %v10312 = vperm.slane %v10014, 3
      %v10313 = vperm.slane %v10014, 4
      %v10314 = vperm.slane %v10014, 5
      %v10315 = vperm.slane %v10014, 6
      %v10316 = vperm.slane %v10014, 7
      %v10317 = vperm.slane %v10029, 0
      %v10318 = vperm.slane %v10029, 1
      %v10319 = vperm.slane %v10029, 2
      %v10320 = vperm.slane %v10029, 3
      %v10321 = vperm.slane %v10029, 4
      %v10322 = vperm.slane %v10029, 5
      %v10323 = vperm.slane %v10029, 6
      %v10324 = vperm.slane %v10029, 7
      %v10325 = vperm.slane %v10044, 0
      %v10326 = vperm.slane %v10044, 1
      %v10327 = vperm.slane %v10044, 2
      %v10328 = vperm.slane %v10044, 3
      %v10329 = vperm.slane %v10044, 4
      %v10330 = vperm.slane %v10044, 5
      %v10331 = vperm.slane %v10044, 6
      %v10332 = vperm.slane %v10044, 7
      %10333 = vst [vmem:[#allocation1] ss:$9 sm:$0xff] %v10077
      %s10334 = scalar_lea.vmem [#allocation1], 1
      %10335 = vst [vmem:[%s10334] ss:$9 sm:$0xff] %v10078
      %s10336 = scalar_lea.vmem [#allocation1], 2
      %10337 = vst [vmem:[%s10336] ss:$9 sm:$0xff] %v10079
      %s10338 = scalar_lea.vmem [#allocation1], 3
      %10339 = vst [vmem:[%s10338] ss:$9 sm:$0xff] %v10080
      %s10340 = scalar_lea.vmem [#allocation1], 4
      %10341 = vst [vmem:[%s10340] ss:$9 sm:$0xff] %v10081
      %s10342 = scalar_lea.vmem [#allocation1], 5
      %10343 = vst [vmem:[%s10342] ss:$9 sm:$0xff] %v10082
      %s10344 = scalar_lea.vmem [#allocation1], 6
      %10345 = vst [vmem:[%s10344] ss:$9 sm:$0xff] %v10083
      %s10346 = scalar_lea.vmem [#allocation1], 7
      %10347 = vst [vmem:[%s10346] ss:$9 sm:$0xff] %v10084
      %v10348 = vld [vmem:[#allocation1] sm:$0xff]
      %10349 = vst [vmem:[#allocation1] ss:$9 sm:$0xff] %v10085
      %10350 = vst [vmem:[%s10334] ss:$9 sm:$0xff] %v10086
      %10351 = vst [vmem:[%s10336] ss:$9 sm:$0xff] %v10087
      %10352 = vst [vmem:[%s10338] ss:$9 sm:$0xff] %v10088
      %10353 = vst [vmem:[%s10340] ss:$9 sm:$0xff] %v10089
      %10354 = vst [vmem:[%s10342] ss:$9 sm:$0xff] %v10090
      %10355 = vst [vmem:[%s10344] ss:$9 sm:$0xff] %v10091
      %10356 = vst [vmem:[%s10346] ss:$9 sm:$0xff] %v10092
      %v10357 = vld [vmem:[#allocation1] sm:$0xff]
      %10358 = vst [vmem:[#allocation1] ss:$9 sm:$0xff] %v10093
      %10359 = vst [vmem:[%s10334] ss:$9 sm:$0xff] %v10094
      %10360 = vst [vmem:[%s10336] ss:$9 sm:$0xff] %v10095
      %10361 = vst [vmem:[%s10338] ss:$9 sm:$0xff] %v10096
      %10362 = vst [vmem:[%s10340] ss:$9 sm:$0xff] %v10097
      %10363 = vst [vmem:[%s10342] ss:$9 sm:$0xff] %v10098
      %10364 = vst [vmem:[%s10344] ss:$9 sm:$0xff] %v10099
      %10365 = vst [vmem:[%s10346] ss:$9 sm:$0xff] %v10100
      %v10366 = vld [vmem:[#allocation1] sm:$0xff]
      %10367 = vst [vmem:[#allocation1] ss:$9 sm:$0xff] %v10101
      %10368 = vst [vmem:[%s10334] ss:$9 sm:$0xff] %v10102
      %10369 = vst [vmem:[%s10336] ss:$9 sm:$0xff] %v10103
      %10370 = vst [vmem:[%s10338] ss:$9 sm:$0xff] %v10104
      %10371 = vst [vmem:[%s10340] ss:$9 sm:$0xff] %v10105
      %10372 = vst [vmem:[%s10342] ss:$9 sm:$0xff] %v10106
      %10373 = vst [vmem:[%s10344] ss:$9 sm:$0xff] %v10107
      %10374 = vst [vmem:[%s10346] ss:$9 sm:$0xff] %v10108
      %v10375 = vld [vmem:[#allocation1] sm:$0xff]
      %10376 = vst [vmem:[#allocation1] ss:$9 sm:$0xff] %v10109
      %10377 = vst [vmem:[%s10334] ss:$9 sm:$0xff] %v10110
      %10378 = vst [vmem:[%s10336] ss:$9 sm:$0xff] %v10111
      %10379 = vst [vmem:[%s10338] ss:$9 sm:$0xff] %v10112
      %10380 = vst [vmem:[%s10340] ss:$9 sm:$0xff] %v10113
      %10381 = vst [vmem:[%s10342] ss:$9 sm:$0xff] %v10114
      %10382 = vst [vmem:[%s10344] ss:$9 sm:$0xff] %v10115
      %10383 = vst [vmem:[%s10346] ss:$9 sm:$0xff] %v10116
      %v10384 = vld [vmem:[#allocation1] sm:$0xff]
      %10385 = vst [vmem:[#allocation1] ss:$9 sm:$0xff] %v10117
      %10386 = vst [vmem:[%s10334] ss:$9 sm:$0xff] %v10118
      %10387 = vst [vmem:[%s10336] ss:$9 sm:$0xff] %v10119
      %10388 = vst [vmem:[%s10338] ss:$9 sm:$0xff] %v10120
      %10389 = vst [vmem:[%s10340] ss:$9 sm:$0xff] %v10121
      %10390 = vst [vmem:[%s10342] ss:$9 sm:$0xff] %v10122
      %10391 = vst [vmem:[%s10344] ss:$9 sm:$0xff] %v10123
      %10392 = vst [vmem:[%s10346] ss:$9 sm:$0xff] %v10124
      %v10393 = vld [vmem:[#allocation1] sm:$0xff]
      %10394 = vst [vmem:[#allocation1] ss:$9 sm:$0xff] %v10125
      %10395 = vst [vmem:[%s10334] ss:$9 sm:$0xff] %v10126
      %10396 = vst [vmem:[%s10336] ss:$9 sm:$0xff] %v10127
      %10397 = vst [vmem:[%s10338] ss:$9 sm:$0xff] %v10128
      %10398 = vst [vmem:[%s10340] ss:$9 sm:$0xff] %v10129
      %10399 = vst [vmem:[%s10342] ss:$9 sm:$0xff] %v10130
      %10400 = vst [vmem:[%s10344] ss:$9 sm:$0xff] %v10131
      %10401 = vst [vmem:[%s10346] ss:$9 sm:$0xff] %v10132
      %v10402 = vld [vmem:[#allocation1] sm:$0xff]
      %10403 = vst [vmem:[#allocation1] ss:$9 sm:$0xff] %v10133
      %10404 = vst [vmem:[%s10334] ss:$9 sm:$0xff] %v10134
      %10405 = vst [vmem:[%s10336] ss:$9 sm:$0xff] %v10135
      %10406 = vst [vmem:[%s10338] ss:$9 sm:$0xff] %v10136
      %10407 = vst [vmem:[%s10340] ss:$9 sm:$0xff] %v10137
      %10408 = vst [vmem:[%s10342] ss:$9 sm:$0xff] %v10138
      %10409 = vst [vmem:[%s10344] ss:$9 sm:$0xff] %v10139
      %10410 = vst [vmem:[%s10346] ss:$9 sm:$0xff] %v10140
      %v10411 = vld [vmem:[#allocation1] sm:$0xff]
      %10412 = vst [vmem:[#allocation1] ss:$9 sm:$0xff] %v10141
      %10413 = vst [vmem:[%s10334] ss:$9 sm:$0xff] %v10142
      %10414 = vst [vmem:[%s10336] ss:$9 sm:$0xff] %v10143
      %10415 = vst [vmem:[%s10338] ss:$9 sm:$0xff] %v10144
      %10416 = vst [vmem:[%s10340] ss:$9 sm:$0xff] %v10145
      %10417 = vst [vmem:[%s10342] ss:$9 sm:$0xff] %v10146
      %10418 = vst [vmem:[%s10344] ss:$9 sm:$0xff] %v10147
      %10419 = vst [vmem:[%s10346] ss:$9 sm:$0xff] %v10148
      %v10420 = vld [vmem:[#allocation1] sm:$0xff]
      %10421 = vst [vmem:[#allocation1] ss:$9 sm:$0xff] %v10149
      %10422 = vst [vmem:[%s10334] ss:$9 sm:$0xff] %v10150
      %10423 = vst [vmem:[%s10336] ss:$9 sm:$0xff] %v10151
      %10424 = vst [vmem:[%s10338] ss:$9 sm:$0xff] %v10152
      %10425 = vst [vmem:[%s10340] ss:$9 sm:$0xff] %v10153
      %10426 = vst [vmem:[%s10342] ss:$9 sm:$0xff] %v10154
      %10427 = vst [vmem:[%s10344] ss:$9 sm:$0xff] %v10155
      %10428 = vst [vmem:[%s10346] ss:$9 sm:$0xff] %v10156
      %v10429 = vld [vmem:[#allocation1] sm:$0xff]
      %10430 = vst [vmem:[#allocation1] ss:$9 sm:$0xff] %v10157
      %10431 = vst [vmem:[%s10334] ss:$9 sm:$0xff] %v10158
      %10432 = vst [vmem:[%s10336] ss:$9 sm:$0xff] %v10159
      %10433 = vst [vmem:[%s10338] ss:$9 sm:$0xff] %v10160
      %10434 = vst [vmem:[%s10340] ss:$9 sm:$0xff] %v10161
      %10435 = vst [vmem:[%s10342] ss:$9 sm:$0xff] %v10162
      %10436 = vst [vmem:[%s10344] ss:$9 sm:$0xff] %v10163
      %10437 = vst [vmem:[%s10346] ss:$9 sm:$0xff] %v10164
      %v10438 = vld [vmem:[#allocation1] sm:$0xff]
      %10439 = vst [vmem:[#allocation1] ss:$9 sm:$0xff] %v10165
      %10440 = vst [vmem:[%s10334] ss:$9 sm:$0xff] %v10166
      %10441 = vst [vmem:[%s10336] ss:$9 sm:$0xff] %v10167
      %10442 = vst [vmem:[%s10338] ss:$9 sm:$0xff] %v10168
      %10443 = vst [vmem:[%s10340] ss:$9 sm:$0xff] %v10169
      %10444 = vst [vmem:[%s10342] ss:$9 sm:$0xff] %v10170
      %10445 = vst [vmem:[%s10344] ss:$9 sm:$0xff] %v10171
      %10446 = vst [vmem:[%s10346] ss:$9 sm:$0xff] %v10172
      %v10447 = vld [vmem:[#allocation1] sm:$0xff]
      %10448 = vst [vmem:[#allocation1] ss:$9 sm:$0xff] %v10173
      %10449 = vst [vmem:[%s10334] ss:$9 sm:$0xff] %v10174
      %10450 = vst [vmem:[%s10336] ss:$9 sm:$0xff] %v10175
      %10451 = vst [vmem:[%s10338] ss:$9 sm:$0xff] %v10176
      %10452 = vst [vmem:[%s10340] ss:$9 sm:$0xff] %v10177
      %10453 = vst [vmem:[%s10342] ss:$9 sm:$0xff] %v10178
      %10454 = vst [vmem:[%s10344] ss:$9 sm:$0xff] %v10179
      %10455 = vst [vmem:[%s10346] ss:$9 sm:$0xff] %v10180
      %v10456 = vld [vmem:[#allocation1] sm:$0xff]
      %10457 = vst [vmem:[#allocation1] ss:$9 sm:$0xff] %v10181
      %10458 = vst [vmem:[%s10334] ss:$9 sm:$0xff] %v10182
      %10459 = vst [vmem:[%s10336] ss:$9 sm:$0xff] %v10183
      %10460 = vst [vmem:[%s10338] ss:$9 sm:$0xff] %v10184
      %10461 = vst [vmem:[%s10340] ss:$9 sm:$0xff] %v10185
      %10462 = vst [vmem:[%s10342] ss:$9 sm:$0xff] %v10186
      %10463 = vst [vmem:[%s10344] ss:$9 sm:$0xff] %v10187
      %10464 = vst [vmem:[%s10346] ss:$9 sm:$0xff] %v10188
      %v10465 = vld [vmem:[#allocation1] sm:$0xff]
      %10466 = vst [vmem:[#allocation1] ss:$9 sm:$0xff] %v10189
      %10467 = vst [vmem:[%s10334] ss:$9 sm:$0xff] %v10190
      %10468 = vst [vmem:[%s10336] ss:$9 sm:$0xff] %v10191
      %10469 = vst [vmem:[%s10338] ss:$9 sm:$0xff] %v10192
      %10470 = vst [vmem:[%s10340] ss:$9 sm:$0xff] %v10193
      %10471 = vst [vmem:[%s10342] ss:$9 sm:$0xff] %v10194
      %10472 = vst [vmem:[%s10344] ss:$9 sm:$0xff] %v10195
      %10473 = vst [vmem:[%s10346] ss:$9 sm:$0xff] %v10196
      %v10474 = vld [vmem:[#allocation1] sm:$0xff]
      %10475 = vst [vmem:[#allocation1] ss:$9 sm:$0xff] %v10197
      %10476 = vst [vmem:[%s10334] ss:$9 sm:$0xff] %v10198
      %10477 = vst [vmem:[%s10336] ss:$9 sm:$0xff] %v10199
      %10478 = vst [vmem:[%s10338] ss:$9 sm:$0xff] %v10200
      %10479 = vst [vmem:[%s10340] ss:$9 sm:$0xff] %v10201
      %10480 = vst [vmem:[%s10342] ss:$9 sm:$0xff] %v10202
      %10481 = vst [vmem:[%s10344] ss:$9 sm:$0xff] %v10203
      %10482 = vst [vmem:[%s10346] ss:$9 sm:$0xff] %v10204
      %v10483 = vld [vmem:[#allocation1] sm:$0xff]
      %10484 = vst [vmem:[#allocation1] ss:$9 sm:$0xff] %v10205
      %10485 = vst [vmem:[%s10334] ss:$9 sm:$0xff] %v10206
      %10486 = vst [vmem:[%s10336] ss:$9 sm:$0xff] %v10207
      %10487 = vst [vmem:[%s10338] ss:$9 sm:$0xff] %v10208
      %10488 = vst [vmem:[%s10340] ss:$9 sm:$0xff] %v10209
      %10489 = vst [vmem:[%s10342] ss:$9 sm:$0xff] %v10210
      %10490 = vst [vmem:[%s10344] ss:$9 sm:$0xff] %v10211
      %10491 = vst [vmem:[%s10346] ss:$9 sm:$0xff] %v10212
      %v10492 = vld [vmem:[#allocation1] sm:$0xff]
      %10493 = vst [vmem:[#allocation1] ss:$9 sm:$0xff] %v10213
      %10494 = vst [vmem:[%s10334] ss:$9 sm:$0xff] %v10214
      %10495 = vst [vmem:[%s10336] ss:$9 sm:$0xff] %v10215
      %10496 = vst [vmem:[%s10338] ss:$9 sm:$0xff] %v10216
      %10497 = vst [vmem:[%s10340] ss:$9 sm:$0xff] %v10217
      %10498 = vst [vmem:[%s10342] ss:$9 sm:$0xff] %v10218
      %10499 = vst [vmem:[%s10344] ss:$9 sm:$0xff] %v10219
      %10500 = vst [vmem:[%s10346] ss:$9 sm:$0xff] %v10220
      %v10501 = vld [vmem:[#allocation1] sm:$0xff]
      %10502 = vst [vmem:[#allocation1] ss:$9 sm:$0xff] %v10221
      %10503 = vst [vmem:[%s10334] ss:$9 sm:$0xff] %v10222
      %10504 = vst [vmem:[%s10336] ss:$9 sm:$0xff] %v10223
      %10505 = vst [vmem:[%s10338] ss:$9 sm:$0xff] %v10224
      %10506 = vst [vmem:[%s10340] ss:$9 sm:$0xff] %v10225
      %10507 = vst [vmem:[%s10342] ss:$9 sm:$0xff] %v10226
      %10508 = vst [vmem:[%s10344] ss:$9 sm:$0xff] %v10227
      %10509 = vst [vmem:[%s10346] ss:$9 sm:$0xff] %v10228
      %v10510 = vld [vmem:[#allocation1] sm:$0xff]
      %10511 = vst [vmem:[#allocation1] ss:$9 sm:$0xff] %v10229
      %10512 = vst [vmem:[%s10334] ss:$9 sm:$0xff] %v10230
      %10513 = vst [vmem:[%s10336] ss:$9 sm:$0xff] %v10231
      %10514 = vst [vmem:[%s10338] ss:$9 sm:$0xff] %v10232
      %10515 = vst [vmem:[%s10340] ss:$9 sm:$0xff] %v10233
      %10516 = vst [vmem:[%s10342] ss:$9 sm:$0xff] %v10234
      %10517 = vst [vmem:[%s10344] ss:$9 sm:$0xff] %v10235
      %10518 = vst [vmem:[%s10346] ss:$9 sm:$0xff] %v10236
      %v10519 = vld [vmem:[#allocation1] sm:$0xff]
      %10520 = vst [vmem:[#allocation1] ss:$9 sm:$0xff] %v10237
      %10521 = vst [vmem:[%s10334] ss:$9 sm:$0xff] %v10238
      %10522 = vst [vmem:[%s10336] ss:$9 sm:$0xff] %v10239
      %10523 = vst [vmem:[%s10338] ss:$9 sm:$0xff] %v10240
      %10524 = vst [vmem:[%s10340] ss:$9 sm:$0xff] %v10241
      %10525 = vst [vmem:[%s10342] ss:$9 sm:$0xff] %v10242
      %10526 = vst [vmem:[%s10344] ss:$9 sm:$0xff] %v10243
      %10527 = vst [vmem:[%s10346] ss:$9 sm:$0xff] %v10244
      %v10528 = vld [vmem:[#allocation1] sm:$0xff]
      %10529 = vst [vmem:[#allocation1] ss:$9 sm:$0xff] %v10245
      %10530 = vst [vmem:[%s10334] ss:$9 sm:$0xff] %v10246
      %10531 = vst [vmem:[%s10336] ss:$9 sm:$0xff] %v10247
      %10532 = vst [vmem:[%s10338] ss:$9 sm:$0xff] %v10248
      %10533 = vst [vmem:[%s10340] ss:$9 sm:$0xff] %v10249
      %10534 = vst [vmem:[%s10342] ss:$9 sm:$0xff] %v10250
      %10535 = vst [vmem:[%s10344] ss:$9 sm:$0xff] %v10251
      %10536 = vst [vmem:[%s10346] ss:$9 sm:$0xff] %v10252
      %v10537 = vld [vmem:[#allocation1] sm:$0xff]
      %10538 = vst [vmem:[#allocation1] ss:$9 sm:$0xff] %v10253
      %10539 = vst [vmem:[%s10334] ss:$9 sm:$0xff] %v10254
      %10540 = vst [vmem:[%s10336] ss:$9 sm:$0xff] %v10255
      %10541 = vst [vmem:[%s10338] ss:$9 sm:$0xff] %v10256
      %10542 = vst [vmem:[%s10340] ss:$9 sm:$0xff] %v10257
      %10543 = vst [vmem:[%s10342] ss:$9 sm:$0xff] %v10258
      %10544 = vst [vmem:[%s10344] ss:$9 sm:$0xff] %v10259
      %10545 = vst [vmem:[%s10346] ss:$9 sm:$0xff] %v10260
      %v10546 = vld [vmem:[#allocation1] sm:$0xff]
      %10547 = vst [vmem:[#allocation1] ss:$9 sm:$0xff] %v10261
      %10548 = vst [vmem:[%s10334] ss:$9 sm:$0xff] %v10262
      %10549 = vst [vmem:[%s10336] ss:$9 sm:$0xff] %v10263
      %10550 = vst [vmem:[%s10338] ss:$9 sm:$0xff] %v10264
      %10551 = vst [vmem:[%s10340] ss:$9 sm:$0xff] %v10265
      %10552 = vst [vmem:[%s10342] ss:$9 sm:$0xff] %v10266
      %10553 = vst [vmem:[%s10344] ss:$9 sm:$0xff] %v10267
      %10554 = vst [vmem:[%s10346] ss:$9 sm:$0xff] %v10268
      %v10555 = vld [vmem:[#allocation1] sm:$0xff]
      %10556 = vst [vmem:[#allocation1] ss:$9 sm:$0xff] %v10269
      %10557 = vst [vmem:[%s10334] ss:$9 sm:$0xff] %v10270
      %10558 = vst [vmem:[%s10336] ss:$9 sm:$0xff] %v10271
      %10559 = vst [vmem:[%s10338] ss:$9 sm:$0xff] %v10272
      %10560 = vst [vmem:[%s10340] ss:$9 sm:$0xff] %v10273
      %10561 = vst [vmem:[%s10342] ss:$9 sm:$0xff] %v10274
      %10562 = vst [vmem:[%s10344] ss:$9 sm:$0xff] %v10275
      %10563 = vst [vmem:[%s10346] ss:$9 sm:$0xff] %v10276
      %v10564 = vld [vmem:[#allocation1] sm:$0xff]
      %10565 = vst [vmem:[#allocation1] ss:$9 sm:$0xff] %v10277
      %10566 = vst [vmem:[%s10334] ss:$9 sm:$0xff] %v10278
      %10567 = vst [vmem:[%s10336] ss:$9 sm:$0xff] %v10279
      %10568 = vst [vmem:[%s10338] ss:$9 sm:$0xff] %v10280
      %10569 = vst [vmem:[%s10340] ss:$9 sm:$0xff] %v10281
      %10570 = vst [vmem:[%s10342] ss:$9 sm:$0xff] %v10282
      %10571 = vst [vmem:[%s10344] ss:$9 sm:$0xff] %v10283
      %10572 = vst [vmem:[%s10346] ss:$9 sm:$0xff] %v10284
      %v10573 = vld [vmem:[#allocation1] sm:$0xff]
      %10574 = vst [vmem:[#allocation1] ss:$9 sm:$0xff] %v10285
      %10575 = vst [vmem:[%s10334] ss:$9 sm:$0xff] %v10286
      %10576 = vst [vmem:[%s10336] ss:$9 sm:$0xff] %v10287
      %10577 = vst [vmem:[%s10338] ss:$9 sm:$0xff] %v10288
      %10578 = vst [vmem:[%s10340] ss:$9 sm:$0xff] %v10289
      %10579 = vst [vmem:[%s10342] ss:$9 sm:$0xff] %v10290
      %10580 = vst [vmem:[%s10344] ss:$9 sm:$0xff] %v10291
      %10581 = vst [vmem:[%s10346] ss:$9 sm:$0xff] %v10292
      %v10582 = vld [vmem:[#allocation1] sm:$0xff]
      %10583 = vst [vmem:[#allocation1] ss:$9 sm:$0xff] %v10293
      %10584 = vst [vmem:[%s10334] ss:$9 sm:$0xff] %v10294
      %10585 = vst [vmem:[%s10336] ss:$9 sm:$0xff] %v10295
      %10586 = vst [vmem:[%s10338] ss:$9 sm:$0xff] %v10296
      %10587 = vst [vmem:[%s10340] ss:$9 sm:$0xff] %v10297
      %10588 = vst [vmem:[%s10342] ss:$9 sm:$0xff] %v10298
      %10589 = vst [vmem:[%s10344] ss:$9 sm:$0xff] %v10299
      %10590 = vst [vmem:[%s10346] ss:$9 sm:$0xff] %v10300
      %v10591 = vld [vmem:[#allocation1] sm:$0xff]
      %10592 = vst [vmem:[#allocation1] ss:$9 sm:$0xff] %v10301
      %10593 = vst [vmem:[%s10334] ss:$9 sm:$0xff] %v10302
      %10594 = vst [vmem:[%s10336] ss:$9 sm:$0xff] %v10303
      %10595 = vst [vmem:[%s10338] ss:$9 sm:$0xff] %v10304
      %10596 = vst [vmem:[%s10340] ss:$9 sm:$0xff] %v10305
      %10597 = vst [vmem:[%s10342] ss:$9 sm:$0xff] %v10306
      %10598 = vst [vmem:[%s10344] ss:$9 sm:$0xff] %v10307
      %10599 = vst [vmem:[%s10346] ss:$9 sm:$0xff] %v10308
      %v10600 = vld [vmem:[#allocation1] sm:$0xff]
      %10601 = vst [vmem:[#allocation1] ss:$9 sm:$0xff] %v10309
      %10602 = vst [vmem:[%s10334] ss:$9 sm:$0xff] %v10310
      %10603 = vst [vmem:[%s10336] ss:$9 sm:$0xff] %v10311
      %10604 = vst [vmem:[%s10338] ss:$9 sm:$0xff] %v10312
      %10605 = vst [vmem:[%s10340] ss:$9 sm:$0xff] %v10313
      %10606 = vst [vmem:[%s10342] ss:$9 sm:$0xff] %v10314
      %10607 = vst [vmem:[%s10344] ss:$9 sm:$0xff] %v10315
      %10608 = vst [vmem:[%s10346] ss:$9 sm:$0xff] %v10316
      %v10609 = vld [vmem:[#allocation1] sm:$0xff]
      %10610 = vst [vmem:[#allocation1] ss:$9 sm:$0xff] %v10317
      %10611 = vst [vmem:[%s10334] ss:$9 sm:$0xff] %v10318
      %10612 = vst [vmem:[%s10336] ss:$9 sm:$0xff] %v10319
      %10613 = vst [vmem:[%s10338] ss:$9 sm:$0xff] %v10320
      %10614 = vst [vmem:[%s10340] ss:$9 sm:$0xff] %v10321
      %10615 = vst [vmem:[%s10342] ss:$9 sm:$0xff] %v10322
      %10616 = vst [vmem:[%s10344] ss:$9 sm:$0xff] %v10323
      %10617 = vst [vmem:[%s10346] ss:$9 sm:$0xff] %v10324
      %v10618 = vld [vmem:[#allocation1] sm:$0xff]
      %10619 = vst [vmem:[#allocation1] ss:$9 sm:$0xff] %v10325
      %10620 = vst [vmem:[%s10334] ss:$9 sm:$0xff] %v10326
      %10621 = vst [vmem:[%s10336] ss:$9 sm:$0xff] %v10327
      %10622 = vst [vmem:[%s10338] ss:$9 sm:$0xff] %v10328
      %10623 = vst [vmem:[%s10340] ss:$9 sm:$0xff] %v10329
      %10624 = vst [vmem:[%s10342] ss:$9 sm:$0xff] %v10330
      %10625 = vst [vmem:[%s10344] ss:$9 sm:$0xff] %v10331
      %10626 = vst [vmem:[%s10346] ss:$9 sm:$0xff] %v10332
      %v10627 = vld [vmem:[#allocation1] sm:$0xff]
      %10628 = vset.pattern.permute.xlu0 0
      %10629 = vperm.xlu0 %10628, %v10348
      %v10630 = vpop.permute.xlu0 %10629
      %10631 = vset.pattern.permute.xlu0 0
      %10632 = vperm.xlu0 %10631, %v10357
      %v10633 = vpop.permute.xlu0 %10632
      %10634 = vset.pattern.permute.xlu0 0
      %10635 = vperm.xlu0 %10634, %v10366
      %v10636 = vpop.permute.xlu0 %10635
      %10637 = vset.pattern.permute.xlu0 0
      %10638 = vperm.xlu0 %10637, %v10375
      %v10639 = vpop.permute.xlu0 %10638
      %10640 = vset.pattern.permute.xlu0 0
      %10641 = vperm.xlu0 %10640, %v10384
      %v10642 = vpop.permute.xlu0 %10641
      %10643 = vset.pattern.permute.xlu0 0
      %10644 = vperm.xlu0 %10643, %v10393
      %v10645 = vpop.permute.xlu0 %10644
      %10646 = vset.pattern.permute.xlu0 0
      %10647 = vperm.xlu0 %10646, %v10402
      %v10648 = vpop.permute.xlu0 %10647
      %10649 = vset.pattern.permute.xlu0 0
      %10650 = vperm.xlu0 %10649, %v10411
      %v10651 = vpop.permute.xlu0 %10650
      %10652 = vset.pattern.permute.xlu0 0
      %10653 = vperm.xlu0 %10652, %v10420
      %v10654 = vpop.permute.xlu0 %10653
      %10655 = vset.pattern.permute.xlu0 0
      %10656 = vperm.xlu0 %10655, %v10429
      %v10657 = vpop.permute.xlu0 %10656
      %10658 = vset.pattern.permute.xlu0 0
      %10659 = vperm.xlu0 %10658, %v10438
      %v10660 = vpop.permute.xlu0 %10659
      %10661 = vset.pattern.permute.xlu0 0
      %10662 = vperm.xlu0 %10661, %v10447
      %v10663 = vpop.permute.xlu0 %10662
      %10664 = vset.pattern.permute.xlu0 0
      %10665 = vperm.xlu0 %10664, %v10456
      %v10666 = vpop.permute.xlu0 %10665
      %10667 = vset.pattern.permute.xlu0 0
      %10668 = vperm.xlu0 %10667, %v10465
      %v10669 = vpop.permute.xlu0 %10668
      %10670 = vset.pattern.permute.xlu0 0
      %10671 = vperm.xlu0 %10670, %v10474
      %v10672 = vpop.permute.xlu0 %10671
      %10673 = vset.pattern.permute.xlu0 0
      %10674 = vperm.xlu0 %10673, %v10483
      %v10675 = vpop.permute.xlu0 %10674
      %10676 = vset.pattern.permute.xlu0 0
      %10677 = vperm.xlu0 %10676, %v10492
      %v10678 = vpop.permute.xlu0 %10677
      %10679 = vset.pattern.permute.xlu0 0
      %10680 = vperm.xlu0 %10679, %v10501
      %v10681 = vpop.permute.xlu0 %10680
      %10682 = vset.pattern.permute.xlu0 0
      %10683 = vperm.xlu0 %10682, %v10510
      %v10684 = vpop.permute.xlu0 %10683
      %10685 = vset.pattern.permute.xlu0 0
      %10686 = vperm.xlu0 %10685, %v10519
      %v10687 = vpop.permute.xlu0 %10686
      %10688 = vset.pattern.permute.xlu0 0
      %10689 = vperm.xlu0 %10688, %v10528
      %v10690 = vpop.permute.xlu0 %10689
      %10691 = vset.pattern.permute.xlu0 0
      %10692 = vperm.xlu0 %10691, %v10537
      %v10693 = vpop.permute.xlu0 %10692
      %10694 = vset.pattern.permute.xlu0 0
      %10695 = vperm.xlu0 %10694, %v10546
      %v10696 = vpop.permute.xlu0 %10695
      %10697 = vset.pattern.permute.xlu0 0
      %10698 = vperm.xlu0 %10697, %v10555
      %v10699 = vpop.permute.xlu0 %10698
      %10700 = vset.pattern.permute.xlu0 0
      %10701 = vperm.xlu0 %10700, %v10564
      %v10702 = vpop.permute.xlu0 %10701
      %10703 = vset.pattern.permute.xlu0 0
      %10704 = vperm.xlu0 %10703, %v10573
      %v10705 = vpop.permute.xlu0 %10704
      %10706 = vset.pattern.permute.xlu0 0
      %10707 = vperm.xlu0 %10706, %v10582
      %v10708 = vpop.permute.xlu0 %10707
      %10709 = vset.pattern.permute.xlu0 0
      %10710 = vperm.xlu0 %10709, %v10591
      %v10711 = vpop.permute.xlu0 %10710
      %10712 = vset.pattern.permute.xlu0 0
      %10713 = vperm.xlu0 %10712, %v10600
      %v10714 = vpop.permute.xlu0 %10713
      %10715 = vset.pattern.permute.xlu0 0
      %10716 = vperm.xlu0 %10715, %v10609
      %v10717 = vpop.permute.xlu0 %10716
      %10718 = vset.pattern.permute.xlu0 0
      %10719 = vperm.xlu0 %10718, %v10618
      %v10720 = vpop.permute.xlu0 %10719
      %10721 = vset.pattern.permute.xlu0 0
      %10722 = vperm.xlu0 %10721, %v10627
      %v10723 = vpop.permute.xlu0 %10722
      %v10724 = vlaneseq
      %v10725 = vand.u32 %v10724, 127
      %v10726 = vperm.slane %v10630, %v10725
      %v10727 = vadd.s32 %v10725, 4294967288
      %v10728 = vperm.slane %v10633, %v10727
      %vm10729 = vcmask 130112
      %v10730 = vsel %vm10729, %v10728, %v10726
      %v10731 = vadd.s32 %v10725, 4294967280
      %v10732 = vperm.slane %v10636, %v10731
      %vm10733 = vcmask 195712
      %v10734 = vsel %vm10733, %v10732, %v10730
      %v10735 = vadd.s32 %v10725, 4294967272
      %v10736 = vperm.slane %v10639, %v10735
      %vm10737 = vcmask 261312
      %v10738 = vsel %vm10737, %v10736, %v10734
      %v10739 = vadd.s32 %v10725, 4294967264
      %v10740 = vperm.slane %v10642, %v10739
      %vm10741 = vcmask 326912
      %v10742 = vsel %vm10741, %v10740, %v10738
      %v10743 = vadd.s32 %v10725, 4294967256
      %v10744 = vperm.slane %v10645, %v10743
      %vm10745 = vcmask 392512
      %v10746 = vsel %vm10745, %v10744, %v10742
      %v10747 = vadd.s32 %v10725, 4294967248
      %v10748 = vperm.slane %v10648, %v10747
      %vm10749 = vcmask 458112
      %v10750 = vsel %vm10749, %v10748, %v10746
      %v10751 = vadd.s32 %v10725, 4294967240
      %v10752 = vperm.slane %v10651, %v10751
      %vm10753 = vcmask 523712
      %v10754 = vsel %vm10753, %v10752, %v10750
      %v10755 = vadd.s32 %v10725, 4294967232
      %v10756 = vperm.slane %v10654, %v10755
      %vm10757 = vcmask 589312
      %v10758 = vsel %vm10757, %v10756, %v10754
      %v10759 = vadd.s32 %v10725, 4294967224
      %v10760 = vperm.slane %v10657, %v10759
      %vm10761 = vcmask 654912
      %v10762 = vsel %vm10761, %v10760, %v10758
      %v10763 = vadd.s32 %v10725, 4294967216
      %v10764 = vperm.slane %v10660, %v10763
      %vm10765 = vcmask 720512
      %v10766 = vsel %vm10765, %v10764, %v10762
      %v10767 = vadd.s32 %v10725, 4294967208
      %v10768 = vperm.slane %v10663, %v10767
      %vm10769 = vcmask 786112
      %v10770 = vsel %vm10769, %v10768, %v10766
      %v10771 = vadd.s32 %v10725, 4294967200
      %v10772 = vperm.slane %v10666, %v10771
      %vm10773 = vcmask 851712
      %v10774 = vsel %vm10773, %v10772, %v10770
      %v10775 = vadd.s32 %v10725, 4294967192
      %v10776 = vperm.slane %v10669, %v10775
      %vm10777 = vcmask 917312
      %v10778 = vsel %vm10777, %v10776, %v10774
      %v10779 = vadd.s32 %v10725, 4294967184
      %v10780 = vperm.slane %v10672, %v10779
      %vm10781 = vcmask 982912
      %v10782 = vsel %vm10781, %v10780, %v10778
      %v10783 = vadd.s32 %v10725, 4294967176
      %v10784 = vperm.slane %v10675, %v10783
      %vm10785 = vcmask 1048512
      %v10786 = vsel %vm10785, %v10784, %v10782
      %v10787 = vperm.slane %v10678, %v10725
      %v10788 = vperm.slane %v10681, %v10727
      %v10789 = vsel %vm10729, %v10788, %v10787
      %v10790 = vperm.slane %v10684, %v10731
      %v10791 = vsel %vm10733, %v10790, %v10789
      %v10792 = vperm.slane %v10687, %v10735
      %v10793 = vsel %vm10737, %v10792, %v10791
      %v10794 = vperm.slane %v10690, %v10739
      %v10795 = vsel %vm10741, %v10794, %v10793
      %v10796 = vperm.slane %v10693, %v10743
      %v10797 = vsel %vm10745, %v10796, %v10795
      %v10798 = vperm.slane %v10696, %v10747
      %v10799 = vsel %vm10749, %v10798, %v10797
      %v10800 = vperm.slane %v10699, %v10751
      %v10801 = vsel %vm10753, %v10800, %v10799
      %v10802 = vperm.slane %v10702, %v10755
      %v10803 = vsel %vm10757, %v10802, %v10801
      %v10804 = vperm.slane %v10705, %v10759
      %v10805 = vsel %vm10761, %v10804, %v10803
      %v10806 = vperm.slane %v10708, %v10763
      %v10807 = vsel %vm10765, %v10806, %v10805
      %v10808 = vperm.slane %v10711, %v10767
      %v10809 = vsel %vm10769, %v10808, %v10807
      %v10810 = vperm.slane %v10714, %v10771
      %v10811 = vsel %vm10773, %v10810, %v10809
      %v10812 = vperm.slane %v10717, %v10775
      %v10813 = vsel %vm10777, %v10812, %v10811
      %v10814 = vperm.slane %v10720, %v10779
      %v10815 = vsel %vm10781, %v10814, %v10813
      %v10816 = vperm.slane %v10723, %v10783
      %v10817 = vsel %vm10785, %v10816, %v10815
      %v10818 = vrot.slane %v10817, 7
      %vm10819 = vcmask 1040384
      %v10820 = vsel %vm10819, %v10786, %v10818
      %v10822 = vlaneseq
      %vm10823 = vcmp.ge.s32.totalorder %v10822, 0
      %vm10824 = vcmp.lt.s32.totalorder %v10822, 256
      %vm10825 = vmand %vm10823, %vm10824
      %10826 = vst.msk [vmem:[%s332] sm:$0x3] %vm10825, %v10820
      %p10827 = scmp.lt.s32.totalorder %s22, 1
      %s10828 = scalar_select %p10827, %s22, 1
      %s10829 = smul.addr %s10828, 2
      %s10830 = scalar_lea.vmem %s9, %s10829
      // Predicated region
      $region57: #{sam_forward.1} parent=55 // pred_check
        %p10831 = pneg %p234
      $region58: #{sam_forward.1} parent=55 // pred_check_branch
        %10833 = sbr.rel (%p10831) target = $region60
      $region59: #{sam_forward.1} parent=55 // pred_region
        _
      $region60: #{sam_forward.1} parent=55 // pred_fallthru
        _
    $region56: #{sam_forward.1} parent=5 // pred_fallthru
      _
    %p10834 = scmp.le.s32.totalorder 2, %s17
    // Predicated region
    $region61: #{sam_forward.1} parent=5 // pred_check
      %p10835 = pneg %p10834
    $region62: #{sam_forward.1} parent=5 // pred_check_branch
      %10837 = sbr.rel (%p10835) target = $region64
    $region63: #{sam_forward.1} parent=5 // pred_region
      %s10838 = ssub.s32 %s17, 2
      // Predicated region
      $region65: #{sam_forward.1} parent=63 // pred_check
        %p10839 = pneg %p240
      $region66: #{sam_forward.1} parent=63 // pred_check_branch
        %10841 = sbr.rel (%p10839) target = $region68
      $region67: #{sam_forward.1} parent=63 // pred_region
        %p10842 = scmp.lt.s32.totalorder %s23, 1
        %s10843 = scalar_select %p10842, %s23, 1
        %s10844 = smul.addr %s10843, 2
        %s10845 = scalar_lea.vmem %s9, %s10844
      $region68: #{sam_forward.1} parent=63 // pred_fallthru
        _
    $region64: #{sam_forward.1} parent=5 // pred_fallthru
      _
  $region6: #{sam_forward.1} parent=0 // loop_footer
    %s21 = sadd.s32 1, %s17
  $region7: #{sam_forward.1} parent=0 // loop_footer_branch
    %16 = sbr.rel target = $region3
  $region8: #{sam_forward.1} parent=0 // loop_exit
    _

</llo_original>
